<compile_context>
chip_gen: v7x
topology: tpu7x:2x2x1
jax: 0.10.0
libtpu: 0.0.40
codegen_flags: <defaults>
</compile_context>

<pallas_src>
import functools
from typing import NamedTuple

import jax
import jax.numpy as jnp
import numpy as np
from jax.experimental import pallas as pl
from jax.experimental.pallas import tpu as pltpu


# ---------------------------------------------------------------------------
# Fused whole-network kernel (one block of B_TILE samples per grid step).
# Activation layout: A_l : (B_TILE * H_l, W_l * C_l)
#   rows  = (sample, image row) stacked, lanes = (column, channel) interleaved.
# All storage dims are padded to (8, 128) tiles on the host.
# ---------------------------------------------------------------------------
def _fused_dnlayers_kernel(*refs, num_layers, negative_slope, use_sigmoid):
    x_ref = refs[0]
    s_refs = refs[1:1 + num_layers]                       # (kh, B*Ho, B*Hin)  bf16
    w_refs = refs[1 + num_layers:1 + 2 * num_layers]      # (kh*Win*Cin, Wo*Cout) bf16
    b_refs = refs[1 + 2 * num_layers:1 + 3 * num_layers]  # (1, Wo*Cout)       f32
    o_ref = refs[1 + 3 * num_layers]                      # (1, B*Ho_L, laneL) f32

    a = x_ref[0]                                          # (B*H0, lane0) bf16
    for l in range(num_layers):
        s_l = s_refs[l]
        w_l = w_refs[l]
        kh = s_l.shape[0]
        # Row-tap gathers (H stride + zero padding) as tiny 0/1 matmuls; exact
        # in bf16, so the downcast before the big dot loses nothing.
        taps = jnp.concatenate(
            [jnp.dot(s_l[i], a, preferred_element_type=jnp.float32)
             .astype(jnp.bfloat16) for i in range(kh)],
            axis=1)                                       # (B*Ho, kh*lane_in) bf16
        # One large-K MXU matmul per layer: column taps, W stride/padding, the
        # Cin reduction and the kh-tap accumulation all happen inside the MXU.
        acc = jnp.dot(taps, w_l[...], preferred_element_type=jnp.float32)
        acc = acc + b_refs[l][...]                        # f32 epilogue (bias)
        if l < num_layers - 1:
            a = jnp.where(acc > 0, acc, negative_slope * acc).astype(jnp.bfloat16)
        else:
            a = acc                                       # no nl after the last conv
    if use_sigmoid:                                       # static flag; off per spec
        a = jax.nn.sigmoid(a)
    o_ref[0] = a                                          # lane-dense padded output


# ---------------------------------------------------------------------------
# Parameter construction (PyTorch Conv2d layout) and one-time host packing.
# ---------------------------------------------------------------------------
def init_d_nlayers_params(key, input_nc=3, ndf=8, n_layers=3):
    """Random params in PyTorch layout: w (Cout, Cin, kh, kw), b (Cout,)."""
    kw = 4
    cfg = [(input_nc, ndf, 2, 1)]                         # (Cin, Cout, stride, pad)
    nf_mult = 1
    for n in range(1, n_layers):
        nf_mult_prev, nf_mult = nf_mult, min(2 ** n, 8)
        cfg.append((ndf * nf_mult_prev, ndf * nf_mult, 2, 1))
    nf_mult_prev, nf_mult = nf_mult, min(2 ** n_layers, 8)
    cfg.append((ndf * nf_mult_prev, ndf * nf_mult, 1, 1))
    cfg.append((ndf * nf_mult, 1, 1, 0))                  # final 1-channel conv (k4,s1,p0)

    params = []
    for (cin, cout, s, p) in cfg:
        key, k1, k2 = jax.random.split(key, 3)
        w = jax.random.normal(k1, (cout, cin, kw, kw), jnp.float32) * 0.02
        b = jax.random.normal(k2, (cout,), jnp.float32) * 0.02
        params.append({"w": w, "b": b, "stride": s, "pad": p})
    return params


class _PackMeta(NamedTuple):
    b_tile: int
    h0: int
    w0: int
    c0: int
    out_h: int
    out_w: int
    out_c: int
    out_hs: int
    out_ws: int
    out_cs: int


class PackedDNLayers(NamedTuple):
    S: tuple
    W: tuple
    b: tuple
    meta: _PackMeta


def _round_lane(w_true, c_true, multiple=128):
    """Smallest (W_store, C_store) >= (W, C) with W_store*C_store % 128 == 0."""
    best = None
    for w in range(w_true, w_true + multiple + 1):
        for c in range(c_true, c_true + multiple + 1):
            if (w * c) % multiple == 0:
                if best is None or w * c < best[0]:
                    best = (w * c, w, c)
                break
    return best[1], best[2]


def _round_rows(h_true, b_tile, multiple=8):
    h = h_true
    while (b_tile * h) % multiple:
        h += 1
    return h


def pack_d_nlayers_params(params, input_hw, b_tile=2):
    """One-time host-side packing of the conv stack into the kernel's matmul form.

    Per layer the kernel computes (per B_TILE-sample block):
        taps = concat_i( kron(I_B, S_l[i]) @ A )        i = 0..kh-1  (row taps)
        A'   = LeakyReLU( taps @ Bcat_l + bias_l )
    Bcat_l bakes in the column taps, W stride/padding, the Cin reduction and
    the vertical stacking of the kh taps.  Storage dims are (8,128)-padded.
    """
    H_t, W_t = input_hw
    C_t = int(params[0]["w"].shape[1])
    H_s = _round_rows(H_t, b_tile)
    W_s, C_s = _round_lane(W_t, C_t)
    in_store = (H_s, W_s, C_s)

    S_list, W_list, b_list = [], [], []
    for p in params:
        w = np.asarray(jax.device_get(p["w"]), np.float32)       # (Cout,Cin,kh,kw)
        bias = np.asarray(jax.device_get(p["b"]), np.float32)
        stride, pad = int(p["stride"]), int(p["pad"])
        Cout, Cin, kh, kw = w.shape
        assert Cin == C_t, (Cin, C_t)
        Ho_t = (H_t + 2 * pad - kh) // stride + 1
        Wo_t = (W_t + 2 * pad - kw) // stride + 1
        Ho_s = _round_rows(Ho_t, b_tile)
        Wo_s, Co_s = _round_lane(Wo_t, Cout)
        lane_in, lane_out = W_s * C_s, Wo_s * Co_s

        # Row-tap selection: S[i, oh, h] = 1 iff h == stride*oh + i - pad (valid),
        # block-diagonal over the B_TILE stacked samples.
        S = np.zeros((kh, Ho_s, H_s), np.float32)
        for i in range(kh):
            for oh in range(Ho_t):
                h = stride * oh + i - pad
                if 0 <= h < H_t:
                    S[i, oh, h] = 1.0
        eye = np.eye(b_tile, dtype=np.float32)
        Sb = np.stack([np.kron(eye, S[i]) for i in range(kh)])    # (kh, B*Ho_s, B*H_s)

        # Concatenated-K banded weights:
        # Bcat[i*lane_in + wc*C_s + ci, ow*Co_s + co] = w[co, ci, i, j]
        #   with wc = stride*ow + j - pad  (out-of-range taps stay zero).
        Bcat = np.zeros((kh * lane_in, lane_out), np.float32)
        for i in range(kh):
            for ow in range(Wo_t):
                for j in range(kw):
                    wc = stride * ow + j - pad
                    if 0 <= wc < W_t:
                        r0 = i * lane_in + wc * C_s
                        c0 = ow * Co_s
                        Bcat[r0:r0 + Cin, c0:c0 + Cout] = w[:, :, i, j].T

        brow = np.zeros((1, lane_out), np.float32)                # zero in padded lanes
        for ow in range(Wo_t):
            brow[0, ow * Co_s:ow * Co_s + Cout] = bias

        S_list.append(jnp.asarray(Sb, jnp.bfloat16))              # exact 0/1 in bf16
        W_list.append(jnp.asarray(Bcat, jnp.bfloat16))
        b_list.append(jnp.asarray(brow, jnp.float32))

        H_t, W_t, C_t = Ho_t, Wo_t, Cout
        H_s, W_s, C_s = Ho_s, Wo_s, Co_s

    meta = _PackMeta(b_tile=b_tile,
                     h0=in_store[0], w0=in_store[1], c0=in_store[2],
                     out_h=H_t, out_w=W_t, out_c=C_t,
                     out_hs=H_s, out_ws=W_s, out_cs=C_s)
    return PackedDNLayers(tuple(S_list), tuple(W_list), tuple(b_list), meta)


# ---------------------------------------------------------------------------
# Public forward pass.
# ---------------------------------------------------------------------------
@functools.partial(jax.jit, static_argnames=(
    "b_tile", "h0", "w0", "c0", "out_h", "out_w", "out_c",
    "out_hs", "out_ws", "out_cs", "negative_slope", "use_sigmoid"))
def _forward_impl(S_list, W_list, b_list, x_nchw, *, b_tile, h0, w0, c0,
                  out_h, out_w, out_c, out_hs, out_ws, out_cs,
                  negative_slope, use_sigmoid):
    N, C, H, W = x_nchw.shape
    B = b_tile
    if N % B:
        raise ValueError(f"batch {N} must be a multiple of b_tile {B}")
    G = N // B

    # Single layout transform: NCHW -> rows=(sample,h), lanes=(w,c), padded + bf16.
    x = jnp.transpose(x_nchw, (0, 2, 3, 1))                       # (N, H, W, C)
    x = jnp.pad(x, ((0, 0), (0, h0 - H), (0, w0 - W), (0, c0 - C)))
    x = x.reshape(G, B * h0, w0 * c0).astype(jnp.bfloat16)

    num_layers = len(S_list)
    kernel = functools.partial(_fused_dnlayers_kernel, num_layers=num_layers,
                               negative_slope=negative_slope,
                               use_sigmoid=use_sigmoid)

    lane_out = out_ws * out_cs
    in_specs = [pl.BlockSpec((1, B * h0, w0 * c0), lambda g: (g, 0, 0))]
    in_specs += [pl.BlockSpec(s.shape, lambda g: (0, 0, 0)) for s in S_list]
    in_specs += [pl.BlockSpec(w_.shape, lambda g: (0, 0)) for w_ in W_list]
    in_specs += [pl.BlockSpec(b_.shape, lambda g: (0, 0)) for b_ in b_list]

    out = pl.pallas_call(
        kernel,
        grid=(G,),                                          # one B_TILE block per step
        in_specs=in_specs,
        out_specs=pl.BlockSpec((1, B * out_hs, lane_out), lambda g: (g, 0, 0)),
        out_shape=jax.ShapeDtypeStruct((G, B * out_hs, lane_out), jnp.float32),
        compiler_params=pltpu.CompilerParams(
            dimension_semantics=("parallel",),              # v7x: blocks over the 2 TCs
            vmem_limit_bytes=32 * 1024 * 1024,              # ~4 MiB resident; v7x-safe
        ),
    )(x, *S_list, *W_list, *b_list)

    # Strip storage padding and restore NCHW.
    out = out.reshape(G, B, out_hs, out_ws, out_cs)[:, :, :out_h, :out_w, :out_c]
    out = out.reshape(N, out_h, out_w, out_c)
    return jnp.transpose(out, (0, 3, 1, 2))


def d_nlayers_forward(packed, x_nchw, negative_slope=0.2, use_sigmoid=False):
    """D_NLayers forward: x (N, C, H, W) f32 -> (N, 1, Ho, Wo) f32."""
    m = packed.meta
    return _forward_impl(packed.S, packed.W, packed.b, x_nchw,
                         b_tile=m.b_tile, h0=m.h0, w0=m.w0, c0=m.c0,
                         out_h=m.out_h, out_w=m.out_w, out_c=m.out_c,
                         out_hs=m.out_hs, out_ws=m.out_ws, out_cs=m.out_cs,
                         negative_slope=negative_slope, use_sigmoid=use_sigmoid)


# ---------------------------------------------------------------------------
# Plain-XLA f32 reference of the same network (for the correctness cross-check).
# ---------------------------------------------------------------------------
def _reference_forward(params, x, negative_slope=0.2):
    out = x
    n = len(params)
    for idx, p in enumerate(params):
        out = jax.lax.conv_general_dilated(
            out, p["w"],
            window_strides=(p["stride"], p["stride"]),
            padding=[(p["pad"], p["pad"])] * 2,
            dimension_numbers=("NCHW", "OIHW", "NCHW"),
            precision=jax.lax.Precision.HIGHEST,
        )
        out = out + p["b"][None, :, None, None]
        if idx < n - 1:
            out = jnp.where(out > 0, out, negative_slope * out)
    return out


if __name__ == "__main__":
    key = jax.random.PRNGKey(0)
    kx, kp = jax.random.split(key)
    # 64x64 is the smallest natural PatchGAN size for this net: 64->32->16->8->7->4.
    # N=4 samples with B_TILE=2 per grid step -> grid=(2,) (even, for v7x megacore).
    N, B_TILE = 4, 2
    x = jax.random.normal(kx, (N, 3, 64, 64), jnp.float32)
    params = init_d_nlayers_params(kp, input_nc=3, ndf=8, n_layers=3)
    packed = pack_d_nlayers_params(params, input_hw=(64, 64), b_tile=B_TILE)

    out = d_nlayers_forward(packed, x)
    jax.block_until_ready(out)
    assert out.shape == (N, 1, 4, 4), out.shape
    assert out.dtype == jnp.float32

    # Numerical cross-check against the f32 XLA conv reference (kernel is bf16 on
    # the MXU path, f32 epilogue).
    ref = _reference_forward(params, x)
    err = float(jnp.max(jnp.abs(out - ref)))
    scale = float(jnp.max(jnp.abs(ref)))
    assert err <= 5e-2 * scale + 1e-6, (err, scale)

    print("KERNEL_OK")
</pallas_src>

<mosaic_0001>
module attributes {stable_mosaic.version = 11 : i64} {
  func.func @_fused_dnlayers_kernel(%arg0: i32, %arg1: memref<1x128x256xbf16, #tpu.memory_space<vmem>>, %arg2: memref<4x64x128xbf16, #tpu.memory_space<vmem>>, %arg3: memref<4x32x64xbf16, #tpu.memory_space<vmem>>, %arg4: memref<4x16x32xbf16, #tpu.memory_space<vmem>>, %arg5: memref<4x16x16xbf16, #tpu.memory_space<vmem>>, %arg6: memref<4x8x16xbf16, #tpu.memory_space<vmem>>, %arg7: memref<1024x256xbf16, #tpu.memory_space<vmem>>, %arg8: memref<1024x256xbf16, #tpu.memory_space<vmem>>, %arg9: memref<1024x256xbf16, #tpu.memory_space<vmem>>, %arg10: memref<1024x512xbf16, #tpu.memory_space<vmem>>, %arg11: memref<2048x128xbf16, #tpu.memory_space<vmem>>, %arg12: memref<1x256xf32, #tpu.memory_space<vmem>>, %arg13: memref<1x256xf32, #tpu.memory_space<vmem>>, %arg14: memref<1x256xf32, #tpu.memory_space<vmem>>, %arg15: memref<1x512xf32, #tpu.memory_space<vmem>>, %arg16: memref<1x128xf32, #tpu.memory_space<vmem>>, %arg17: memref<1x8x128xf32, #tpu.memory_space<vmem>>) attributes {dimension_semantics = [#tpu.dimension_semantics<parallel>], iteration_bounds = array<i64: 2>, scalar_prefetch = 0 : i64, scratch_operands = 0 : i64, tpu.core_type = #tpu.core_type<tc>, window_params = [{transform_indices = @transform_0, window_bounds = array<i64: 1, 128, 256>}, {pipeline_mode = #tpu.pipeline_mode<synchronous>, transform_indices = @transform_1, window_bounds = array<i64: 4, 64, 128>}, {pipeline_mode = #tpu.pipeline_mode<synchronous>, transform_indices = @transform_2, window_bounds = array<i64: 4, 32, 64>}, {pipeline_mode = #tpu.pipeline_mode<synchronous>, transform_indices = @transform_3, window_bounds = array<i64: 4, 16, 32>}, {pipeline_mode = #tpu.pipeline_mode<synchronous>, transform_indices = @transform_4, window_bounds = array<i64: 4, 16, 16>}, {pipeline_mode = #tpu.pipeline_mode<synchronous>, transform_indices = @transform_5, window_bounds = array<i64: 4, 8, 16>}, {pipeline_mode = #tpu.pipeline_mode<synchronous>, transform_indices = @transform_6, window_bounds = array<i64: 1024, 256>}, {pipeline_mode = #tpu.pipeline_mode<synchronous>, transform_indices = @transform_7, window_bounds = array<i64: 1024, 256>}, {pipeline_mode = #tpu.pipeline_mode<synchronous>, transform_indices = @transform_8, window_bounds = array<i64: 1024, 256>}, {pipeline_mode = #tpu.pipeline_mode<synchronous>, transform_indices = @transform_9, window_bounds = array<i64: 1024, 512>}, {pipeline_mode = #tpu.pipeline_mode<synchronous>, transform_indices = @transform_10, window_bounds = array<i64: 2048, 128>}, {pipeline_mode = #tpu.pipeline_mode<synchronous>, transform_indices = @transform_11, window_bounds = array<i64: 1, 256>}, {pipeline_mode = #tpu.pipeline_mode<synchronous>, transform_indices = @transform_12, window_bounds = array<i64: 1, 256>}, {pipeline_mode = #tpu.pipeline_mode<synchronous>, transform_indices = @transform_13, window_bounds = array<i64: 1, 256>}, {pipeline_mode = #tpu.pipeline_mode<synchronous>, transform_indices = @transform_14, window_bounds = array<i64: 1, 512>}, {pipeline_mode = #tpu.pipeline_mode<synchronous>, transform_indices = @transform_15, window_bounds = array<i64: 1, 128>}, {transform_indices = @transform_16, window_bounds = array<i64: 1, 8, 128>}]} {
    %c0 = arith.constant 0 : index
    %c0_0 = arith.constant 0 : index
    %c0_1 = arith.constant 0 : index
    %0 = vector.load %arg1[%c0, %c0_0, %c0_1] : memref<1x128x256xbf16, #tpu.memory_space<vmem>>, vector<1x128x256xbf16>
    %1 = vector.shape_cast %0 : vector<1x128x256xbf16> to vector<128x256xbf16>
    %c0_2 = arith.constant 0 : index
    %c0_3 = arith.constant 0 : index
    %c0_4 = arith.constant 0 : index
    %2 = vector.load %arg2[%c0_2, %c0_3, %c0_4] : memref<4x64x128xbf16, #tpu.memory_space<vmem>>, vector<1x64x128xbf16>
    %3 = vector.shape_cast %2 : vector<1x64x128xbf16> to vector<64x128xbf16>
    %cst = arith.constant dense<0.000000e+00> : vector<64x256xf32>
    %4 = tpu.matmul %3, %1, %cst {dimension_numbers = #tpu.dot_dimension_numbers<[1], [0], [0], [1], [0, 0, 1, 1], [], []>} : vector<64x128xbf16>, vector<128x256xbf16>, vector<64x256xf32> -> vector<64x256xf32>
    %5 = arith.truncf %4 : vector<64x256xf32> to vector<64x256xbf16>
    %c1 = arith.constant 1 : index
    %c0_5 = arith.constant 0 : index
    %c0_6 = arith.constant 0 : index
    %6 = vector.load %arg2[%c1, %c0_5, %c0_6] : memref<4x64x128xbf16, #tpu.memory_space<vmem>>, vector<1x64x128xbf16>
    %7 = vector.shape_cast %6 : vector<1x64x128xbf16> to vector<64x128xbf16>
    %cst_7 = arith.constant dense<0.000000e+00> : vector<64x256xf32>
    %8 = tpu.matmul %7, %1, %cst_7 {dimension_numbers = #tpu.dot_dimension_numbers<[1], [0], [0], [1], [0, 0, 1, 1], [], []>} : vector<64x128xbf16>, vector<128x256xbf16>, vector<64x256xf32> -> vector<64x256xf32>
    %9 = arith.truncf %8 : vector<64x256xf32> to vector<64x256xbf16>
    %c2 = arith.constant 2 : index
    %c0_8 = arith.constant 0 : index
    %c0_9 = arith.constant 0 : index
    %10 = vector.load %arg2[%c2, %c0_8, %c0_9] : memref<4x64x128xbf16, #tpu.memory_space<vmem>>, vector<1x64x128xbf16>
    %11 = vector.shape_cast %10 : vector<1x64x128xbf16> to vector<64x128xbf16>
    %cst_10 = arith.constant dense<0.000000e+00> : vector<64x256xf32>
    %12 = tpu.matmul %11, %1, %cst_10 {dimension_numbers = #tpu.dot_dimension_numbers<[1], [0], [0], [1], [0, 0, 1, 1], [], []>} : vector<64x128xbf16>, vector<128x256xbf16>, vector<64x256xf32> -> vector<64x256xf32>
    %13 = arith.truncf %12 : vector<64x256xf32> to vector<64x256xbf16>
    %c3 = arith.constant 3 : index
    %c0_11 = arith.constant 0 : index
    %c0_12 = arith.constant 0 : index
    %14 = vector.load %arg2[%c3, %c0_11, %c0_12] : memref<4x64x128xbf16, #tpu.memory_space<vmem>>, vector<1x64x128xbf16>
    %15 = vector.shape_cast %14 : vector<1x64x128xbf16> to vector<64x128xbf16>
    %cst_13 = arith.constant dense<0.000000e+00> : vector<64x256xf32>
    %16 = tpu.matmul %15, %1, %cst_13 {dimension_numbers = #tpu.dot_dimension_numbers<[1], [0], [0], [1], [0, 0, 1, 1], [], []>} : vector<64x128xbf16>, vector<128x256xbf16>, vector<64x256xf32> -> vector<64x256xf32>
    %17 = arith.truncf %16 : vector<64x256xf32> to vector<64x256xbf16>
    %18 = tpu.concatenate %5, %9, %13, %17 in 1 : vector<64x256xbf16>, vector<64x256xbf16>, vector<64x256xbf16>, vector<64x256xbf16> -> vector<64x1024xbf16>
    %c0_14 = arith.constant 0 : index
    %c0_15 = arith.constant 0 : index
    %19 = vector.load %arg7[%c0_14, %c0_15] : memref<1024x256xbf16, #tpu.memory_space<vmem>>, vector<1024x256xbf16>
    %cst_16 = arith.constant dense<0.000000e+00> : vector<64x256xf32>
    %20 = tpu.matmul %18, %19, %cst_16 {dimension_numbers = #tpu.dot_dimension_numbers<[1], [0], [0], [1], [0, 0, 1, 1], [], []>} : vector<64x1024xbf16>, vector<1024x256xbf16>, vector<64x256xf32> -> vector<64x256xf32>
    %c0_17 = arith.constant 0 : index
    %c0_18 = arith.constant 0 : index
    %21 = vector.load %arg12[%c0_17, %c0_18] : memref<1x256xf32, #tpu.memory_space<vmem>>, vector<1x256xf32>
    %22 = vector.broadcast %21 : vector<1x256xf32> to vector<64x256xf32>
    %23 = arith.addf %20, %22 : vector<64x256xf32>
    %cst_19 = arith.constant 0.000000e+00 : f32
    %24 = vector.broadcast %cst_19 : f32 to vector<64x256xf32>
    %25 = arith.cmpf ogt, %23, %24 : vector<64x256xf32>
    %cst_20 = arith.constant 2.000000e-01 : f32
    %26 = vector.broadcast %cst_20 : f32 to vector<64x256xf32>
    %27 = arith.mulf %26, %23 : vector<64x256xf32>
    %28 = arith.select %25, %23, %27 : vector<64x256xi1>, vector<64x256xf32>
    %29 = arith.truncf %28 : vector<64x256xf32> to vector<64x256xbf16>
    %c0_21 = arith.constant 0 : index
    %c0_22 = arith.constant 0 : index
    %c0_23 = arith.constant 0 : index
    %30 = vector.load %arg3[%c0_21, %c0_22, %c0_23] : memref<4x32x64xbf16, #tpu.memory_space<vmem>>, vector<1x32x64xbf16>
    %31 = vector.shape_cast %30 : vector<1x32x64xbf16> to vector<32x64xbf16>
    %cst_24 = arith.constant dense<0.000000e+00> : vector<32x256xf32>
    %32 = tpu.matmul %31, %29, %cst_24 {dimension_numbers = #tpu.dot_dimension_numbers<[1], [0], [0], [1], [0, 0, 1, 1], [], []>} : vector<32x64xbf16>, vector<64x256xbf16>, vector<32x256xf32> -> vector<32x256xf32>
    %33 = arith.truncf %32 : vector<32x256xf32> to vector<32x256xbf16>
    %c1_25 = arith.constant 1 : index
    %c0_26 = arith.constant 0 : index
    %c0_27 = arith.constant 0 : index
    %34 = vector.load %arg3[%c1_25, %c0_26, %c0_27] : memref<4x32x64xbf16, #tpu.memory_space<vmem>>, vector<1x32x64xbf16>
    %35 = vector.shape_cast %34 : vector<1x32x64xbf16> to vector<32x64xbf16>
    %cst_28 = arith.constant dense<0.000000e+00> : vector<32x256xf32>
    %36 = tpu.matmul %35, %29, %cst_28 {dimension_numbers = #tpu.dot_dimension_numbers<[1], [0], [0], [1], [0, 0, 1, 1], [], []>} : vector<32x64xbf16>, vector<64x256xbf16>, vector<32x256xf32> -> vector<32x256xf32>
    %37 = arith.truncf %36 : vector<32x256xf32> to vector<32x256xbf16>
    %c2_29 = arith.constant 2 : index
    %c0_30 = arith.constant 0 : index
    %c0_31 = arith.constant 0 : index
    %38 = vector.load %arg3[%c2_29, %c0_30, %c0_31] : memref<4x32x64xbf16, #tpu.memory_space<vmem>>, vector<1x32x64xbf16>
    %39 = vector.shape_cast %38 : vector<1x32x64xbf16> to vector<32x64xbf16>
    %cst_32 = arith.constant dense<0.000000e+00> : vector<32x256xf32>
    %40 = tpu.matmul %39, %29, %cst_32 {dimension_numbers = #tpu.dot_dimension_numbers<[1], [0], [0], [1], [0, 0, 1, 1], [], []>} : vector<32x64xbf16>, vector<64x256xbf16>, vector<32x256xf32> -> vector<32x256xf32>
    %41 = arith.truncf %40 : vector<32x256xf32> to vector<32x256xbf16>
    %c3_33 = arith.constant 3 : index
    %c0_34 = arith.constant 0 : index
    %c0_35 = arith.constant 0 : index
    %42 = vector.load %arg3[%c3_33, %c0_34, %c0_35] : memref<4x32x64xbf16, #tpu.memory_space<vmem>>, vector<1x32x64xbf16>
    %43 = vector.shape_cast %42 : vector<1x32x64xbf16> to vector<32x64xbf16>
    %cst_36 = arith.constant dense<0.000000e+00> : vector<32x256xf32>
    %44 = tpu.matmul %43, %29, %cst_36 {dimension_numbers = #tpu.dot_dimension_numbers<[1], [0], [0], [1], [0, 0, 1, 1], [], []>} : vector<32x64xbf16>, vector<64x256xbf16>, vector<32x256xf32> -> vector<32x256xf32>
    %45 = arith.truncf %44 : vector<32x256xf32> to vector<32x256xbf16>
    %46 = tpu.concatenate %33, %37, %41, %45 in 1 : vector<32x256xbf16>, vector<32x256xbf16>, vector<32x256xbf16>, vector<32x256xbf16> -> vector<32x1024xbf16>
    %c0_37 = arith.constant 0 : index
    %c0_38 = arith.constant 0 : index
    %47 = vector.load %arg8[%c0_37, %c0_38] : memref<1024x256xbf16, #tpu.memory_space<vmem>>, vector<1024x256xbf16>
    %cst_39 = arith.constant dense<0.000000e+00> : vector<32x256xf32>
    %48 = tpu.matmul %46, %47, %cst_39 {dimension_numbers = #tpu.dot_dimension_numbers<[1], [0], [0], [1], [0, 0, 1, 1], [], []>} : vector<32x1024xbf16>, vector<1024x256xbf16>, vector<32x256xf32> -> vector<32x256xf32>
    %c0_40 = arith.constant 0 : index
    %c0_41 = arith.constant 0 : index
    %49 = vector.load %arg13[%c0_40, %c0_41] : memref<1x256xf32, #tpu.memory_space<vmem>>, vector<1x256xf32>
    %50 = vector.broadcast %49 : vector<1x256xf32> to vector<32x256xf32>
    %51 = arith.addf %48, %50 : vector<32x256xf32>
    %cst_42 = arith.constant 0.000000e+00 : f32
    %52 = vector.broadcast %cst_42 : f32 to vector<32x256xf32>
    %53 = arith.cmpf ogt, %51, %52 : vector<32x256xf32>
    %cst_43 = arith.constant 2.000000e-01 : f32
    %54 = vector.broadcast %cst_43 : f32 to vector<32x256xf32>
    %55 = arith.mulf %54, %51 : vector<32x256xf32>
    %56 = arith.select %53, %51, %55 : vector<32x256xi1>, vector<32x256xf32>
    %57 = arith.truncf %56 : vector<32x256xf32> to vector<32x256xbf16>
    %c0_44 = arith.constant 0 : index
    %c0_45 = arith.constant 0 : index
    %c0_46 = arith.constant 0 : index
    %58 = vector.load %arg4[%c0_44, %c0_45, %c0_46] : memref<4x16x32xbf16, #tpu.memory_space<vmem>>, vector<1x16x32xbf16>
    %59 = vector.shape_cast %58 : vector<1x16x32xbf16> to vector<16x32xbf16>
    %cst_47 = arith.constant dense<0.000000e+00> : vector<16x256xf32>
    %60 = tpu.matmul %59, %57, %cst_47 {dimension_numbers = #tpu.dot_dimension_numbers<[1], [0], [0], [1], [0, 0, 1, 1], [], []>} : vector<16x32xbf16>, vector<32x256xbf16>, vector<16x256xf32> -> vector<16x256xf32>
    %61 = arith.truncf %60 : vector<16x256xf32> to vector<16x256xbf16>
    %c1_48 = arith.constant 1 : index
    %c0_49 = arith.constant 0 : index
    %c0_50 = arith.constant 0 : index
    %62 = vector.load %arg4[%c1_48, %c0_49, %c0_50] : memref<4x16x32xbf16, #tpu.memory_space<vmem>>, vector<1x16x32xbf16>
    %63 = vector.shape_cast %62 : vector<1x16x32xbf16> to vector<16x32xbf16>
    %cst_51 = arith.constant dense<0.000000e+00> : vector<16x256xf32>
    %64 = tpu.matmul %63, %57, %cst_51 {dimension_numbers = #tpu.dot_dimension_numbers<[1], [0], [0], [1], [0, 0, 1, 1], [], []>} : vector<16x32xbf16>, vector<32x256xbf16>, vector<16x256xf32> -> vector<16x256xf32>
    %65 = arith.truncf %64 : vector<16x256xf32> to vector<16x256xbf16>
    %c2_52 = arith.constant 2 : index
    %c0_53 = arith.constant 0 : index
    %c0_54 = arith.constant 0 : index
    %66 = vector.load %arg4[%c2_52, %c0_53, %c0_54] : memref<4x16x32xbf16, #tpu.memory_space<vmem>>, vector<1x16x32xbf16>
    %67 = vector.shape_cast %66 : vector<1x16x32xbf16> to vector<16x32xbf16>
    %cst_55 = arith.constant dense<0.000000e+00> : vector<16x256xf32>
    %68 = tpu.matmul %67, %57, %cst_55 {dimension_numbers = #tpu.dot_dimension_numbers<[1], [0], [0], [1], [0, 0, 1, 1], [], []>} : vector<16x32xbf16>, vector<32x256xbf16>, vector<16x256xf32> -> vector<16x256xf32>
    %69 = arith.truncf %68 : vector<16x256xf32> to vector<16x256xbf16>
    %c3_56 = arith.constant 3 : index
    %c0_57 = arith.constant 0 : index
    %c0_58 = arith.constant 0 : index
    %70 = vector.load %arg4[%c3_56, %c0_57, %c0_58] : memref<4x16x32xbf16, #tpu.memory_space<vmem>>, vector<1x16x32xbf16>
    %71 = vector.shape_cast %70 : vector<1x16x32xbf16> to vector<16x32xbf16>
    %cst_59 = arith.constant dense<0.000000e+00> : vector<16x256xf32>
    %72 = tpu.matmul %71, %57, %cst_59 {dimension_numbers = #tpu.dot_dimension_numbers<[1], [0], [0], [1], [0, 0, 1, 1], [], []>} : vector<16x32xbf16>, vector<32x256xbf16>, vector<16x256xf32> -> vector<16x256xf32>
    %73 = arith.truncf %72 : vector<16x256xf32> to vector<16x256xbf16>
    %74 = tpu.concatenate %61, %65, %69, %73 in 1 : vector<16x256xbf16>, vector<16x256xbf16>, vector<16x256xbf16>, vector<16x256xbf16> -> vector<16x1024xbf16>
    %c0_60 = arith.constant 0 : index
    %c0_61 = arith.constant 0 : index
    %75 = vector.load %arg9[%c0_60, %c0_61] : memref<1024x256xbf16, #tpu.memory_space<vmem>>, vector<1024x256xbf16>
    %cst_62 = arith.constant dense<0.000000e+00> : vector<16x256xf32>
    %76 = tpu.matmul %74, %75, %cst_62 {dimension_numbers = #tpu.dot_dimension_numbers<[1], [0], [0], [1], [0, 0, 1, 1], [], []>} : vector<16x1024xbf16>, vector<1024x256xbf16>, vector<16x256xf32> -> vector<16x256xf32>
    %c0_63 = arith.constant 0 : index
    %c0_64 = arith.constant 0 : index
    %77 = vector.load %arg14[%c0_63, %c0_64] : memref<1x256xf32, #tpu.memory_space<vmem>>, vector<1x256xf32>
    %78 = vector.broadcast %77 : vector<1x256xf32> to vector<16x256xf32>
    %79 = arith.addf %76, %78 : vector<16x256xf32>
    %cst_65 = arith.constant 0.000000e+00 : f32
    %80 = vector.broadcast %cst_65 : f32 to vector<16x256xf32>
    %81 = arith.cmpf ogt, %79, %80 : vector<16x256xf32>
    %cst_66 = arith.constant 2.000000e-01 : f32
    %82 = vector.broadcast %cst_66 : f32 to vector<16x256xf32>
    %83 = arith.mulf %82, %79 : vector<16x256xf32>
    %84 = arith.select %81, %79, %83 : vector<16x256xi1>, vector<16x256xf32>
    %85 = arith.truncf %84 : vector<16x256xf32> to vector<16x256xbf16>
    %c0_67 = arith.constant 0 : index
    %c0_68 = arith.constant 0 : index
    %c0_69 = arith.constant 0 : index
    %86 = vector.load %arg5[%c0_67, %c0_68, %c0_69] : memref<4x16x16xbf16, #tpu.memory_space<vmem>>, vector<1x16x16xbf16>
    %87 = vector.shape_cast %86 : vector<1x16x16xbf16> to vector<16x16xbf16>
    %cst_70 = arith.constant dense<0.000000e+00> : vector<16x256xf32>
    %88 = tpu.matmul %87, %85, %cst_70 {dimension_numbers = #tpu.dot_dimension_numbers<[1], [0], [0], [1], [0, 0, 1, 1], [], []>} : vector<16x16xbf16>, vector<16x256xbf16>, vector<16x256xf32> -> vector<16x256xf32>
    %89 = arith.truncf %88 : vector<16x256xf32> to vector<16x256xbf16>
    %c1_71 = arith.constant 1 : index
    %c0_72 = arith.constant 0 : index
    %c0_73 = arith.constant 0 : index
    %90 = vector.load %arg5[%c1_71, %c0_72, %c0_73] : memref<4x16x16xbf16, #tpu.memory_space<vmem>>, vector<1x16x16xbf16>
    %91 = vector.shape_cast %90 : vector<1x16x16xbf16> to vector<16x16xbf16>
    %cst_74 = arith.constant dense<0.000000e+00> : vector<16x256xf32>
    %92 = tpu.matmul %91, %85, %cst_74 {dimension_numbers = #tpu.dot_dimension_numbers<[1], [0], [0], [1], [0, 0, 1, 1], [], []>} : vector<16x16xbf16>, vector<16x256xbf16>, vector<16x256xf32> -> vector<16x256xf32>
    %93 = arith.truncf %92 : vector<16x256xf32> to vector<16x256xbf16>
    %c2_75 = arith.constant 2 : index
    %c0_76 = arith.constant 0 : index
    %c0_77 = arith.constant 0 : index
    %94 = vector.load %arg5[%c2_75, %c0_76, %c0_77] : memref<4x16x16xbf16, #tpu.memory_space<vmem>>, vector<1x16x16xbf16>
    %95 = vector.shape_cast %94 : vector<1x16x16xbf16> to vector<16x16xbf16>
    %cst_78 = arith.constant dense<0.000000e+00> : vector<16x256xf32>
    %96 = tpu.matmul %95, %85, %cst_78 {dimension_numbers = #tpu.dot_dimension_numbers<[1], [0], [0], [1], [0, 0, 1, 1], [], []>} : vector<16x16xbf16>, vector<16x256xbf16>, vector<16x256xf32> -> vector<16x256xf32>
    %97 = arith.truncf %96 : vector<16x256xf32> to vector<16x256xbf16>
    %c3_79 = arith.constant 3 : index
    %c0_80 = arith.constant 0 : index
    %c0_81 = arith.constant 0 : index
    %98 = vector.load %arg5[%c3_79, %c0_80, %c0_81] : memref<4x16x16xbf16, #tpu.memory_space<vmem>>, vector<1x16x16xbf16>
    %99 = vector.shape_cast %98 : vector<1x16x16xbf16> to vector<16x16xbf16>
    %cst_82 = arith.constant dense<0.000000e+00> : vector<16x256xf32>
    %100 = tpu.matmul %99, %85, %cst_82 {dimension_numbers = #tpu.dot_dimension_numbers<[1], [0], [0], [1], [0, 0, 1, 1], [], []>} : vector<16x16xbf16>, vector<16x256xbf16>, vector<16x256xf32> -> vector<16x256xf32>
    %101 = arith.truncf %100 : vector<16x256xf32> to vector<16x256xbf16>
    %102 = tpu.concatenate %89, %93, %97, %101 in 1 : vector<16x256xbf16>, vector<16x256xbf16>, vector<16x256xbf16>, vector<16x256xbf16> -> vector<16x1024xbf16>
    %c0_83 = arith.constant 0 : index
    %c0_84 = arith.constant 0 : index
    %103 = vector.load %arg10[%c0_83, %c0_84] : memref<1024x512xbf16, #tpu.memory_space<vmem>>, vector<1024x512xbf16>
    %cst_85 = arith.constant dense<0.000000e+00> : vector<16x512xf32>
    %104 = tpu.matmul %102, %103, %cst_85 {dimension_numbers = #tpu.dot_dimension_numbers<[1], [0], [0], [1], [0, 0, 1, 1], [], []>} : vector<16x1024xbf16>, vector<1024x512xbf16>, vector<16x512xf32> -> vector<16x512xf32>
    %c0_86 = arith.constant 0 : index
    %c0_87 = arith.constant 0 : index
    %105 = vector.load %arg15[%c0_86, %c0_87] : memref<1x512xf32, #tpu.memory_space<vmem>>, vector<1x512xf32>
    %106 = vector.broadcast %105 : vector<1x512xf32> to vector<16x512xf32>
    %107 = arith.addf %104, %106 : vector<16x512xf32>
    %cst_88 = arith.constant 0.000000e+00 : f32
    %108 = vector.broadcast %cst_88 : f32 to vector<16x512xf32>
    %109 = arith.cmpf ogt, %107, %108 : vector<16x512xf32>
    %cst_89 = arith.constant 2.000000e-01 : f32
    %110 = vector.broadcast %cst_89 : f32 to vector<16x512xf32>
    %111 = arith.mulf %110, %107 : vector<16x512xf32>
    %112 = arith.select %109, %107, %111 : vector<16x512xi1>, vector<16x512xf32>
    %113 = arith.truncf %112 : vector<16x512xf32> to vector<16x512xbf16>
    %c0_90 = arith.constant 0 : index
    %c0_91 = arith.constant 0 : index
    %c0_92 = arith.constant 0 : index
    %114 = vector.load %arg6[%c0_90, %c0_91, %c0_92] : memref<4x8x16xbf16, #tpu.memory_space<vmem>>, vector<1x8x16xbf16>
    %115 = vector.shape_cast %114 : vector<1x8x16xbf16> to vector<8x16xbf16>
    %cst_93 = arith.constant dense<0.000000e+00> : vector<8x512xf32>
    %116 = tpu.matmul %115, %113, %cst_93 {dimension_numbers = #tpu.dot_dimension_numbers<[1], [0], [0], [1], [0, 0, 1, 1], [], []>} : vector<8x16xbf16>, vector<16x512xbf16>, vector<8x512xf32> -> vector<8x512xf32>
    %117 = arith.truncf %116 : vector<8x512xf32> to vector<8x512xbf16>
    %c1_94 = arith.constant 1 : index
    %c0_95 = arith.constant 0 : index
    %c0_96 = arith.constant 0 : index
    %118 = vector.load %arg6[%c1_94, %c0_95, %c0_96] : memref<4x8x16xbf16, #tpu.memory_space<vmem>>, vector<1x8x16xbf16>
    %119 = vector.shape_cast %118 : vector<1x8x16xbf16> to vector<8x16xbf16>
    %cst_97 = arith.constant dense<0.000000e+00> : vector<8x512xf32>
    %120 = tpu.matmul %119, %113, %cst_97 {dimension_numbers = #tpu.dot_dimension_numbers<[1], [0], [0], [1], [0, 0, 1, 1], [], []>} : vector<8x16xbf16>, vector<16x512xbf16>, vector<8x512xf32> -> vector<8x512xf32>
    %121 = arith.truncf %120 : vector<8x512xf32> to vector<8x512xbf16>
    %c2_98 = arith.constant 2 : index
    %c0_99 = arith.constant 0 : index
    %c0_100 = arith.constant 0 : index
    %122 = vector.load %arg6[%c2_98, %c0_99, %c0_100] : memref<4x8x16xbf16, #tpu.memory_space<vmem>>, vector<1x8x16xbf16>
    %123 = vector.shape_cast %122 : vector<1x8x16xbf16> to vector<8x16xbf16>
    %cst_101 = arith.constant dense<0.000000e+00> : vector<8x512xf32>
    %124 = tpu.matmul %123, %113, %cst_101 {dimension_numbers = #tpu.dot_dimension_numbers<[1], [0], [0], [1], [0, 0, 1, 1], [], []>} : vector<8x16xbf16>, vector<16x512xbf16>, vector<8x512xf32> -> vector<8x512xf32>
    %125 = arith.truncf %124 : vector<8x512xf32> to vector<8x512xbf16>
    %c3_102 = arith.constant 3 : index
    %c0_103 = arith.constant 0 : index
    %c0_104 = arith.constant 0 : index
    %126 = vector.load %arg6[%c3_102, %c0_103, %c0_104] : memref<4x8x16xbf16, #tpu.memory_space<vmem>>, vector<1x8x16xbf16>
    %127 = vector.shape_cast %126 : vector<1x8x16xbf16> to vector<8x16xbf16>
    %cst_105 = arith.constant dense<0.000000e+00> : vector<8x512xf32>
    %128 = tpu.matmul %127, %113, %cst_105 {dimension_numbers = #tpu.dot_dimension_numbers<[1], [0], [0], [1], [0, 0, 1, 1], [], []>} : vector<8x16xbf16>, vector<16x512xbf16>, vector<8x512xf32> -> vector<8x512xf32>
    %129 = arith.truncf %128 : vector<8x512xf32> to vector<8x512xbf16>
    %130 = tpu.concatenate %117, %121, %125, %129 in 1 : vector<8x512xbf16>, vector<8x512xbf16>, vector<8x512xbf16>, vector<8x512xbf16> -> vector<8x2048xbf16>
    %c0_106 = arith.constant 0 : index
    %c0_107 = arith.constant 0 : index
    %131 = vector.load %arg11[%c0_106, %c0_107] : memref<2048x128xbf16, #tpu.memory_space<vmem>>, vector<2048x128xbf16>
    %cst_108 = arith.constant dense<0.000000e+00> : vector<8x128xf32>
    %132 = tpu.matmul %130, %131, %cst_108 {dimension_numbers = #tpu.dot_dimension_numbers<[1], [0], [0], [1], [0, 0, 1, 1], [], []>} : vector<8x2048xbf16>, vector<2048x128xbf16>, vector<8x128xf32> -> vector<8x128xf32>
    %c0_109 = arith.constant 0 : index
    %c0_110 = arith.constant 0 : index
    %133 = vector.load %arg16[%c0_109, %c0_110] : memref<1x128xf32, #tpu.memory_space<vmem>>, vector<1x128xf32>
    %134 = vector.broadcast %133 : vector<1x128xf32> to vector<8x128xf32>
    %135 = arith.addf %132, %134 : vector<8x128xf32>
    %c0_111 = arith.constant 0 : index
    %c0_112 = arith.constant 0 : index
    %c0_113 = arith.constant 0 : index
    %136 = vector.load %arg17[%c0_111, %c0_112, %c0_113] : memref<1x8x128xf32, #tpu.memory_space<vmem>>, vector<1x8x128xf32>
    %137 = vector.shape_cast %136 : vector<1x8x128xf32> to vector<8x128xf32>
    %138 = vector.shape_cast %135 : vector<8x128xf32> to vector<1x8x128xf32>
    tpu.vector_store %arg17[%c0_111, %c0_112, %c0_113], %138 {strides = array<i32>} : memref<1x8x128xf32, #tpu.memory_space<vmem>>, vector<1x8x128xf32>,
    return
  }
  func.func @transform_0(%arg0: i32) -> (i32, i32, i32) {
    %c0_i32 = arith.constant 0 : i32
    %c0_i32_0 = arith.constant 0 : i32
    %c0_i32_1 = arith.constant 0 : i32
    return %arg0, %c0_i32, %c0_i32_0 : i32, i32, i32
  }
  func.func @transform_1(%arg0: i32) -> (i32, i32, i32) {
    %c0_i32 = arith.constant 0 : i32
    %c0_i32_0 = arith.constant 0 : i32
    %c0_i32_1 = arith.constant 0 : i32
    %c0_i32_2 = arith.constant 0 : i32
    return %c0_i32, %c0_i32_0, %c0_i32_1 : i32, i32, i32
  }
  func.func @transform_2(%arg0: i32) -> (i32, i32, i32) {
    %c0_i32 = arith.constant 0 : i32
    %c0_i32_0 = arith.constant 0 : i32
    %c0_i32_1 = arith.constant 0 : i32
    %c0_i32_2 = arith.constant 0 : i32
    return %c0_i32, %c0_i32_0, %c0_i32_1 : i32, i32, i32
  }
  func.func @transform_3(%arg0: i32) -> (i32, i32, i32) {
    %c0_i32 = arith.constant 0 : i32
    %c0_i32_0 = arith.constant 0 : i32
    %c0_i32_1 = arith.constant 0 : i32
    %c0_i32_2 = arith.constant 0 : i32
    return %c0_i32, %c0_i32_0, %c0_i32_1 : i32, i32, i32
  }
  func.func @transform_4(%arg0: i32) -> (i32, i32, i32) {
    %c0_i32 = arith.constant 0 : i32
    %c0_i32_0 = arith.constant 0 : i32
    %c0_i32_1 = arith.constant 0 : i32
    %c0_i32_2 = arith.constant 0 : i32
    return %c0_i32, %c0_i32_0, %c0_i32_1 : i32, i32, i32
  }
  func.func @transform_5(%arg0: i32) -> (i32, i32, i32) {
    %c0_i32 = arith.constant 0 : i32
    %c0_i32_0 = arith.constant 0 : i32
    %c0_i32_1 = arith.constant 0 : i32
    %c0_i32_2 = arith.constant 0 : i32
    return %c0_i32, %c0_i32_0, %c0_i32_1 : i32, i32, i32
  }
  func.func @transform_6(%arg0: i32) -> (i32, i32) {
    %c0_i32 = arith.constant 0 : i32
    %c0_i32_0 = arith.constant 0 : i32
    %c0_i32_1 = arith.constant 0 : i32
    return %c0_i32, %c0_i32_0 : i32, i32
  }
  func.func @transform_7(%arg0: i32) -> (i32, i32) {
    %c0_i32 = arith.constant 0 : i32
    %c0_i32_0 = arith.constant 0 : i32
    %c0_i32_1 = arith.constant 0 : i32
    return %c0_i32, %c0_i32_0 : i32, i32
  }
  func.func @transform_8(%arg0: i32) -> (i32, i32) {
    %c0_i32 = arith.constant 0 : i32
    %c0_i32_0 = arith.constant 0 : i32
    %c0_i32_1 = arith.constant 0 : i32
    return %c0_i32, %c0_i32_0 : i32, i32
  }
  func.func @transform_9(%arg0: i32) -> (i32, i32) {
    %c0_i32 = arith.constant 0 : i32
    %c0_i32_0 = arith.constant 0 : i32
    %c0_i32_1 = arith.constant 0 : i32
    return %c0_i32, %c0_i32_0 : i32, i32
  }
  func.func @transform_10(%arg0: i32) -> (i32, i32) {
    %c0_i32 = arith.constant 0 : i32
    %c0_i32_0 = arith.constant 0 : i32
    %c0_i32_1 = arith.constant 0 : i32
    return %c0_i32, %c0_i32_0 : i32, i32
  }
  func.func @transform_11(%arg0: i32) -> (i32, i32) {
    %c0_i32 = arith.constant 0 : i32
    %c0_i32_0 = arith.constant 0 : i32
    %c0_i32_1 = arith.constant 0 : i32
    return %c0_i32, %c0_i32_0 : i32, i32
  }
  func.func @transform_12(%arg0: i32) -> (i32, i32) {
    %c0_i32 = arith.constant 0 : i32
    %c0_i32_0 = arith.constant 0 : i32
    %c0_i32_1 = arith.constant 0 : i32
    return %c0_i32, %c0_i32_0 : i32, i32
  }
  func.func @transform_13(%arg0: i32) -> (i32, i32) {
    %c0_i32 = arith.constant 0 : i32
    %c0_i32_0 = arith.constant 0 : i32
    %c0_i32_1 = arith.constant 0 : i32
    return %c0_i32, %c0_i32_0 : i32, i32
  }
  func.func @transform_14(%arg0: i32) -> (i32, i32) {
    %c0_i32 = arith.constant 0 : i32
    %c0_i32_0 = arith.constant 0 : i32
    %c0_i32_1 = arith.constant 0 : i32
    return %c0_i32, %c0_i32_0 : i32, i32
  }
  func.func @transform_15(%arg0: i32) -> (i32, i32) {
    %c0_i32 = arith.constant 0 : i32
    %c0_i32_0 = arith.constant 0 : i32
    %c0_i32_1 = arith.constant 0 : i32
    return %c0_i32, %c0_i32_0 : i32, i32
  }
  func.func @transform_16(%arg0: i32) -> (i32, i32, i32) {
    %c0_i32 = arith.constant 0 : i32
    %c0_i32_0 = arith.constant 0 : i32
    %c0_i32_1 = arith.constant 0 : i32
    return %arg0, %c0_i32, %c0_i32_0 : i32, i32, i32
  }
}

</mosaic_0001>

<llo_original>
// kernel: _forward_impl.1
$region0: #{_forward_impl.1}
  #allocation0 [shape = 'u32[]', space=smem, size = 0x4, offset = 0x4, fixed_abs, tag = 'smem constant byte address 0x4 - core index']
  #allocation1 [shape = 'u32[144,128]{1,0:T(1,128)}', space=vmem, size = 0x12000, scoped, tag = 'internal scratch']
  %s0 = inlined_call_operand.vmem [shape: bf16[2,128,256], index: 0, kind: input, shape index: {}]
  %s1 = inlined_call_operand.hbm [shape: bf16[4,64,128], index: 1, kind: input, shape index: {}]
  %s2 = inlined_call_operand.hbm [shape: bf16[4,32,64], index: 2, kind: input, shape index: {}]
  %s3 = inlined_call_operand.hbm [shape: bf16[4,16,32], index: 3, kind: input, shape index: {}]
  %s4 = inlined_call_operand.hbm [shape: bf16[4,16,16], index: 4, kind: input, shape index: {}]
  %s5 = inlined_call_operand.hbm [shape: bf16[4,8,16], index: 5, kind: input, shape index: {}]
  %s6 = inlined_call_operand.vmem [shape: bf16[1024,256], index: 6, kind: input, shape index: {}]
  %s7 = inlined_call_operand.vmem [shape: bf16[1024,256], index: 7, kind: input, shape index: {}]
  %s8 = inlined_call_operand.hbm [shape: bf16[1024,256], index: 8, kind: input, shape index: {}]
  %s9 = inlined_call_operand.vmem [shape: bf16[1024,512], index: 9, kind: input, shape index: {}]
  %s10 = inlined_call_operand.hbm [shape: bf16[2048,128], index: 10, kind: input, shape index: {}]
  %s11 = inlined_call_operand.hbm [shape: f32[1,256], index: 11, kind: input, shape index: {}]
  %s12 = inlined_call_operand.vmem [shape: f32[1,256], index: 12, kind: input, shape index: {}]
  %s13 = inlined_call_operand.vmem [shape: f32[1,256], index: 13, kind: input, shape index: {}]
  %s14 = inlined_call_operand.vmem [shape: f32[1,512], index: 14, kind: input, shape index: {}]
  %s15 = inlined_call_operand.vmem [shape: f32[1,128], index: 15, kind: input, shape index: {}]
  %s16 = inlined_call_operand.vmem [shape: f32[2,8,128], index: 16, kind: output, shape index: {}]
  %s17 = sld [smem:[#allocation0]]
  $region129: #{_forward_impl.1} parent=0
    _
  %s19 = ssub.s32 1, %s17
  %s20 = scalar_select 0, %s19, %s17
  $region1: #{_forward_impl.1} parent=0
    #allocation2 [shape = 'u8[65536]{0}', space=vmem, size = 0x10000, scoped, tag = 'input window, operand 1, single buffered']
    #allocation3 [shape = 's32[2]{0}', space=sflag, size = 0x8, scoped, tag = 'scoped memory for _forward_impl.1']
    #allocation4 [shape = 'u8[32768]{0}', space=vmem, size = 0x8000, scoped, tag = 'input window, operand 2, single buffered']
    #allocation5 [shape = 's32[1]{0}', space=sflag, size = 0x4, scoped, tag = 'scoped memory for _forward_impl.1']
    #allocation6 [shape = 'u8[16384]{0}', space=vmem, size = 0x4000, scoped, tag = 'input window, operand 3, single buffered']
    #allocation7 [shape = 'u8[16384]{0}', space=vmem, size = 0x4000, scoped, tag = 'input window, operand 4, single buffered']
    #allocation8 [shape = 's32[1]{0}', space=sflag, size = 0x4, scoped, tag = 'scoped memory for _forward_impl.1']
    #allocation9 [shape = 'u8[8192]{0}', space=vmem, size = 0x2000, scoped, tag = 'input window, operand 5, single buffered']
    #allocation10 [shape = 'u8[524288]{0}', space=vmem, size = 0x80000, scoped, tag = 'input window, operand 8, single buffered']
    #allocation11 [shape = 's32[1]{0}', space=sflag, size = 0x4, scoped, tag = 'scoped memory for _forward_impl.1']
    #allocation12 [shape = 'u8[524288]{0}', space=vmem, size = 0x80000, scoped, tag = 'input window, operand 10, single buffered']
    #allocation13 [shape = 'u8[1024]{0}', space=vmem, size = 0x400, scoped, tag = 'input window, operand 11, single buffered']
    #allocation14 [shape = 's32[1]{0}', space=sflag, size = 0x4, scoped, tag = 'scoped memory for _forward_impl.1']
    %21 = vsyncpa [#allocation3], 0
    %22 = vsyncpa [#allocation5], 0
    %23 = vsyncpa [#allocation8], 0
    %24 = vsyncpa [#allocation11], 0
    %25 = vsyncpa [#allocation14], 0
    loop: start=0, step=1, limit=4
    $region2: #{_forward_impl.1} parent=1 // loop_pre_header
      _
    $region3: #{_forward_impl.1} parent=1 // loop_header
      %s27 = sphi 0, %s31
      %p28 = scmp.ge.s32.totalorder %s27, 4
      %s37 = sphi 0, %s39
      %s40 = sphi 0, %s37
      %s41 = sphi 0, %s40
      %s57 = sphi 0, %s41
      %s61 = sphi 0, %s61
      %s63 = sphi 0, %s61
      %s64 = sphi 0, %s63
      %s78 = sphi 0, %s64
      %s82 = sphi 0, %s82
      %s84 = sphi 0, %s82
      %s85 = sphi 0, %s84
      %s99 = sphi 0, %s85
      %s103 = sphi 0, %s103
      %s105 = sphi 0, %s103
      %s106 = sphi 0, %s105
      %s120 = sphi 0, %s106
      %s124 = sphi 0, %s124
      %s126 = sphi 0, %s124
      %s127 = sphi 0, %s126
      %s141 = sphi 0, %s127
      %s145 = sphi 0, %s145
      %s147 = sphi 0, %s145
      %s148 = sphi 0, %s147
      %s162 = sphi 0, %s148
      %s166 = sphi 0, %s166
      %s168 = sphi 0, %s166
      %s169 = sphi 0, %s168
      %s183 = sphi 0, %s169
      %s187 = sphi 0, %s187
      %s189 = sphi 0, %s187
      %s190 = sphi 0, %s189
      %s204 = sphi 0, %s190
      %s208 = sphi 0, %s208
      %s210 = sphi 0, %s208
      %s211 = sphi 0, %s210
      %s225 = sphi 0, %s211
      %s229 = sphi 0, %s229
      %s231 = sphi 0, %s229
      %s232 = sphi 0, %s231
      %s246 = sphi 0, %s232
      %s250 = sphi 0, %s250
      %s252 = sphi 0, %s250
      %s253 = sphi 0, %s252
      %s267 = sphi 0, %s253
      %s271 = sphi 0, %s271
      %s273 = sphi 0, %s271
      %s274 = sphi 0, %s273
      %s288 = sphi 0, %s274
      %s292 = sphi 0, %s292
      %s294 = sphi 0, %s292
      %s295 = sphi 0, %s294
      %s309 = sphi 0, %s295
      %s313 = sphi 0, %s313
      %s315 = sphi 0, %s313
      %s316 = sphi 0, %s315
      %s330 = sphi 0, %s316
      %s334 = sphi 0, %s334
      %s336 = sphi 0, %s334
      %s337 = sphi 0, %s336
      %s351 = sphi 0, %s337
      %s355 = sphi 0, %s355
      %s357 = sphi 0, %s355
      %s358 = sphi 0, %s357
      %s372 = sphi 0, %s358
      %s378 = sphi 0, %s380
      %s381 = sphi 0, %s378
      %s382 = sphi 0, %s381
      %s398 = sphi 0, %s382
    $region4: #{_forward_impl.1} parent=1 // loop_header_branch
      %30 = sbr.rel (%p28) target = $region8
    $region5: #{_forward_impl.1} parent=1 // loop_body
      %s32 = ssub.s32 %s27, 1
      %s33 = ssub.s32 %s27, 2
      %s34 = sadd.s32 %s27, 1
      %s35 = ssub.s32 %s27, %s34
      %p36 = scmp.eq.s32.totalorder %s35, 0
      %s38 = sadd.s32 %s37, 1
      %s39 = scalar_select %p36, %s37, %s38
      %p42 = pneg %p36
      %p43 = scmp.eq.s32.totalorder %s27, 1
      %p44 = por %p42, %p43
      %p45 = scmp.ne.s32.totalorder %s37, %s40
      %p46 = scmp.eq.s32.totalorder %s27, 0
      %p47 = por %p45, %p46
      %p48 = scmp.ne.s32.totalorder %s37, %s40
      %p49 = scmp.eq.s32.totalorder %s32, 1
      %p50 = por %p48, %p49
      %p51 = scmp.ne.s32.totalorder %s40, %s41
      %p52 = scmp.eq.s32.totalorder %s32, 0
      %p53 = por %p51, %p52
      %p54 = scmp.ne.s32.totalorder %s40, %s41
      %p55 = scmp.eq.s32.totalorder %s33, 1
      %p56 = por %p54, %p55
      %p58 = scmp.ne.s32.totalorder %s41, %s57
      %p59 = scmp.eq.s32.totalorder %s33, 0
      %p60 = por %p58, %p59
      %s62 = sadd.s32 %s61, 1
      %p65 = scmp.eq.s32.totalorder %s27, 1
      %p66 = scmp.ne.s32.totalorder %s61, %s63
      %p67 = scmp.eq.s32.totalorder %s27, 0
      %p68 = por %p66, %p67
      %p69 = scmp.ne.s32.totalorder %s61, %s63
      %p70 = scmp.eq.s32.totalorder %s32, 1
      %p71 = por %p69, %p70
      %p72 = scmp.ne.s32.totalorder %s63, %s64
      %p73 = scmp.eq.s32.totalorder %s32, 0
      %p74 = por %p72, %p73
      %p75 = scmp.ne.s32.totalorder %s63, %s64
      %p76 = scmp.eq.s32.totalorder %s33, 1
      %p77 = por %p75, %p76
      %p79 = scmp.ne.s32.totalorder %s64, %s78
      %p80 = scmp.eq.s32.totalorder %s33, 0
      %p81 = por %p79, %p80
      %s83 = sadd.s32 %s82, 1
      %p86 = scmp.eq.s32.totalorder %s27, 1
      %p87 = scmp.ne.s32.totalorder %s82, %s84
      %p88 = scmp.eq.s32.totalorder %s27, 0
      %p89 = por %p87, %p88
      %p90 = scmp.ne.s32.totalorder %s82, %s84
      %p91 = scmp.eq.s32.totalorder %s32, 1
      %p92 = por %p90, %p91
      %p93 = scmp.ne.s32.totalorder %s84, %s85
      %p94 = scmp.eq.s32.totalorder %s32, 0
      %p95 = por %p93, %p94
      %p96 = scmp.ne.s32.totalorder %s84, %s85
      %p97 = scmp.eq.s32.totalorder %s33, 1
      %p98 = por %p96, %p97
      %p100 = scmp.ne.s32.totalorder %s85, %s99
      %p101 = scmp.eq.s32.totalorder %s33, 0
      %p102 = por %p100, %p101
      %s104 = sadd.s32 %s103, 1
      %p107 = scmp.eq.s32.totalorder %s27, 1
      %p108 = scmp.ne.s32.totalorder %s103, %s105
      %p109 = scmp.eq.s32.totalorder %s27, 0
      %p110 = por %p108, %p109
      %p111 = scmp.ne.s32.totalorder %s103, %s105
      %p112 = scmp.eq.s32.totalorder %s32, 1
      %p113 = por %p111, %p112
      %p114 = scmp.ne.s32.totalorder %s105, %s106
      %p115 = scmp.eq.s32.totalorder %s32, 0
      %p116 = por %p114, %p115
      %p117 = scmp.ne.s32.totalorder %s105, %s106
      %p118 = scmp.eq.s32.totalorder %s33, 1
      %p119 = por %p117, %p118
      %p121 = scmp.ne.s32.totalorder %s106, %s120
      %p122 = scmp.eq.s32.totalorder %s33, 0
      %p123 = por %p121, %p122
      %s125 = sadd.s32 %s124, 1
      %p128 = scmp.eq.s32.totalorder %s27, 1
      %p129 = scmp.ne.s32.totalorder %s124, %s126
      %p130 = scmp.eq.s32.totalorder %s27, 0
      %p131 = por %p129, %p130
      %p132 = scmp.ne.s32.totalorder %s124, %s126
      %p133 = scmp.eq.s32.totalorder %s32, 1
      %p134 = por %p132, %p133
      %p135 = scmp.ne.s32.totalorder %s126, %s127
      %p136 = scmp.eq.s32.totalorder %s32, 0
      %p137 = por %p135, %p136
      %p138 = scmp.ne.s32.totalorder %s126, %s127
      %p139 = scmp.eq.s32.totalorder %s33, 1
      %p140 = por %p138, %p139
      %p142 = scmp.ne.s32.totalorder %s127, %s141
      %p143 = scmp.eq.s32.totalorder %s33, 0
      %p144 = por %p142, %p143
      %s146 = sadd.s32 %s145, 1
      %p149 = scmp.eq.s32.totalorder %s27, 1
      %p150 = scmp.ne.s32.totalorder %s145, %s147
      %p151 = scmp.eq.s32.totalorder %s27, 0
      %p152 = por %p150, %p151
      %p153 = scmp.ne.s32.totalorder %s145, %s147
      %p154 = scmp.eq.s32.totalorder %s32, 1
      %p155 = por %p153, %p154
      %p156 = scmp.ne.s32.totalorder %s147, %s148
      %p157 = scmp.eq.s32.totalorder %s32, 0
      %p158 = por %p156, %p157
      %p159 = scmp.ne.s32.totalorder %s147, %s148
      %p160 = scmp.eq.s32.totalorder %s33, 1
      %p161 = por %p159, %p160
      %p163 = scmp.ne.s32.totalorder %s148, %s162
      %p164 = scmp.eq.s32.totalorder %s33, 0
      %p165 = por %p163, %p164
      %s167 = sadd.s32 %s166, 1
      %p170 = scmp.eq.s32.totalorder %s27, 1
      %p171 = scmp.ne.s32.totalorder %s166, %s168
      %p172 = scmp.eq.s32.totalorder %s27, 0
      %p173 = por %p171, %p172
      %p174 = scmp.ne.s32.totalorder %s166, %s168
      %p175 = scmp.eq.s32.totalorder %s32, 1
      %p176 = por %p174, %p175
      %p177 = scmp.ne.s32.totalorder %s168, %s169
      %p178 = scmp.eq.s32.totalorder %s32, 0
      %p179 = por %p177, %p178
      %p180 = scmp.ne.s32.totalorder %s168, %s169
      %p181 = scmp.eq.s32.totalorder %s33, 1
      %p182 = por %p180, %p181
      %p184 = scmp.ne.s32.totalorder %s169, %s183
      %p185 = scmp.eq.s32.totalorder %s33, 0
      %p186 = por %p184, %p185
      %s188 = sadd.s32 %s187, 1
      %p191 = scmp.eq.s32.totalorder %s27, 1
      %p192 = scmp.ne.s32.totalorder %s187, %s189
      %p193 = scmp.eq.s32.totalorder %s27, 0
      %p194 = por %p192, %p193
      %p195 = scmp.ne.s32.totalorder %s187, %s189
      %p196 = scmp.eq.s32.totalorder %s32, 1
      %p197 = por %p195, %p196
      %p198 = scmp.ne.s32.totalorder %s189, %s190
      %p199 = scmp.eq.s32.totalorder %s32, 0
      %p200 = por %p198, %p199
      %p201 = scmp.ne.s32.totalorder %s189, %s190
      %p202 = scmp.eq.s32.totalorder %s33, 1
      %p203 = por %p201, %p202
      %p205 = scmp.ne.s32.totalorder %s190, %s204
      %p206 = scmp.eq.s32.totalorder %s33, 0
      %p207 = por %p205, %p206
      %s209 = sadd.s32 %s208, 1
      %p212 = scmp.eq.s32.totalorder %s27, 1
      %p213 = scmp.ne.s32.totalorder %s208, %s210
      %p214 = scmp.eq.s32.totalorder %s27, 0
      %p215 = por %p213, %p214
      %p216 = scmp.ne.s32.totalorder %s208, %s210
      %p217 = scmp.eq.s32.totalorder %s32, 1
      %p218 = por %p216, %p217
      %p219 = scmp.ne.s32.totalorder %s210, %s211
      %p220 = scmp.eq.s32.totalorder %s32, 0
      %p221 = por %p219, %p220
      %p222 = scmp.ne.s32.totalorder %s210, %s211
      %p223 = scmp.eq.s32.totalorder %s33, 1
      %p224 = por %p222, %p223
      %p226 = scmp.ne.s32.totalorder %s211, %s225
      %p227 = scmp.eq.s32.totalorder %s33, 0
      %p228 = por %p226, %p227
      %s230 = sadd.s32 %s229, 1
      %p233 = scmp.eq.s32.totalorder %s27, 1
      %p234 = scmp.ne.s32.totalorder %s229, %s231
      %p235 = scmp.eq.s32.totalorder %s27, 0
      %p236 = por %p234, %p235
      %p237 = scmp.ne.s32.totalorder %s229, %s231
      %p238 = scmp.eq.s32.totalorder %s32, 1
      %p239 = por %p237, %p238
      %p240 = scmp.ne.s32.totalorder %s231, %s232
      %p241 = scmp.eq.s32.totalorder %s32, 0
      %p242 = por %p240, %p241
      %p243 = scmp.ne.s32.totalorder %s231, %s232
      %p244 = scmp.eq.s32.totalorder %s33, 1
      %p245 = por %p243, %p244
      %p247 = scmp.ne.s32.totalorder %s232, %s246
      %p248 = scmp.eq.s32.totalorder %s33, 0
      %p249 = por %p247, %p248
      %s251 = sadd.s32 %s250, 1
      %p254 = scmp.eq.s32.totalorder %s27, 1
      %p255 = scmp.ne.s32.totalorder %s250, %s252
      %p256 = scmp.eq.s32.totalorder %s27, 0
      %p257 = por %p255, %p256
      %p258 = scmp.ne.s32.totalorder %s250, %s252
      %p259 = scmp.eq.s32.totalorder %s32, 1
      %p260 = por %p258, %p259
      %p261 = scmp.ne.s32.totalorder %s252, %s253
      %p262 = scmp.eq.s32.totalorder %s32, 0
      %p263 = por %p261, %p262
      %p264 = scmp.ne.s32.totalorder %s252, %s253
      %p265 = scmp.eq.s32.totalorder %s33, 1
      %p266 = por %p264, %p265
      %p268 = scmp.ne.s32.totalorder %s253, %s267
      %p269 = scmp.eq.s32.totalorder %s33, 0
      %p270 = por %p268, %p269
      %s272 = sadd.s32 %s271, 1
      %p275 = scmp.eq.s32.totalorder %s27, 1
      %p276 = scmp.ne.s32.totalorder %s271, %s273
      %p277 = scmp.eq.s32.totalorder %s27, 0
      %p278 = por %p276, %p277
      %p279 = scmp.ne.s32.totalorder %s271, %s273
      %p280 = scmp.eq.s32.totalorder %s32, 1
      %p281 = por %p279, %p280
      %p282 = scmp.ne.s32.totalorder %s273, %s274
      %p283 = scmp.eq.s32.totalorder %s32, 0
      %p284 = por %p282, %p283
      %p285 = scmp.ne.s32.totalorder %s273, %s274
      %p286 = scmp.eq.s32.totalorder %s33, 1
      %p287 = por %p285, %p286
      %p289 = scmp.ne.s32.totalorder %s274, %s288
      %p290 = scmp.eq.s32.totalorder %s33, 0
      %p291 = por %p289, %p290
      %s293 = sadd.s32 %s292, 1
      %p296 = scmp.eq.s32.totalorder %s27, 1
      %p297 = scmp.ne.s32.totalorder %s292, %s294
      %p298 = scmp.eq.s32.totalorder %s27, 0
      %p299 = por %p297, %p298
      %p300 = scmp.ne.s32.totalorder %s292, %s294
      %p301 = scmp.eq.s32.totalorder %s32, 1
      %p302 = por %p300, %p301
      %p303 = scmp.ne.s32.totalorder %s294, %s295
      %p304 = scmp.eq.s32.totalorder %s32, 0
      %p305 = por %p303, %p304
      %p306 = scmp.ne.s32.totalorder %s294, %s295
      %p307 = scmp.eq.s32.totalorder %s33, 1
      %p308 = por %p306, %p307
      %p310 = scmp.ne.s32.totalorder %s295, %s309
      %p311 = scmp.eq.s32.totalorder %s33, 0
      %p312 = por %p310, %p311
      %s314 = sadd.s32 %s313, 1
      %p317 = scmp.eq.s32.totalorder %s27, 1
      %p318 = scmp.ne.s32.totalorder %s313, %s315
      %p319 = scmp.eq.s32.totalorder %s27, 0
      %p320 = por %p318, %p319
      %p321 = scmp.ne.s32.totalorder %s313, %s315
      %p322 = scmp.eq.s32.totalorder %s32, 1
      %p323 = por %p321, %p322
      %p324 = scmp.ne.s32.totalorder %s315, %s316
      %p325 = scmp.eq.s32.totalorder %s32, 0
      %p326 = por %p324, %p325
      %p327 = scmp.ne.s32.totalorder %s315, %s316
      %p328 = scmp.eq.s32.totalorder %s33, 1
      %p329 = por %p327, %p328
      %p331 = scmp.ne.s32.totalorder %s316, %s330
      %p332 = scmp.eq.s32.totalorder %s33, 0
      %p333 = por %p331, %p332
      %s335 = sadd.s32 %s334, 1
      %p338 = scmp.eq.s32.totalorder %s27, 1
      %p339 = scmp.ne.s32.totalorder %s334, %s336
      %p340 = scmp.eq.s32.totalorder %s27, 0
      %p341 = por %p339, %p340
      %p342 = scmp.ne.s32.totalorder %s334, %s336
      %p343 = scmp.eq.s32.totalorder %s32, 1
      %p344 = por %p342, %p343
      %p345 = scmp.ne.s32.totalorder %s336, %s337
      %p346 = scmp.eq.s32.totalorder %s32, 0
      %p347 = por %p345, %p346
      %p348 = scmp.ne.s32.totalorder %s336, %s337
      %p349 = scmp.eq.s32.totalorder %s33, 1
      %p350 = por %p348, %p349
      %p352 = scmp.ne.s32.totalorder %s337, %s351
      %p353 = scmp.eq.s32.totalorder %s33, 0
      %p354 = por %p352, %p353
      %s356 = sadd.s32 %s355, 1
      %p359 = scmp.eq.s32.totalorder %s27, 1
      %p360 = scmp.ne.s32.totalorder %s355, %s357
      %p361 = scmp.eq.s32.totalorder %s27, 0
      %p362 = por %p360, %p361
      %p363 = scmp.ne.s32.totalorder %s355, %s357
      %p364 = scmp.eq.s32.totalorder %s32, 1
      %p365 = por %p363, %p364
      %p366 = scmp.ne.s32.totalorder %s357, %s358
      %p367 = scmp.eq.s32.totalorder %s32, 0
      %p368 = por %p366, %p367
      %p369 = scmp.ne.s32.totalorder %s357, %s358
      %p370 = scmp.eq.s32.totalorder %s33, 1
      %p371 = por %p369, %p370
      %p373 = scmp.ne.s32.totalorder %s358, %s372
      %p374 = scmp.eq.s32.totalorder %s33, 0
      %p375 = por %p373, %p374
      %s376 = ssub.s32 %s27, %s34
      %p377 = scmp.eq.s32.totalorder %s376, 0
      %s379 = sadd.s32 %s378, 1
      %s380 = scalar_select %p377, %s378, %s379
      %p383 = pneg %p377
      %p384 = scmp.eq.s32.totalorder %s27, 1
      %p385 = por %p383, %p384
      %p386 = scmp.ne.s32.totalorder %s378, %s381
      %p387 = scmp.eq.s32.totalorder %s27, 0
      %p388 = por %p386, %p387
      %p389 = scmp.ne.s32.totalorder %s378, %s381
      %p390 = scmp.eq.s32.totalorder %s32, 1
      %p391 = por %p389, %p390
      %p392 = scmp.ne.s32.totalorder %s381, %s382
      %p393 = scmp.eq.s32.totalorder %s32, 0
      %p394 = por %p392, %p393
      %p395 = scmp.ne.s32.totalorder %s381, %s382
      %p396 = scmp.eq.s32.totalorder %s33, 1
      %p397 = por %p395, %p396
      %p399 = scmp.ne.s32.totalorder %s382, %s398
      %p400 = scmp.eq.s32.totalorder %s33, 0
      %p401 = por %p399, %p400
      %p402 = scmp.le.s32.totalorder 1, %s27
      %p403 = scmp.lt.s32.totalorder %s27, 3
      %p404 = pnand %p402, %p403
      %p405 = pneg %p404
      // Predicated region
      $region9: #{_forward_impl.1} parent=5 // pred_check
        _
      $region10: #{_forward_impl.1} parent=5 // pred_check_branch
        %407 = sbr.rel (%p404) target = $region12
      $region11: #{_forward_impl.1} parent=5 // pred_region
        %s408 = ssub.s32 %s27, 1
        // Predicated region
        $region13: #{_forward_impl.1} parent=11 // pred_check
          %p409 = pneg %p74
        $region14: #{_forward_impl.1} parent=11 // pred_check_branch
          %411 = sbr.rel (%p409) target = $region16
        $region15: #{_forward_impl.1} parent=11 // pred_region
          %s413 = ssub.s32 2048, 2048
          %414 = vsyncadd [#allocation3], %s413
          %s415 = sshll.u32 [#allocation2], 4
          %s416 = int_to_ptr.vmem [resolvable:$true] %s415
          %421 = dma.hbm_to_vmem [thread:$0]  %s1, 2048, %s416, [#allocation3], 64, 64, 4
        $region16: #{_forward_impl.1} parent=11 // pred_fallthru
          _
        // Predicated region
        $region17: #{_forward_impl.1} parent=11 // pred_check
          %p422 = pneg %p95
        $region18: #{_forward_impl.1} parent=11 // pred_check_branch
          %424 = sbr.rel (%p422) target = $region20
        $region19: #{_forward_impl.1} parent=11 // pred_region
          %s426 = ssub.s32 1024, 1024
          %427 = vsyncadd [#allocation5], %s426
          %s428 = sshll.u32 [#allocation4], 4
          %s429 = int_to_ptr.vmem [resolvable:$true] %s428
          %434 = dma.hbm_to_vmem [thread:$0]  %s2, 1024, %s429, [#allocation5], 64, 64, 4
        $region20: #{_forward_impl.1} parent=11 // pred_fallthru
          _
        // Predicated region
        $region21: #{_forward_impl.1} parent=11 // pred_check
          %p435 = pneg %p116
        $region22: #{_forward_impl.1} parent=11 // pred_check_branch
          %437 = sbr.rel (%p435) target = $region24
        $region23: #{_forward_impl.1} parent=11 // pred_region
          %s439 = ssub.s32 512, 512
          %440 = vsyncadd [#allocation5], %s439
          %s441 = sshll.u32 [#allocation6], 4
          %s442 = int_to_ptr.vmem [resolvable:$true] %s441
          %447 = dma.hbm_to_vmem [thread:$0]  %s3, 512, %s442, [#allocation5], 64, 64, 4
        $region24: #{_forward_impl.1} parent=11 // pred_fallthru
          _
        // Predicated region
        $region25: #{_forward_impl.1} parent=11 // pred_check
          %p448 = pneg %p137
        $region26: #{_forward_impl.1} parent=11 // pred_check_branch
          %450 = sbr.rel (%p448) target = $region28
        $region27: #{_forward_impl.1} parent=11 // pred_region
          %s452 = ssub.s32 512, 512
          %453 = vsyncadd [#allocation8], %s452
          %s454 = sshll.u32 [#allocation7], 4
          %s455 = int_to_ptr.vmem [resolvable:$true] %s454
          %460 = dma.hbm_to_vmem [thread:$0]  %s4, 512, %s455, [#allocation8], 64, 64, 4
        $region28: #{_forward_impl.1} parent=11 // pred_fallthru
          _
        // Predicated region
        $region29: #{_forward_impl.1} parent=11 // pred_check
          %p461 = pneg %p158
        $region30: #{_forward_impl.1} parent=11 // pred_check_branch
          %463 = sbr.rel (%p461) target = $region32
        $region31: #{_forward_impl.1} parent=11 // pred_region
          %s465 = ssub.s32 256, 256
          %466 = vsyncadd [#allocation8], %s465
          %s467 = sshll.u32 [#allocation9], 4
          %s468 = int_to_ptr.vmem [resolvable:$true] %s467
          %473 = dma.hbm_to_vmem [thread:$0]  %s5, 256, %s468, [#allocation8], 64, 64, 4
        $region32: #{_forward_impl.1} parent=11 // pred_fallthru
          _
        // Predicated region
        $region33: #{_forward_impl.1} parent=11 // pred_check
          %p474 = pneg %p179
        $region34: #{_forward_impl.1} parent=11 // pred_check_branch
          %476 = sbr.rel (%p474) target = $region36
        $region35: #{_forward_impl.1} parent=11 // pred_region
          _
        $region36: #{_forward_impl.1} parent=11 // pred_fallthru
          _
        // Predicated region
        $region37: #{_forward_impl.1} parent=11 // pred_check
          %p477 = pneg %p200
        $region38: #{_forward_impl.1} parent=11 // pred_check_branch
          %479 = sbr.rel (%p477) target = $region40
        $region39: #{_forward_impl.1} parent=11 // pred_region
          _
        $region40: #{_forward_impl.1} parent=11 // pred_fallthru
          _
        // Predicated region
        $region41: #{_forward_impl.1} parent=11 // pred_check
          %p480 = pneg %p221
        $region42: #{_forward_impl.1} parent=11 // pred_check_branch
          %482 = sbr.rel (%p480) target = $region44
        $region43: #{_forward_impl.1} parent=11 // pred_region
          %s484 = ssub.s32 16384, 16384
          %485 = vsyncadd [#allocation11], %s484
          %s486 = sshll.u32 [#allocation10], 4
          %s487 = int_to_ptr.vmem [resolvable:$true] %s486
          %492 = dma.hbm_to_vmem [thread:$0]  %s8, 16384, %s487, [#allocation11], 128, 128, 8
        $region44: #{_forward_impl.1} parent=11 // pred_fallthru
          _
        // Predicated region
        $region45: #{_forward_impl.1} parent=11 // pred_check
          %p493 = pneg %p242
        $region46: #{_forward_impl.1} parent=11 // pred_check_branch
          %495 = sbr.rel (%p493) target = $region48
        $region47: #{_forward_impl.1} parent=11 // pred_region
          _
        $region48: #{_forward_impl.1} parent=11 // pred_fallthru
          _
        // Predicated region
        $region49: #{_forward_impl.1} parent=11 // pred_check
          %p496 = pneg %p263
        $region50: #{_forward_impl.1} parent=11 // pred_check_branch
          %498 = sbr.rel (%p496) target = $region52
        $region51: #{_forward_impl.1} parent=11 // pred_region
          %s500 = ssub.s32 16384, 16384
          %501 = vsyncadd [#allocation11], %s500
          %s502 = sshll.u32 [#allocation12], 4
          %s503 = int_to_ptr.vmem [resolvable:$true] %s502
          %508 = dma.hbm_to_vmem [thread:$0]  %s10, 16384, %s503, [#allocation11], 64, 64, 4
        $region52: #{_forward_impl.1} parent=11 // pred_fallthru
          _
        // Predicated region
        $region53: #{_forward_impl.1} parent=11 // pred_check
          %p509 = pneg %p284
        $region54: #{_forward_impl.1} parent=11 // pred_check_branch
          %511 = sbr.rel (%p509) target = $region56
        $region55: #{_forward_impl.1} parent=11 // pred_region
          %s513 = ssub.s32 32, 32
          %514 = vsyncadd [#allocation14], %s513
          %s516 = sshll.u32 [#allocation13], 4
          %s517 = int_to_ptr.vmem [resolvable:$true] %s516
          %519 = dma.hbm_to_vmem [thread:$0]  %s11, 32, %s517, [#allocation14]
        $region56: #{_forward_impl.1} parent=11 // pred_fallthru
          _
        // Predicated region
        $region57: #{_forward_impl.1} parent=11 // pred_check
          %p520 = pneg %p305
        $region58: #{_forward_impl.1} parent=11 // pred_check_branch
          %522 = sbr.rel (%p520) target = $region60
        $region59: #{_forward_impl.1} parent=11 // pred_region
          _
        $region60: #{_forward_impl.1} parent=11 // pred_fallthru
          _
        // Predicated region
        $region61: #{_forward_impl.1} parent=11 // pred_check
          %p523 = pneg %p326
        $region62: #{_forward_impl.1} parent=11 // pred_check_branch
          %525 = sbr.rel (%p523) target = $region64
        $region63: #{_forward_impl.1} parent=11 // pred_region
          _
        $region64: #{_forward_impl.1} parent=11 // pred_fallthru
          _
        // Predicated region
        $region65: #{_forward_impl.1} parent=11 // pred_check
          %p526 = pneg %p347
        $region66: #{_forward_impl.1} parent=11 // pred_check_branch
          %528 = sbr.rel (%p526) target = $region68
        $region67: #{_forward_impl.1} parent=11 // pred_region
          _
        $region68: #{_forward_impl.1} parent=11 // pred_fallthru
          _
        // Predicated region
        $region69: #{_forward_impl.1} parent=11 // pred_check
          %p529 = pneg %p368
        $region70: #{_forward_impl.1} parent=11 // pred_check_branch
          %531 = sbr.rel (%p529) target = $region72
        $region71: #{_forward_impl.1} parent=11 // pred_region
          _
        $region72: #{_forward_impl.1} parent=11 // pred_fallthru
          _
      $region12: #{_forward_impl.1} parent=5 // pred_fallthru
        _
      %p532 = scmp.lt.s32.totalorder %s27, 2
      // Predicated region
      $region73: #{_forward_impl.1} parent=5 // pred_check
        %p533 = pneg %p532
      $region74: #{_forward_impl.1} parent=5 // pred_check_branch
        %535 = sbr.rel (%p533) target = $region76
      $region75: #{_forward_impl.1} parent=5 // pred_region
        // Predicated region
        $region77: #{_forward_impl.1} parent=75 // pred_check
          %p536 = pneg %p47
        $region78: #{_forward_impl.1} parent=75 // pred_check_branch
          %538 = sbr.rel (%p536) target = $region80
        $region79: #{_forward_impl.1} parent=75 // pred_region
          %p539 = scmp.lt.s32.totalorder %s27, 1
          %s540 = scalar_select %p539, %s27, 1
          %s541 = smul.addr %s540, 32
          %s542 = smul.addr %s541, 4
          %s543 = scalar_lea.vmem %s0, %s542
        $region80: #{_forward_impl.1} parent=75 // pred_fallthru
          _
      $region76: #{_forward_impl.1} parent=5 // pred_fallthru
        _
      %p544 = scmp.le.s32.totalorder 1, %s27
      %p545 = scmp.lt.s32.totalorder %s27, 3
      %p546 = pnand %p544, %p545
      %p547 = pneg %p546
      // Predicated region
      $region81: #{_forward_impl.1} parent=5 // pred_check
        _
      $region82: #{_forward_impl.1} parent=5 // pred_check_branch
        %549 = sbr.rel (%p546) target = $region84
      $region83: #{_forward_impl.1} parent=5 // pred_region
        %s550 = ssub.s32 %s27, 1
        // Predicated region
        $region85: #{_forward_impl.1} parent=83 // pred_check
          %p551 = pneg %p74
        $region86: #{_forward_impl.1} parent=83 // pred_check_branch
          %553 = sbr.rel (%p551) target = $region88
        $region87: #{_forward_impl.1} parent=83 // pred_region
          %554 = dma.done [#allocation3], 2048
        $region88: #{_forward_impl.1} parent=83 // pred_fallthru
          _
        // Predicated region
        $region89: #{_forward_impl.1} parent=83 // pred_check
          %p555 = pneg %p95
        $region90: #{_forward_impl.1} parent=83 // pred_check_branch
          %557 = sbr.rel (%p555) target = $region92
        $region91: #{_forward_impl.1} parent=83 // pred_region
          %558 = dma.done [#allocation5], 1024
        $region92: #{_forward_impl.1} parent=83 // pred_fallthru
          _
        // Predicated region
        $region93: #{_forward_impl.1} parent=83 // pred_check
          %p559 = pneg %p116
        $region94: #{_forward_impl.1} parent=83 // pred_check_branch
          %561 = sbr.rel (%p559) target = $region96
        $region95: #{_forward_impl.1} parent=83 // pred_region
          %562 = dma.done [#allocation5], 512
        $region96: #{_forward_impl.1} parent=83 // pred_fallthru
          _
        // Predicated region
        $region97: #{_forward_impl.1} parent=83 // pred_check
          %p563 = pneg %p137
        $region98: #{_forward_impl.1} parent=83 // pred_check_branch
          %565 = sbr.rel (%p563) target = $region100
        $region99: #{_forward_impl.1} parent=83 // pred_region
          %566 = dma.done [#allocation8], 512
        $region100: #{_forward_impl.1} parent=83 // pred_fallthru
          _
        // Predicated region
        $region101: #{_forward_impl.1} parent=83 // pred_check
          %p567 = pneg %p158
        $region102: #{_forward_impl.1} parent=83 // pred_check_branch
          %569 = sbr.rel (%p567) target = $region104
        $region103: #{_forward_impl.1} parent=83 // pred_region
          %570 = dma.done [#allocation8], 256
        $region104: #{_forward_impl.1} parent=83 // pred_fallthru
          _
        // Predicated region
        $region105: #{_forward_impl.1} parent=83 // pred_check
          %p571 = pneg %p221
        $region106: #{_forward_impl.1} parent=83 // pred_check_branch
          %573 = sbr.rel (%p571) target = $region108
        $region107: #{_forward_impl.1} parent=83 // pred_region
          %574 = dma.done [#allocation11], 16384
        $region108: #{_forward_impl.1} parent=83 // pred_fallthru
          _
        // Predicated region
        $region109: #{_forward_impl.1} parent=83 // pred_check
          %p575 = pneg %p263
        $region110: #{_forward_impl.1} parent=83 // pred_check_branch
          %577 = sbr.rel (%p575) target = $region112
        $region111: #{_forward_impl.1} parent=83 // pred_region
          %578 = dma.done [#allocation11], 16384
        $region112: #{_forward_impl.1} parent=83 // pred_fallthru
          _
        // Predicated region
        $region113: #{_forward_impl.1} parent=83 // pred_check
          %p579 = pneg %p284
        $region114: #{_forward_impl.1} parent=83 // pred_check_branch
          %581 = sbr.rel (%p579) target = $region116
        $region115: #{_forward_impl.1} parent=83 // pred_region
          %582 = dma.done [#allocation14], 32
        $region116: #{_forward_impl.1} parent=83 // pred_fallthru
          _
        %p583 = scmp.lt.s32.totalorder %s32, 1
        %s584 = scalar_select %p583, %s32, 1
        %s585 = smul.addr %s584, 32
        %s586 = smul.addr %s585, 4
        %s587 = scalar_lea.vmem %s0, %s586
        %p588 = pneg %p53
        %p589 = pneg %p50
        %p590 = pneg %p74
        %p591 = pneg %p71
        %p592 = pneg %p95
        %p593 = pneg %p92
        %p594 = pneg %p116
        %p595 = pneg %p113
        %p596 = pneg %p137
        %p597 = pneg %p134
        %p598 = pneg %p158
        %p599 = pneg %p155
        %p600 = pneg %p179
        %p601 = pneg %p176
        %p602 = pneg %p200
        %p603 = pneg %p197
        %p604 = pneg %p221
        %p605 = pneg %p218
        %p606 = pneg %p242
        %p607 = pneg %p239
        %p608 = pneg %p263
        %p609 = pneg %p260
        %p610 = pneg %p284
        %p611 = pneg %p281
        %p612 = pneg %p305
        %p613 = pneg %p302
        %p614 = pneg %p326
        %p615 = pneg %p323
        %p616 = pneg %p347
        %p617 = pneg %p344
        %p618 = pneg %p368
        %p619 = pneg %p365
        %p620 = pneg %p394
        %p621 = pneg %p391
        %p622 = scmp.lt.s32.totalorder %s32, 1
        %s623 = scalar_select %p622, %s32, 1
        %s624 = smul.addr %s623, 8
        %s625 = scalar_lea.vmem %s16, %s624
        %p626 = scmp.lt.s32.totalorder %s32, 1
        %s627 = scalar_select %p626, %s32, 1
        %s628 = smul.addr %s627, 32
        %s629 = smul.addr %s628, 4
        %s630 = scalar_lea.vmem %s0, %s629
        %p631 = scmp.lt.s32.totalorder %s32, 1
        %s632 = scalar_select %p631, %s32, 1
        %s633 = smul.addr %s632, 8
        %s634 = scalar_lea.vmem %s16, %s633
        %v636 = vld [vmem:[%s630] sm:$0xff]
        %v637 = vld [vmem:[%s630 + $0x8] sm:$0xff]
        %v638 = vld [vmem:[%s630 + $0x10] sm:$0xff]
        %v639 = vld [vmem:[%s630 + $0x18] sm:$0xff]
        %v640 = vld [vmem:[%s630 + $0x20] sm:$0xff]
        %v641 = vld [vmem:[%s630 + $0x28] sm:$0xff]
        %v642 = vld [vmem:[%s630 + $0x30] sm:$0xff]
        %v643 = vld [vmem:[%s630 + $0x38] sm:$0xff]
        %v644 = vld [vmem:[%s630 + $0x40] sm:$0xff]
        %v645 = vld [vmem:[%s630 + $0x48] sm:$0xff]
        %v646 = vld [vmem:[%s630 + $0x50] sm:$0xff]
        %v647 = vld [vmem:[%s630 + $0x58] sm:$0xff]
        %v648 = vld [vmem:[%s630 + $0x60] sm:$0xff]
        %v649 = vld [vmem:[%s630 + $0x68] sm:$0xff]
        %v650 = vld [vmem:[%s630 + $0x70] sm:$0xff]
        %v651 = vld [vmem:[%s630 + $0x78] sm:$0xff]
        %v652 = vld [vmem:[#allocation2] sm:$0xf]
        %v653 = vld [vmem:[#allocation2 + $0x4] sm:$0xf]
        %v654 = vld [vmem:[#allocation2 + $0x8] sm:$0xf]
        %v655 = vld [vmem:[#allocation2 + $0xc] sm:$0xf]
        %v656 = vld [vmem:[#allocation2 + $0x10] sm:$0xf]
        %v657 = vld [vmem:[#allocation2 + $0x14] sm:$0xf]
        %v658 = vld [vmem:[#allocation2 + $0x18] sm:$0xf]
        %v659 = vld [vmem:[#allocation2 + $0x1c] sm:$0xf]
        %v668 = vunpack.c.l.b16 %v652
        %v669 = vunpack.c.l.b16 %v653
        %v670 = vunpack.c.l.b16 %v654
        %v671 = vunpack.c.l.b16 %v655
        %v672 = vunpack.c.l.b16 %v656
        %v673 = vunpack.c.l.b16 %v657
        %v674 = vunpack.c.l.b16 %v658
        %v675 = vunpack.c.l.b16 %v659
        %v676 = vpack.c.b16 %v669, %v668
        %v677 = vpack.c.b16 %v671, %v670
        %v678 = vpack.c.b16 %v673, %v672
        %v679 = vpack.c.b16 %v675, %v674
        %v700 = vunpack.c.l.b16 %v636
        %v701 = vunpack.c.h.b16 %v636
        %v702 = vunpack.c.l.b16 %v637
        %v703 = vunpack.c.h.b16 %v637
        %v704 = vunpack.c.l.b16 %v638
        %v705 = vunpack.c.h.b16 %v638
        %v706 = vunpack.c.l.b16 %v639
        %v707 = vunpack.c.h.b16 %v639
        %v708 = vunpack.c.l.b16 %v640
        %v709 = vunpack.c.h.b16 %v640
        %v710 = vunpack.c.l.b16 %v641
        %v711 = vunpack.c.h.b16 %v641
        %v712 = vunpack.c.l.b16 %v642
        %v713 = vunpack.c.h.b16 %v642
        %v714 = vunpack.c.l.b16 %v643
        %v715 = vunpack.c.h.b16 %v643
        %v716 = vunpack.c.l.b16 %v644
        %v717 = vunpack.c.h.b16 %v644
        %v718 = vunpack.c.l.b16 %v645
        %v719 = vunpack.c.h.b16 %v645
        %v720 = vunpack.c.l.b16 %v646
        %v721 = vunpack.c.h.b16 %v646
        %v722 = vunpack.c.l.b16 %v647
        %v723 = vunpack.c.h.b16 %v647
        %v724 = vunpack.c.l.b16 %v648
        %v725 = vunpack.c.h.b16 %v648
        %v726 = vunpack.c.l.b16 %v649
        %v727 = vunpack.c.h.b16 %v649
        %v728 = vunpack.c.l.b16 %v650
        %v729 = vunpack.c.h.b16 %v650
        %v730 = vunpack.c.l.b16 %v651
        %v731 = vunpack.c.h.b16 %v651
        %v732 = vpack.c.b16 %v702, %v700
        %v733 = vpack.c.b16 %v703, %v701
        %v734 = vpack.c.b16 %v706, %v704
        %v735 = vpack.c.b16 %v707, %v705
        %v736 = vpack.c.b16 %v710, %v708
        %v737 = vpack.c.b16 %v711, %v709
        %v738 = vpack.c.b16 %v714, %v712
        %v739 = vpack.c.b16 %v715, %v713
        %v740 = vpack.c.b16 %v718, %v716
        %v741 = vpack.c.b16 %v719, %v717
        %v742 = vpack.c.b16 %v722, %v720
        %v743 = vpack.c.b16 %v723, %v721
        %v744 = vpack.c.b16 %v726, %v724
        %v745 = vpack.c.b16 %v727, %v725
        %v746 = vpack.c.b16 %v730, %v728
        %v747 = vpack.c.b16 %v731, %v729
        %764 = vmatprep.subr.bf16.mxu0 %v733
        %765 = vmatpush1.bf16.msra.mxu0 %v732
        %766 = vmatprep.subr.bf16.mxu0 %v735
        %767 = vmatpush1.bf16.msra.mxu0 %v734
        %768 = vmatprep.subr.bf16.mxu0 %v737
        %769 = vmatpush1.bf16.msra.mxu0 %v736
        %770 = vmatprep.subr.bf16.mxu0 %v739
        %771 = vmatpush1.bf16.msra.mxu0 %v738
        %772 = vmatprep.subr.bf16.mxu0 %v741
        %773 = vmatpush1.bf16.msra.mxu0 %v740
        %774 = vmatprep.subr.bf16.mxu0 %v743
        %775 = vmatpush1.bf16.msra.mxu0 %v742
        %776 = vmatprep.subr.bf16.mxu0 %v745
        %777 = vmatpush1.bf16.msra.mxu0 %v744
        %778 = vmatprep.subr.bf16.mxu0 %v747
        %779 = vmatpush1.bf16.msra.mxu0 %v746
        %780 = vmatprep.subr.bf16.mxu0 0
        %781 = vmatpush1.bf16.msra.mxu0 0
        %782 = vmatprep.subr.bf16.mxu0 0
        %783 = vmatpush1.bf16.msra.mxu0 0
        %784 = vmatprep.subr.bf16.mxu0 0
        %785 = vmatpush1.bf16.msra.mxu0 0
        %786 = vmatprep.subr.bf16.mxu0 0
        %787 = vmatpush1.bf16.msra.mxu0 0
        %788 = vmatprep.subr.bf16.mxu0 0
        %789 = vmatpush1.bf16.msra.mxu0 0
        %790 = vmatprep.subr.bf16.mxu0 0
        %791 = vmatpush1.bf16.msra.mxu0 0
        %792 = vmatprep.subr.bf16.mxu0 0
        %793 = vmatpush1.bf16.msra.mxu0 0
        %794 = vmatprep.subr.bf16.mxu0 0
        %795 = vmatpush1.bf16.msra.mxu0 0
        %796 = vmatprep.mubr.bf16.mxu0 0
        %797 = vmatmul.mubr.bf16.gmra.mrb[0].mxu0 %v676
        %v798 = vpop.f32.mrb[0].mxu0
        %v799 = vadd.f32 0.0, %v798
        %v800 = vpop.f32.mrb[0].mxu0
        %v801 = vadd.f32 0.0, %v800
        %v802 = vpop.f32.mrb[0].mxu0
        %v803 = vadd.f32 0.0, %v802
        %v804 = vpop.f32.mrb[0].mxu0
        %v805 = vadd.f32 0.0, %v804
        %806 = vmatprep.mubr.bf16.mxu0 0
        %807 = vmatmul.mubr.bf16.gmra.mrb[0].mxu0 %v677
        %v808 = vpop.f32.mrb[0].mxu0
        %v809 = vadd.f32 0.0, %v808
        %v810 = vpop.f32.mrb[0].mxu0
        %v811 = vadd.f32 0.0, %v810
        %v812 = vpop.f32.mrb[0].mxu0
        %v813 = vadd.f32 0.0, %v812
        %v814 = vpop.f32.mrb[0].mxu0
        %v815 = vadd.f32 0.0, %v814
        %816 = vmatprep.mubr.bf16.mxu0 0
        %817 = vmatmul.mubr.bf16.gmra.mrb[0].mxu0 %v678
        %v818 = vpop.f32.mrb[0].mxu0
        %v819 = vadd.f32 0.0, %v818
        %v820 = vpop.f32.mrb[0].mxu0
        %v821 = vadd.f32 0.0, %v820
        %v822 = vpop.f32.mrb[0].mxu0
        %v823 = vadd.f32 0.0, %v822
        %v824 = vpop.f32.mrb[0].mxu0
        %v825 = vadd.f32 0.0, %v824
        %826 = vmatprep.mubr.bf16.mxu0 0
        %827 = vmatmul.mubr.bf16.gmra.mrb[0].mxu0 %v679
        %v828 = vpop.f32.mrb[0].mxu0
        %v829 = vadd.f32 0.0, %v828
        %v830 = vpop.f32.mrb[0].mxu0
        %v831 = vadd.f32 0.0, %v830
        %v832 = vpop.f32.mrb[0].mxu0
        %v833 = vadd.f32 0.0, %v832
        %v834 = vpop.f32.mrb[0].mxu0
        %v835 = vadd.f32 0.0, %v834
        %836 = vdwg.mxu0
        %v837 = vpack.c.bf16 %v803, %v799
        %v838 = vpack.c.bf16 %v805, %v801
        %v839 = vpack.c.bf16 %v813, %v809
        %v840 = vpack.c.bf16 %v815, %v811
        %v841 = vpack.c.bf16 %v823, %v819
        %v842 = vpack.c.bf16 %v825, %v821
        %v843 = vpack.c.bf16 %v833, %v829
        %v844 = vpack.c.bf16 %v835, %v831
        %s845 = scalar_lea.vmem [#allocation2], 32
        %v846 = vld [vmem:[%s845] sm:$0xf]
        %v847 = vld [vmem:[%s845 + $0x4] sm:$0xf]
        %v848 = vld [vmem:[%s845 + $0x8] sm:$0xf]
        %v849 = vld [vmem:[%s845 + $0xc] sm:$0xf]
        %v850 = vld [vmem:[%s845 + $0x10] sm:$0xf]
        %v851 = vld [vmem:[%s845 + $0x14] sm:$0xf]
        %v852 = vld [vmem:[%s845 + $0x18] sm:$0xf]
        %v853 = vld [vmem:[%s845 + $0x1c] sm:$0xf]
        %v862 = vunpack.c.l.b16 %v846
        %v863 = vunpack.c.l.b16 %v847
        %v864 = vunpack.c.l.b16 %v848
        %v865 = vunpack.c.l.b16 %v849
        %v866 = vunpack.c.l.b16 %v850
        %v867 = vunpack.c.l.b16 %v851
        %v868 = vunpack.c.l.b16 %v852
        %v869 = vunpack.c.l.b16 %v853
        %v870 = vpack.c.b16 %v863, %v862
        %v871 = vpack.c.b16 %v865, %v864
        %v872 = vpack.c.b16 %v867, %v866
        %v873 = vpack.c.b16 %v869, %v868
        %878 = vmatprep.subr.bf16.mxu0 %v733
        %879 = vmatpush1.bf16.msra.mxu0 %v732
        %880 = vmatprep.subr.bf16.mxu0 %v735
        %881 = vmatpush1.bf16.msra.mxu0 %v734
        %882 = vmatprep.subr.bf16.mxu0 %v737
        %883 = vmatpush1.bf16.msra.mxu0 %v736
        %884 = vmatprep.subr.bf16.mxu0 %v739
        %885 = vmatpush1.bf16.msra.mxu0 %v738
        %886 = vmatprep.subr.bf16.mxu0 %v741
        %887 = vmatpush1.bf16.msra.mxu0 %v740
        %888 = vmatprep.subr.bf16.mxu0 %v743
        %889 = vmatpush1.bf16.msra.mxu0 %v742
        %890 = vmatprep.subr.bf16.mxu0 %v745
        %891 = vmatpush1.bf16.msra.mxu0 %v744
        %892 = vmatprep.subr.bf16.mxu0 %v747
        %893 = vmatpush1.bf16.msra.mxu0 %v746
        %894 = vmatprep.subr.bf16.mxu0 0
        %895 = vmatpush1.bf16.msra.mxu0 0
        %896 = vmatprep.subr.bf16.mxu0 0
        %897 = vmatpush1.bf16.msra.mxu0 0
        %898 = vmatprep.subr.bf16.mxu0 0
        %899 = vmatpush1.bf16.msra.mxu0 0
        %900 = vmatprep.subr.bf16.mxu0 0
        %901 = vmatpush1.bf16.msra.mxu0 0
        %902 = vmatprep.subr.bf16.mxu0 0
        %903 = vmatpush1.bf16.msra.mxu0 0
        %904 = vmatprep.subr.bf16.mxu0 0
        %905 = vmatpush1.bf16.msra.mxu0 0
        %906 = vmatprep.subr.bf16.mxu0 0
        %907 = vmatpush1.bf16.msra.mxu0 0
        %908 = vmatprep.subr.bf16.mxu0 0
        %909 = vmatpush1.bf16.msra.mxu0 0
        %910 = vmatprep.mubr.bf16.mxu0 0
        %911 = vmatmul.mubr.bf16.gmra.mrb[0].mxu0 %v870
        %v912 = vpop.f32.mrb[0].mxu0
        %v913 = vadd.f32 0.0, %v912
        %v914 = vpop.f32.mrb[0].mxu0
        %v915 = vadd.f32 0.0, %v914
        %v916 = vpop.f32.mrb[0].mxu0
        %v917 = vadd.f32 0.0, %v916
        %v918 = vpop.f32.mrb[0].mxu0
        %v919 = vadd.f32 0.0, %v918
        %920 = vmatprep.mubr.bf16.mxu0 0
        %921 = vmatmul.mubr.bf16.gmra.mrb[0].mxu0 %v871
        %v922 = vpop.f32.mrb[0].mxu0
        %v923 = vadd.f32 0.0, %v922
        %v924 = vpop.f32.mrb[0].mxu0
        %v925 = vadd.f32 0.0, %v924
        %v926 = vpop.f32.mrb[0].mxu0
        %v927 = vadd.f32 0.0, %v926
        %v928 = vpop.f32.mrb[0].mxu0
        %v929 = vadd.f32 0.0, %v928
        %930 = vmatprep.mubr.bf16.mxu0 0
        %931 = vmatmul.mubr.bf16.gmra.mrb[0].mxu0 %v872
        %v932 = vpop.f32.mrb[0].mxu0
        %v933 = vadd.f32 0.0, %v932
        %v934 = vpop.f32.mrb[0].mxu0
        %v935 = vadd.f32 0.0, %v934
        %v936 = vpop.f32.mrb[0].mxu0
        %v937 = vadd.f32 0.0, %v936
        %v938 = vpop.f32.mrb[0].mxu0
        %v939 = vadd.f32 0.0, %v938
        %940 = vmatprep.mubr.bf16.mxu0 0
        %941 = vmatmul.mubr.bf16.gmra.mrb[0].mxu0 %v873
        %v942 = vpop.f32.mrb[0].mxu0
        %v943 = vadd.f32 0.0, %v942
        %v944 = vpop.f32.mrb[0].mxu0
        %v945 = vadd.f32 0.0, %v944
        %v946 = vpop.f32.mrb[0].mxu0
        %v947 = vadd.f32 0.0, %v946
        %v948 = vpop.f32.mrb[0].mxu0
        %v949 = vadd.f32 0.0, %v948
        %950 = vdwg.mxu0
        %v951 = vpack.c.bf16 %v917, %v913
        %v952 = vpack.c.bf16 %v919, %v915
        %v953 = vpack.c.bf16 %v927, %v923
        %v954 = vpack.c.bf16 %v929, %v925
        %v955 = vpack.c.bf16 %v937, %v933
        %v956 = vpack.c.bf16 %v939, %v935
        %v957 = vpack.c.bf16 %v947, %v943
        %v958 = vpack.c.bf16 %v949, %v945
        %s959 = scalar_lea.vmem [#allocation2], 64
        %v960 = vld [vmem:[%s959] sm:$0xf]
        %v961 = vld [vmem:[%s959 + $0x4] sm:$0xf]
        %v962 = vld [vmem:[%s959 + $0x8] sm:$0xf]
        %v963 = vld [vmem:[%s959 + $0xc] sm:$0xf]
        %v964 = vld [vmem:[%s959 + $0x10] sm:$0xf]
        %v965 = vld [vmem:[%s959 + $0x14] sm:$0xf]
        %v966 = vld [vmem:[%s959 + $0x18] sm:$0xf]
        %v967 = vld [vmem:[%s959 + $0x1c] sm:$0xf]
        %v976 = vunpack.c.l.b16 %v960
        %v977 = vunpack.c.l.b16 %v961
        %v978 = vunpack.c.l.b16 %v962
        %v979 = vunpack.c.l.b16 %v963
        %v980 = vunpack.c.l.b16 %v964
        %v981 = vunpack.c.l.b16 %v965
        %v982 = vunpack.c.l.b16 %v966
        %v983 = vunpack.c.l.b16 %v967
        %v984 = vpack.c.b16 %v977, %v976
        %v985 = vpack.c.b16 %v979, %v978
        %v986 = vpack.c.b16 %v981, %v980
        %v987 = vpack.c.b16 %v983, %v982
        %992 = vmatprep.subr.bf16.mxu0 %v733
        %993 = vmatpush1.bf16.msra.mxu0 %v732
        %994 = vmatprep.subr.bf16.mxu0 %v735
        %995 = vmatpush1.bf16.msra.mxu0 %v734
        %996 = vmatprep.subr.bf16.mxu0 %v737
        %997 = vmatpush1.bf16.msra.mxu0 %v736
        %998 = vmatprep.subr.bf16.mxu0 %v739
        %999 = vmatpush1.bf16.msra.mxu0 %v738
        %1000 = vmatprep.subr.bf16.mxu0 %v741
        %1001 = vmatpush1.bf16.msra.mxu0 %v740
        %1002 = vmatprep.subr.bf16.mxu0 %v743
        %1003 = vmatpush1.bf16.msra.mxu0 %v742
        %1004 = vmatprep.subr.bf16.mxu0 %v745
        %1005 = vmatpush1.bf16.msra.mxu0 %v744
        %1006 = vmatprep.subr.bf16.mxu0 %v747
        %1007 = vmatpush1.bf16.msra.mxu0 %v746
        %1008 = vmatprep.subr.bf16.mxu0 0
        %1009 = vmatpush1.bf16.msra.mxu0 0
        %1010 = vmatprep.subr.bf16.mxu0 0
        %1011 = vmatpush1.bf16.msra.mxu0 0
        %1012 = vmatprep.subr.bf16.mxu0 0
        %1013 = vmatpush1.bf16.msra.mxu0 0
        %1014 = vmatprep.subr.bf16.mxu0 0
        %1015 = vmatpush1.bf16.msra.mxu0 0
        %1016 = vmatprep.subr.bf16.mxu0 0
        %1017 = vmatpush1.bf16.msra.mxu0 0
        %1018 = vmatprep.subr.bf16.mxu0 0
        %1019 = vmatpush1.bf16.msra.mxu0 0
        %1020 = vmatprep.subr.bf16.mxu0 0
        %1021 = vmatpush1.bf16.msra.mxu0 0
        %1022 = vmatprep.subr.bf16.mxu0 0
        %1023 = vmatpush1.bf16.msra.mxu0 0
        %1024 = vmatprep.mubr.bf16.mxu0 0
        %1025 = vmatmul.mubr.bf16.gmra.mrb[0].mxu0 %v984
        %v1026 = vpop.f32.mrb[0].mxu0
        %v1027 = vadd.f32 0.0, %v1026
        %v1028 = vpop.f32.mrb[0].mxu0
        %v1029 = vadd.f32 0.0, %v1028
        %v1030 = vpop.f32.mrb[0].mxu0
        %v1031 = vadd.f32 0.0, %v1030
        %v1032 = vpop.f32.mrb[0].mxu0
        %v1033 = vadd.f32 0.0, %v1032
        %1034 = vmatprep.mubr.bf16.mxu0 0
        %1035 = vmatmul.mubr.bf16.gmra.mrb[0].mxu0 %v985
        %v1036 = vpop.f32.mrb[0].mxu0
        %v1037 = vadd.f32 0.0, %v1036
        %v1038 = vpop.f32.mrb[0].mxu0
        %v1039 = vadd.f32 0.0, %v1038
        %v1040 = vpop.f32.mrb[0].mxu0
        %v1041 = vadd.f32 0.0, %v1040
        %v1042 = vpop.f32.mrb[0].mxu0
        %v1043 = vadd.f32 0.0, %v1042
        %1044 = vmatprep.mubr.bf16.mxu0 0
        %1045 = vmatmul.mubr.bf16.gmra.mrb[0].mxu0 %v986
        %v1046 = vpop.f32.mrb[0].mxu0
        %v1047 = vadd.f32 0.0, %v1046
        %v1048 = vpop.f32.mrb[0].mxu0
        %v1049 = vadd.f32 0.0, %v1048
        %v1050 = vpop.f32.mrb[0].mxu0
        %v1051 = vadd.f32 0.0, %v1050
        %v1052 = vpop.f32.mrb[0].mxu0
        %v1053 = vadd.f32 0.0, %v1052
        %1054 = vmatprep.mubr.bf16.mxu0 0
        %1055 = vmatmul.mubr.bf16.gmra.mrb[0].mxu0 %v987
        %v1056 = vpop.f32.mrb[0].mxu0
        %v1057 = vadd.f32 0.0, %v1056
        %v1058 = vpop.f32.mrb[0].mxu0
        %v1059 = vadd.f32 0.0, %v1058
        %v1060 = vpop.f32.mrb[0].mxu0
        %v1061 = vadd.f32 0.0, %v1060
        %v1062 = vpop.f32.mrb[0].mxu0
        %v1063 = vadd.f32 0.0, %v1062
        %1064 = vdwg.mxu0
        %v1065 = vpack.c.bf16 %v1031, %v1027
        %v1066 = vpack.c.bf16 %v1033, %v1029
        %v1067 = vpack.c.bf16 %v1041, %v1037
        %v1068 = vpack.c.bf16 %v1043, %v1039
        %v1069 = vpack.c.bf16 %v1051, %v1047
        %v1070 = vpack.c.bf16 %v1053, %v1049
        %v1071 = vpack.c.bf16 %v1061, %v1057
        %v1072 = vpack.c.bf16 %v1063, %v1059
        %s1073 = scalar_lea.vmem [#allocation2], 96
        %v1074 = vld [vmem:[%s1073] sm:$0xf]
        %v1075 = vld [vmem:[%s1073 + $0x4] sm:$0xf]
        %v1076 = vld [vmem:[%s1073 + $0x8] sm:$0xf]
        %v1077 = vld [vmem:[%s1073 + $0xc] sm:$0xf]
        %v1078 = vld [vmem:[%s1073 + $0x10] sm:$0xf]
        %v1079 = vld [vmem:[%s1073 + $0x14] sm:$0xf]
        %v1080 = vld [vmem:[%s1073 + $0x18] sm:$0xf]
        %v1081 = vld [vmem:[%s1073 + $0x1c] sm:$0xf]
        %v1090 = vunpack.c.l.b16 %v1074
        %v1091 = vunpack.c.l.b16 %v1075
        %v1092 = vunpack.c.l.b16 %v1076
        %v1093 = vunpack.c.l.b16 %v1077
        %v1094 = vunpack.c.l.b16 %v1078
        %v1095 = vunpack.c.l.b16 %v1079
        %v1096 = vunpack.c.l.b16 %v1080
        %v1097 = vunpack.c.l.b16 %v1081
        %v1098 = vpack.c.b16 %v1091, %v1090
        %v1099 = vpack.c.b16 %v1093, %v1092
        %v1100 = vpack.c.b16 %v1095, %v1094
        %v1101 = vpack.c.b16 %v1097, %v1096
        %1106 = vmatprep.subr.bf16.mxu0 %v733
        %1107 = vmatpush1.bf16.msra.mxu0 %v732
        %1108 = vmatprep.subr.bf16.mxu0 %v735
        %1109 = vmatpush1.bf16.msra.mxu0 %v734
        %1110 = vmatprep.subr.bf16.mxu0 %v737
        %1111 = vmatpush1.bf16.msra.mxu0 %v736
        %1112 = vmatprep.subr.bf16.mxu0 %v739
        %1113 = vmatpush1.bf16.msra.mxu0 %v738
        %1114 = vmatprep.subr.bf16.mxu0 %v741
        %1115 = vmatpush1.bf16.msra.mxu0 %v740
        %1116 = vmatprep.subr.bf16.mxu0 %v743
        %1117 = vmatpush1.bf16.msra.mxu0 %v742
        %1118 = vmatprep.subr.bf16.mxu0 %v745
        %1119 = vmatpush1.bf16.msra.mxu0 %v744
        %1120 = vmatprep.subr.bf16.mxu0 %v747
        %1121 = vmatpush1.bf16.msra.mxu0 %v746
        %1122 = vmatprep.subr.bf16.mxu0 0
        %1123 = vmatpush1.bf16.msra.mxu0 0
        %1124 = vmatprep.subr.bf16.mxu0 0
        %1125 = vmatpush1.bf16.msra.mxu0 0
        %1126 = vmatprep.subr.bf16.mxu0 0
        %1127 = vmatpush1.bf16.msra.mxu0 0
        %1128 = vmatprep.subr.bf16.mxu0 0
        %1129 = vmatpush1.bf16.msra.mxu0 0
        %1130 = vmatprep.subr.bf16.mxu0 0
        %1131 = vmatpush1.bf16.msra.mxu0 0
        %1132 = vmatprep.subr.bf16.mxu0 0
        %1133 = vmatpush1.bf16.msra.mxu0 0
        %1134 = vmatprep.subr.bf16.mxu0 0
        %1135 = vmatpush1.bf16.msra.mxu0 0
        %1136 = vmatprep.subr.bf16.mxu0 0
        %1137 = vmatpush1.bf16.msra.mxu0 0
        %1138 = vmatprep.mubr.bf16.mxu0 0
        %1139 = vmatmul.mubr.bf16.gmra.mrb[0].mxu0 %v1098
        %v1140 = vpop.f32.mrb[0].mxu0
        %v1141 = vadd.f32 0.0, %v1140
        %v1142 = vpop.f32.mrb[0].mxu0
        %v1143 = vadd.f32 0.0, %v1142
        %v1144 = vpop.f32.mrb[0].mxu0
        %v1145 = vadd.f32 0.0, %v1144
        %v1146 = vpop.f32.mrb[0].mxu0
        %v1147 = vadd.f32 0.0, %v1146
        %1148 = vmatprep.mubr.bf16.mxu0 0
        %1149 = vmatmul.mubr.bf16.gmra.mrb[0].mxu0 %v1099
        %v1150 = vpop.f32.mrb[0].mxu0
        %v1151 = vadd.f32 0.0, %v1150
        %v1152 = vpop.f32.mrb[0].mxu0
        %v1153 = vadd.f32 0.0, %v1152
        %v1154 = vpop.f32.mrb[0].mxu0
        %v1155 = vadd.f32 0.0, %v1154
        %v1156 = vpop.f32.mrb[0].mxu0
        %v1157 = vadd.f32 0.0, %v1156
        %1158 = vmatprep.mubr.bf16.mxu0 0
        %1159 = vmatmul.mubr.bf16.gmra.mrb[0].mxu0 %v1100
        %v1160 = vpop.f32.mrb[0].mxu0
        %v1161 = vadd.f32 0.0, %v1160
        %v1162 = vpop.f32.mrb[0].mxu0
        %v1163 = vadd.f32 0.0, %v1162
        %v1164 = vpop.f32.mrb[0].mxu0
        %v1165 = vadd.f32 0.0, %v1164
        %v1166 = vpop.f32.mrb[0].mxu0
        %v1167 = vadd.f32 0.0, %v1166
        %1168 = vmatprep.mubr.bf16.mxu0 0
        %1169 = vmatmul.mubr.bf16.gmra.mrb[0].mxu0 %v1101
        %v1170 = vpop.f32.mrb[0].mxu0
        %v1171 = vadd.f32 0.0, %v1170
        %v1172 = vpop.f32.mrb[0].mxu0
        %v1173 = vadd.f32 0.0, %v1172
        %v1174 = vpop.f32.mrb[0].mxu0
        %v1175 = vadd.f32 0.0, %v1174
        %v1176 = vpop.f32.mrb[0].mxu0
        %v1177 = vadd.f32 0.0, %v1176
        %1178 = vdwg.mxu0
        %v1179 = vpack.c.bf16 %v1145, %v1141
        %v1180 = vpack.c.bf16 %v1147, %v1143
        %v1181 = vpack.c.bf16 %v1155, %v1151
        %v1182 = vpack.c.bf16 %v1157, %v1153
        %v1183 = vpack.c.bf16 %v1165, %v1161
        %v1184 = vpack.c.bf16 %v1167, %v1163
        %v1185 = vpack.c.bf16 %v1175, %v1171
        %v1186 = vpack.c.bf16 %v1177, %v1173
        %v1187 = vld [vmem:[%s6] sm:$0xff]
        %v1188 = vld [vmem:[%s6 + $0x8] sm:$0xff]
        %v1189 = vld [vmem:[%s6 + $0x10] sm:$0xff]
        %v1190 = vld [vmem:[%s6 + $0x18] sm:$0xff]
        %v1191 = vld [vmem:[%s6 + $0x20] sm:$0xff]
        %v1192 = vld [vmem:[%s6 + $0x28] sm:$0xff]
        %v1193 = vld [vmem:[%s6 + $0x30] sm:$0xff]
        %v1194 = vld [vmem:[%s6 + $0x38] sm:$0xff]
        %v1195 = vld [vmem:[%s6 + $0x40] sm:$0xff]
        %v1196 = vld [vmem:[%s6 + $0x48] sm:$0xff]
        %v1197 = vld [vmem:[%s6 + $0x50] sm:$0xff]
        %v1198 = vld [vmem:[%s6 + $0x58] sm:$0xff]
        %v1199 = vld [vmem:[%s6 + $0x60] sm:$0xff]
        %v1200 = vld [vmem:[%s6 + $0x68] sm:$0xff]
        %v1201 = vld [vmem:[%s6 + $0x70] sm:$0xff]
        %v1202 = vld [vmem:[%s6 + $0x78] sm:$0xff]
        %v1203 = vld [vmem:[%s6 + $0x80] sm:$0xff]
        %v1204 = vld [vmem:[%s6 + $0x88] sm:$0xff]
        %v1205 = vld [vmem:[%s6 + $0x90] sm:$0xff]
        %v1206 = vld [vmem:[%s6 + $0x98] sm:$0xff]
        %v1207 = vld [vmem:[%s6 + $0xa0] sm:$0xff]
        %v1208 = vld [vmem:[%s6 + $0xa8] sm:$0xff]
        %v1209 = vld [vmem:[%s6 + $0xb0] sm:$0xff]
        %v1210 = vld [vmem:[%s6 + $0xb8] sm:$0xff]
        %v1211 = vld [vmem:[%s6 + $0xc0] sm:$0xff]
        %v1212 = vld [vmem:[%s6 + $0xc8] sm:$0xff]
        %v1213 = vld [vmem:[%s6 + $0xd0] sm:$0xff]
        %v1214 = vld [vmem:[%s6 + $0xd8] sm:$0xff]
        %v1215 = vld [vmem:[%s6 + $0xe0] sm:$0xff]
        %v1216 = vld [vmem:[%s6 + $0xe8] sm:$0xff]
        %v1217 = vld [vmem:[%s6 + $0xf0] sm:$0xff]
        %v1218 = vld [vmem:[%s6 + $0xf8] sm:$0xff]
        %v1219 = vld [vmem:[%s6 + $0x100] sm:$0xff]
        %v1220 = vld [vmem:[%s6 + $0x108] sm:$0xff]
        %v1221 = vld [vmem:[%s6 + $0x110] sm:$0xff]
        %v1222 = vld [vmem:[%s6 + $0x118] sm:$0xff]
        %v1223 = vld [vmem:[%s6 + $0x120] sm:$0xff]
        %v1224 = vld [vmem:[%s6 + $0x128] sm:$0xff]
        %v1225 = vld [vmem:[%s6 + $0x130] sm:$0xff]
        %v1226 = vld [vmem:[%s6 + $0x138] sm:$0xff]
        %v1227 = vld [vmem:[%s6 + $0x140] sm:$0xff]
        %v1228 = vld [vmem:[%s6 + $0x148] sm:$0xff]
        %v1229 = vld [vmem:[%s6 + $0x150] sm:$0xff]
        %v1230 = vld [vmem:[%s6 + $0x158] sm:$0xff]
        %v1231 = vld [vmem:[%s6 + $0x160] sm:$0xff]
        %v1232 = vld [vmem:[%s6 + $0x168] sm:$0xff]
        %v1233 = vld [vmem:[%s6 + $0x170] sm:$0xff]
        %v1234 = vld [vmem:[%s6 + $0x178] sm:$0xff]
        %v1235 = vld [vmem:[%s6 + $0x180] sm:$0xff]
        %v1236 = vld [vmem:[%s6 + $0x188] sm:$0xff]
        %v1237 = vld [vmem:[%s6 + $0x190] sm:$0xff]
        %v1238 = vld [vmem:[%s6 + $0x198] sm:$0xff]
        %v1239 = vld [vmem:[%s6 + $0x1a0] sm:$0xff]
        %v1240 = vld [vmem:[%s6 + $0x1a8] sm:$0xff]
        %v1241 = vld [vmem:[%s6 + $0x1b0] sm:$0xff]
        %v1242 = vld [vmem:[%s6 + $0x1b8] sm:$0xff]
        %v1243 = vld [vmem:[%s6 + $0x1c0] sm:$0xff]
        %v1244 = vld [vmem:[%s6 + $0x1c8] sm:$0xff]
        %v1245 = vld [vmem:[%s6 + $0x1d0] sm:$0xff]
        %v1246 = vld [vmem:[%s6 + $0x1d8] sm:$0xff]
        %v1247 = vld [vmem:[%s6 + $0x1e0] sm:$0xff]
        %v1248 = vld [vmem:[%s6 + $0x1e8] sm:$0xff]
        %v1249 = vld [vmem:[%s6 + $0x1f0] sm:$0xff]
        %v1250 = vld [vmem:[%s6 + $0x1f8] sm:$0xff]
        %v1251 = vld [vmem:[%s6 + $0x200] sm:$0xff]
        %v1252 = vld [vmem:[%s6 + $0x208] sm:$0xff]
        %v1253 = vld [vmem:[%s6 + $0x210] sm:$0xff]
        %v1254 = vld [vmem:[%s6 + $0x218] sm:$0xff]
        %v1255 = vld [vmem:[%s6 + $0x220] sm:$0xff]
        %v1256 = vld [vmem:[%s6 + $0x228] sm:$0xff]
        %v1257 = vld [vmem:[%s6 + $0x230] sm:$0xff]
        %v1258 = vld [vmem:[%s6 + $0x238] sm:$0xff]
        %v1259 = vld [vmem:[%s6 + $0x240] sm:$0xff]
        %v1260 = vld [vmem:[%s6 + $0x248] sm:$0xff]
        %v1261 = vld [vmem:[%s6 + $0x250] sm:$0xff]
        %v1262 = vld [vmem:[%s6 + $0x258] sm:$0xff]
        %v1263 = vld [vmem:[%s6 + $0x260] sm:$0xff]
        %v1264 = vld [vmem:[%s6 + $0x268] sm:$0xff]
        %v1265 = vld [vmem:[%s6 + $0x270] sm:$0xff]
        %v1266 = vld [vmem:[%s6 + $0x278] sm:$0xff]
        %v1267 = vld [vmem:[%s6 + $0x280] sm:$0xff]
        %v1268 = vld [vmem:[%s6 + $0x288] sm:$0xff]
        %v1269 = vld [vmem:[%s6 + $0x290] sm:$0xff]
        %v1270 = vld [vmem:[%s6 + $0x298] sm:$0xff]
        %v1271 = vld [vmem:[%s6 + $0x2a0] sm:$0xff]
        %v1272 = vld [vmem:[%s6 + $0x2a8] sm:$0xff]
        %v1273 = vld [vmem:[%s6 + $0x2b0] sm:$0xff]
        %v1274 = vld [vmem:[%s6 + $0x2b8] sm:$0xff]
        %v1275 = vld [vmem:[%s6 + $0x2c0] sm:$0xff]
        %v1276 = vld [vmem:[%s6 + $0x2c8] sm:$0xff]
        %v1277 = vld [vmem:[%s6 + $0x2d0] sm:$0xff]
        %v1278 = vld [vmem:[%s6 + $0x2d8] sm:$0xff]
        %v1279 = vld [vmem:[%s6 + $0x2e0] sm:$0xff]
        %v1280 = vld [vmem:[%s6 + $0x2e8] sm:$0xff]
        %v1281 = vld [vmem:[%s6 + $0x2f0] sm:$0xff]
        %v1282 = vld [vmem:[%s6 + $0x2f8] sm:$0xff]
        %v1283 = vld [vmem:[%s6 + $0x300] sm:$0xff]
        %v1284 = vld [vmem:[%s6 + $0x308] sm:$0xff]
        %v1285 = vld [vmem:[%s6 + $0x310] sm:$0xff]
        %v1286 = vld [vmem:[%s6 + $0x318] sm:$0xff]
        %v1287 = vld [vmem:[%s6 + $0x320] sm:$0xff]
        %v1288 = vld [vmem:[%s6 + $0x328] sm:$0xff]
        %v1289 = vld [vmem:[%s6 + $0x330] sm:$0xff]
        %v1290 = vld [vmem:[%s6 + $0x338] sm:$0xff]
        %v1291 = vld [vmem:[%s6 + $0x340] sm:$0xff]
        %v1292 = vld [vmem:[%s6 + $0x348] sm:$0xff]
        %v1293 = vld [vmem:[%s6 + $0x350] sm:$0xff]
        %v1294 = vld [vmem:[%s6 + $0x358] sm:$0xff]
        %v1295 = vld [vmem:[%s6 + $0x360] sm:$0xff]
        %v1296 = vld [vmem:[%s6 + $0x368] sm:$0xff]
        %v1297 = vld [vmem:[%s6 + $0x370] sm:$0xff]
        %v1298 = vld [vmem:[%s6 + $0x378] sm:$0xff]
        %v1299 = vld [vmem:[%s6 + $0x380] sm:$0xff]
        %v1300 = vld [vmem:[%s6 + $0x388] sm:$0xff]
        %v1301 = vld [vmem:[%s6 + $0x390] sm:$0xff]
        %v1302 = vld [vmem:[%s6 + $0x398] sm:$0xff]
        %v1303 = vld [vmem:[%s6 + $0x3a0] sm:$0xff]
        %v1304 = vld [vmem:[%s6 + $0x3a8] sm:$0xff]
        %v1305 = vld [vmem:[%s6 + $0x3b0] sm:$0xff]
        %v1306 = vld [vmem:[%s6 + $0x3b8] sm:$0xff]
        %v1307 = vld [vmem:[%s6 + $0x3c0] sm:$0xff]
        %v1308 = vld [vmem:[%s6 + $0x3c8] sm:$0xff]
        %v1309 = vld [vmem:[%s6 + $0x3d0] sm:$0xff]
        %v1310 = vld [vmem:[%s6 + $0x3d8] sm:$0xff]
        %v1311 = vld [vmem:[%s6 + $0x3e0] sm:$0xff]
        %v1312 = vld [vmem:[%s6 + $0x3e8] sm:$0xff]
        %v1313 = vld [vmem:[%s6 + $0x3f0] sm:$0xff]
        %v1314 = vld [vmem:[%s6 + $0x3f8] sm:$0xff]
        %v1315 = vld [vmem:[#allocation13] sm:$0x3]
        %v1317 = vlaneseq
        %v1318 = vshrl.u32 %v1317, 7
        %v1319 = vsub.s32 0, %v1318
        %v1320 = vrot.slane %v1315, %v1319
        %v1321 = vlaneseq
        %v1322 = vshrl.u32 %v1321, 7
        %v1323 = vsub.s32 1, %v1322
        %v1324 = vrot.slane %v1315, %v1323
        %v1455 = vunpack.c.l.b16 %v1187
        %v1456 = vunpack.c.h.b16 %v1187
        %v1457 = vunpack.c.l.b16 %v1188
        %v1458 = vunpack.c.h.b16 %v1188
        %v1459 = vunpack.c.l.b16 %v1189
        %v1460 = vunpack.c.h.b16 %v1189
        %v1461 = vunpack.c.l.b16 %v1190
        %v1462 = vunpack.c.h.b16 %v1190
        %v1463 = vunpack.c.l.b16 %v1191
        %v1464 = vunpack.c.h.b16 %v1191
        %v1465 = vunpack.c.l.b16 %v1192
        %v1466 = vunpack.c.h.b16 %v1192
        %v1467 = vunpack.c.l.b16 %v1193
        %v1468 = vunpack.c.h.b16 %v1193
        %v1469 = vunpack.c.l.b16 %v1194
        %v1470 = vunpack.c.h.b16 %v1194
        %v1471 = vunpack.c.l.b16 %v1195
        %v1472 = vunpack.c.h.b16 %v1195
        %v1473 = vunpack.c.l.b16 %v1196
        %v1474 = vunpack.c.h.b16 %v1196
        %v1475 = vunpack.c.l.b16 %v1197
        %v1476 = vunpack.c.h.b16 %v1197
        %v1477 = vunpack.c.l.b16 %v1198
        %v1478 = vunpack.c.h.b16 %v1198
        %v1479 = vunpack.c.l.b16 %v1199
        %v1480 = vunpack.c.h.b16 %v1199
        %v1481 = vunpack.c.l.b16 %v1200
        %v1482 = vunpack.c.h.b16 %v1200
        %v1483 = vunpack.c.l.b16 %v1201
        %v1484 = vunpack.c.h.b16 %v1201
        %v1485 = vunpack.c.l.b16 %v1202
        %v1486 = vunpack.c.h.b16 %v1202
        %v1487 = vunpack.c.l.b16 %v1203
        %v1488 = vunpack.c.h.b16 %v1203
        %v1489 = vunpack.c.l.b16 %v1204
        %v1490 = vunpack.c.h.b16 %v1204
        %v1491 = vunpack.c.l.b16 %v1205
        %v1492 = vunpack.c.h.b16 %v1205
        %v1493 = vunpack.c.l.b16 %v1206
        %v1494 = vunpack.c.h.b16 %v1206
        %v1495 = vunpack.c.l.b16 %v1207
        %v1496 = vunpack.c.h.b16 %v1207
        %v1497 = vunpack.c.l.b16 %v1208
        %v1498 = vunpack.c.h.b16 %v1208
        %v1499 = vunpack.c.l.b16 %v1209
        %v1500 = vunpack.c.h.b16 %v1209
        %v1501 = vunpack.c.l.b16 %v1210
        %v1502 = vunpack.c.h.b16 %v1210
        %v1503 = vunpack.c.l.b16 %v1211
        %v1504 = vunpack.c.h.b16 %v1211
        %v1505 = vunpack.c.l.b16 %v1212
        %v1506 = vunpack.c.h.b16 %v1212
        %v1507 = vunpack.c.l.b16 %v1213
        %v1508 = vunpack.c.h.b16 %v1213
        %v1509 = vunpack.c.l.b16 %v1214
        %v1510 = vunpack.c.h.b16 %v1214
        %v1511 = vunpack.c.l.b16 %v1215
        %v1512 = vunpack.c.h.b16 %v1215
        %v1513 = vunpack.c.l.b16 %v1216
        %v1514 = vunpack.c.h.b16 %v1216
        %v1515 = vunpack.c.l.b16 %v1217
        %v1516 = vunpack.c.h.b16 %v1217
        %v1517 = vunpack.c.l.b16 %v1218
        %v1518 = vunpack.c.h.b16 %v1218
        %v1519 = vunpack.c.l.b16 %v1219
        %v1520 = vunpack.c.h.b16 %v1219
        %v1521 = vunpack.c.l.b16 %v1220
        %v1522 = vunpack.c.h.b16 %v1220
        %v1523 = vunpack.c.l.b16 %v1221
        %v1524 = vunpack.c.h.b16 %v1221
        %v1525 = vunpack.c.l.b16 %v1222
        %v1526 = vunpack.c.h.b16 %v1222
        %v1527 = vunpack.c.l.b16 %v1223
        %v1528 = vunpack.c.h.b16 %v1223
        %v1529 = vunpack.c.l.b16 %v1224
        %v1530 = vunpack.c.h.b16 %v1224
        %v1531 = vunpack.c.l.b16 %v1225
        %v1532 = vunpack.c.h.b16 %v1225
        %v1533 = vunpack.c.l.b16 %v1226
        %v1534 = vunpack.c.h.b16 %v1226
        %v1535 = vunpack.c.l.b16 %v1227
        %v1536 = vunpack.c.h.b16 %v1227
        %v1537 = vunpack.c.l.b16 %v1228
        %v1538 = vunpack.c.h.b16 %v1228
        %v1539 = vunpack.c.l.b16 %v1229
        %v1540 = vunpack.c.h.b16 %v1229
        %v1541 = vunpack.c.l.b16 %v1230
        %v1542 = vunpack.c.h.b16 %v1230
        %v1543 = vunpack.c.l.b16 %v1231
        %v1544 = vunpack.c.h.b16 %v1231
        %v1545 = vunpack.c.l.b16 %v1232
        %v1546 = vunpack.c.h.b16 %v1232
        %v1547 = vunpack.c.l.b16 %v1233
        %v1548 = vunpack.c.h.b16 %v1233
        %v1549 = vunpack.c.l.b16 %v1234
        %v1550 = vunpack.c.h.b16 %v1234
        %v1551 = vunpack.c.l.b16 %v1235
        %v1552 = vunpack.c.h.b16 %v1235
        %v1553 = vunpack.c.l.b16 %v1236
        %v1554 = vunpack.c.h.b16 %v1236
        %v1555 = vunpack.c.l.b16 %v1237
        %v1556 = vunpack.c.h.b16 %v1237
        %v1557 = vunpack.c.l.b16 %v1238
        %v1558 = vunpack.c.h.b16 %v1238
        %v1559 = vunpack.c.l.b16 %v1239
        %v1560 = vunpack.c.h.b16 %v1239
        %v1561 = vunpack.c.l.b16 %v1240
        %v1562 = vunpack.c.h.b16 %v1240
        %v1563 = vunpack.c.l.b16 %v1241
        %v1564 = vunpack.c.h.b16 %v1241
        %v1565 = vunpack.c.l.b16 %v1242
        %v1566 = vunpack.c.h.b16 %v1242
        %v1567 = vunpack.c.l.b16 %v1243
        %v1568 = vunpack.c.h.b16 %v1243
        %v1569 = vunpack.c.l.b16 %v1244
        %v1570 = vunpack.c.h.b16 %v1244
        %v1571 = vunpack.c.l.b16 %v1245
        %v1572 = vunpack.c.h.b16 %v1245
        %v1573 = vunpack.c.l.b16 %v1246
        %v1574 = vunpack.c.h.b16 %v1246
        %v1575 = vunpack.c.l.b16 %v1247
        %v1576 = vunpack.c.h.b16 %v1247
        %v1577 = vunpack.c.l.b16 %v1248
        %v1578 = vunpack.c.h.b16 %v1248
        %v1579 = vunpack.c.l.b16 %v1249
        %v1580 = vunpack.c.h.b16 %v1249
        %v1581 = vunpack.c.l.b16 %v1250
        %v1582 = vunpack.c.h.b16 %v1250
        %v1583 = vunpack.c.l.b16 %v1251
        %v1584 = vunpack.c.h.b16 %v1251
        %v1585 = vunpack.c.l.b16 %v1252
        %v1586 = vunpack.c.h.b16 %v1252
        %v1587 = vunpack.c.l.b16 %v1253
        %v1588 = vunpack.c.h.b16 %v1253
        %v1589 = vunpack.c.l.b16 %v1254
        %v1590 = vunpack.c.h.b16 %v1254
        %v1591 = vunpack.c.l.b16 %v1255
        %v1592 = vunpack.c.h.b16 %v1255
        %v1593 = vunpack.c.l.b16 %v1256
        %v1594 = vunpack.c.h.b16 %v1256
        %v1595 = vunpack.c.l.b16 %v1257
        %v1596 = vunpack.c.h.b16 %v1257
        %v1597 = vunpack.c.l.b16 %v1258
        %v1598 = vunpack.c.h.b16 %v1258
        %v1599 = vunpack.c.l.b16 %v1259
        %v1600 = vunpack.c.h.b16 %v1259
        %v1601 = vunpack.c.l.b16 %v1260
        %v1602 = vunpack.c.h.b16 %v1260
        %v1603 = vunpack.c.l.b16 %v1261
        %v1604 = vunpack.c.h.b16 %v1261
        %v1605 = vunpack.c.l.b16 %v1262
        %v1606 = vunpack.c.h.b16 %v1262
        %v1607 = vunpack.c.l.b16 %v1263
        %v1608 = vunpack.c.h.b16 %v1263
        %v1609 = vunpack.c.l.b16 %v1264
        %v1610 = vunpack.c.h.b16 %v1264
        %v1611 = vunpack.c.l.b16 %v1265
        %v1612 = vunpack.c.h.b16 %v1265
        %v1613 = vunpack.c.l.b16 %v1266
        %v1614 = vunpack.c.h.b16 %v1266
        %v1615 = vunpack.c.l.b16 %v1267
        %v1616 = vunpack.c.h.b16 %v1267
        %v1617 = vunpack.c.l.b16 %v1268
        %v1618 = vunpack.c.h.b16 %v1268
        %v1619 = vunpack.c.l.b16 %v1269
        %v1620 = vunpack.c.h.b16 %v1269
        %v1621 = vunpack.c.l.b16 %v1270
        %v1622 = vunpack.c.h.b16 %v1270
        %v1623 = vunpack.c.l.b16 %v1271
        %v1624 = vunpack.c.h.b16 %v1271
        %v1625 = vunpack.c.l.b16 %v1272
        %v1626 = vunpack.c.h.b16 %v1272
        %v1627 = vunpack.c.l.b16 %v1273
        %v1628 = vunpack.c.h.b16 %v1273
        %v1629 = vunpack.c.l.b16 %v1274
        %v1630 = vunpack.c.h.b16 %v1274
        %v1631 = vunpack.c.l.b16 %v1275
        %v1632 = vunpack.c.h.b16 %v1275
        %v1633 = vunpack.c.l.b16 %v1276
        %v1634 = vunpack.c.h.b16 %v1276
        %v1635 = vunpack.c.l.b16 %v1277
        %v1636 = vunpack.c.h.b16 %v1277
        %v1637 = vunpack.c.l.b16 %v1278
        %v1638 = vunpack.c.h.b16 %v1278
        %v1639 = vunpack.c.l.b16 %v1279
        %v1640 = vunpack.c.h.b16 %v1279
        %v1641 = vunpack.c.l.b16 %v1280
        %v1642 = vunpack.c.h.b16 %v1280
        %v1643 = vunpack.c.l.b16 %v1281
        %v1644 = vunpack.c.h.b16 %v1281
        %v1645 = vunpack.c.l.b16 %v1282
        %v1646 = vunpack.c.h.b16 %v1282
        %v1647 = vunpack.c.l.b16 %v1283
        %v1648 = vunpack.c.h.b16 %v1283
        %v1649 = vunpack.c.l.b16 %v1284
        %v1650 = vunpack.c.h.b16 %v1284
        %v1651 = vunpack.c.l.b16 %v1285
        %v1652 = vunpack.c.h.b16 %v1285
        %v1653 = vunpack.c.l.b16 %v1286
        %v1654 = vunpack.c.h.b16 %v1286
        %v1655 = vunpack.c.l.b16 %v1287
        %v1656 = vunpack.c.h.b16 %v1287
        %v1657 = vunpack.c.l.b16 %v1288
        %v1658 = vunpack.c.h.b16 %v1288
        %v1659 = vunpack.c.l.b16 %v1289
        %v1660 = vunpack.c.h.b16 %v1289
        %v1661 = vunpack.c.l.b16 %v1290
        %v1662 = vunpack.c.h.b16 %v1290
        %v1663 = vunpack.c.l.b16 %v1291
        %v1664 = vunpack.c.h.b16 %v1291
        %v1665 = vunpack.c.l.b16 %v1292
        %v1666 = vunpack.c.h.b16 %v1292
        %v1667 = vunpack.c.l.b16 %v1293
        %v1668 = vunpack.c.h.b16 %v1293
        %v1669 = vunpack.c.l.b16 %v1294
        %v1670 = vunpack.c.h.b16 %v1294
        %v1671 = vunpack.c.l.b16 %v1295
        %v1672 = vunpack.c.h.b16 %v1295
        %v1673 = vunpack.c.l.b16 %v1296
        %v1674 = vunpack.c.h.b16 %v1296
        %v1675 = vunpack.c.l.b16 %v1297
        %v1676 = vunpack.c.h.b16 %v1297
        %v1677 = vunpack.c.l.b16 %v1298
        %v1678 = vunpack.c.h.b16 %v1298
        %v1679 = vunpack.c.l.b16 %v1299
        %v1680 = vunpack.c.h.b16 %v1299
        %v1681 = vunpack.c.l.b16 %v1300
        %v1682 = vunpack.c.h.b16 %v1300
        %v1683 = vunpack.c.l.b16 %v1301
        %v1684 = vunpack.c.h.b16 %v1301
        %v1685 = vunpack.c.l.b16 %v1302
        %v1686 = vunpack.c.h.b16 %v1302
        %v1687 = vunpack.c.l.b16 %v1303
        %v1688 = vunpack.c.h.b16 %v1303
        %v1689 = vunpack.c.l.b16 %v1304
        %v1690 = vunpack.c.h.b16 %v1304
        %v1691 = vunpack.c.l.b16 %v1305
        %v1692 = vunpack.c.h.b16 %v1305
        %v1693 = vunpack.c.l.b16 %v1306
        %v1694 = vunpack.c.h.b16 %v1306
        %v1695 = vunpack.c.l.b16 %v1307
        %v1696 = vunpack.c.h.b16 %v1307
        %v1697 = vunpack.c.l.b16 %v1308
        %v1698 = vunpack.c.h.b16 %v1308
        %v1699 = vunpack.c.l.b16 %v1309
        %v1700 = vunpack.c.h.b16 %v1309
        %v1701 = vunpack.c.l.b16 %v1310
        %v1702 = vunpack.c.h.b16 %v1310
        %v1703 = vunpack.c.l.b16 %v1311
        %v1704 = vunpack.c.h.b16 %v1311
        %v1705 = vunpack.c.l.b16 %v1312
        %v1706 = vunpack.c.h.b16 %v1312
        %v1707 = vunpack.c.l.b16 %v1313
        %v1708 = vunpack.c.h.b16 %v1313
        %v1709 = vunpack.c.l.b16 %v1314
        %v1710 = vunpack.c.h.b16 %v1314
        %v1711 = vpack.c.b16 %v1457, %v1455
        %v1712 = vpack.c.b16 %v1458, %v1456
        %v1713 = vpack.c.b16 %v1461, %v1459
        %v1714 = vpack.c.b16 %v1462, %v1460
        %v1715 = vpack.c.b16 %v1465, %v1463
        %v1716 = vpack.c.b16 %v1466, %v1464
        %v1717 = vpack.c.b16 %v1469, %v1467
        %v1718 = vpack.c.b16 %v1470, %v1468
        %v1719 = vpack.c.b16 %v1473, %v1471
        %v1720 = vpack.c.b16 %v1474, %v1472
        %v1721 = vpack.c.b16 %v1477, %v1475
        %v1722 = vpack.c.b16 %v1478, %v1476
        %v1723 = vpack.c.b16 %v1481, %v1479
        %v1724 = vpack.c.b16 %v1482, %v1480
        %v1725 = vpack.c.b16 %v1485, %v1483
        %v1726 = vpack.c.b16 %v1486, %v1484
        %v1727 = vpack.c.b16 %v1489, %v1487
        %v1728 = vpack.c.b16 %v1490, %v1488
        %v1729 = vpack.c.b16 %v1493, %v1491
        %v1730 = vpack.c.b16 %v1494, %v1492
        %v1731 = vpack.c.b16 %v1497, %v1495
        %v1732 = vpack.c.b16 %v1498, %v1496
        %v1733 = vpack.c.b16 %v1501, %v1499
        %v1734 = vpack.c.b16 %v1502, %v1500
        %v1735 = vpack.c.b16 %v1505, %v1503
        %v1736 = vpack.c.b16 %v1506, %v1504
        %v1737 = vpack.c.b16 %v1509, %v1507
        %v1738 = vpack.c.b16 %v1510, %v1508
        %v1739 = vpack.c.b16 %v1513, %v1511
        %v1740 = vpack.c.b16 %v1514, %v1512
        %v1741 = vpack.c.b16 %v1517, %v1515
        %v1742 = vpack.c.b16 %v1518, %v1516
        %v1743 = vpack.c.b16 %v1521, %v1519
        %v1744 = vpack.c.b16 %v1522, %v1520
        %v1745 = vpack.c.b16 %v1525, %v1523
        %v1746 = vpack.c.b16 %v1526, %v1524
        %v1747 = vpack.c.b16 %v1529, %v1527
        %v1748 = vpack.c.b16 %v1530, %v1528
        %v1749 = vpack.c.b16 %v1533, %v1531
        %v1750 = vpack.c.b16 %v1534, %v1532
        %v1751 = vpack.c.b16 %v1537, %v1535
        %v1752 = vpack.c.b16 %v1538, %v1536
        %v1753 = vpack.c.b16 %v1541, %v1539
        %v1754 = vpack.c.b16 %v1542, %v1540
        %v1755 = vpack.c.b16 %v1545, %v1543
        %v1756 = vpack.c.b16 %v1546, %v1544
        %v1757 = vpack.c.b16 %v1549, %v1547
        %v1758 = vpack.c.b16 %v1550, %v1548
        %v1759 = vpack.c.b16 %v1553, %v1551
        %v1760 = vpack.c.b16 %v1554, %v1552
        %v1761 = vpack.c.b16 %v1557, %v1555
        %v1762 = vpack.c.b16 %v1558, %v1556
        %v1763 = vpack.c.b16 %v1561, %v1559
        %v1764 = vpack.c.b16 %v1562, %v1560
        %v1765 = vpack.c.b16 %v1565, %v1563
        %v1766 = vpack.c.b16 %v1566, %v1564
        %v1767 = vpack.c.b16 %v1569, %v1567
        %v1768 = vpack.c.b16 %v1570, %v1568
        %v1769 = vpack.c.b16 %v1573, %v1571
        %v1770 = vpack.c.b16 %v1574, %v1572
        %v1771 = vpack.c.b16 %v1577, %v1575
        %v1772 = vpack.c.b16 %v1578, %v1576
        %v1773 = vpack.c.b16 %v1581, %v1579
        %v1774 = vpack.c.b16 %v1582, %v1580
        %v1775 = vpack.c.b16 %v1585, %v1583
        %v1776 = vpack.c.b16 %v1586, %v1584
        %v1777 = vpack.c.b16 %v1589, %v1587
        %v1778 = vpack.c.b16 %v1590, %v1588
        %v1779 = vpack.c.b16 %v1593, %v1591
        %v1780 = vpack.c.b16 %v1594, %v1592
        %v1781 = vpack.c.b16 %v1597, %v1595
        %v1782 = vpack.c.b16 %v1598, %v1596
        %v1783 = vpack.c.b16 %v1601, %v1599
        %v1784 = vpack.c.b16 %v1602, %v1600
        %v1785 = vpack.c.b16 %v1605, %v1603
        %v1786 = vpack.c.b16 %v1606, %v1604
        %v1787 = vpack.c.b16 %v1609, %v1607
        %v1788 = vpack.c.b16 %v1610, %v1608
        %v1789 = vpack.c.b16 %v1613, %v1611
        %v1790 = vpack.c.b16 %v1614, %v1612
        %v1791 = vpack.c.b16 %v1617, %v1615
        %v1792 = vpack.c.b16 %v1618, %v1616
        %v1793 = vpack.c.b16 %v1621, %v1619
        %v1794 = vpack.c.b16 %v1622, %v1620
        %v1795 = vpack.c.b16 %v1625, %v1623
        %v1796 = vpack.c.b16 %v1626, %v1624
        %v1797 = vpack.c.b16 %v1629, %v1627
        %v1798 = vpack.c.b16 %v1630, %v1628
        %v1799 = vpack.c.b16 %v1633, %v1631
        %v1800 = vpack.c.b16 %v1634, %v1632
        %v1801 = vpack.c.b16 %v1637, %v1635
        %v1802 = vpack.c.b16 %v1638, %v1636
        %v1803 = vpack.c.b16 %v1641, %v1639
        %v1804 = vpack.c.b16 %v1642, %v1640
        %v1805 = vpack.c.b16 %v1645, %v1643
        %v1806 = vpack.c.b16 %v1646, %v1644
        %v1807 = vpack.c.b16 %v1649, %v1647
        %v1808 = vpack.c.b16 %v1650, %v1648
        %v1809 = vpack.c.b16 %v1653, %v1651
        %v1810 = vpack.c.b16 %v1654, %v1652
        %v1811 = vpack.c.b16 %v1657, %v1655
        %v1812 = vpack.c.b16 %v1658, %v1656
        %v1813 = vpack.c.b16 %v1661, %v1659
        %v1814 = vpack.c.b16 %v1662, %v1660
        %v1815 = vpack.c.b16 %v1665, %v1663
        %v1816 = vpack.c.b16 %v1666, %v1664
        %v1817 = vpack.c.b16 %v1669, %v1667
        %v1818 = vpack.c.b16 %v1670, %v1668
        %v1819 = vpack.c.b16 %v1673, %v1671
        %v1820 = vpack.c.b16 %v1674, %v1672
        %v1821 = vpack.c.b16 %v1677, %v1675
        %v1822 = vpack.c.b16 %v1678, %v1676
        %v1823 = vpack.c.b16 %v1681, %v1679
        %v1824 = vpack.c.b16 %v1682, %v1680
        %v1825 = vpack.c.b16 %v1685, %v1683
        %v1826 = vpack.c.b16 %v1686, %v1684
        %v1827 = vpack.c.b16 %v1689, %v1687
        %v1828 = vpack.c.b16 %v1690, %v1688
        %v1829 = vpack.c.b16 %v1693, %v1691
        %v1830 = vpack.c.b16 %v1694, %v1692
        %v1831 = vpack.c.b16 %v1697, %v1695
        %v1832 = vpack.c.b16 %v1698, %v1696
        %v1833 = vpack.c.b16 %v1701, %v1699
        %v1834 = vpack.c.b16 %v1702, %v1700
        %v1835 = vpack.c.b16 %v1705, %v1703
        %v1836 = vpack.c.b16 %v1706, %v1704
        %v1837 = vpack.c.b16 %v1709, %v1707
        %v1838 = vpack.c.b16 %v1710, %v1708
        %1967 = vmatprep.subr.bf16.mxu0 %v1712
        %1968 = vmatpush1.bf16.msra.mxu0 %v1711
        %1969 = vmatprep.subr.bf16.mxu0 %v1714
        %1970 = vmatpush1.bf16.msra.mxu0 %v1713
        %1971 = vmatprep.subr.bf16.mxu0 %v1716
        %1972 = vmatpush1.bf16.msra.mxu0 %v1715
        %1973 = vmatprep.subr.bf16.mxu0 %v1718
        %1974 = vmatpush1.bf16.msra.mxu0 %v1717
        %1975 = vmatprep.subr.bf16.mxu0 %v1720
        %1976 = vmatpush1.bf16.msra.mxu0 %v1719
        %1977 = vmatprep.subr.bf16.mxu0 %v1722
        %1978 = vmatpush1.bf16.msra.mxu0 %v1721
        %1979 = vmatprep.subr.bf16.mxu0 %v1724
        %1980 = vmatpush1.bf16.msra.mxu0 %v1723
        %1981 = vmatprep.subr.bf16.mxu0 %v1726
        %1982 = vmatpush1.bf16.msra.mxu0 %v1725
        %1983 = vmatprep.subr.bf16.mxu0 %v1728
        %1984 = vmatpush1.bf16.msra.mxu0 %v1727
        %1985 = vmatprep.subr.bf16.mxu0 %v1730
        %1986 = vmatpush1.bf16.msra.mxu0 %v1729
        %1987 = vmatprep.subr.bf16.mxu0 %v1732
        %1988 = vmatpush1.bf16.msra.mxu0 %v1731
        %1989 = vmatprep.subr.bf16.mxu0 %v1734
        %1990 = vmatpush1.bf16.msra.mxu0 %v1733
        %1991 = vmatprep.subr.bf16.mxu0 %v1736
        %1992 = vmatpush1.bf16.msra.mxu0 %v1735
        %1993 = vmatprep.subr.bf16.mxu0 %v1738
        %1994 = vmatpush1.bf16.msra.mxu0 %v1737
        %1995 = vmatprep.subr.bf16.mxu0 %v1740
        %1996 = vmatpush1.bf16.msra.mxu0 %v1739
        %1997 = vmatprep.subr.bf16.mxu0 %v1742
        %1998 = vmatpush1.bf16.msra.mxu0 %v1741
        %1999 = vmatprep.mubr.bf16.mxu0 %v838
        %2000 = vmatmul.mubr.bf16.gmra.mrb[0].mxu0 %v837
        %v2001 = vpop.f32.mrb[0].mxu0
        %v2002 = vadd.f32 %v1320, %v2001
        %v2003 = vpop.f32.mrb[0].mxu0
        %v2004 = vadd.f32 %v1324, %v2003
        %v2005 = vpop.f32.mrb[0].mxu0
        %v2006 = vadd.f32 %v1320, %v2005
        %v2007 = vpop.f32.mrb[0].mxu0
        %v2008 = vadd.f32 %v1324, %v2007
        %2009 = vmatprep.mubr.bf16.mxu0 %v840
        %2010 = vmatmul.mubr.bf16.gmra.mrb[0].mxu0 %v839
        %v2011 = vpop.f32.mrb[0].mxu0
        %v2012 = vadd.f32 %v1320, %v2011
        %v2013 = vpop.f32.mrb[0].mxu0
        %v2014 = vadd.f32 %v1324, %v2013
        %v2015 = vpop.f32.mrb[0].mxu0
        %v2016 = vadd.f32 %v1320, %v2015
        %v2017 = vpop.f32.mrb[0].mxu0
        %v2018 = vadd.f32 %v1324, %v2017
        %2019 = vmatprep.mubr.bf16.mxu0 %v842
        %2020 = vmatmul.mubr.bf16.gmra.mrb[0].mxu0 %v841
        %v2021 = vpop.f32.mrb[0].mxu0
        %v2022 = vadd.f32 %v1320, %v2021
        %v2023 = vpop.f32.mrb[0].mxu0
        %v2024 = vadd.f32 %v1324, %v2023
        %v2025 = vpop.f32.mrb[0].mxu0
        %v2026 = vadd.f32 %v1320, %v2025
        %v2027 = vpop.f32.mrb[0].mxu0
        %v2028 = vadd.f32 %v1324, %v2027
        %2029 = vmatprep.mubr.bf16.mxu0 %v844
        %2030 = vmatmul.mubr.bf16.gmra.mrb[0].mxu0 %v843
        %v2031 = vpop.f32.mrb[0].mxu0
        %v2032 = vadd.f32 %v1320, %v2031
        %v2033 = vpop.f32.mrb[0].mxu0
        %v2034 = vadd.f32 %v1324, %v2033
        %v2035 = vpop.f32.mrb[0].mxu0
        %v2036 = vadd.f32 %v1320, %v2035
        %v2037 = vpop.f32.mrb[0].mxu0
        %v2038 = vadd.f32 %v1324, %v2037
        %2039 = vdwg.mxu0
        %2040 = vmatprep.subr.bf16.mxu0 %v1744
        %2041 = vmatpush1.bf16.msra.mxu0 %v1743
        %2042 = vmatprep.subr.bf16.mxu0 %v1746
        %2043 = vmatpush1.bf16.msra.mxu0 %v1745
        %2044 = vmatprep.subr.bf16.mxu0 %v1748
        %2045 = vmatpush1.bf16.msra.mxu0 %v1747
        %2046 = vmatprep.subr.bf16.mxu0 %v1750
        %2047 = vmatpush1.bf16.msra.mxu0 %v1749
        %2048 = vmatprep.subr.bf16.mxu0 %v1752
        %2049 = vmatpush1.bf16.msra.mxu0 %v1751
        %2050 = vmatprep.subr.bf16.mxu0 %v1754
        %2051 = vmatpush1.bf16.msra.mxu0 %v1753
        %2052 = vmatprep.subr.bf16.mxu0 %v1756
        %2053 = vmatpush1.bf16.msra.mxu0 %v1755
        %2054 = vmatprep.subr.bf16.mxu0 %v1758
        %2055 = vmatpush1.bf16.msra.mxu0 %v1757
        %2056 = vmatprep.subr.bf16.mxu0 %v1760
        %2057 = vmatpush1.bf16.msra.mxu0 %v1759
        %2058 = vmatprep.subr.bf16.mxu0 %v1762
        %2059 = vmatpush1.bf16.msra.mxu0 %v1761
        %2060 = vmatprep.subr.bf16.mxu0 %v1764
        %2061 = vmatpush1.bf16.msra.mxu0 %v1763
        %2062 = vmatprep.subr.bf16.mxu0 %v1766
        %2063 = vmatpush1.bf16.msra.mxu0 %v1765
        %2064 = vmatprep.subr.bf16.mxu0 %v1768
        %2065 = vmatpush1.bf16.msra.mxu0 %v1767
        %2066 = vmatprep.subr.bf16.mxu0 %v1770
        %2067 = vmatpush1.bf16.msra.mxu0 %v1769
        %2068 = vmatprep.subr.bf16.mxu0 %v1772
        %2069 = vmatpush1.bf16.msra.mxu0 %v1771
        %2070 = vmatprep.subr.bf16.mxu0 %v1774
        %2071 = vmatpush1.bf16.msra.mxu0 %v1773
        %2072 = vmatprep.mubr.bf16.mxu0 %v952
        %2073 = vmatmul.mubr.bf16.gmra.mrb[0].mxu0 %v951
        %v2074 = vpop.f32.mrb[0].mxu0
        %v2075 = vadd.f32 %v2002, %v2074
        %v2076 = vpop.f32.mrb[0].mxu0
        %v2077 = vadd.f32 %v2004, %v2076
        %v2078 = vpop.f32.mrb[0].mxu0
        %v2079 = vadd.f32 %v2006, %v2078
        %v2080 = vpop.f32.mrb[0].mxu0
        %v2081 = vadd.f32 %v2008, %v2080
        %2082 = vmatprep.mubr.bf16.mxu0 %v954
        %2083 = vmatmul.mubr.bf16.gmra.mrb[0].mxu0 %v953
        %v2084 = vpop.f32.mrb[0].mxu0
        %v2085 = vadd.f32 %v2012, %v2084
        %v2086 = vpop.f32.mrb[0].mxu0
        %v2087 = vadd.f32 %v2014, %v2086
        %v2088 = vpop.f32.mrb[0].mxu0
        %v2089 = vadd.f32 %v2016, %v2088
        %v2090 = vpop.f32.mrb[0].mxu0
        %v2091 = vadd.f32 %v2018, %v2090
        %2092 = vmatprep.mubr.bf16.mxu0 %v956
        %2093 = vmatmul.mubr.bf16.gmra.mrb[0].mxu0 %v955
        %v2094 = vpop.f32.mrb[0].mxu0
        %v2095 = vadd.f32 %v2022, %v2094
        %v2096 = vpop.f32.mrb[0].mxu0
        %v2097 = vadd.f32 %v2024, %v2096
        %v2098 = vpop.f32.mrb[0].mxu0
        %v2099 = vadd.f32 %v2026, %v2098
        %v2100 = vpop.f32.mrb[0].mxu0
        %v2101 = vadd.f32 %v2028, %v2100
        %2102 = vmatprep.mubr.bf16.mxu0 %v958
        %2103 = vmatmul.mubr.bf16.gmra.mrb[0].mxu0 %v957
        %v2104 = vpop.f32.mrb[0].mxu0
        %v2105 = vadd.f32 %v2032, %v2104
        %v2106 = vpop.f32.mrb[0].mxu0
        %v2107 = vadd.f32 %v2034, %v2106
        %v2108 = vpop.f32.mrb[0].mxu0
        %v2109 = vadd.f32 %v2036, %v2108
        %v2110 = vpop.f32.mrb[0].mxu0
        %v2111 = vadd.f32 %v2038, %v2110
        %2112 = vdwg.mxu0
        %2113 = vmatprep.subr.bf16.mxu0 %v1776
        %2114 = vmatpush1.bf16.msra.mxu0 %v1775
        %2115 = vmatprep.subr.bf16.mxu0 %v1778
        %2116 = vmatpush1.bf16.msra.mxu0 %v1777
        %2117 = vmatprep.subr.bf16.mxu0 %v1780
        %2118 = vmatpush1.bf16.msra.mxu0 %v1779
        %2119 = vmatprep.subr.bf16.mxu0 %v1782
        %2120 = vmatpush1.bf16.msra.mxu0 %v1781
        %2121 = vmatprep.subr.bf16.mxu0 %v1784
        %2122 = vmatpush1.bf16.msra.mxu0 %v1783
        %2123 = vmatprep.subr.bf16.mxu0 %v1786
        %2124 = vmatpush1.bf16.msra.mxu0 %v1785
        %2125 = vmatprep.subr.bf16.mxu0 %v1788
        %2126 = vmatpush1.bf16.msra.mxu0 %v1787
        %2127 = vmatprep.subr.bf16.mxu0 %v1790
        %2128 = vmatpush1.bf16.msra.mxu0 %v1789
        %2129 = vmatprep.subr.bf16.mxu0 %v1792
        %2130 = vmatpush1.bf16.msra.mxu0 %v1791
        %2131 = vmatprep.subr.bf16.mxu0 %v1794
        %2132 = vmatpush1.bf16.msra.mxu0 %v1793
        %2133 = vmatprep.subr.bf16.mxu0 %v1796
        %2134 = vmatpush1.bf16.msra.mxu0 %v1795
        %2135 = vmatprep.subr.bf16.mxu0 %v1798
        %2136 = vmatpush1.bf16.msra.mxu0 %v1797
        %2137 = vmatprep.subr.bf16.mxu0 %v1800
        %2138 = vmatpush1.bf16.msra.mxu0 %v1799
        %2139 = vmatprep.subr.bf16.mxu0 %v1802
        %2140 = vmatpush1.bf16.msra.mxu0 %v1801
        %2141 = vmatprep.subr.bf16.mxu0 %v1804
        %2142 = vmatpush1.bf16.msra.mxu0 %v1803
        %2143 = vmatprep.subr.bf16.mxu0 %v1806
        %2144 = vmatpush1.bf16.msra.mxu0 %v1805
        %2145 = vmatprep.mubr.bf16.mxu0 %v1066
        %2146 = vmatmul.mubr.bf16.gmra.mrb[0].mxu0 %v1065
        %v2147 = vpop.f32.mrb[0].mxu0
        %v2148 = vadd.f32 %v2075, %v2147
        %v2149 = vpop.f32.mrb[0].mxu0
        %v2150 = vadd.f32 %v2077, %v2149
        %v2151 = vpop.f32.mrb[0].mxu0
        %v2152 = vadd.f32 %v2079, %v2151
        %v2153 = vpop.f32.mrb[0].mxu0
        %v2154 = vadd.f32 %v2081, %v2153
        %2155 = vmatprep.mubr.bf16.mxu0 %v1068
        %2156 = vmatmul.mubr.bf16.gmra.mrb[0].mxu0 %v1067
        %v2157 = vpop.f32.mrb[0].mxu0
        %v2158 = vadd.f32 %v2085, %v2157
        %v2159 = vpop.f32.mrb[0].mxu0
        %v2160 = vadd.f32 %v2087, %v2159
        %v2161 = vpop.f32.mrb[0].mxu0
        %v2162 = vadd.f32 %v2089, %v2161
        %v2163 = vpop.f32.mrb[0].mxu0
        %v2164 = vadd.f32 %v2091, %v2163
        %2165 = vmatprep.mubr.bf16.mxu0 %v1070
        %2166 = vmatmul.mubr.bf16.gmra.mrb[0].mxu0 %v1069
        %v2167 = vpop.f32.mrb[0].mxu0
        %v2168 = vadd.f32 %v2095, %v2167
        %v2169 = vpop.f32.mrb[0].mxu0
        %v2170 = vadd.f32 %v2097, %v2169
        %v2171 = vpop.f32.mrb[0].mxu0
        %v2172 = vadd.f32 %v2099, %v2171
        %v2173 = vpop.f32.mrb[0].mxu0
        %v2174 = vadd.f32 %v2101, %v2173
        %2175 = vmatprep.mubr.bf16.mxu0 %v1072
        %2176 = vmatmul.mubr.bf16.gmra.mrb[0].mxu0 %v1071
        %v2177 = vpop.f32.mrb[0].mxu0
        %v2178 = vadd.f32 %v2105, %v2177
        %v2179 = vpop.f32.mrb[0].mxu0
        %v2180 = vadd.f32 %v2107, %v2179
        %v2181 = vpop.f32.mrb[0].mxu0
        %v2182 = vadd.f32 %v2109, %v2181
        %v2183 = vpop.f32.mrb[0].mxu0
        %v2184 = vadd.f32 %v2111, %v2183
        %2185 = vdwg.mxu0
        %2186 = vmatprep.subr.bf16.mxu0 %v1808
        %2187 = vmatpush1.bf16.msra.mxu0 %v1807
        %2188 = vmatprep.subr.bf16.mxu0 %v1810
        %2189 = vmatpush1.bf16.msra.mxu0 %v1809
        %2190 = vmatprep.subr.bf16.mxu0 %v1812
        %2191 = vmatpush1.bf16.msra.mxu0 %v1811
        %2192 = vmatprep.subr.bf16.mxu0 %v1814
        %2193 = vmatpush1.bf16.msra.mxu0 %v1813
        %2194 = vmatprep.subr.bf16.mxu0 %v1816
        %2195 = vmatpush1.bf16.msra.mxu0 %v1815
        %2196 = vmatprep.subr.bf16.mxu0 %v1818
        %2197 = vmatpush1.bf16.msra.mxu0 %v1817
        %2198 = vmatprep.subr.bf16.mxu0 %v1820
        %2199 = vmatpush1.bf16.msra.mxu0 %v1819
        %2200 = vmatprep.subr.bf16.mxu0 %v1822
        %2201 = vmatpush1.bf16.msra.mxu0 %v1821
        %2202 = vmatprep.subr.bf16.mxu0 %v1824
        %2203 = vmatpush1.bf16.msra.mxu0 %v1823
        %2204 = vmatprep.subr.bf16.mxu0 %v1826
        %2205 = vmatpush1.bf16.msra.mxu0 %v1825
        %2206 = vmatprep.subr.bf16.mxu0 %v1828
        %2207 = vmatpush1.bf16.msra.mxu0 %v1827
        %2208 = vmatprep.subr.bf16.mxu0 %v1830
        %2209 = vmatpush1.bf16.msra.mxu0 %v1829
        %2210 = vmatprep.subr.bf16.mxu0 %v1832
        %2211 = vmatpush1.bf16.msra.mxu0 %v1831
        %2212 = vmatprep.subr.bf16.mxu0 %v1834
        %2213 = vmatpush1.bf16.msra.mxu0 %v1833
        %2214 = vmatprep.subr.bf16.mxu0 %v1836
        %2215 = vmatpush1.bf16.msra.mxu0 %v1835
        %2216 = vmatprep.subr.bf16.mxu0 %v1838
        %2217 = vmatpush1.bf16.msra.mxu0 %v1837
        %2218 = vmatprep.mubr.bf16.mxu0 %v1180
        %2219 = vmatmul.mubr.bf16.gmra.mrb[0].mxu0 %v1179
        %v2220 = vpop.f32.mrb[0].mxu0
        %v2221 = vadd.f32 %v2148, %v2220
        %v2222 = vpop.f32.mrb[0].mxu0
        %v2223 = vadd.f32 %v2150, %v2222
        %v2224 = vpop.f32.mrb[0].mxu0
        %v2225 = vadd.f32 %v2152, %v2224
        %v2226 = vpop.f32.mrb[0].mxu0
        %v2227 = vadd.f32 %v2154, %v2226
        %2228 = vmatprep.mubr.bf16.mxu0 %v1182
        %2229 = vmatmul.mubr.bf16.gmra.mrb[0].mxu0 %v1181
        %v2230 = vpop.f32.mrb[0].mxu0
        %v2231 = vadd.f32 %v2158, %v2230
        %v2232 = vpop.f32.mrb[0].mxu0
        %v2233 = vadd.f32 %v2160, %v2232
        %v2234 = vpop.f32.mrb[0].mxu0
        %v2235 = vadd.f32 %v2162, %v2234
        %v2236 = vpop.f32.mrb[0].mxu0
        %v2237 = vadd.f32 %v2164, %v2236
        %2238 = vmatprep.mubr.bf16.mxu0 %v1184
        %2239 = vmatmul.mubr.bf16.gmra.mrb[0].mxu0 %v1183
        %v2240 = vpop.f32.mrb[0].mxu0
        %v2241 = vadd.f32 %v2168, %v2240
        %v2242 = vpop.f32.mrb[0].mxu0
        %v2243 = vadd.f32 %v2170, %v2242
        %v2244 = vpop.f32.mrb[0].mxu0
        %v2245 = vadd.f32 %v2172, %v2244
        %v2246 = vpop.f32.mrb[0].mxu0
        %v2247 = vadd.f32 %v2174, %v2246
        %2248 = vmatprep.mubr.bf16.mxu0 %v1186
        %2249 = vmatmul.mubr.bf16.gmra.mrb[0].mxu0 %v1185
        %v2250 = vpop.f32.mrb[0].mxu0
        %v2251 = vadd.f32 %v2178, %v2250
        %v2252 = vpop.f32.mrb[0].mxu0
        %v2253 = vadd.f32 %v2180, %v2252
        %v2254 = vpop.f32.mrb[0].mxu0
        %v2255 = vadd.f32 %v2182, %v2254
        %v2256 = vpop.f32.mrb[0].mxu0
        %v2257 = vadd.f32 %v2184, %v2256
        %2258 = vdwg.mxu0
        %vm2259 = vcmp.gt.f32.partialorder %v2221, 0.0
        %vm2260 = vcmp.gt.f32.partialorder %v2223, 0.0
        %vm2261 = vcmp.gt.f32.partialorder %v2225, 0.0
        %vm2262 = vcmp.gt.f32.partialorder %v2227, 0.0
        %vm2263 = vcmp.gt.f32.partialorder %v2231, 0.0
        %vm2264 = vcmp.gt.f32.partialorder %v2233, 0.0
        %vm2265 = vcmp.gt.f32.partialorder %v2235, 0.0
        %vm2266 = vcmp.gt.f32.partialorder %v2237, 0.0
        %vm2267 = vcmp.gt.f32.partialorder %v2241, 0.0
        %vm2268 = vcmp.gt.f32.partialorder %v2243, 0.0
        %vm2269 = vcmp.gt.f32.partialorder %v2245, 0.0
        %vm2270 = vcmp.gt.f32.partialorder %v2247, 0.0
        %vm2271 = vcmp.gt.f32.partialorder %v2251, 0.0
        %vm2272 = vcmp.gt.f32.partialorder %v2253, 0.0
        %vm2273 = vcmp.gt.f32.partialorder %v2255, 0.0
        %vm2274 = vcmp.gt.f32.partialorder %v2257, 0.0
        %v2275 = vmul.f32 %v2221, 0.2
        %v2276 = vmul.f32 %v2223, 0.2
        %v2277 = vmul.f32 %v2225, 0.2
        %v2278 = vmul.f32 %v2227, 0.2
        %v2279 = vmul.f32 %v2231, 0.2
        %v2280 = vmul.f32 %v2233, 0.2
        %v2281 = vmul.f32 %v2235, 0.2
        %v2282 = vmul.f32 %v2237, 0.2
        %v2283 = vmul.f32 %v2241, 0.2
        %v2284 = vmul.f32 %v2243, 0.2
        %v2285 = vmul.f32 %v2245, 0.2
        %v2286 = vmul.f32 %v2247, 0.2
        %v2287 = vmul.f32 %v2251, 0.2
        %v2288 = vmul.f32 %v2253, 0.2
        %v2289 = vmul.f32 %v2255, 0.2
        %v2290 = vmul.f32 %v2257, 0.2
        %v2291 = vsel %vm2259, %v2221, %v2275
        %v2292 = vsel %vm2260, %v2223, %v2276
        %v2293 = vsel %vm2261, %v2225, %v2277
        %v2294 = vsel %vm2262, %v2227, %v2278
        %v2295 = vsel %vm2263, %v2231, %v2279
        %v2296 = vsel %vm2264, %v2233, %v2280
        %v2297 = vsel %vm2265, %v2235, %v2281
        %v2298 = vsel %vm2266, %v2237, %v2282
        %v2299 = vsel %vm2267, %v2241, %v2283
        %v2300 = vsel %vm2268, %v2243, %v2284
        %v2301 = vsel %vm2269, %v2245, %v2285
        %v2302 = vsel %vm2270, %v2247, %v2286
        %v2303 = vsel %vm2271, %v2251, %v2287
        %v2304 = vsel %vm2272, %v2253, %v2288
        %v2305 = vsel %vm2273, %v2255, %v2289
        %v2306 = vsel %vm2274, %v2257, %v2290
        %v2307 = vpack.c.bf16 %v2293, %v2291
        %v2308 = vpack.c.bf16 %v2294, %v2292
        %v2309 = vpack.c.bf16 %v2297, %v2295
        %v2310 = vpack.c.bf16 %v2298, %v2296
        %v2311 = vpack.c.bf16 %v2301, %v2299
        %v2312 = vpack.c.bf16 %v2302, %v2300
        %v2313 = vpack.c.bf16 %v2305, %v2303
        %v2314 = vpack.c.bf16 %v2306, %v2304
        %v2315 = vld [vmem:[#allocation4] sm:$0xf]
        %v2316 = vld [vmem:[#allocation4 + $0x4] sm:$0xf]
        %v2317 = vld [vmem:[#allocation4 + $0x8] sm:$0xf]
        %v2318 = vld [vmem:[#allocation4 + $0xc] sm:$0xf]
        %v2323 = vunpack.c.l.b16 %v2315
        %v2324 = vunpack.c.l.b16 %v2316
        %v2325 = vunpack.c.l.b16 %v2317
        %v2326 = vunpack.c.l.b16 %v2318
        %v2327 = vpack.c.b16 %v2324, %v2323
        %v2328 = vpack.c.b16 %v2326, %v2325
        %vm2329 = vcmask 523264
        %v2331 = vsel %vm2329, %v2327, 0
        %v2334 = vsel %vm2329, %v2328, 0
        %2336 = vmatprep.subr.bf16.mxu0 %v2308
        %2337 = vmatpush1.bf16.msra.mxu0 %v2307
        %2338 = vmatprep.subr.bf16.mxu0 %v2310
        %2339 = vmatpush1.bf16.msra.mxu0 %v2309
        %2340 = vmatprep.subr.bf16.mxu0 %v2312
        %2341 = vmatpush1.bf16.msra.mxu0 %v2311
        %2342 = vmatprep.subr.bf16.mxu0 %v2314
        %2343 = vmatpush1.bf16.msra.mxu0 %v2313
        %2344 = vmatprep.subr.bf16.mxu0 0
        %2345 = vmatpush1.bf16.msra.mxu0 0
        %2346 = vmatprep.subr.bf16.mxu0 0
        %2347 = vmatpush1.bf16.msra.mxu0 0
        %2348 = vmatprep.subr.bf16.mxu0 0
        %2349 = vmatpush1.bf16.msra.mxu0 0
        %2350 = vmatprep.subr.bf16.mxu0 0
        %2351 = vmatpush1.bf16.msra.mxu0 0
        %2352 = vmatprep.subr.bf16.mxu0 0
        %2353 = vmatpush1.bf16.msra.mxu0 0
        %2354 = vmatprep.subr.bf16.mxu0 0
        %2355 = vmatpush1.bf16.msra.mxu0 0
        %2356 = vmatprep.subr.bf16.mxu0 0
        %2357 = vmatpush1.bf16.msra.mxu0 0
        %2358 = vmatprep.subr.bf16.mxu0 0
        %2359 = vmatpush1.bf16.msra.mxu0 0
        %2360 = vmatprep.subr.bf16.mxu0 0
        %2361 = vmatpush1.bf16.msra.mxu0 0
        %2362 = vmatprep.subr.bf16.mxu0 0
        %2363 = vmatpush1.bf16.msra.mxu0 0
        %2364 = vmatprep.subr.bf16.mxu0 0
        %2365 = vmatpush1.bf16.msra.mxu0 0
        %2366 = vmatprep.subr.bf16.mxu0 0
        %2367 = vmatpush1.bf16.msra.mxu0 0
        %2368 = vmatprep.mubr.bf16.mxu0 0
        %2369 = vmatmul.mubr.bf16.gmra.mrb[0].mxu0 %v2331
        %v2370 = vpop.f32.mrb[0].mxu0
        %v2371 = vadd.f32 0.0, %v2370
        %v2372 = vpop.f32.mrb[0].mxu0
        %v2373 = vadd.f32 0.0, %v2372
        %v2374 = vpop.f32.mrb[0].mxu0
        %v2375 = vadd.f32 0.0, %v2374
        %v2376 = vpop.f32.mrb[0].mxu0
        %v2377 = vadd.f32 0.0, %v2376
        %2378 = vmatprep.mubr.bf16.mxu0 0
        %2379 = vmatmul.mubr.bf16.gmra.mrb[0].mxu0 %v2334
        %v2380 = vpop.f32.mrb[0].mxu0
        %v2381 = vadd.f32 0.0, %v2380
        %v2382 = vpop.f32.mrb[0].mxu0
        %v2383 = vadd.f32 0.0, %v2382
        %v2384 = vpop.f32.mrb[0].mxu0
        %v2385 = vadd.f32 0.0, %v2384
        %v2386 = vpop.f32.mrb[0].mxu0
        %v2387 = vadd.f32 0.0, %v2386
        %2388 = vdwg.mxu0
        %v2389 = vpack.c.bf16 %v2375, %v2371
        %v2390 = vpack.c.bf16 %v2377, %v2373
        %v2391 = vpack.c.bf16 %v2385, %v2381
        %v2392 = vpack.c.bf16 %v2387, %v2383
        %s2393 = scalar_lea.vmem [#allocation4], 16
        %v2394 = vld [vmem:[%s2393] sm:$0xf]
        %v2395 = vld [vmem:[%s2393 + $0x4] sm:$0xf]
        %v2396 = vld [vmem:[%s2393 + $0x8] sm:$0xf]
        %v2397 = vld [vmem:[%s2393 + $0xc] sm:$0xf]
        %v2402 = vunpack.c.l.b16 %v2394
        %v2403 = vunpack.c.l.b16 %v2395
        %v2404 = vunpack.c.l.b16 %v2396
        %v2405 = vunpack.c.l.b16 %v2397
        %v2406 = vpack.c.b16 %v2403, %v2402
        %v2407 = vpack.c.b16 %v2405, %v2404
        %v2409 = vsel %vm2329, %v2406, 0
        %v2412 = vsel %vm2329, %v2407, 0
        %2414 = vmatprep.subr.bf16.mxu0 %v2308
        %2415 = vmatpush1.bf16.msra.mxu0 %v2307
        %2416 = vmatprep.subr.bf16.mxu0 %v2310
        %2417 = vmatpush1.bf16.msra.mxu0 %v2309
        %2418 = vmatprep.subr.bf16.mxu0 %v2312
        %2419 = vmatpush1.bf16.msra.mxu0 %v2311
        %2420 = vmatprep.subr.bf16.mxu0 %v2314
        %2421 = vmatpush1.bf16.msra.mxu0 %v2313
        %2422 = vmatprep.subr.bf16.mxu0 0
        %2423 = vmatpush1.bf16.msra.mxu0 0
        %2424 = vmatprep.subr.bf16.mxu0 0
        %2425 = vmatpush1.bf16.msra.mxu0 0
        %2426 = vmatprep.subr.bf16.mxu0 0
        %2427 = vmatpush1.bf16.msra.mxu0 0
        %2428 = vmatprep.subr.bf16.mxu0 0
        %2429 = vmatpush1.bf16.msra.mxu0 0
        %2430 = vmatprep.subr.bf16.mxu0 0
        %2431 = vmatpush1.bf16.msra.mxu0 0
        %2432 = vmatprep.subr.bf16.mxu0 0
        %2433 = vmatpush1.bf16.msra.mxu0 0
        %2434 = vmatprep.subr.bf16.mxu0 0
        %2435 = vmatpush1.bf16.msra.mxu0 0
        %2436 = vmatprep.subr.bf16.mxu0 0
        %2437 = vmatpush1.bf16.msra.mxu0 0
        %2438 = vmatprep.subr.bf16.mxu0 0
        %2439 = vmatpush1.bf16.msra.mxu0 0
        %2440 = vmatprep.subr.bf16.mxu0 0
        %2441 = vmatpush1.bf16.msra.mxu0 0
        %2442 = vmatprep.subr.bf16.mxu0 0
        %2443 = vmatpush1.bf16.msra.mxu0 0
        %2444 = vmatprep.subr.bf16.mxu0 0
        %2445 = vmatpush1.bf16.msra.mxu0 0
        %2446 = vmatprep.mubr.bf16.mxu0 0
        %2447 = vmatmul.mubr.bf16.gmra.mrb[0].mxu0 %v2409
        %v2448 = vpop.f32.mrb[0].mxu0
        %v2449 = vadd.f32 0.0, %v2448
        %v2450 = vpop.f32.mrb[0].mxu0
        %v2451 = vadd.f32 0.0, %v2450
        %v2452 = vpop.f32.mrb[0].mxu0
        %v2453 = vadd.f32 0.0, %v2452
        %v2454 = vpop.f32.mrb[0].mxu0
        %v2455 = vadd.f32 0.0, %v2454
        %2456 = vmatprep.mubr.bf16.mxu0 0
        %2457 = vmatmul.mubr.bf16.gmra.mrb[0].mxu0 %v2412
        %v2458 = vpop.f32.mrb[0].mxu0
        %v2459 = vadd.f32 0.0, %v2458
        %v2460 = vpop.f32.mrb[0].mxu0
        %v2461 = vadd.f32 0.0, %v2460
        %v2462 = vpop.f32.mrb[0].mxu0
        %v2463 = vadd.f32 0.0, %v2462
        %v2464 = vpop.f32.mrb[0].mxu0
        %v2465 = vadd.f32 0.0, %v2464
        %2466 = vdwg.mxu0
        %v2467 = vpack.c.bf16 %v2453, %v2449
        %v2468 = vpack.c.bf16 %v2455, %v2451
        %v2469 = vpack.c.bf16 %v2463, %v2459
        %v2470 = vpack.c.bf16 %v2465, %v2461
        %s2471 = scalar_lea.vmem [#allocation4], 32
        %v2472 = vld [vmem:[%s2471] sm:$0xf]
        %v2473 = vld [vmem:[%s2471 + $0x4] sm:$0xf]
        %v2474 = vld [vmem:[%s2471 + $0x8] sm:$0xf]
        %v2475 = vld [vmem:[%s2471 + $0xc] sm:$0xf]
        %v2480 = vunpack.c.l.b16 %v2472
        %v2481 = vunpack.c.l.b16 %v2473
        %v2482 = vunpack.c.l.b16 %v2474
        %v2483 = vunpack.c.l.b16 %v2475
        %v2484 = vpack.c.b16 %v2481, %v2480
        %v2485 = vpack.c.b16 %v2483, %v2482
        %v2487 = vsel %vm2329, %v2484, 0
        %v2490 = vsel %vm2329, %v2485, 0
        %2492 = vmatprep.subr.bf16.mxu0 %v2308
        %2493 = vmatpush1.bf16.msra.mxu0 %v2307
        %2494 = vmatprep.subr.bf16.mxu0 %v2310
        %2495 = vmatpush1.bf16.msra.mxu0 %v2309
        %2496 = vmatprep.subr.bf16.mxu0 %v2312
        %2497 = vmatpush1.bf16.msra.mxu0 %v2311
        %2498 = vmatprep.subr.bf16.mxu0 %v2314
        %2499 = vmatpush1.bf16.msra.mxu0 %v2313
        %2500 = vmatprep.subr.bf16.mxu0 0
        %2501 = vmatpush1.bf16.msra.mxu0 0
        %2502 = vmatprep.subr.bf16.mxu0 0
        %2503 = vmatpush1.bf16.msra.mxu0 0
        %2504 = vmatprep.subr.bf16.mxu0 0
        %2505 = vmatpush1.bf16.msra.mxu0 0
        %2506 = vmatprep.subr.bf16.mxu0 0
        %2507 = vmatpush1.bf16.msra.mxu0 0
        %2508 = vmatprep.subr.bf16.mxu0 0
        %2509 = vmatpush1.bf16.msra.mxu0 0
        %2510 = vmatprep.subr.bf16.mxu0 0
        %2511 = vmatpush1.bf16.msra.mxu0 0
        %2512 = vmatprep.subr.bf16.mxu0 0
        %2513 = vmatpush1.bf16.msra.mxu0 0
        %2514 = vmatprep.subr.bf16.mxu0 0
        %2515 = vmatpush1.bf16.msra.mxu0 0
        %2516 = vmatprep.subr.bf16.mxu0 0
        %2517 = vmatpush1.bf16.msra.mxu0 0
        %2518 = vmatprep.subr.bf16.mxu0 0
        %2519 = vmatpush1.bf16.msra.mxu0 0
        %2520 = vmatprep.subr.bf16.mxu0 0
        %2521 = vmatpush1.bf16.msra.mxu0 0
        %2522 = vmatprep.subr.bf16.mxu0 0
        %2523 = vmatpush1.bf16.msra.mxu0 0
        %2524 = vmatprep.mubr.bf16.mxu0 0
        %2525 = vmatmul.mubr.bf16.gmra.mrb[0].mxu0 %v2487
        %v2526 = vpop.f32.mrb[0].mxu0
        %v2527 = vadd.f32 0.0, %v2526
        %v2528 = vpop.f32.mrb[0].mxu0
        %v2529 = vadd.f32 0.0, %v2528
        %v2530 = vpop.f32.mrb[0].mxu0
        %v2531 = vadd.f32 0.0, %v2530
        %v2532 = vpop.f32.mrb[0].mxu0
        %v2533 = vadd.f32 0.0, %v2532
        %2534 = vmatprep.mubr.bf16.mxu0 0
        %2535 = vmatmul.mubr.bf16.gmra.mrb[0].mxu0 %v2490
        %v2536 = vpop.f32.mrb[0].mxu0
        %v2537 = vadd.f32 0.0, %v2536
        %v2538 = vpop.f32.mrb[0].mxu0
        %v2539 = vadd.f32 0.0, %v2538
        %v2540 = vpop.f32.mrb[0].mxu0
        %v2541 = vadd.f32 0.0, %v2540
        %v2542 = vpop.f32.mrb[0].mxu0
        %v2543 = vadd.f32 0.0, %v2542
        %2544 = vdwg.mxu0
        %v2545 = vpack.c.bf16 %v2531, %v2527
        %v2546 = vpack.c.bf16 %v2533, %v2529
        %v2547 = vpack.c.bf16 %v2541, %v2537
        %v2548 = vpack.c.bf16 %v2543, %v2539
        %s2549 = scalar_lea.vmem [#allocation4], 48
        %v2550 = vld [vmem:[%s2549] sm:$0xf]
        %v2551 = vld [vmem:[%s2549 + $0x4] sm:$0xf]
        %v2552 = vld [vmem:[%s2549 + $0x8] sm:$0xf]
        %v2553 = vld [vmem:[%s2549 + $0xc] sm:$0xf]
        %v2558 = vunpack.c.l.b16 %v2550
        %v2559 = vunpack.c.l.b16 %v2551
        %v2560 = vunpack.c.l.b16 %v2552
        %v2561 = vunpack.c.l.b16 %v2553
        %v2562 = vpack.c.b16 %v2559, %v2558
        %v2563 = vpack.c.b16 %v2561, %v2560
        %v2565 = vsel %vm2329, %v2562, 0
        %v2568 = vsel %vm2329, %v2563, 0
        %2570 = vmatprep.subr.bf16.mxu0 %v2308
        %2571 = vmatpush1.bf16.msra.mxu0 %v2307
        %2572 = vmatprep.subr.bf16.mxu0 %v2310
        %2573 = vmatpush1.bf16.msra.mxu0 %v2309
        %2574 = vmatprep.subr.bf16.mxu0 %v2312
        %2575 = vmatpush1.bf16.msra.mxu0 %v2311
        %2576 = vmatprep.subr.bf16.mxu0 %v2314
        %2577 = vmatpush1.bf16.msra.mxu0 %v2313
        %2578 = vmatprep.subr.bf16.mxu0 0
        %2579 = vmatpush1.bf16.msra.mxu0 0
        %2580 = vmatprep.subr.bf16.mxu0 0
        %2581 = vmatpush1.bf16.msra.mxu0 0
        %2582 = vmatprep.subr.bf16.mxu0 0
        %2583 = vmatpush1.bf16.msra.mxu0 0
        %2584 = vmatprep.subr.bf16.mxu0 0
        %2585 = vmatpush1.bf16.msra.mxu0 0
        %2586 = vmatprep.subr.bf16.mxu0 0
        %2587 = vmatpush1.bf16.msra.mxu0 0
        %2588 = vmatprep.subr.bf16.mxu0 0
        %2589 = vmatpush1.bf16.msra.mxu0 0
        %2590 = vmatprep.subr.bf16.mxu0 0
        %2591 = vmatpush1.bf16.msra.mxu0 0
        %2592 = vmatprep.subr.bf16.mxu0 0
        %2593 = vmatpush1.bf16.msra.mxu0 0
        %2594 = vmatprep.subr.bf16.mxu0 0
        %2595 = vmatpush1.bf16.msra.mxu0 0
        %2596 = vmatprep.subr.bf16.mxu0 0
        %2597 = vmatpush1.bf16.msra.mxu0 0
        %2598 = vmatprep.subr.bf16.mxu0 0
        %2599 = vmatpush1.bf16.msra.mxu0 0
        %2600 = vmatprep.subr.bf16.mxu0 0
        %2601 = vmatpush1.bf16.msra.mxu0 0
        %2602 = vmatprep.mubr.bf16.mxu0 0
        %2603 = vmatmul.mubr.bf16.gmra.mrb[0].mxu0 %v2565
        %v2604 = vpop.f32.mrb[0].mxu0
        %v2605 = vadd.f32 0.0, %v2604
        %v2606 = vpop.f32.mrb[0].mxu0
        %v2607 = vadd.f32 0.0, %v2606
        %v2608 = vpop.f32.mrb[0].mxu0
        %v2609 = vadd.f32 0.0, %v2608
        %v2610 = vpop.f32.mrb[0].mxu0
        %v2611 = vadd.f32 0.0, %v2610
        %2612 = vmatprep.mubr.bf16.mxu0 0
        %2613 = vmatmul.mubr.bf16.gmra.mrb[0].mxu0 %v2568
        %v2614 = vpop.f32.mrb[0].mxu0
        %v2615 = vadd.f32 0.0, %v2614
        %v2616 = vpop.f32.mrb[0].mxu0
        %v2617 = vadd.f32 0.0, %v2616
        %v2618 = vpop.f32.mrb[0].mxu0
        %v2619 = vadd.f32 0.0, %v2618
        %v2620 = vpop.f32.mrb[0].mxu0
        %v2621 = vadd.f32 0.0, %v2620
        %2622 = vdwg.mxu0
        %v2623 = vpack.c.bf16 %v2609, %v2605
        %v2624 = vpack.c.bf16 %v2611, %v2607
        %v2625 = vpack.c.bf16 %v2619, %v2615
        %v2626 = vpack.c.bf16 %v2621, %v2617
        %v2627 = vld [vmem:[%s7] sm:$0xff]
        %v2628 = vld [vmem:[%s7 + $0x8] sm:$0xff]
        %v2629 = vld [vmem:[%s7 + $0x10] sm:$0xff]
        %v2630 = vld [vmem:[%s7 + $0x18] sm:$0xff]
        %v2631 = vld [vmem:[%s7 + $0x20] sm:$0xff]
        %v2632 = vld [vmem:[%s7 + $0x28] sm:$0xff]
        %v2633 = vld [vmem:[%s7 + $0x30] sm:$0xff]
        %v2634 = vld [vmem:[%s7 + $0x38] sm:$0xff]
        %v2635 = vld [vmem:[%s7 + $0x40] sm:$0xff]
        %v2636 = vld [vmem:[%s7 + $0x48] sm:$0xff]
        %v2637 = vld [vmem:[%s7 + $0x50] sm:$0xff]
        %v2638 = vld [vmem:[%s7 + $0x58] sm:$0xff]
        %v2639 = vld [vmem:[%s7 + $0x60] sm:$0xff]
        %v2640 = vld [vmem:[%s7 + $0x68] sm:$0xff]
        %v2641 = vld [vmem:[%s7 + $0x70] sm:$0xff]
        %v2642 = vld [vmem:[%s7 + $0x78] sm:$0xff]
        %v2643 = vld [vmem:[%s7 + $0x80] sm:$0xff]
        %v2644 = vld [vmem:[%s7 + $0x88] sm:$0xff]
        %v2645 = vld [vmem:[%s7 + $0x90] sm:$0xff]
        %v2646 = vld [vmem:[%s7 + $0x98] sm:$0xff]
        %v2647 = vld [vmem:[%s7 + $0xa0] sm:$0xff]
        %v2648 = vld [vmem:[%s7 + $0xa8] sm:$0xff]
        %v2649 = vld [vmem:[%s7 + $0xb0] sm:$0xff]
        %v2650 = vld [vmem:[%s7 + $0xb8] sm:$0xff]
        %v2651 = vld [vmem:[%s7 + $0xc0] sm:$0xff]
        %v2652 = vld [vmem:[%s7 + $0xc8] sm:$0xff]
        %v2653 = vld [vmem:[%s7 + $0xd0] sm:$0xff]
        %v2654 = vld [vmem:[%s7 + $0xd8] sm:$0xff]
        %v2655 = vld [vmem:[%s7 + $0xe0] sm:$0xff]
        %v2656 = vld [vmem:[%s7 + $0xe8] sm:$0xff]
        %v2657 = vld [vmem:[%s7 + $0xf0] sm:$0xff]
        %v2658 = vld [vmem:[%s7 + $0xf8] sm:$0xff]
        %v2659 = vld [vmem:[%s7 + $0x100] sm:$0xff]
        %v2660 = vld [vmem:[%s7 + $0x108] sm:$0xff]
        %v2661 = vld [vmem:[%s7 + $0x110] sm:$0xff]
        %v2662 = vld [vmem:[%s7 + $0x118] sm:$0xff]
        %v2663 = vld [vmem:[%s7 + $0x120] sm:$0xff]
        %v2664 = vld [vmem:[%s7 + $0x128] sm:$0xff]
        %v2665 = vld [vmem:[%s7 + $0x130] sm:$0xff]
        %v2666 = vld [vmem:[%s7 + $0x138] sm:$0xff]
        %v2667 = vld [vmem:[%s7 + $0x140] sm:$0xff]
        %v2668 = vld [vmem:[%s7 + $0x148] sm:$0xff]
        %v2669 = vld [vmem:[%s7 + $0x150] sm:$0xff]
        %v2670 = vld [vmem:[%s7 + $0x158] sm:$0xff]
        %v2671 = vld [vmem:[%s7 + $0x160] sm:$0xff]
        %v2672 = vld [vmem:[%s7 + $0x168] sm:$0xff]
        %v2673 = vld [vmem:[%s7 + $0x170] sm:$0xff]
        %v2674 = vld [vmem:[%s7 + $0x178] sm:$0xff]
        %v2675 = vld [vmem:[%s7 + $0x180] sm:$0xff]
        %v2676 = vld [vmem:[%s7 + $0x188] sm:$0xff]
        %v2677 = vld [vmem:[%s7 + $0x190] sm:$0xff]
        %v2678 = vld [vmem:[%s7 + $0x198] sm:$0xff]
        %v2679 = vld [vmem:[%s7 + $0x1a0] sm:$0xff]
        %v2680 = vld [vmem:[%s7 + $0x1a8] sm:$0xff]
        %v2681 = vld [vmem:[%s7 + $0x1b0] sm:$0xff]
        %v2682 = vld [vmem:[%s7 + $0x1b8] sm:$0xff]
        %v2683 = vld [vmem:[%s7 + $0x1c0] sm:$0xff]
        %v2684 = vld [vmem:[%s7 + $0x1c8] sm:$0xff]
        %v2685 = vld [vmem:[%s7 + $0x1d0] sm:$0xff]
        %v2686 = vld [vmem:[%s7 + $0x1d8] sm:$0xff]
        %v2687 = vld [vmem:[%s7 + $0x1e0] sm:$0xff]
        %v2688 = vld [vmem:[%s7 + $0x1e8] sm:$0xff]
        %v2689 = vld [vmem:[%s7 + $0x1f0] sm:$0xff]
        %v2690 = vld [vmem:[%s7 + $0x1f8] sm:$0xff]
        %v2691 = vld [vmem:[%s7 + $0x200] sm:$0xff]
        %v2692 = vld [vmem:[%s7 + $0x208] sm:$0xff]
        %v2693 = vld [vmem:[%s7 + $0x210] sm:$0xff]
        %v2694 = vld [vmem:[%s7 + $0x218] sm:$0xff]
        %v2695 = vld [vmem:[%s7 + $0x220] sm:$0xff]
        %v2696 = vld [vmem:[%s7 + $0x228] sm:$0xff]
        %v2697 = vld [vmem:[%s7 + $0x230] sm:$0xff]
        %v2698 = vld [vmem:[%s7 + $0x238] sm:$0xff]
        %v2699 = vld [vmem:[%s7 + $0x240] sm:$0xff]
        %v2700 = vld [vmem:[%s7 + $0x248] sm:$0xff]
        %v2701 = vld [vmem:[%s7 + $0x250] sm:$0xff]
        %v2702 = vld [vmem:[%s7 + $0x258] sm:$0xff]
        %v2703 = vld [vmem:[%s7 + $0x260] sm:$0xff]
        %v2704 = vld [vmem:[%s7 + $0x268] sm:$0xff]
        %v2705 = vld [vmem:[%s7 + $0x270] sm:$0xff]
        %v2706 = vld [vmem:[%s7 + $0x278] sm:$0xff]
        %v2707 = vld [vmem:[%s7 + $0x280] sm:$0xff]
        %v2708 = vld [vmem:[%s7 + $0x288] sm:$0xff]
        %v2709 = vld [vmem:[%s7 + $0x290] sm:$0xff]
        %v2710 = vld [vmem:[%s7 + $0x298] sm:$0xff]
        %v2711 = vld [vmem:[%s7 + $0x2a0] sm:$0xff]
        %v2712 = vld [vmem:[%s7 + $0x2a8] sm:$0xff]
        %v2713 = vld [vmem:[%s7 + $0x2b0] sm:$0xff]
        %v2714 = vld [vmem:[%s7 + $0x2b8] sm:$0xff]
        %v2715 = vld [vmem:[%s7 + $0x2c0] sm:$0xff]
        %v2716 = vld [vmem:[%s7 + $0x2c8] sm:$0xff]
        %v2717 = vld [vmem:[%s7 + $0x2d0] sm:$0xff]
        %v2718 = vld [vmem:[%s7 + $0x2d8] sm:$0xff]
        %v2719 = vld [vmem:[%s7 + $0x2e0] sm:$0xff]
        %v2720 = vld [vmem:[%s7 + $0x2e8] sm:$0xff]
        %v2721 = vld [vmem:[%s7 + $0x2f0] sm:$0xff]
        %v2722 = vld [vmem:[%s7 + $0x2f8] sm:$0xff]
        %v2723 = vld [vmem:[%s7 + $0x300] sm:$0xff]
        %v2724 = vld [vmem:[%s7 + $0x308] sm:$0xff]
        %v2725 = vld [vmem:[%s7 + $0x310] sm:$0xff]
        %v2726 = vld [vmem:[%s7 + $0x318] sm:$0xff]
        %v2727 = vld [vmem:[%s7 + $0x320] sm:$0xff]
        %v2728 = vld [vmem:[%s7 + $0x328] sm:$0xff]
        %v2729 = vld [vmem:[%s7 + $0x330] sm:$0xff]
        %v2730 = vld [vmem:[%s7 + $0x338] sm:$0xff]
        %v2731 = vld [vmem:[%s7 + $0x340] sm:$0xff]
        %v2732 = vld [vmem:[%s7 + $0x348] sm:$0xff]
        %v2733 = vld [vmem:[%s7 + $0x350] sm:$0xff]
        %v2734 = vld [vmem:[%s7 + $0x358] sm:$0xff]
        %v2735 = vld [vmem:[%s7 + $0x360] sm:$0xff]
        %v2736 = vld [vmem:[%s7 + $0x368] sm:$0xff]
        %v2737 = vld [vmem:[%s7 + $0x370] sm:$0xff]
        %v2738 = vld [vmem:[%s7 + $0x378] sm:$0xff]
        %v2739 = vld [vmem:[%s7 + $0x380] sm:$0xff]
        %v2740 = vld [vmem:[%s7 + $0x388] sm:$0xff]
        %v2741 = vld [vmem:[%s7 + $0x390] sm:$0xff]
        %v2742 = vld [vmem:[%s7 + $0x398] sm:$0xff]
        %v2743 = vld [vmem:[%s7 + $0x3a0] sm:$0xff]
        %v2744 = vld [vmem:[%s7 + $0x3a8] sm:$0xff]
        %v2745 = vld [vmem:[%s7 + $0x3b0] sm:$0xff]
        %v2746 = vld [vmem:[%s7 + $0x3b8] sm:$0xff]
        %v2747 = vld [vmem:[%s7 + $0x3c0] sm:$0xff]
        %v2748 = vld [vmem:[%s7 + $0x3c8] sm:$0xff]
        %v2749 = vld [vmem:[%s7 + $0x3d0] sm:$0xff]
        %v2750 = vld [vmem:[%s7 + $0x3d8] sm:$0xff]
        %v2751 = vld [vmem:[%s7 + $0x3e0] sm:$0xff]
        %v2752 = vld [vmem:[%s7 + $0x3e8] sm:$0xff]
        %v2753 = vld [vmem:[%s7 + $0x3f0] sm:$0xff]
        %v2754 = vld [vmem:[%s7 + $0x3f8] sm:$0xff]
        %v2755 = vld [vmem:[%s12] sm:$0x3]
        %v2757 = vlaneseq
        %v2758 = vshrl.u32 %v2757, 7
        %v2759 = vsub.s32 0, %v2758
        %v2760 = vrot.slane %v2755, %v2759
        %v2761 = vlaneseq
        %v2762 = vshrl.u32 %v2761, 7
        %v2763 = vsub.s32 1, %v2762
        %v2764 = vrot.slane %v2755, %v2763
        %v2895 = vunpack.c.l.b16 %v2627
        %v2896 = vunpack.c.h.b16 %v2627
        %v2897 = vunpack.c.l.b16 %v2628
        %v2898 = vunpack.c.h.b16 %v2628
        %v2899 = vunpack.c.l.b16 %v2629
        %v2900 = vunpack.c.h.b16 %v2629
        %v2901 = vunpack.c.l.b16 %v2630
        %v2902 = vunpack.c.h.b16 %v2630
        %v2903 = vunpack.c.l.b16 %v2631
        %v2904 = vunpack.c.h.b16 %v2631
        %v2905 = vunpack.c.l.b16 %v2632
        %v2906 = vunpack.c.h.b16 %v2632
        %v2907 = vunpack.c.l.b16 %v2633
        %v2908 = vunpack.c.h.b16 %v2633
        %v2909 = vunpack.c.l.b16 %v2634
        %v2910 = vunpack.c.h.b16 %v2634
        %v2911 = vunpack.c.l.b16 %v2635
        %v2912 = vunpack.c.h.b16 %v2635
        %v2913 = vunpack.c.l.b16 %v2636
        %v2914 = vunpack.c.h.b16 %v2636
        %v2915 = vunpack.c.l.b16 %v2637
        %v2916 = vunpack.c.h.b16 %v2637
        %v2917 = vunpack.c.l.b16 %v2638
        %v2918 = vunpack.c.h.b16 %v2638
        %v2919 = vunpack.c.l.b16 %v2639
        %v2920 = vunpack.c.h.b16 %v2639
        %v2921 = vunpack.c.l.b16 %v2640
        %v2922 = vunpack.c.h.b16 %v2640
        %v2923 = vunpack.c.l.b16 %v2641
        %v2924 = vunpack.c.h.b16 %v2641
        %v2925 = vunpack.c.l.b16 %v2642
        %v2926 = vunpack.c.h.b16 %v2642
        %v2927 = vunpack.c.l.b16 %v2643
        %v2928 = vunpack.c.h.b16 %v2643
        %v2929 = vunpack.c.l.b16 %v2644
        %v2930 = vunpack.c.h.b16 %v2644
        %v2931 = vunpack.c.l.b16 %v2645
        %v2932 = vunpack.c.h.b16 %v2645
        %v2933 = vunpack.c.l.b16 %v2646
        %v2934 = vunpack.c.h.b16 %v2646
        %v2935 = vunpack.c.l.b16 %v2647
        %v2936 = vunpack.c.h.b16 %v2647
        %v2937 = vunpack.c.l.b16 %v2648
        %v2938 = vunpack.c.h.b16 %v2648
        %v2939 = vunpack.c.l.b16 %v2649
        %v2940 = vunpack.c.h.b16 %v2649
        %v2941 = vunpack.c.l.b16 %v2650
        %v2942 = vunpack.c.h.b16 %v2650
        %v2943 = vunpack.c.l.b16 %v2651
        %v2944 = vunpack.c.h.b16 %v2651
        %v2945 = vunpack.c.l.b16 %v2652
        %v2946 = vunpack.c.h.b16 %v2652
        %v2947 = vunpack.c.l.b16 %v2653
        %v2948 = vunpack.c.h.b16 %v2653
        %v2949 = vunpack.c.l.b16 %v2654
        %v2950 = vunpack.c.h.b16 %v2654
        %v2951 = vunpack.c.l.b16 %v2655
        %v2952 = vunpack.c.h.b16 %v2655
        %v2953 = vunpack.c.l.b16 %v2656
        %v2954 = vunpack.c.h.b16 %v2656
        %v2955 = vunpack.c.l.b16 %v2657
        %v2956 = vunpack.c.h.b16 %v2657
        %v2957 = vunpack.c.l.b16 %v2658
        %v2958 = vunpack.c.h.b16 %v2658
        %v2959 = vunpack.c.l.b16 %v2659
        %v2960 = vunpack.c.h.b16 %v2659
        %v2961 = vunpack.c.l.b16 %v2660
        %v2962 = vunpack.c.h.b16 %v2660
        %v2963 = vunpack.c.l.b16 %v2661
        %v2964 = vunpack.c.h.b16 %v2661
        %v2965 = vunpack.c.l.b16 %v2662
        %v2966 = vunpack.c.h.b16 %v2662
        %v2967 = vunpack.c.l.b16 %v2663
        %v2968 = vunpack.c.h.b16 %v2663
        %v2969 = vunpack.c.l.b16 %v2664
        %v2970 = vunpack.c.h.b16 %v2664
        %v2971 = vunpack.c.l.b16 %v2665
        %v2972 = vunpack.c.h.b16 %v2665
        %v2973 = vunpack.c.l.b16 %v2666
        %v2974 = vunpack.c.h.b16 %v2666
        %v2975 = vunpack.c.l.b16 %v2667
        %v2976 = vunpack.c.h.b16 %v2667
        %v2977 = vunpack.c.l.b16 %v2668
        %v2978 = vunpack.c.h.b16 %v2668
        %v2979 = vunpack.c.l.b16 %v2669
        %v2980 = vunpack.c.h.b16 %v2669
        %v2981 = vunpack.c.l.b16 %v2670
        %v2982 = vunpack.c.h.b16 %v2670
        %v2983 = vunpack.c.l.b16 %v2671
        %v2984 = vunpack.c.h.b16 %v2671
        %v2985 = vunpack.c.l.b16 %v2672
        %v2986 = vunpack.c.h.b16 %v2672
        %v2987 = vunpack.c.l.b16 %v2673
        %v2988 = vunpack.c.h.b16 %v2673
        %v2989 = vunpack.c.l.b16 %v2674
        %v2990 = vunpack.c.h.b16 %v2674
        %v2991 = vunpack.c.l.b16 %v2675
        %v2992 = vunpack.c.h.b16 %v2675
        %v2993 = vunpack.c.l.b16 %v2676
        %v2994 = vunpack.c.h.b16 %v2676
        %v2995 = vunpack.c.l.b16 %v2677
        %v2996 = vunpack.c.h.b16 %v2677
        %v2997 = vunpack.c.l.b16 %v2678
        %v2998 = vunpack.c.h.b16 %v2678
        %v2999 = vunpack.c.l.b16 %v2679
        %v3000 = vunpack.c.h.b16 %v2679
        %v3001 = vunpack.c.l.b16 %v2680
        %v3002 = vunpack.c.h.b16 %v2680
        %v3003 = vunpack.c.l.b16 %v2681
        %v3004 = vunpack.c.h.b16 %v2681
        %v3005 = vunpack.c.l.b16 %v2682
        %v3006 = vunpack.c.h.b16 %v2682
        %v3007 = vunpack.c.l.b16 %v2683
        %v3008 = vunpack.c.h.b16 %v2683
        %v3009 = vunpack.c.l.b16 %v2684
        %v3010 = vunpack.c.h.b16 %v2684
        %v3011 = vunpack.c.l.b16 %v2685
        %v3012 = vunpack.c.h.b16 %v2685
        %v3013 = vunpack.c.l.b16 %v2686
        %v3014 = vunpack.c.h.b16 %v2686
        %v3015 = vunpack.c.l.b16 %v2687
        %v3016 = vunpack.c.h.b16 %v2687
        %v3017 = vunpack.c.l.b16 %v2688
        %v3018 = vunpack.c.h.b16 %v2688
        %v3019 = vunpack.c.l.b16 %v2689
        %v3020 = vunpack.c.h.b16 %v2689
        %v3021 = vunpack.c.l.b16 %v2690
        %v3022 = vunpack.c.h.b16 %v2690
        %v3023 = vunpack.c.l.b16 %v2691
        %v3024 = vunpack.c.h.b16 %v2691
        %v3025 = vunpack.c.l.b16 %v2692
        %v3026 = vunpack.c.h.b16 %v2692
        %v3027 = vunpack.c.l.b16 %v2693
        %v3028 = vunpack.c.h.b16 %v2693
        %v3029 = vunpack.c.l.b16 %v2694
        %v3030 = vunpack.c.h.b16 %v2694
        %v3031 = vunpack.c.l.b16 %v2695
        %v3032 = vunpack.c.h.b16 %v2695
        %v3033 = vunpack.c.l.b16 %v2696
        %v3034 = vunpack.c.h.b16 %v2696
        %v3035 = vunpack.c.l.b16 %v2697
        %v3036 = vunpack.c.h.b16 %v2697
        %v3037 = vunpack.c.l.b16 %v2698
        %v3038 = vunpack.c.h.b16 %v2698
        %v3039 = vunpack.c.l.b16 %v2699
        %v3040 = vunpack.c.h.b16 %v2699
        %v3041 = vunpack.c.l.b16 %v2700
        %v3042 = vunpack.c.h.b16 %v2700
        %v3043 = vunpack.c.l.b16 %v2701
        %v3044 = vunpack.c.h.b16 %v2701
        %v3045 = vunpack.c.l.b16 %v2702
        %v3046 = vunpack.c.h.b16 %v2702
        %v3047 = vunpack.c.l.b16 %v2703
        %v3048 = vunpack.c.h.b16 %v2703
        %v3049 = vunpack.c.l.b16 %v2704
        %v3050 = vunpack.c.h.b16 %v2704
        %v3051 = vunpack.c.l.b16 %v2705
        %v3052 = vunpack.c.h.b16 %v2705
        %v3053 = vunpack.c.l.b16 %v2706
        %v3054 = vunpack.c.h.b16 %v2706
        %v3055 = vunpack.c.l.b16 %v2707
        %v3056 = vunpack.c.h.b16 %v2707
        %v3057 = vunpack.c.l.b16 %v2708
        %v3058 = vunpack.c.h.b16 %v2708
        %v3059 = vunpack.c.l.b16 %v2709
        %v3060 = vunpack.c.h.b16 %v2709
        %v3061 = vunpack.c.l.b16 %v2710
        %v3062 = vunpack.c.h.b16 %v2710
        %v3063 = vunpack.c.l.b16 %v2711
        %v3064 = vunpack.c.h.b16 %v2711
        %v3065 = vunpack.c.l.b16 %v2712
        %v3066 = vunpack.c.h.b16 %v2712
        %v3067 = vunpack.c.l.b16 %v2713
        %v3068 = vunpack.c.h.b16 %v2713
        %v3069 = vunpack.c.l.b16 %v2714
        %v3070 = vunpack.c.h.b16 %v2714
        %v3071 = vunpack.c.l.b16 %v2715
        %v3072 = vunpack.c.h.b16 %v2715
        %v3073 = vunpack.c.l.b16 %v2716
        %v3074 = vunpack.c.h.b16 %v2716
        %v3075 = vunpack.c.l.b16 %v2717
        %v3076 = vunpack.c.h.b16 %v2717
        %v3077 = vunpack.c.l.b16 %v2718
        %v3078 = vunpack.c.h.b16 %v2718
        %v3079 = vunpack.c.l.b16 %v2719
        %v3080 = vunpack.c.h.b16 %v2719
        %v3081 = vunpack.c.l.b16 %v2720
        %v3082 = vunpack.c.h.b16 %v2720
        %v3083 = vunpack.c.l.b16 %v2721
        %v3084 = vunpack.c.h.b16 %v2721
        %v3085 = vunpack.c.l.b16 %v2722
        %v3086 = vunpack.c.h.b16 %v2722
        %v3087 = vunpack.c.l.b16 %v2723
        %v3088 = vunpack.c.h.b16 %v2723
        %v3089 = vunpack.c.l.b16 %v2724
        %v3090 = vunpack.c.h.b16 %v2724
        %v3091 = vunpack.c.l.b16 %v2725
        %v3092 = vunpack.c.h.b16 %v2725
        %v3093 = vunpack.c.l.b16 %v2726
        %v3094 = vunpack.c.h.b16 %v2726
        %v3095 = vunpack.c.l.b16 %v2727
        %v3096 = vunpack.c.h.b16 %v2727
        %v3097 = vunpack.c.l.b16 %v2728
        %v3098 = vunpack.c.h.b16 %v2728
        %v3099 = vunpack.c.l.b16 %v2729
        %v3100 = vunpack.c.h.b16 %v2729
        %v3101 = vunpack.c.l.b16 %v2730
        %v3102 = vunpack.c.h.b16 %v2730
        %v3103 = vunpack.c.l.b16 %v2731
        %v3104 = vunpack.c.h.b16 %v2731
        %v3105 = vunpack.c.l.b16 %v2732
        %v3106 = vunpack.c.h.b16 %v2732
        %v3107 = vunpack.c.l.b16 %v2733
        %v3108 = vunpack.c.h.b16 %v2733
        %v3109 = vunpack.c.l.b16 %v2734
        %v3110 = vunpack.c.h.b16 %v2734
        %v3111 = vunpack.c.l.b16 %v2735
        %v3112 = vunpack.c.h.b16 %v2735
        %v3113 = vunpack.c.l.b16 %v2736
        %v3114 = vunpack.c.h.b16 %v2736
        %v3115 = vunpack.c.l.b16 %v2737
        %v3116 = vunpack.c.h.b16 %v2737
        %v3117 = vunpack.c.l.b16 %v2738
        %v3118 = vunpack.c.h.b16 %v2738
        %v3119 = vunpack.c.l.b16 %v2739
        %v3120 = vunpack.c.h.b16 %v2739
        %v3121 = vunpack.c.l.b16 %v2740
        %v3122 = vunpack.c.h.b16 %v2740
        %v3123 = vunpack.c.l.b16 %v2741
        %v3124 = vunpack.c.h.b16 %v2741
        %v3125 = vunpack.c.l.b16 %v2742
        %v3126 = vunpack.c.h.b16 %v2742
        %v3127 = vunpack.c.l.b16 %v2743
        %v3128 = vunpack.c.h.b16 %v2743
        %v3129 = vunpack.c.l.b16 %v2744
        %v3130 = vunpack.c.h.b16 %v2744
        %v3131 = vunpack.c.l.b16 %v2745
        %v3132 = vunpack.c.h.b16 %v2745
        %v3133 = vunpack.c.l.b16 %v2746
        %v3134 = vunpack.c.h.b16 %v2746
        %v3135 = vunpack.c.l.b16 %v2747
        %v3136 = vunpack.c.h.b16 %v2747
        %v3137 = vunpack.c.l.b16 %v2748
        %v3138 = vunpack.c.h.b16 %v2748
        %v3139 = vunpack.c.l.b16 %v2749
        %v3140 = vunpack.c.h.b16 %v2749
        %v3141 = vunpack.c.l.b16 %v2750
        %v3142 = vunpack.c.h.b16 %v2750
        %v3143 = vunpack.c.l.b16 %v2751
        %v3144 = vunpack.c.h.b16 %v2751
        %v3145 = vunpack.c.l.b16 %v2752
        %v3146 = vunpack.c.h.b16 %v2752
        %v3147 = vunpack.c.l.b16 %v2753
        %v3148 = vunpack.c.h.b16 %v2753
        %v3149 = vunpack.c.l.b16 %v2754
        %v3150 = vunpack.c.h.b16 %v2754
        %v3151 = vpack.c.b16 %v2897, %v2895
        %v3152 = vpack.c.b16 %v2898, %v2896
        %v3153 = vpack.c.b16 %v2901, %v2899
        %v3154 = vpack.c.b16 %v2902, %v2900
        %v3155 = vpack.c.b16 %v2905, %v2903
        %v3156 = vpack.c.b16 %v2906, %v2904
        %v3157 = vpack.c.b16 %v2909, %v2907
        %v3158 = vpack.c.b16 %v2910, %v2908
        %v3159 = vpack.c.b16 %v2913, %v2911
        %v3160 = vpack.c.b16 %v2914, %v2912
        %v3161 = vpack.c.b16 %v2917, %v2915
        %v3162 = vpack.c.b16 %v2918, %v2916
        %v3163 = vpack.c.b16 %v2921, %v2919
        %v3164 = vpack.c.b16 %v2922, %v2920
        %v3165 = vpack.c.b16 %v2925, %v2923
        %v3166 = vpack.c.b16 %v2926, %v2924
        %v3167 = vpack.c.b16 %v2929, %v2927
        %v3168 = vpack.c.b16 %v2930, %v2928
        %v3169 = vpack.c.b16 %v2933, %v2931
        %v3170 = vpack.c.b16 %v2934, %v2932
        %v3171 = vpack.c.b16 %v2937, %v2935
        %v3172 = vpack.c.b16 %v2938, %v2936
        %v3173 = vpack.c.b16 %v2941, %v2939
        %v3174 = vpack.c.b16 %v2942, %v2940
        %v3175 = vpack.c.b16 %v2945, %v2943
        %v3176 = vpack.c.b16 %v2946, %v2944
        %v3177 = vpack.c.b16 %v2949, %v2947
        %v3178 = vpack.c.b16 %v2950, %v2948
        %v3179 = vpack.c.b16 %v2953, %v2951
        %v3180 = vpack.c.b16 %v2954, %v2952
        %v3181 = vpack.c.b16 %v2957, %v2955
        %v3182 = vpack.c.b16 %v2958, %v2956
        %v3183 = vpack.c.b16 %v2961, %v2959
        %v3184 = vpack.c.b16 %v2962, %v2960
        %v3185 = vpack.c.b16 %v2965, %v2963
        %v3186 = vpack.c.b16 %v2966, %v2964
        %v3187 = vpack.c.b16 %v2969, %v2967
        %v3188 = vpack.c.b16 %v2970, %v2968
        %v3189 = vpack.c.b16 %v2973, %v2971
        %v3190 = vpack.c.b16 %v2974, %v2972
        %v3191 = vpack.c.b16 %v2977, %v2975
        %v3192 = vpack.c.b16 %v2978, %v2976
        %v3193 = vpack.c.b16 %v2981, %v2979
        %v3194 = vpack.c.b16 %v2982, %v2980
        %v3195 = vpack.c.b16 %v2985, %v2983
        %v3196 = vpack.c.b16 %v2986, %v2984
        %v3197 = vpack.c.b16 %v2989, %v2987
        %v3198 = vpack.c.b16 %v2990, %v2988
        %v3199 = vpack.c.b16 %v2993, %v2991
        %v3200 = vpack.c.b16 %v2994, %v2992
        %v3201 = vpack.c.b16 %v2997, %v2995
        %v3202 = vpack.c.b16 %v2998, %v2996
        %v3203 = vpack.c.b16 %v3001, %v2999
        %v3204 = vpack.c.b16 %v3002, %v3000
        %v3205 = vpack.c.b16 %v3005, %v3003
        %v3206 = vpack.c.b16 %v3006, %v3004
        %v3207 = vpack.c.b16 %v3009, %v3007
        %v3208 = vpack.c.b16 %v3010, %v3008
        %v3209 = vpack.c.b16 %v3013, %v3011
        %v3210 = vpack.c.b16 %v3014, %v3012
        %v3211 = vpack.c.b16 %v3017, %v3015
        %v3212 = vpack.c.b16 %v3018, %v3016
        %v3213 = vpack.c.b16 %v3021, %v3019
        %v3214 = vpack.c.b16 %v3022, %v3020
        %v3215 = vpack.c.b16 %v3025, %v3023
        %v3216 = vpack.c.b16 %v3026, %v3024
        %v3217 = vpack.c.b16 %v3029, %v3027
        %v3218 = vpack.c.b16 %v3030, %v3028
        %v3219 = vpack.c.b16 %v3033, %v3031
        %v3220 = vpack.c.b16 %v3034, %v3032
        %v3221 = vpack.c.b16 %v3037, %v3035
        %v3222 = vpack.c.b16 %v3038, %v3036
        %v3223 = vpack.c.b16 %v3041, %v3039
        %v3224 = vpack.c.b16 %v3042, %v3040
        %v3225 = vpack.c.b16 %v3045, %v3043
        %v3226 = vpack.c.b16 %v3046, %v3044
        %v3227 = vpack.c.b16 %v3049, %v3047
        %v3228 = vpack.c.b16 %v3050, %v3048
        %v3229 = vpack.c.b16 %v3053, %v3051
        %v3230 = vpack.c.b16 %v3054, %v3052
        %v3231 = vpack.c.b16 %v3057, %v3055
        %v3232 = vpack.c.b16 %v3058, %v3056
        %v3233 = vpack.c.b16 %v3061, %v3059
        %v3234 = vpack.c.b16 %v3062, %v3060
        %v3235 = vpack.c.b16 %v3065, %v3063
        %v3236 = vpack.c.b16 %v3066, %v3064
        %v3237 = vpack.c.b16 %v3069, %v3067
        %v3238 = vpack.c.b16 %v3070, %v3068
        %v3239 = vpack.c.b16 %v3073, %v3071
        %v3240 = vpack.c.b16 %v3074, %v3072
        %v3241 = vpack.c.b16 %v3077, %v3075
        %v3242 = vpack.c.b16 %v3078, %v3076
        %v3243 = vpack.c.b16 %v3081, %v3079
        %v3244 = vpack.c.b16 %v3082, %v3080
        %v3245 = vpack.c.b16 %v3085, %v3083
        %v3246 = vpack.c.b16 %v3086, %v3084
        %v3247 = vpack.c.b16 %v3089, %v3087
        %v3248 = vpack.c.b16 %v3090, %v3088
        %v3249 = vpack.c.b16 %v3093, %v3091
        %v3250 = vpack.c.b16 %v3094, %v3092
        %v3251 = vpack.c.b16 %v3097, %v3095
        %v3252 = vpack.c.b16 %v3098, %v3096
        %v3253 = vpack.c.b16 %v3101, %v3099
        %v3254 = vpack.c.b16 %v3102, %v3100
        %v3255 = vpack.c.b16 %v3105, %v3103
        %v3256 = vpack.c.b16 %v3106, %v3104
        %v3257 = vpack.c.b16 %v3109, %v3107
        %v3258 = vpack.c.b16 %v3110, %v3108
        %v3259 = vpack.c.b16 %v3113, %v3111
        %v3260 = vpack.c.b16 %v3114, %v3112
        %v3261 = vpack.c.b16 %v3117, %v3115
        %v3262 = vpack.c.b16 %v3118, %v3116
        %v3263 = vpack.c.b16 %v3121, %v3119
        %v3264 = vpack.c.b16 %v3122, %v3120
        %v3265 = vpack.c.b16 %v3125, %v3123
        %v3266 = vpack.c.b16 %v3126, %v3124
        %v3267 = vpack.c.b16 %v3129, %v3127
        %v3268 = vpack.c.b16 %v3130, %v3128
        %v3269 = vpack.c.b16 %v3133, %v3131
        %v3270 = vpack.c.b16 %v3134, %v3132
        %v3271 = vpack.c.b16 %v3137, %v3135
        %v3272 = vpack.c.b16 %v3138, %v3136
        %v3273 = vpack.c.b16 %v3141, %v3139
        %v3274 = vpack.c.b16 %v3142, %v3140
        %v3275 = vpack.c.b16 %v3145, %v3143
        %v3276 = vpack.c.b16 %v3146, %v3144
        %v3277 = vpack.c.b16 %v3149, %v3147
        %v3278 = vpack.c.b16 %v3150, %v3148
        %3407 = vmatprep.subr.bf16.mxu0 %v3152
        %3408 = vmatpush1.bf16.msra.mxu0 %v3151
        %3409 = vmatprep.subr.bf16.mxu0 %v3154
        %3410 = vmatpush1.bf16.msra.mxu0 %v3153
        %3411 = vmatprep.subr.bf16.mxu0 %v3156
        %3412 = vmatpush1.bf16.msra.mxu0 %v3155
        %3413 = vmatprep.subr.bf16.mxu0 %v3158
        %3414 = vmatpush1.bf16.msra.mxu0 %v3157
        %3415 = vmatprep.subr.bf16.mxu0 %v3160
        %3416 = vmatpush1.bf16.msra.mxu0 %v3159
        %3417 = vmatprep.subr.bf16.mxu0 %v3162
        %3418 = vmatpush1.bf16.msra.mxu0 %v3161
        %3419 = vmatprep.subr.bf16.mxu0 %v3164
        %3420 = vmatpush1.bf16.msra.mxu0 %v3163
        %3421 = vmatprep.subr.bf16.mxu0 %v3166
        %3422 = vmatpush1.bf16.msra.mxu0 %v3165
        %3423 = vmatprep.subr.bf16.mxu0 %v3168
        %3424 = vmatpush1.bf16.msra.mxu0 %v3167
        %3425 = vmatprep.subr.bf16.mxu0 %v3170
        %3426 = vmatpush1.bf16.msra.mxu0 %v3169
        %3427 = vmatprep.subr.bf16.mxu0 %v3172
        %3428 = vmatpush1.bf16.msra.mxu0 %v3171
        %3429 = vmatprep.subr.bf16.mxu0 %v3174
        %3430 = vmatpush1.bf16.msra.mxu0 %v3173
        %3431 = vmatprep.subr.bf16.mxu0 %v3176
        %3432 = vmatpush1.bf16.msra.mxu0 %v3175
        %3433 = vmatprep.subr.bf16.mxu0 %v3178
        %3434 = vmatpush1.bf16.msra.mxu0 %v3177
        %3435 = vmatprep.subr.bf16.mxu0 %v3180
        %3436 = vmatpush1.bf16.msra.mxu0 %v3179
        %3437 = vmatprep.subr.bf16.mxu0 %v3182
        %3438 = vmatpush1.bf16.msra.mxu0 %v3181
        %3439 = vmatprep.mubr.bf16.mxu0 %v2390
        %3440 = vmatmul.mubr.bf16.gmra.mrb[0].mxu0 %v2389
        %v3441 = vpop.f32.mrb[0].mxu0
        %v3442 = vadd.f32 %v2760, %v3441
        %v3443 = vpop.f32.mrb[0].mxu0
        %v3444 = vadd.f32 %v2764, %v3443
        %v3445 = vpop.f32.mrb[0].mxu0
        %v3446 = vadd.f32 %v2760, %v3445
        %v3447 = vpop.f32.mrb[0].mxu0
        %v3448 = vadd.f32 %v2764, %v3447
        %3449 = vmatprep.mubr.bf16.mxu0 %v2392
        %3450 = vmatmul.mubr.bf16.gmra.mrb[0].mxu0 %v2391
        %v3451 = vpop.f32.mrb[0].mxu0
        %v3452 = vadd.f32 %v2760, %v3451
        %v3453 = vpop.f32.mrb[0].mxu0
        %v3454 = vadd.f32 %v2764, %v3453
        %v3455 = vpop.f32.mrb[0].mxu0
        %v3456 = vadd.f32 %v2760, %v3455
        %v3457 = vpop.f32.mrb[0].mxu0
        %v3458 = vadd.f32 %v2764, %v3457
        %3459 = vdwg.mxu0
        %3460 = vmatprep.subr.bf16.mxu0 %v3184
        %3461 = vmatpush1.bf16.msra.mxu0 %v3183
        %3462 = vmatprep.subr.bf16.mxu0 %v3186
        %3463 = vmatpush1.bf16.msra.mxu0 %v3185
        %3464 = vmatprep.subr.bf16.mxu0 %v3188
        %3465 = vmatpush1.bf16.msra.mxu0 %v3187
        %3466 = vmatprep.subr.bf16.mxu0 %v3190
        %3467 = vmatpush1.bf16.msra.mxu0 %v3189
        %3468 = vmatprep.subr.bf16.mxu0 %v3192
        %3469 = vmatpush1.bf16.msra.mxu0 %v3191
        %3470 = vmatprep.subr.bf16.mxu0 %v3194
        %3471 = vmatpush1.bf16.msra.mxu0 %v3193
        %3472 = vmatprep.subr.bf16.mxu0 %v3196
        %3473 = vmatpush1.bf16.msra.mxu0 %v3195
        %3474 = vmatprep.subr.bf16.mxu0 %v3198
        %3475 = vmatpush1.bf16.msra.mxu0 %v3197
        %3476 = vmatprep.subr.bf16.mxu0 %v3200
        %3477 = vmatpush1.bf16.msra.mxu0 %v3199
        %3478 = vmatprep.subr.bf16.mxu0 %v3202
        %3479 = vmatpush1.bf16.msra.mxu0 %v3201
        %3480 = vmatprep.subr.bf16.mxu0 %v3204
        %3481 = vmatpush1.bf16.msra.mxu0 %v3203
        %3482 = vmatprep.subr.bf16.mxu0 %v3206
        %3483 = vmatpush1.bf16.msra.mxu0 %v3205
        %3484 = vmatprep.subr.bf16.mxu0 %v3208
        %3485 = vmatpush1.bf16.msra.mxu0 %v3207
        %3486 = vmatprep.subr.bf16.mxu0 %v3210
        %3487 = vmatpush1.bf16.msra.mxu0 %v3209
        %3488 = vmatprep.subr.bf16.mxu0 %v3212
        %3489 = vmatpush1.bf16.msra.mxu0 %v3211
        %3490 = vmatprep.subr.bf16.mxu0 %v3214
        %3491 = vmatpush1.bf16.msra.mxu0 %v3213
        %3492 = vmatprep.mubr.bf16.mxu0 %v2468
        %3493 = vmatmul.mubr.bf16.gmra.mrb[0].mxu0 %v2467
        %v3494 = vpop.f32.mrb[0].mxu0
        %v3495 = vadd.f32 %v3442, %v3494
        %v3496 = vpop.f32.mrb[0].mxu0
        %v3497 = vadd.f32 %v3444, %v3496
        %v3498 = vpop.f32.mrb[0].mxu0
        %v3499 = vadd.f32 %v3446, %v3498
        %v3500 = vpop.f32.mrb[0].mxu0
        %v3501 = vadd.f32 %v3448, %v3500
        %3502 = vmatprep.mubr.bf16.mxu0 %v2470
        %3503 = vmatmul.mubr.bf16.gmra.mrb[0].mxu0 %v2469
        %v3504 = vpop.f32.mrb[0].mxu0
        %v3505 = vadd.f32 %v3452, %v3504
        %v3506 = vpop.f32.mrb[0].mxu0
        %v3507 = vadd.f32 %v3454, %v3506
        %v3508 = vpop.f32.mrb[0].mxu0
        %v3509 = vadd.f32 %v3456, %v3508
        %v3510 = vpop.f32.mrb[0].mxu0
        %v3511 = vadd.f32 %v3458, %v3510
        %3512 = vdwg.mxu0
        %3513 = vmatprep.subr.bf16.mxu0 %v3216
        %3514 = vmatpush1.bf16.msra.mxu0 %v3215
        %3515 = vmatprep.subr.bf16.mxu0 %v3218
        %3516 = vmatpush1.bf16.msra.mxu0 %v3217
        %3517 = vmatprep.subr.bf16.mxu0 %v3220
        %3518 = vmatpush1.bf16.msra.mxu0 %v3219
        %3519 = vmatprep.subr.bf16.mxu0 %v3222
        %3520 = vmatpush1.bf16.msra.mxu0 %v3221
        %3521 = vmatprep.subr.bf16.mxu0 %v3224
        %3522 = vmatpush1.bf16.msra.mxu0 %v3223
        %3523 = vmatprep.subr.bf16.mxu0 %v3226
        %3524 = vmatpush1.bf16.msra.mxu0 %v3225
        %3525 = vmatprep.subr.bf16.mxu0 %v3228
        %3526 = vmatpush1.bf16.msra.mxu0 %v3227
        %3527 = vmatprep.subr.bf16.mxu0 %v3230
        %3528 = vmatpush1.bf16.msra.mxu0 %v3229
        %3529 = vmatprep.subr.bf16.mxu0 %v3232
        %3530 = vmatpush1.bf16.msra.mxu0 %v3231
        %3531 = vmatprep.subr.bf16.mxu0 %v3234
        %3532 = vmatpush1.bf16.msra.mxu0 %v3233
        %3533 = vmatprep.subr.bf16.mxu0 %v3236
        %3534 = vmatpush1.bf16.msra.mxu0 %v3235
        %3535 = vmatprep.subr.bf16.mxu0 %v3238
        %3536 = vmatpush1.bf16.msra.mxu0 %v3237
        %3537 = vmatprep.subr.bf16.mxu0 %v3240
        %3538 = vmatpush1.bf16.msra.mxu0 %v3239
        %3539 = vmatprep.subr.bf16.mxu0 %v3242
        %3540 = vmatpush1.bf16.msra.mxu0 %v3241
        %3541 = vmatprep.subr.bf16.mxu0 %v3244
        %3542 = vmatpush1.bf16.msra.mxu0 %v3243
        %3543 = vmatprep.subr.bf16.mxu0 %v3246
        %3544 = vmatpush1.bf16.msra.mxu0 %v3245
        %3545 = vmatprep.mubr.bf16.mxu0 %v2546
        %3546 = vmatmul.mubr.bf16.gmra.mrb[0].mxu0 %v2545
        %v3547 = vpop.f32.mrb[0].mxu0
        %v3548 = vadd.f32 %v3495, %v3547
        %v3549 = vpop.f32.mrb[0].mxu0
        %v3550 = vadd.f32 %v3497, %v3549
        %v3551 = vpop.f32.mrb[0].mxu0
        %v3552 = vadd.f32 %v3499, %v3551
        %v3553 = vpop.f32.mrb[0].mxu0
        %v3554 = vadd.f32 %v3501, %v3553
        %3555 = vmatprep.mubr.bf16.mxu0 %v2548
        %3556 = vmatmul.mubr.bf16.gmra.mrb[0].mxu0 %v2547
        %v3557 = vpop.f32.mrb[0].mxu0
        %v3558 = vadd.f32 %v3505, %v3557
        %v3559 = vpop.f32.mrb[0].mxu0
        %v3560 = vadd.f32 %v3507, %v3559
        %v3561 = vpop.f32.mrb[0].mxu0
        %v3562 = vadd.f32 %v3509, %v3561
        %v3563 = vpop.f32.mrb[0].mxu0
        %v3564 = vadd.f32 %v3511, %v3563
        %3565 = vdwg.mxu0
        %3566 = vmatprep.subr.bf16.mxu0 %v3248
        %3567 = vmatpush1.bf16.msra.mxu0 %v3247
        %3568 = vmatprep.subr.bf16.mxu0 %v3250
        %3569 = vmatpush1.bf16.msra.mxu0 %v3249
        %3570 = vmatprep.subr.bf16.mxu0 %v3252
        %3571 = vmatpush1.bf16.msra.mxu0 %v3251
        %3572 = vmatprep.subr.bf16.mxu0 %v3254
        %3573 = vmatpush1.bf16.msra.mxu0 %v3253
        %3574 = vmatprep.subr.bf16.mxu0 %v3256
        %3575 = vmatpush1.bf16.msra.mxu0 %v3255
        %3576 = vmatprep.subr.bf16.mxu0 %v3258
        %3577 = vmatpush1.bf16.msra.mxu0 %v3257
        %3578 = vmatprep.subr.bf16.mxu0 %v3260
        %3579 = vmatpush1.bf16.msra.mxu0 %v3259
        %3580 = vmatprep.subr.bf16.mxu0 %v3262
        %3581 = vmatpush1.bf16.msra.mxu0 %v3261
        %3582 = vmatprep.subr.bf16.mxu0 %v3264
        %3583 = vmatpush1.bf16.msra.mxu0 %v3263
        %3584 = vmatprep.subr.bf16.mxu0 %v3266
        %3585 = vmatpush1.bf16.msra.mxu0 %v3265
        %3586 = vmatprep.subr.bf16.mxu0 %v3268
        %3587 = vmatpush1.bf16.msra.mxu0 %v3267
        %3588 = vmatprep.subr.bf16.mxu0 %v3270
        %3589 = vmatpush1.bf16.msra.mxu0 %v3269
        %3590 = vmatprep.subr.bf16.mxu0 %v3272
        %3591 = vmatpush1.bf16.msra.mxu0 %v3271
        %3592 = vmatprep.subr.bf16.mxu0 %v3274
        %3593 = vmatpush1.bf16.msra.mxu0 %v3273
        %3594 = vmatprep.subr.bf16.mxu0 %v3276
        %3595 = vmatpush1.bf16.msra.mxu0 %v3275
        %3596 = vmatprep.subr.bf16.mxu0 %v3278
        %3597 = vmatpush1.bf16.msra.mxu0 %v3277
        %3598 = vmatprep.mubr.bf16.mxu0 %v2624
        %3599 = vmatmul.mubr.bf16.gmra.mrb[0].mxu0 %v2623
        %v3600 = vpop.f32.mrb[0].mxu0
        %v3601 = vadd.f32 %v3548, %v3600
        %v3602 = vpop.f32.mrb[0].mxu0
        %v3603 = vadd.f32 %v3550, %v3602
        %v3604 = vpop.f32.mrb[0].mxu0
        %v3605 = vadd.f32 %v3552, %v3604
        %v3606 = vpop.f32.mrb[0].mxu0
        %v3607 = vadd.f32 %v3554, %v3606
        %3608 = vmatprep.mubr.bf16.mxu0 %v2626
        %3609 = vmatmul.mubr.bf16.gmra.mrb[0].mxu0 %v2625
        %v3610 = vpop.f32.mrb[0].mxu0
        %v3611 = vadd.f32 %v3558, %v3610
        %v3612 = vpop.f32.mrb[0].mxu0
        %v3613 = vadd.f32 %v3560, %v3612
        %v3614 = vpop.f32.mrb[0].mxu0
        %v3615 = vadd.f32 %v3562, %v3614
        %v3616 = vpop.f32.mrb[0].mxu0
        %v3617 = vadd.f32 %v3564, %v3616
        %3618 = vdwg.mxu0
        %vm3619 = vcmp.gt.f32.partialorder %v3601, 0.0
        %vm3620 = vcmp.gt.f32.partialorder %v3603, 0.0
        %vm3621 = vcmp.gt.f32.partialorder %v3605, 0.0
        %vm3622 = vcmp.gt.f32.partialorder %v3607, 0.0
        %vm3623 = vcmp.gt.f32.partialorder %v3611, 0.0
        %vm3624 = vcmp.gt.f32.partialorder %v3613, 0.0
        %vm3625 = vcmp.gt.f32.partialorder %v3615, 0.0
        %vm3626 = vcmp.gt.f32.partialorder %v3617, 0.0
        %v3627 = vmul.f32 %v3601, 0.2
        %v3628 = vmul.f32 %v3603, 0.2
        %v3629 = vmul.f32 %v3605, 0.2
        %v3630 = vmul.f32 %v3607, 0.2
        %v3631 = vmul.f32 %v3611, 0.2
        %v3632 = vmul.f32 %v3613, 0.2
        %v3633 = vmul.f32 %v3615, 0.2
        %v3634 = vmul.f32 %v3617, 0.2
        %v3635 = vsel %vm3619, %v3601, %v3627
        %v3636 = vsel %vm3620, %v3603, %v3628
        %v3637 = vsel %vm3621, %v3605, %v3629
        %v3638 = vsel %vm3622, %v3607, %v3630
        %v3639 = vsel %vm3623, %v3611, %v3631
        %v3640 = vsel %vm3624, %v3613, %v3632
        %v3641 = vsel %vm3625, %v3615, %v3633
        %v3642 = vsel %vm3626, %v3617, %v3634
        %v3643 = vpack.c.bf16 %v3637, %v3635
        %v3644 = vpack.c.bf16 %v3638, %v3636
        %v3645 = vpack.c.bf16 %v3641, %v3639
        %v3646 = vpack.c.bf16 %v3642, %v3640
        %v3647 = vld [vmem:[#allocation6] sm:$0xf]
        %v3648 = vld [vmem:[#allocation6 + $0x4] sm:$0xf]
        %v3651 = vunpack.c.l.b16 %v3647
        %v3652 = vunpack.c.l.b16 %v3648
        %v3653 = vpack.c.b16 %v3652, %v3651
        %vm3654 = vcmask 261120
        %v3656 = vsel %vm3654, %v3653, 0
        %3658 = vmatprep.subr.bf16.mxu0 %v3644
        %3659 = vmatpush1.bf16.msra.mxu0 %v3643
        %3660 = vmatprep.subr.bf16.mxu0 %v3646
        %3661 = vmatpush1.bf16.msra.mxu0 %v3645
        %3662 = vmatprep.subr.bf16.mxu0 0
        %3663 = vmatpush1.bf16.msra.mxu0 0
        %3664 = vmatprep.subr.bf16.mxu0 0
        %3665 = vmatpush1.bf16.msra.mxu0 0
        %3666 = vmatprep.subr.bf16.mxu0 0
        %3667 = vmatpush1.bf16.msra.mxu0 0
        %3668 = vmatprep.subr.bf16.mxu0 0
        %3669 = vmatpush1.bf16.msra.mxu0 0
        %3670 = vmatprep.subr.bf16.mxu0 0
        %3671 = vmatpush1.bf16.msra.mxu0 0
        %3672 = vmatprep.subr.bf16.mxu0 0
        %3673 = vmatpush1.bf16.msra.mxu0 0
        %3674 = vmatprep.subr.bf16.mxu0 0
        %3675 = vmatpush1.bf16.msra.mxu0 0
        %3676 = vmatprep.subr.bf16.mxu0 0
        %3677 = vmatpush1.bf16.msra.mxu0 0
        %3678 = vmatprep.subr.bf16.mxu0 0
        %3679 = vmatpush1.bf16.msra.mxu0 0
        %3680 = vmatprep.subr.bf16.mxu0 0
        %3681 = vmatpush1.bf16.msra.mxu0 0
        %3682 = vmatprep.subr.bf16.mxu0 0
        %3683 = vmatpush1.bf16.msra.mxu0 0
        %3684 = vmatprep.subr.bf16.mxu0 0
        %3685 = vmatpush1.bf16.msra.mxu0 0
        %3686 = vmatprep.subr.bf16.mxu0 0
        %3687 = vmatpush1.bf16.msra.mxu0 0
        %3688 = vmatprep.subr.bf16.mxu0 0
        %3689 = vmatpush1.bf16.msra.mxu0 0
        %3690 = vmatprep.mubr.bf16.mxu0 0
        %3691 = vmatmul.mubr.bf16.gmra.mrb[0].mxu0 %v3656
        %v3692 = vpop.f32.mrb[0].mxu0
        %v3693 = vadd.f32 0.0, %v3692
        %v3694 = vpop.f32.mrb[0].mxu0
        %v3695 = vadd.f32 0.0, %v3694
        %v3696 = vpop.f32.mrb[0].mxu0
        %v3697 = vadd.f32 0.0, %v3696
        %v3698 = vpop.f32.mrb[0].mxu0
        %v3699 = vadd.f32 0.0, %v3698
        %3700 = vdwg.mxu0
        %v3701 = vpack.c.bf16 %v3697, %v3693
        %v3702 = vpack.c.bf16 %v3699, %v3695
        %s3703 = scalar_lea.vmem [#allocation6], 8
        %v3704 = vld [vmem:[%s3703] sm:$0xf]
        %v3705 = vld [vmem:[%s3703 + $0x4] sm:$0xf]
        %v3708 = vunpack.c.l.b16 %v3704
        %v3709 = vunpack.c.l.b16 %v3705
        %v3710 = vpack.c.b16 %v3709, %v3708
        %v3712 = vsel %vm3654, %v3710, 0
        %3714 = vmatprep.subr.bf16.mxu0 %v3644
        %3715 = vmatpush1.bf16.msra.mxu0 %v3643
        %3716 = vmatprep.subr.bf16.mxu0 %v3646
        %3717 = vmatpush1.bf16.msra.mxu0 %v3645
        %3718 = vmatprep.subr.bf16.mxu0 0
        %3719 = vmatpush1.bf16.msra.mxu0 0
        %3720 = vmatprep.subr.bf16.mxu0 0
        %3721 = vmatpush1.bf16.msra.mxu0 0
        %3722 = vmatprep.subr.bf16.mxu0 0
        %3723 = vmatpush1.bf16.msra.mxu0 0
        %3724 = vmatprep.subr.bf16.mxu0 0
        %3725 = vmatpush1.bf16.msra.mxu0 0
        %3726 = vmatprep.subr.bf16.mxu0 0
        %3727 = vmatpush1.bf16.msra.mxu0 0
        %3728 = vmatprep.subr.bf16.mxu0 0
        %3729 = vmatpush1.bf16.msra.mxu0 0
        %3730 = vmatprep.subr.bf16.mxu0 0
        %3731 = vmatpush1.bf16.msra.mxu0 0
        %3732 = vmatprep.subr.bf16.mxu0 0
        %3733 = vmatpush1.bf16.msra.mxu0 0
        %3734 = vmatprep.subr.bf16.mxu0 0
        %3735 = vmatpush1.bf16.msra.mxu0 0
        %3736 = vmatprep.subr.bf16.mxu0 0
        %3737 = vmatpush1.bf16.msra.mxu0 0
        %3738 = vmatprep.subr.bf16.mxu0 0
        %3739 = vmatpush1.bf16.msra.mxu0 0
        %3740 = vmatprep.subr.bf16.mxu0 0
        %3741 = vmatpush1.bf16.msra.mxu0 0
        %3742 = vmatprep.subr.bf16.mxu0 0
        %3743 = vmatpush1.bf16.msra.mxu0 0
        %3744 = vmatprep.subr.bf16.mxu0 0
        %3745 = vmatpush1.bf16.msra.mxu0 0
        %3746 = vmatprep.mubr.bf16.mxu0 0
        %3747 = vmatmul.mubr.bf16.gmra.mrb[0].mxu0 %v3712
        %v3748 = vpop.f32.mrb[0].mxu0
        %v3749 = vadd.f32 0.0, %v3748
        %v3750 = vpop.f32.mrb[0].mxu0
        %v3751 = vadd.f32 0.0, %v3750
        %v3752 = vpop.f32.mrb[0].mxu0
        %v3753 = vadd.f32 0.0, %v3752
        %v3754 = vpop.f32.mrb[0].mxu0
        %v3755 = vadd.f32 0.0, %v3754
        %3756 = vdwg.mxu0
        %v3757 = vpack.c.bf16 %v3753, %v3749
        %v3758 = vpack.c.bf16 %v3755, %v3751
        %s3759 = scalar_lea.vmem [#allocation6], 16
        %v3760 = vld [vmem:[%s3759] sm:$0xf]
        %v3761 = vld [vmem:[%s3759 + $0x4] sm:$0xf]
        %v3764 = vunpack.c.l.b16 %v3760
        %v3765 = vunpack.c.l.b16 %v3761
        %v3766 = vpack.c.b16 %v3765, %v3764
        %v3768 = vsel %vm3654, %v3766, 0
        %3770 = vmatprep.subr.bf16.mxu0 %v3644
        %3771 = vmatpush1.bf16.msra.mxu0 %v3643
        %3772 = vmatprep.subr.bf16.mxu0 %v3646
        %3773 = vmatpush1.bf16.msra.mxu0 %v3645
        %3774 = vmatprep.subr.bf16.mxu0 0
        %3775 = vmatpush1.bf16.msra.mxu0 0
        %3776 = vmatprep.subr.bf16.mxu0 0
        %3777 = vmatpush1.bf16.msra.mxu0 0
        %3778 = vmatprep.subr.bf16.mxu0 0
        %3779 = vmatpush1.bf16.msra.mxu0 0
        %3780 = vmatprep.subr.bf16.mxu0 0
        %3781 = vmatpush1.bf16.msra.mxu0 0
        %3782 = vmatprep.subr.bf16.mxu0 0
        %3783 = vmatpush1.bf16.msra.mxu0 0
        %3784 = vmatprep.subr.bf16.mxu0 0
        %3785 = vmatpush1.bf16.msra.mxu0 0
        %3786 = vmatprep.subr.bf16.mxu0 0
        %3787 = vmatpush1.bf16.msra.mxu0 0
        %3788 = vmatprep.subr.bf16.mxu0 0
        %3789 = vmatpush1.bf16.msra.mxu0 0
        %3790 = vmatprep.subr.bf16.mxu0 0
        %3791 = vmatpush1.bf16.msra.mxu0 0
        %3792 = vmatprep.subr.bf16.mxu0 0
        %3793 = vmatpush1.bf16.msra.mxu0 0
        %3794 = vmatprep.subr.bf16.mxu0 0
        %3795 = vmatpush1.bf16.msra.mxu0 0
        %3796 = vmatprep.subr.bf16.mxu0 0
        %3797 = vmatpush1.bf16.msra.mxu0 0
        %3798 = vmatprep.subr.bf16.mxu0 0
        %3799 = vmatpush1.bf16.msra.mxu0 0
        %3800 = vmatprep.subr.bf16.mxu0 0
        %3801 = vmatpush1.bf16.msra.mxu0 0
        %3802 = vmatprep.mubr.bf16.mxu0 0
        %3803 = vmatmul.mubr.bf16.gmra.mrb[0].mxu0 %v3768
        %v3804 = vpop.f32.mrb[0].mxu0
        %v3805 = vadd.f32 0.0, %v3804
        %v3806 = vpop.f32.mrb[0].mxu0
        %v3807 = vadd.f32 0.0, %v3806
        %v3808 = vpop.f32.mrb[0].mxu0
        %v3809 = vadd.f32 0.0, %v3808
        %v3810 = vpop.f32.mrb[0].mxu0
        %v3811 = vadd.f32 0.0, %v3810
        %3812 = vdwg.mxu0
        %v3813 = vpack.c.bf16 %v3809, %v3805
        %v3814 = vpack.c.bf16 %v3811, %v3807
        %s3815 = scalar_lea.vmem [#allocation6], 24
        %v3816 = vld [vmem:[%s3815] sm:$0xf]
        %v3817 = vld [vmem:[%s3815 + $0x4] sm:$0xf]
        %v3820 = vunpack.c.l.b16 %v3816
        %v3821 = vunpack.c.l.b16 %v3817
        %v3822 = vpack.c.b16 %v3821, %v3820
        %v3824 = vsel %vm3654, %v3822, 0
        %3826 = vmatprep.subr.bf16.mxu0 %v3644
        %3827 = vmatpush1.bf16.msra.mxu0 %v3643
        %3828 = vmatprep.subr.bf16.mxu0 %v3646
        %3829 = vmatpush1.bf16.msra.mxu0 %v3645
        %3830 = vmatprep.subr.bf16.mxu0 0
        %3831 = vmatpush1.bf16.msra.mxu0 0
        %3832 = vmatprep.subr.bf16.mxu0 0
        %3833 = vmatpush1.bf16.msra.mxu0 0
        %3834 = vmatprep.subr.bf16.mxu0 0
        %3835 = vmatpush1.bf16.msra.mxu0 0
        %3836 = vmatprep.subr.bf16.mxu0 0
        %3837 = vmatpush1.bf16.msra.mxu0 0
        %3838 = vmatprep.subr.bf16.mxu0 0
        %3839 = vmatpush1.bf16.msra.mxu0 0
        %3840 = vmatprep.subr.bf16.mxu0 0
        %3841 = vmatpush1.bf16.msra.mxu0 0
        %3842 = vmatprep.subr.bf16.mxu0 0
        %3843 = vmatpush1.bf16.msra.mxu0 0
        %3844 = vmatprep.subr.bf16.mxu0 0
        %3845 = vmatpush1.bf16.msra.mxu0 0
        %3846 = vmatprep.subr.bf16.mxu0 0
        %3847 = vmatpush1.bf16.msra.mxu0 0
        %3848 = vmatprep.subr.bf16.mxu0 0
        %3849 = vmatpush1.bf16.msra.mxu0 0
        %3850 = vmatprep.subr.bf16.mxu0 0
        %3851 = vmatpush1.bf16.msra.mxu0 0
        %3852 = vmatprep.subr.bf16.mxu0 0
        %3853 = vmatpush1.bf16.msra.mxu0 0
        %3854 = vmatprep.subr.bf16.mxu0 0
        %3855 = vmatpush1.bf16.msra.mxu0 0
        %3856 = vmatprep.subr.bf16.mxu0 0
        %3857 = vmatpush1.bf16.msra.mxu0 0
        %3858 = vmatprep.mubr.bf16.mxu0 0
        %3859 = vmatmul.mubr.bf16.gmra.mrb[0].mxu0 %v3824
        %v3860 = vpop.f32.mrb[0].mxu0
        %v3861 = vadd.f32 0.0, %v3860
        %v3862 = vpop.f32.mrb[0].mxu0
        %v3863 = vadd.f32 0.0, %v3862
        %v3864 = vpop.f32.mrb[0].mxu0
        %v3865 = vadd.f32 0.0, %v3864
        %v3866 = vpop.f32.mrb[0].mxu0
        %v3867 = vadd.f32 0.0, %v3866
        %3868 = vdwg.mxu0
        %v3869 = vpack.c.bf16 %v3865, %v3861
        %v3870 = vpack.c.bf16 %v3867, %v3863
        %v3871 = vld [vmem:[#allocation10] sm:$0xff]
        %v3872 = vld [vmem:[#allocation10 + $0x8] sm:$0xff]
        %v3873 = vld [vmem:[#allocation10 + $0x10] sm:$0xff]
        %v3874 = vld [vmem:[#allocation10 + $0x18] sm:$0xff]
        %v3875 = vld [vmem:[#allocation10 + $0x20] sm:$0xff]
        %v3876 = vld [vmem:[#allocation10 + $0x28] sm:$0xff]
        %v3877 = vld [vmem:[#allocation10 + $0x30] sm:$0xff]
        %v3878 = vld [vmem:[#allocation10 + $0x38] sm:$0xff]
        %v3879 = vld [vmem:[#allocation10 + $0x40] sm:$0xff]
        %v3880 = vld [vmem:[#allocation10 + $0x48] sm:$0xff]
        %v3881 = vld [vmem:[#allocation10 + $0x50] sm:$0xff]
        %v3882 = vld [vmem:[#allocation10 + $0x58] sm:$0xff]
        %v3883 = vld [vmem:[#allocation10 + $0x60] sm:$0xff]
        %v3884 = vld [vmem:[#allocation10 + $0x68] sm:$0xff]
        %v3885 = vld [vmem:[#allocation10 + $0x70] sm:$0xff]
        %v3886 = vld [vmem:[#allocation10 + $0x78] sm:$0xff]
        %v3887 = vld [vmem:[#allocation10 + $0x80] sm:$0xff]
        %v3888 = vld [vmem:[#allocation10 + $0x88] sm:$0xff]
        %v3889 = vld [vmem:[#allocation10 + $0x90] sm:$0xff]
        %v3890 = vld [vmem:[#allocation10 + $0x98] sm:$0xff]
        %v3891 = vld [vmem:[#allocation10 + $0xa0] sm:$0xff]
        %v3892 = vld [vmem:[#allocation10 + $0xa8] sm:$0xff]
        %v3893 = vld [vmem:[#allocation10 + $0xb0] sm:$0xff]
        %v3894 = vld [vmem:[#allocation10 + $0xb8] sm:$0xff]
        %v3895 = vld [vmem:[#allocation10 + $0xc0] sm:$0xff]
        %v3896 = vld [vmem:[#allocation10 + $0xc8] sm:$0xff]
        %v3897 = vld [vmem:[#allocation10 + $0xd0] sm:$0xff]
        %v3898 = vld [vmem:[#allocation10 + $0xd8] sm:$0xff]
        %v3899 = vld [vmem:[#allocation10 + $0xe0] sm:$0xff]
        %v3900 = vld [vmem:[#allocation10 + $0xe8] sm:$0xff]
        %v3901 = vld [vmem:[#allocation10 + $0xf0] sm:$0xff]
        %v3902 = vld [vmem:[#allocation10 + $0xf8] sm:$0xff]
        %v3903 = vld [vmem:[#allocation10 + $0x100] sm:$0xff]
        %v3904 = vld [vmem:[#allocation10 + $0x108] sm:$0xff]
        %v3905 = vld [vmem:[#allocation10 + $0x110] sm:$0xff]
        %v3906 = vld [vmem:[#allocation10 + $0x118] sm:$0xff]
        %v3907 = vld [vmem:[#allocation10 + $0x120] sm:$0xff]
        %v3908 = vld [vmem:[#allocation10 + $0x128] sm:$0xff]
        %v3909 = vld [vmem:[#allocation10 + $0x130] sm:$0xff]
        %v3910 = vld [vmem:[#allocation10 + $0x138] sm:$0xff]
        %v3911 = vld [vmem:[#allocation10 + $0x140] sm:$0xff]
        %v3912 = vld [vmem:[#allocation10 + $0x148] sm:$0xff]
        %v3913 = vld [vmem:[#allocation10 + $0x150] sm:$0xff]
        %v3914 = vld [vmem:[#allocation10 + $0x158] sm:$0xff]
        %v3915 = vld [vmem:[#allocation10 + $0x160] sm:$0xff]
        %v3916 = vld [vmem:[#allocation10 + $0x168] sm:$0xff]
        %v3917 = vld [vmem:[#allocation10 + $0x170] sm:$0xff]
        %v3918 = vld [vmem:[#allocation10 + $0x178] sm:$0xff]
        %v3919 = vld [vmem:[#allocation10 + $0x180] sm:$0xff]
        %v3920 = vld [vmem:[#allocation10 + $0x188] sm:$0xff]
        %v3921 = vld [vmem:[#allocation10 + $0x190] sm:$0xff]
        %v3922 = vld [vmem:[#allocation10 + $0x198] sm:$0xff]
        %v3923 = vld [vmem:[#allocation10 + $0x1a0] sm:$0xff]
        %v3924 = vld [vmem:[#allocation10 + $0x1a8] sm:$0xff]
        %v3925 = vld [vmem:[#allocation10 + $0x1b0] sm:$0xff]
        %v3926 = vld [vmem:[#allocation10 + $0x1b8] sm:$0xff]
        %v3927 = vld [vmem:[#allocation10 + $0x1c0] sm:$0xff]
        %v3928 = vld [vmem:[#allocation10 + $0x1c8] sm:$0xff]
        %v3929 = vld [vmem:[#allocation10 + $0x1d0] sm:$0xff]
        %v3930 = vld [vmem:[#allocation10 + $0x1d8] sm:$0xff]
        %v3931 = vld [vmem:[#allocation10 + $0x1e0] sm:$0xff]
        %v3932 = vld [vmem:[#allocation10 + $0x1e8] sm:$0xff]
        %v3933 = vld [vmem:[#allocation10 + $0x1f0] sm:$0xff]
        %v3934 = vld [vmem:[#allocation10 + $0x1f8] sm:$0xff]
        %v3935 = vld [vmem:[#allocation10 + $0x200] sm:$0xff]
        %v3936 = vld [vmem:[#allocation10 + $0x208] sm:$0xff]
        %v3937 = vld [vmem:[#allocation10 + $0x210] sm:$0xff]
        %v3938 = vld [vmem:[#allocation10 + $0x218] sm:$0xff]
        %v3939 = vld [vmem:[#allocation10 + $0x220] sm:$0xff]
        %v3940 = vld [vmem:[#allocation10 + $0x228] sm:$0xff]
        %v3941 = vld [vmem:[#allocation10 + $0x230] sm:$0xff]
        %v3942 = vld [vmem:[#allocation10 + $0x238] sm:$0xff]
        %v3943 = vld [vmem:[#allocation10 + $0x240] sm:$0xff]
        %v3944 = vld [vmem:[#allocation10 + $0x248] sm:$0xff]
        %v3945 = vld [vmem:[#allocation10 + $0x250] sm:$0xff]
        %v3946 = vld [vmem:[#allocation10 + $0x258] sm:$0xff]
        %v3947 = vld [vmem:[#allocation10 + $0x260] sm:$0xff]
        %v3948 = vld [vmem:[#allocation10 + $0x268] sm:$0xff]
        %v3949 = vld [vmem:[#allocation10 + $0x270] sm:$0xff]
        %v3950 = vld [vmem:[#allocation10 + $0x278] sm:$0xff]
        %v3951 = vld [vmem:[#allocation10 + $0x280] sm:$0xff]
        %v3952 = vld [vmem:[#allocation10 + $0x288] sm:$0xff]
        %v3953 = vld [vmem:[#allocation10 + $0x290] sm:$0xff]
        %v3954 = vld [vmem:[#allocation10 + $0x298] sm:$0xff]
        %v3955 = vld [vmem:[#allocation10 + $0x2a0] sm:$0xff]
        %v3956 = vld [vmem:[#allocation10 + $0x2a8] sm:$0xff]
        %v3957 = vld [vmem:[#allocation10 + $0x2b0] sm:$0xff]
        %v3958 = vld [vmem:[#allocation10 + $0x2b8] sm:$0xff]
        %v3959 = vld [vmem:[#allocation10 + $0x2c0] sm:$0xff]
        %v3960 = vld [vmem:[#allocation10 + $0x2c8] sm:$0xff]
        %v3961 = vld [vmem:[#allocation10 + $0x2d0] sm:$0xff]
        %v3962 = vld [vmem:[#allocation10 + $0x2d8] sm:$0xff]
        %v3963 = vld [vmem:[#allocation10 + $0x2e0] sm:$0xff]
        %v3964 = vld [vmem:[#allocation10 + $0x2e8] sm:$0xff]
        %v3965 = vld [vmem:[#allocation10 + $0x2f0] sm:$0xff]
        %v3966 = vld [vmem:[#allocation10 + $0x2f8] sm:$0xff]
        %v3967 = vld [vmem:[#allocation10 + $0x300] sm:$0xff]
        %v3968 = vld [vmem:[#allocation10 + $0x308] sm:$0xff]
        %v3969 = vld [vmem:[#allocation10 + $0x310] sm:$0xff]
        %v3970 = vld [vmem:[#allocation10 + $0x318] sm:$0xff]
        %v3971 = vld [vmem:[#allocation10 + $0x320] sm:$0xff]
        %v3972 = vld [vmem:[#allocation10 + $0x328] sm:$0xff]
        %v3973 = vld [vmem:[#allocation10 + $0x330] sm:$0xff]
        %v3974 = vld [vmem:[#allocation10 + $0x338] sm:$0xff]
        %v3975 = vld [vmem:[#allocation10 + $0x340] sm:$0xff]
        %v3976 = vld [vmem:[#allocation10 + $0x348] sm:$0xff]
        %v3977 = vld [vmem:[#allocation10 + $0x350] sm:$0xff]
        %v3978 = vld [vmem:[#allocation10 + $0x358] sm:$0xff]
        %v3979 = vld [vmem:[#allocation10 + $0x360] sm:$0xff]
        %v3980 = vld [vmem:[#allocation10 + $0x368] sm:$0xff]
        %v3981 = vld [vmem:[#allocation10 + $0x370] sm:$0xff]
        %v3982 = vld [vmem:[#allocation10 + $0x378] sm:$0xff]
        %v3983 = vld [vmem:[#allocation10 + $0x380] sm:$0xff]
        %v3984 = vld [vmem:[#allocation10 + $0x388] sm:$0xff]
        %v3985 = vld [vmem:[#allocation10 + $0x390] sm:$0xff]
        %v3986 = vld [vmem:[#allocation10 + $0x398] sm:$0xff]
        %v3987 = vld [vmem:[#allocation10 + $0x3a0] sm:$0xff]
        %v3988 = vld [vmem:[#allocation10 + $0x3a8] sm:$0xff]
        %v3989 = vld [vmem:[#allocation10 + $0x3b0] sm:$0xff]
        %v3990 = vld [vmem:[#allocation10 + $0x3b8] sm:$0xff]
        %v3991 = vld [vmem:[#allocation10 + $0x3c0] sm:$0xff]
        %v3992 = vld [vmem:[#allocation10 + $0x3c8] sm:$0xff]
        %v3993 = vld [vmem:[#allocation10 + $0x3d0] sm:$0xff]
        %v3994 = vld [vmem:[#allocation10 + $0x3d8] sm:$0xff]
        %v3995 = vld [vmem:[#allocation10 + $0x3e0] sm:$0xff]
        %v3996 = vld [vmem:[#allocation10 + $0x3e8] sm:$0xff]
        %v3997 = vld [vmem:[#allocation10 + $0x3f0] sm:$0xff]
        %v3998 = vld [vmem:[#allocation10 + $0x3f8] sm:$0xff]
        %v3999 = vld [vmem:[%s13] sm:$0x3]
        %v4001 = vlaneseq
        %v4002 = vshrl.u32 %v4001, 7
        %v4003 = vsub.s32 0, %v4002
        %v4004 = vrot.slane %v3999, %v4003
        %v4005 = vlaneseq
        %v4006 = vshrl.u32 %v4005, 7
        %v4007 = vsub.s32 1, %v4006
        %v4008 = vrot.slane %v3999, %v4007
        %v4139 = vunpack.c.l.b16 %v3871
        %v4140 = vunpack.c.h.b16 %v3871
        %v4141 = vunpack.c.l.b16 %v3872
        %v4142 = vunpack.c.h.b16 %v3872
        %v4143 = vunpack.c.l.b16 %v3873
        %v4144 = vunpack.c.h.b16 %v3873
        %v4145 = vunpack.c.l.b16 %v3874
        %v4146 = vunpack.c.h.b16 %v3874
        %v4147 = vunpack.c.l.b16 %v3875
        %v4148 = vunpack.c.h.b16 %v3875
        %v4149 = vunpack.c.l.b16 %v3876
        %v4150 = vunpack.c.h.b16 %v3876
        %v4151 = vunpack.c.l.b16 %v3877
        %v4152 = vunpack.c.h.b16 %v3877
        %v4153 = vunpack.c.l.b16 %v3878
        %v4154 = vunpack.c.h.b16 %v3878
        %v4155 = vunpack.c.l.b16 %v3879
        %v4156 = vunpack.c.h.b16 %v3879
        %v4157 = vunpack.c.l.b16 %v3880
        %v4158 = vunpack.c.h.b16 %v3880
        %v4159 = vunpack.c.l.b16 %v3881
        %v4160 = vunpack.c.h.b16 %v3881
        %v4161 = vunpack.c.l.b16 %v3882
        %v4162 = vunpack.c.h.b16 %v3882
        %v4163 = vunpack.c.l.b16 %v3883
        %v4164 = vunpack.c.h.b16 %v3883
        %v4165 = vunpack.c.l.b16 %v3884
        %v4166 = vunpack.c.h.b16 %v3884
        %v4167 = vunpack.c.l.b16 %v3885
        %v4168 = vunpack.c.h.b16 %v3885
        %v4169 = vunpack.c.l.b16 %v3886
        %v4170 = vunpack.c.h.b16 %v3886
        %v4171 = vunpack.c.l.b16 %v3887
        %v4172 = vunpack.c.h.b16 %v3887
        %v4173 = vunpack.c.l.b16 %v3888
        %v4174 = vunpack.c.h.b16 %v3888
        %v4175 = vunpack.c.l.b16 %v3889
        %v4176 = vunpack.c.h.b16 %v3889
        %v4177 = vunpack.c.l.b16 %v3890
        %v4178 = vunpack.c.h.b16 %v3890
        %v4179 = vunpack.c.l.b16 %v3891
        %v4180 = vunpack.c.h.b16 %v3891
        %v4181 = vunpack.c.l.b16 %v3892
        %v4182 = vunpack.c.h.b16 %v3892
        %v4183 = vunpack.c.l.b16 %v3893
        %v4184 = vunpack.c.h.b16 %v3893
        %v4185 = vunpack.c.l.b16 %v3894
        %v4186 = vunpack.c.h.b16 %v3894
        %v4187 = vunpack.c.l.b16 %v3895
        %v4188 = vunpack.c.h.b16 %v3895
        %v4189 = vunpack.c.l.b16 %v3896
        %v4190 = vunpack.c.h.b16 %v3896
        %v4191 = vunpack.c.l.b16 %v3897
        %v4192 = vunpack.c.h.b16 %v3897
        %v4193 = vunpack.c.l.b16 %v3898
        %v4194 = vunpack.c.h.b16 %v3898
        %v4195 = vunpack.c.l.b16 %v3899
        %v4196 = vunpack.c.h.b16 %v3899
        %v4197 = vunpack.c.l.b16 %v3900
        %v4198 = vunpack.c.h.b16 %v3900
        %v4199 = vunpack.c.l.b16 %v3901
        %v4200 = vunpack.c.h.b16 %v3901
        %v4201 = vunpack.c.l.b16 %v3902
        %v4202 = vunpack.c.h.b16 %v3902
        %v4203 = vunpack.c.l.b16 %v3903
        %v4204 = vunpack.c.h.b16 %v3903
        %v4205 = vunpack.c.l.b16 %v3904
        %v4206 = vunpack.c.h.b16 %v3904
        %v4207 = vunpack.c.l.b16 %v3905
        %v4208 = vunpack.c.h.b16 %v3905
        %v4209 = vunpack.c.l.b16 %v3906
        %v4210 = vunpack.c.h.b16 %v3906
        %v4211 = vunpack.c.l.b16 %v3907
        %v4212 = vunpack.c.h.b16 %v3907
        %v4213 = vunpack.c.l.b16 %v3908
        %v4214 = vunpack.c.h.b16 %v3908
        %v4215 = vunpack.c.l.b16 %v3909
        %v4216 = vunpack.c.h.b16 %v3909
        %v4217 = vunpack.c.l.b16 %v3910
        %v4218 = vunpack.c.h.b16 %v3910
        %v4219 = vunpack.c.l.b16 %v3911
        %v4220 = vunpack.c.h.b16 %v3911
        %v4221 = vunpack.c.l.b16 %v3912
        %v4222 = vunpack.c.h.b16 %v3912
        %v4223 = vunpack.c.l.b16 %v3913
        %v4224 = vunpack.c.h.b16 %v3913
        %v4225 = vunpack.c.l.b16 %v3914
        %v4226 = vunpack.c.h.b16 %v3914
        %v4227 = vunpack.c.l.b16 %v3915
        %v4228 = vunpack.c.h.b16 %v3915
        %v4229 = vunpack.c.l.b16 %v3916
        %v4230 = vunpack.c.h.b16 %v3916
        %v4231 = vunpack.c.l.b16 %v3917
        %v4232 = vunpack.c.h.b16 %v3917
        %v4233 = vunpack.c.l.b16 %v3918
        %v4234 = vunpack.c.h.b16 %v3918
        %v4235 = vunpack.c.l.b16 %v3919
        %v4236 = vunpack.c.h.b16 %v3919
        %v4237 = vunpack.c.l.b16 %v3920
        %v4238 = vunpack.c.h.b16 %v3920
        %v4239 = vunpack.c.l.b16 %v3921
        %v4240 = vunpack.c.h.b16 %v3921
        %v4241 = vunpack.c.l.b16 %v3922
        %v4242 = vunpack.c.h.b16 %v3922
        %v4243 = vunpack.c.l.b16 %v3923
        %v4244 = vunpack.c.h.b16 %v3923
        %v4245 = vunpack.c.l.b16 %v3924
        %v4246 = vunpack.c.h.b16 %v3924
        %v4247 = vunpack.c.l.b16 %v3925
        %v4248 = vunpack.c.h.b16 %v3925
        %v4249 = vunpack.c.l.b16 %v3926
        %v4250 = vunpack.c.h.b16 %v3926
        %v4251 = vunpack.c.l.b16 %v3927
        %v4252 = vunpack.c.h.b16 %v3927
        %v4253 = vunpack.c.l.b16 %v3928
        %v4254 = vunpack.c.h.b16 %v3928
        %v4255 = vunpack.c.l.b16 %v3929
        %v4256 = vunpack.c.h.b16 %v3929
        %v4257 = vunpack.c.l.b16 %v3930
        %v4258 = vunpack.c.h.b16 %v3930
        %v4259 = vunpack.c.l.b16 %v3931
        %v4260 = vunpack.c.h.b16 %v3931
        %v4261 = vunpack.c.l.b16 %v3932
        %v4262 = vunpack.c.h.b16 %v3932
        %v4263 = vunpack.c.l.b16 %v3933
        %v4264 = vunpack.c.h.b16 %v3933
        %v4265 = vunpack.c.l.b16 %v3934
        %v4266 = vunpack.c.h.b16 %v3934
        %v4267 = vunpack.c.l.b16 %v3935
        %v4268 = vunpack.c.h.b16 %v3935
        %v4269 = vunpack.c.l.b16 %v3936
        %v4270 = vunpack.c.h.b16 %v3936
        %v4271 = vunpack.c.l.b16 %v3937
        %v4272 = vunpack.c.h.b16 %v3937
        %v4273 = vunpack.c.l.b16 %v3938
        %v4274 = vunpack.c.h.b16 %v3938
        %v4275 = vunpack.c.l.b16 %v3939
        %v4276 = vunpack.c.h.b16 %v3939
        %v4277 = vunpack.c.l.b16 %v3940
        %v4278 = vunpack.c.h.b16 %v3940
        %v4279 = vunpack.c.l.b16 %v3941
        %v4280 = vunpack.c.h.b16 %v3941
        %v4281 = vunpack.c.l.b16 %v3942
        %v4282 = vunpack.c.h.b16 %v3942
        %v4283 = vunpack.c.l.b16 %v3943
        %v4284 = vunpack.c.h.b16 %v3943
        %v4285 = vunpack.c.l.b16 %v3944
        %v4286 = vunpack.c.h.b16 %v3944
        %v4287 = vunpack.c.l.b16 %v3945
        %v4288 = vunpack.c.h.b16 %v3945
        %v4289 = vunpack.c.l.b16 %v3946
        %v4290 = vunpack.c.h.b16 %v3946
        %v4291 = vunpack.c.l.b16 %v3947
        %v4292 = vunpack.c.h.b16 %v3947
        %v4293 = vunpack.c.l.b16 %v3948
        %v4294 = vunpack.c.h.b16 %v3948
        %v4295 = vunpack.c.l.b16 %v3949
        %v4296 = vunpack.c.h.b16 %v3949
        %v4297 = vunpack.c.l.b16 %v3950
        %v4298 = vunpack.c.h.b16 %v3950
        %v4299 = vunpack.c.l.b16 %v3951
        %v4300 = vunpack.c.h.b16 %v3951
        %v4301 = vunpack.c.l.b16 %v3952
        %v4302 = vunpack.c.h.b16 %v3952
        %v4303 = vunpack.c.l.b16 %v3953
        %v4304 = vunpack.c.h.b16 %v3953
        %v4305 = vunpack.c.l.b16 %v3954
        %v4306 = vunpack.c.h.b16 %v3954
        %v4307 = vunpack.c.l.b16 %v3955
        %v4308 = vunpack.c.h.b16 %v3955
        %v4309 = vunpack.c.l.b16 %v3956
        %v4310 = vunpack.c.h.b16 %v3956
        %v4311 = vunpack.c.l.b16 %v3957
        %v4312 = vunpack.c.h.b16 %v3957
        %v4313 = vunpack.c.l.b16 %v3958
        %v4314 = vunpack.c.h.b16 %v3958
        %v4315 = vunpack.c.l.b16 %v3959
        %v4316 = vunpack.c.h.b16 %v3959
        %v4317 = vunpack.c.l.b16 %v3960
        %v4318 = vunpack.c.h.b16 %v3960
        %v4319 = vunpack.c.l.b16 %v3961
        %v4320 = vunpack.c.h.b16 %v3961
        %v4321 = vunpack.c.l.b16 %v3962
        %v4322 = vunpack.c.h.b16 %v3962
        %v4323 = vunpack.c.l.b16 %v3963
        %v4324 = vunpack.c.h.b16 %v3963
        %v4325 = vunpack.c.l.b16 %v3964
        %v4326 = vunpack.c.h.b16 %v3964
        %v4327 = vunpack.c.l.b16 %v3965
        %v4328 = vunpack.c.h.b16 %v3965
        %v4329 = vunpack.c.l.b16 %v3966
        %v4330 = vunpack.c.h.b16 %v3966
        %v4331 = vunpack.c.l.b16 %v3967
        %v4332 = vunpack.c.h.b16 %v3967
        %v4333 = vunpack.c.l.b16 %v3968
        %v4334 = vunpack.c.h.b16 %v3968
        %v4335 = vunpack.c.l.b16 %v3969
        %v4336 = vunpack.c.h.b16 %v3969
        %v4337 = vunpack.c.l.b16 %v3970
        %v4338 = vunpack.c.h.b16 %v3970
        %v4339 = vunpack.c.l.b16 %v3971
        %v4340 = vunpack.c.h.b16 %v3971
        %v4341 = vunpack.c.l.b16 %v3972
        %v4342 = vunpack.c.h.b16 %v3972
        %v4343 = vunpack.c.l.b16 %v3973
        %v4344 = vunpack.c.h.b16 %v3973
        %v4345 = vunpack.c.l.b16 %v3974
        %v4346 = vunpack.c.h.b16 %v3974
        %v4347 = vunpack.c.l.b16 %v3975
        %v4348 = vunpack.c.h.b16 %v3975
        %v4349 = vunpack.c.l.b16 %v3976
        %v4350 = vunpack.c.h.b16 %v3976
        %v4351 = vunpack.c.l.b16 %v3977
        %v4352 = vunpack.c.h.b16 %v3977
        %v4353 = vunpack.c.l.b16 %v3978
        %v4354 = vunpack.c.h.b16 %v3978
        %v4355 = vunpack.c.l.b16 %v3979
        %v4356 = vunpack.c.h.b16 %v3979
        %v4357 = vunpack.c.l.b16 %v3980
        %v4358 = vunpack.c.h.b16 %v3980
        %v4359 = vunpack.c.l.b16 %v3981
        %v4360 = vunpack.c.h.b16 %v3981
        %v4361 = vunpack.c.l.b16 %v3982
        %v4362 = vunpack.c.h.b16 %v3982
        %v4363 = vunpack.c.l.b16 %v3983
        %v4364 = vunpack.c.h.b16 %v3983
        %v4365 = vunpack.c.l.b16 %v3984
        %v4366 = vunpack.c.h.b16 %v3984
        %v4367 = vunpack.c.l.b16 %v3985
        %v4368 = vunpack.c.h.b16 %v3985
        %v4369 = vunpack.c.l.b16 %v3986
        %v4370 = vunpack.c.h.b16 %v3986
        %v4371 = vunpack.c.l.b16 %v3987
        %v4372 = vunpack.c.h.b16 %v3987
        %v4373 = vunpack.c.l.b16 %v3988
        %v4374 = vunpack.c.h.b16 %v3988
        %v4375 = vunpack.c.l.b16 %v3989
        %v4376 = vunpack.c.h.b16 %v3989
        %v4377 = vunpack.c.l.b16 %v3990
        %v4378 = vunpack.c.h.b16 %v3990
        %v4379 = vunpack.c.l.b16 %v3991
        %v4380 = vunpack.c.h.b16 %v3991
        %v4381 = vunpack.c.l.b16 %v3992
        %v4382 = vunpack.c.h.b16 %v3992
        %v4383 = vunpack.c.l.b16 %v3993
        %v4384 = vunpack.c.h.b16 %v3993
        %v4385 = vunpack.c.l.b16 %v3994
        %v4386 = vunpack.c.h.b16 %v3994
        %v4387 = vunpack.c.l.b16 %v3995
        %v4388 = vunpack.c.h.b16 %v3995
        %v4389 = vunpack.c.l.b16 %v3996
        %v4390 = vunpack.c.h.b16 %v3996
        %v4391 = vunpack.c.l.b16 %v3997
        %v4392 = vunpack.c.h.b16 %v3997
        %v4393 = vunpack.c.l.b16 %v3998
        %v4394 = vunpack.c.h.b16 %v3998
        %v4395 = vpack.c.b16 %v4141, %v4139
        %v4396 = vpack.c.b16 %v4142, %v4140
        %v4397 = vpack.c.b16 %v4145, %v4143
        %v4398 = vpack.c.b16 %v4146, %v4144
        %v4399 = vpack.c.b16 %v4149, %v4147
        %v4400 = vpack.c.b16 %v4150, %v4148
        %v4401 = vpack.c.b16 %v4153, %v4151
        %v4402 = vpack.c.b16 %v4154, %v4152
        %v4403 = vpack.c.b16 %v4157, %v4155
        %v4404 = vpack.c.b16 %v4158, %v4156
        %v4405 = vpack.c.b16 %v4161, %v4159
        %v4406 = vpack.c.b16 %v4162, %v4160
        %v4407 = vpack.c.b16 %v4165, %v4163
        %v4408 = vpack.c.b16 %v4166, %v4164
        %v4409 = vpack.c.b16 %v4169, %v4167
        %v4410 = vpack.c.b16 %v4170, %v4168
        %v4411 = vpack.c.b16 %v4173, %v4171
        %v4412 = vpack.c.b16 %v4174, %v4172
        %v4413 = vpack.c.b16 %v4177, %v4175
        %v4414 = vpack.c.b16 %v4178, %v4176
        %v4415 = vpack.c.b16 %v4181, %v4179
        %v4416 = vpack.c.b16 %v4182, %v4180
        %v4417 = vpack.c.b16 %v4185, %v4183
        %v4418 = vpack.c.b16 %v4186, %v4184
        %v4419 = vpack.c.b16 %v4189, %v4187
        %v4420 = vpack.c.b16 %v4190, %v4188
        %v4421 = vpack.c.b16 %v4193, %v4191
        %v4422 = vpack.c.b16 %v4194, %v4192
        %v4423 = vpack.c.b16 %v4197, %v4195
        %v4424 = vpack.c.b16 %v4198, %v4196
        %v4425 = vpack.c.b16 %v4201, %v4199
        %v4426 = vpack.c.b16 %v4202, %v4200
        %v4427 = vpack.c.b16 %v4205, %v4203
        %v4428 = vpack.c.b16 %v4206, %v4204
        %v4429 = vpack.c.b16 %v4209, %v4207
        %v4430 = vpack.c.b16 %v4210, %v4208
        %v4431 = vpack.c.b16 %v4213, %v4211
        %v4432 = vpack.c.b16 %v4214, %v4212
        %v4433 = vpack.c.b16 %v4217, %v4215
        %v4434 = vpack.c.b16 %v4218, %v4216
        %v4435 = vpack.c.b16 %v4221, %v4219
        %v4436 = vpack.c.b16 %v4222, %v4220
        %v4437 = vpack.c.b16 %v4225, %v4223
        %v4438 = vpack.c.b16 %v4226, %v4224
        %v4439 = vpack.c.b16 %v4229, %v4227
        %v4440 = vpack.c.b16 %v4230, %v4228
        %v4441 = vpack.c.b16 %v4233, %v4231
        %v4442 = vpack.c.b16 %v4234, %v4232
        %v4443 = vpack.c.b16 %v4237, %v4235
        %v4444 = vpack.c.b16 %v4238, %v4236
        %v4445 = vpack.c.b16 %v4241, %v4239
        %v4446 = vpack.c.b16 %v4242, %v4240
        %v4447 = vpack.c.b16 %v4245, %v4243
        %v4448 = vpack.c.b16 %v4246, %v4244
        %v4449 = vpack.c.b16 %v4249, %v4247
        %v4450 = vpack.c.b16 %v4250, %v4248
        %v4451 = vpack.c.b16 %v4253, %v4251
        %v4452 = vpack.c.b16 %v4254, %v4252
        %v4453 = vpack.c.b16 %v4257, %v4255
        %v4454 = vpack.c.b16 %v4258, %v4256
        %v4455 = vpack.c.b16 %v4261, %v4259
        %v4456 = vpack.c.b16 %v4262, %v4260
        %v4457 = vpack.c.b16 %v4265, %v4263
        %v4458 = vpack.c.b16 %v4266, %v4264
        %v4459 = vpack.c.b16 %v4269, %v4267
        %v4460 = vpack.c.b16 %v4270, %v4268
        %v4461 = vpack.c.b16 %v4273, %v4271
        %v4462 = vpack.c.b16 %v4274, %v4272
        %v4463 = vpack.c.b16 %v4277, %v4275
        %v4464 = vpack.c.b16 %v4278, %v4276
        %v4465 = vpack.c.b16 %v4281, %v4279
        %v4466 = vpack.c.b16 %v4282, %v4280
        %v4467 = vpack.c.b16 %v4285, %v4283
        %v4468 = vpack.c.b16 %v4286, %v4284
        %v4469 = vpack.c.b16 %v4289, %v4287
        %v4470 = vpack.c.b16 %v4290, %v4288
        %v4471 = vpack.c.b16 %v4293, %v4291
        %v4472 = vpack.c.b16 %v4294, %v4292
        %v4473 = vpack.c.b16 %v4297, %v4295
        %v4474 = vpack.c.b16 %v4298, %v4296
        %v4475 = vpack.c.b16 %v4301, %v4299
        %v4476 = vpack.c.b16 %v4302, %v4300
        %v4477 = vpack.c.b16 %v4305, %v4303
        %v4478 = vpack.c.b16 %v4306, %v4304
        %v4479 = vpack.c.b16 %v4309, %v4307
        %v4480 = vpack.c.b16 %v4310, %v4308
        %v4481 = vpack.c.b16 %v4313, %v4311
        %v4482 = vpack.c.b16 %v4314, %v4312
        %v4483 = vpack.c.b16 %v4317, %v4315
        %v4484 = vpack.c.b16 %v4318, %v4316
        %v4485 = vpack.c.b16 %v4321, %v4319
        %v4486 = vpack.c.b16 %v4322, %v4320
        %v4487 = vpack.c.b16 %v4325, %v4323
        %v4488 = vpack.c.b16 %v4326, %v4324
        %v4489 = vpack.c.b16 %v4329, %v4327
        %v4490 = vpack.c.b16 %v4330, %v4328
        %v4491 = vpack.c.b16 %v4333, %v4331
        %v4492 = vpack.c.b16 %v4334, %v4332
        %v4493 = vpack.c.b16 %v4337, %v4335
        %v4494 = vpack.c.b16 %v4338, %v4336
        %v4495 = vpack.c.b16 %v4341, %v4339
        %v4496 = vpack.c.b16 %v4342, %v4340
        %v4497 = vpack.c.b16 %v4345, %v4343
        %v4498 = vpack.c.b16 %v4346, %v4344
        %v4499 = vpack.c.b16 %v4349, %v4347
        %v4500 = vpack.c.b16 %v4350, %v4348
        %v4501 = vpack.c.b16 %v4353, %v4351
        %v4502 = vpack.c.b16 %v4354, %v4352
        %v4503 = vpack.c.b16 %v4357, %v4355
        %v4504 = vpack.c.b16 %v4358, %v4356
        %v4505 = vpack.c.b16 %v4361, %v4359
        %v4506 = vpack.c.b16 %v4362, %v4360
        %v4507 = vpack.c.b16 %v4365, %v4363
        %v4508 = vpack.c.b16 %v4366, %v4364
        %v4509 = vpack.c.b16 %v4369, %v4367
        %v4510 = vpack.c.b16 %v4370, %v4368
        %v4511 = vpack.c.b16 %v4373, %v4371
        %v4512 = vpack.c.b16 %v4374, %v4372
        %v4513 = vpack.c.b16 %v4377, %v4375
        %v4514 = vpack.c.b16 %v4378, %v4376
        %v4515 = vpack.c.b16 %v4381, %v4379
        %v4516 = vpack.c.b16 %v4382, %v4380
        %v4517 = vpack.c.b16 %v4385, %v4383
        %v4518 = vpack.c.b16 %v4386, %v4384
        %v4519 = vpack.c.b16 %v4389, %v4387
        %v4520 = vpack.c.b16 %v4390, %v4388
        %v4521 = vpack.c.b16 %v4393, %v4391
        %v4522 = vpack.c.b16 %v4394, %v4392
        %4651 = vmatprep.subr.bf16.mxu0 %v4396
        %4652 = vmatpush1.bf16.msra.mxu0 %v4395
        %4653 = vmatprep.subr.bf16.mxu0 %v4398
        %4654 = vmatpush1.bf16.msra.mxu0 %v4397
        %4655 = vmatprep.subr.bf16.mxu0 %v4400
        %4656 = vmatpush1.bf16.msra.mxu0 %v4399
        %4657 = vmatprep.subr.bf16.mxu0 %v4402
        %4658 = vmatpush1.bf16.msra.mxu0 %v4401
        %4659 = vmatprep.subr.bf16.mxu0 %v4404
        %4660 = vmatpush1.bf16.msra.mxu0 %v4403
        %4661 = vmatprep.subr.bf16.mxu0 %v4406
        %4662 = vmatpush1.bf16.msra.mxu0 %v4405
        %4663 = vmatprep.subr.bf16.mxu0 %v4408
        %4664 = vmatpush1.bf16.msra.mxu0 %v4407
        %4665 = vmatprep.subr.bf16.mxu0 %v4410
        %4666 = vmatpush1.bf16.msra.mxu0 %v4409
        %4667 = vmatprep.subr.bf16.mxu0 %v4412
        %4668 = vmatpush1.bf16.msra.mxu0 %v4411
        %4669 = vmatprep.subr.bf16.mxu0 %v4414
        %4670 = vmatpush1.bf16.msra.mxu0 %v4413
        %4671 = vmatprep.subr.bf16.mxu0 %v4416
        %4672 = vmatpush1.bf16.msra.mxu0 %v4415
        %4673 = vmatprep.subr.bf16.mxu0 %v4418
        %4674 = vmatpush1.bf16.msra.mxu0 %v4417
        %4675 = vmatprep.subr.bf16.mxu0 %v4420
        %4676 = vmatpush1.bf16.msra.mxu0 %v4419
        %4677 = vmatprep.subr.bf16.mxu0 %v4422
        %4678 = vmatpush1.bf16.msra.mxu0 %v4421
        %4679 = vmatprep.subr.bf16.mxu0 %v4424
        %4680 = vmatpush1.bf16.msra.mxu0 %v4423
        %4681 = vmatprep.subr.bf16.mxu0 %v4426
        %4682 = vmatpush1.bf16.msra.mxu0 %v4425
        %4683 = vmatprep.mubr.bf16.mxu0 %v3702
        %4684 = vmatmul.mubr.bf16.gmra.mrb[0].mxu0 %v3701
        %v4685 = vpop.f32.mrb[0].mxu0
        %v4686 = vadd.f32 %v4004, %v4685
        %v4687 = vpop.f32.mrb[0].mxu0
        %v4688 = vadd.f32 %v4008, %v4687
        %v4689 = vpop.f32.mrb[0].mxu0
        %v4690 = vadd.f32 %v4004, %v4689
        %v4691 = vpop.f32.mrb[0].mxu0
        %v4692 = vadd.f32 %v4008, %v4691
        %4693 = vdwg.mxu0
        %4694 = vmatprep.subr.bf16.mxu0 %v4428
        %4695 = vmatpush1.bf16.msra.mxu0 %v4427
        %4696 = vmatprep.subr.bf16.mxu0 %v4430
        %4697 = vmatpush1.bf16.msra.mxu0 %v4429
        %4698 = vmatprep.subr.bf16.mxu0 %v4432
        %4699 = vmatpush1.bf16.msra.mxu0 %v4431
        %4700 = vmatprep.subr.bf16.mxu0 %v4434
        %4701 = vmatpush1.bf16.msra.mxu0 %v4433
        %4702 = vmatprep.subr.bf16.mxu0 %v4436
        %4703 = vmatpush1.bf16.msra.mxu0 %v4435
        %4704 = vmatprep.subr.bf16.mxu0 %v4438
        %4705 = vmatpush1.bf16.msra.mxu0 %v4437
        %4706 = vmatprep.subr.bf16.mxu0 %v4440
        %4707 = vmatpush1.bf16.msra.mxu0 %v4439
        %4708 = vmatprep.subr.bf16.mxu0 %v4442
        %4709 = vmatpush1.bf16.msra.mxu0 %v4441
        %4710 = vmatprep.subr.bf16.mxu0 %v4444
        %4711 = vmatpush1.bf16.msra.mxu0 %v4443
        %4712 = vmatprep.subr.bf16.mxu0 %v4446
        %4713 = vmatpush1.bf16.msra.mxu0 %v4445
        %4714 = vmatprep.subr.bf16.mxu0 %v4448
        %4715 = vmatpush1.bf16.msra.mxu0 %v4447
        %4716 = vmatprep.subr.bf16.mxu0 %v4450
        %4717 = vmatpush1.bf16.msra.mxu0 %v4449
        %4718 = vmatprep.subr.bf16.mxu0 %v4452
        %4719 = vmatpush1.bf16.msra.mxu0 %v4451
        %4720 = vmatprep.subr.bf16.mxu0 %v4454
        %4721 = vmatpush1.bf16.msra.mxu0 %v4453
        %4722 = vmatprep.subr.bf16.mxu0 %v4456
        %4723 = vmatpush1.bf16.msra.mxu0 %v4455
        %4724 = vmatprep.subr.bf16.mxu0 %v4458
        %4725 = vmatpush1.bf16.msra.mxu0 %v4457
        %4726 = vmatprep.mubr.bf16.mxu0 %v3758
        %4727 = vmatmul.mubr.bf16.gmra.mrb[0].mxu0 %v3757
        %v4728 = vpop.f32.mrb[0].mxu0
        %v4729 = vadd.f32 %v4686, %v4728
        %v4730 = vpop.f32.mrb[0].mxu0
        %v4731 = vadd.f32 %v4688, %v4730
        %v4732 = vpop.f32.mrb[0].mxu0
        %v4733 = vadd.f32 %v4690, %v4732
        %v4734 = vpop.f32.mrb[0].mxu0
        %v4735 = vadd.f32 %v4692, %v4734
        %4736 = vdwg.mxu0
        %4737 = vmatprep.subr.bf16.mxu0 %v4460
        %4738 = vmatpush1.bf16.msra.mxu0 %v4459
        %4739 = vmatprep.subr.bf16.mxu0 %v4462
        %4740 = vmatpush1.bf16.msra.mxu0 %v4461
        %4741 = vmatprep.subr.bf16.mxu0 %v4464
        %4742 = vmatpush1.bf16.msra.mxu0 %v4463
        %4743 = vmatprep.subr.bf16.mxu0 %v4466
        %4744 = vmatpush1.bf16.msra.mxu0 %v4465
        %4745 = vmatprep.subr.bf16.mxu0 %v4468
        %4746 = vmatpush1.bf16.msra.mxu0 %v4467
        %4747 = vmatprep.subr.bf16.mxu0 %v4470
        %4748 = vmatpush1.bf16.msra.mxu0 %v4469
        %4749 = vmatprep.subr.bf16.mxu0 %v4472
        %4750 = vmatpush1.bf16.msra.mxu0 %v4471
        %4751 = vmatprep.subr.bf16.mxu0 %v4474
        %4752 = vmatpush1.bf16.msra.mxu0 %v4473
        %4753 = vmatprep.subr.bf16.mxu0 %v4476
        %4754 = vmatpush1.bf16.msra.mxu0 %v4475
        %4755 = vmatprep.subr.bf16.mxu0 %v4478
        %4756 = vmatpush1.bf16.msra.mxu0 %v4477
        %4757 = vmatprep.subr.bf16.mxu0 %v4480
        %4758 = vmatpush1.bf16.msra.mxu0 %v4479
        %4759 = vmatprep.subr.bf16.mxu0 %v4482
        %4760 = vmatpush1.bf16.msra.mxu0 %v4481
        %4761 = vmatprep.subr.bf16.mxu0 %v4484
        %4762 = vmatpush1.bf16.msra.mxu0 %v4483
        %4763 = vmatprep.subr.bf16.mxu0 %v4486
        %4764 = vmatpush1.bf16.msra.mxu0 %v4485
        %4765 = vmatprep.subr.bf16.mxu0 %v4488
        %4766 = vmatpush1.bf16.msra.mxu0 %v4487
        %4767 = vmatprep.subr.bf16.mxu0 %v4490
        %4768 = vmatpush1.bf16.msra.mxu0 %v4489
        %4769 = vmatprep.mubr.bf16.mxu0 %v3814
        %4770 = vmatmul.mubr.bf16.gmra.mrb[0].mxu0 %v3813
        %v4771 = vpop.f32.mrb[0].mxu0
        %v4772 = vadd.f32 %v4729, %v4771
        %v4773 = vpop.f32.mrb[0].mxu0
        %v4774 = vadd.f32 %v4731, %v4773
        %v4775 = vpop.f32.mrb[0].mxu0
        %v4776 = vadd.f32 %v4733, %v4775
        %v4777 = vpop.f32.mrb[0].mxu0
        %v4778 = vadd.f32 %v4735, %v4777
        %4779 = vdwg.mxu0
        %4780 = vmatprep.subr.bf16.mxu0 %v4492
        %4781 = vmatpush1.bf16.msra.mxu0 %v4491
        %4782 = vmatprep.subr.bf16.mxu0 %v4494
        %4783 = vmatpush1.bf16.msra.mxu0 %v4493
        %4784 = vmatprep.subr.bf16.mxu0 %v4496
        %4785 = vmatpush1.bf16.msra.mxu0 %v4495
        %4786 = vmatprep.subr.bf16.mxu0 %v4498
        %4787 = vmatpush1.bf16.msra.mxu0 %v4497
        %4788 = vmatprep.subr.bf16.mxu0 %v4500
        %4789 = vmatpush1.bf16.msra.mxu0 %v4499
        %4790 = vmatprep.subr.bf16.mxu0 %v4502
        %4791 = vmatpush1.bf16.msra.mxu0 %v4501
        %4792 = vmatprep.subr.bf16.mxu0 %v4504
        %4793 = vmatpush1.bf16.msra.mxu0 %v4503
        %4794 = vmatprep.subr.bf16.mxu0 %v4506
        %4795 = vmatpush1.bf16.msra.mxu0 %v4505
        %4796 = vmatprep.subr.bf16.mxu0 %v4508
        %4797 = vmatpush1.bf16.msra.mxu0 %v4507
        %4798 = vmatprep.subr.bf16.mxu0 %v4510
        %4799 = vmatpush1.bf16.msra.mxu0 %v4509
        %4800 = vmatprep.subr.bf16.mxu0 %v4512
        %4801 = vmatpush1.bf16.msra.mxu0 %v4511
        %4802 = vmatprep.subr.bf16.mxu0 %v4514
        %4803 = vmatpush1.bf16.msra.mxu0 %v4513
        %4804 = vmatprep.subr.bf16.mxu0 %v4516
        %4805 = vmatpush1.bf16.msra.mxu0 %v4515
        %4806 = vmatprep.subr.bf16.mxu0 %v4518
        %4807 = vmatpush1.bf16.msra.mxu0 %v4517
        %4808 = vmatprep.subr.bf16.mxu0 %v4520
        %4809 = vmatpush1.bf16.msra.mxu0 %v4519
        %4810 = vmatprep.subr.bf16.mxu0 %v4522
        %4811 = vmatpush1.bf16.msra.mxu0 %v4521
        %4812 = vmatprep.mubr.bf16.mxu0 %v3870
        %4813 = vmatmul.mubr.bf16.gmra.mrb[0].mxu0 %v3869
        %v4814 = vpop.f32.mrb[0].mxu0
        %v4815 = vadd.f32 %v4772, %v4814
        %v4816 = vpop.f32.mrb[0].mxu0
        %v4817 = vadd.f32 %v4774, %v4816
        %v4818 = vpop.f32.mrb[0].mxu0
        %v4819 = vadd.f32 %v4776, %v4818
        %v4820 = vpop.f32.mrb[0].mxu0
        %v4821 = vadd.f32 %v4778, %v4820
        %4822 = vdwg.mxu0
        %vm4823 = vcmp.gt.f32.partialorder %v4815, 0.0
        %vm4824 = vcmp.gt.f32.partialorder %v4817, 0.0
        %vm4825 = vcmp.gt.f32.partialorder %v4819, 0.0
        %vm4826 = vcmp.gt.f32.partialorder %v4821, 0.0
        %v4827 = vmul.f32 %v4815, 0.2
        %v4828 = vmul.f32 %v4817, 0.2
        %v4829 = vmul.f32 %v4819, 0.2
        %v4830 = vmul.f32 %v4821, 0.2
        %v4831 = vsel %vm4823, %v4815, %v4827
        %v4832 = vsel %vm4824, %v4817, %v4828
        %v4833 = vsel %vm4825, %v4819, %v4829
        %v4834 = vsel %vm4826, %v4821, %v4830
        %v4835 = vpack.c.bf16 %v4833, %v4831
        %v4836 = vpack.c.bf16 %v4834, %v4832
        %v4837 = vld [vmem:[#allocation7] sm:$0xf]
        %v4838 = vld [vmem:[#allocation7 + $0x4] sm:$0xf]
        %v4841 = vunpack.c.l.b16 %v4837
        %v4842 = vunpack.c.l.b16 %v4838
        %v4843 = vpack.c.b16 %v4842, %v4841
        %vm4844 = vcmask 130048
        %v4846 = vsel %vm4844, %v4843, 0
        %4848 = vmatprep.subr.bf16.mxu0 %v4836
        %4849 = vmatpush1.bf16.msra.mxu0 %v4835
        %4850 = vmatprep.subr.bf16.mxu0 0
        %4851 = vmatpush1.bf16.msra.mxu0 0
        %4852 = vmatprep.subr.bf16.mxu0 0
        %4853 = vmatpush1.bf16.msra.mxu0 0
        %4854 = vmatprep.subr.bf16.mxu0 0
        %4855 = vmatpush1.bf16.msra.mxu0 0
        %4856 = vmatprep.subr.bf16.mxu0 0
        %4857 = vmatpush1.bf16.msra.mxu0 0
        %4858 = vmatprep.subr.bf16.mxu0 0
        %4859 = vmatpush1.bf16.msra.mxu0 0
        %4860 = vmatprep.subr.bf16.mxu0 0
        %4861 = vmatpush1.bf16.msra.mxu0 0
        %4862 = vmatprep.subr.bf16.mxu0 0
        %4863 = vmatpush1.bf16.msra.mxu0 0
        %4864 = vmatprep.subr.bf16.mxu0 0
        %4865 = vmatpush1.bf16.msra.mxu0 0
        %4866 = vmatprep.subr.bf16.mxu0 0
        %4867 = vmatpush1.bf16.msra.mxu0 0
        %4868 = vmatprep.subr.bf16.mxu0 0
        %4869 = vmatpush1.bf16.msra.mxu0 0
        %4870 = vmatprep.subr.bf16.mxu0 0
        %4871 = vmatpush1.bf16.msra.mxu0 0
        %4872 = vmatprep.subr.bf16.mxu0 0
        %4873 = vmatpush1.bf16.msra.mxu0 0
        %4874 = vmatprep.subr.bf16.mxu0 0
        %4875 = vmatpush1.bf16.msra.mxu0 0
        %4876 = vmatprep.subr.bf16.mxu0 0
        %4877 = vmatpush1.bf16.msra.mxu0 0
        %4878 = vmatprep.subr.bf16.mxu0 0
        %4879 = vmatpush1.bf16.msra.mxu0 0
        %4880 = vmatprep.mubr.bf16.mxu0 0
        %4881 = vmatmul.mubr.bf16.gmra.mrb[0].mxu0 %v4846
        %v4882 = vpop.f32.mrb[0].mxu0
        %v4883 = vadd.f32 0.0, %v4882
        %v4884 = vpop.f32.mrb[0].mxu0
        %v4885 = vadd.f32 0.0, %v4884
        %v4886 = vpop.f32.mrb[0].mxu0
        %v4887 = vadd.f32 0.0, %v4886
        %v4888 = vpop.f32.mrb[0].mxu0
        %v4889 = vadd.f32 0.0, %v4888
        %4890 = vdwg.mxu0
        %v4891 = vpack.c.bf16 %v4887, %v4883
        %v4892 = vpack.c.bf16 %v4889, %v4885
        %s4893 = scalar_lea.vmem [#allocation7], 8
        %v4894 = vld [vmem:[%s4893] sm:$0xf]
        %v4895 = vld [vmem:[%s4893 + $0x4] sm:$0xf]
        %v4898 = vunpack.c.l.b16 %v4894
        %v4899 = vunpack.c.l.b16 %v4895
        %v4900 = vpack.c.b16 %v4899, %v4898
        %v4902 = vsel %vm4844, %v4900, 0
        %4904 = vmatprep.subr.bf16.mxu0 %v4836
        %4905 = vmatpush1.bf16.msra.mxu0 %v4835
        %4906 = vmatprep.subr.bf16.mxu0 0
        %4907 = vmatpush1.bf16.msra.mxu0 0
        %4908 = vmatprep.subr.bf16.mxu0 0
        %4909 = vmatpush1.bf16.msra.mxu0 0
        %4910 = vmatprep.subr.bf16.mxu0 0
        %4911 = vmatpush1.bf16.msra.mxu0 0
        %4912 = vmatprep.subr.bf16.mxu0 0
        %4913 = vmatpush1.bf16.msra.mxu0 0
        %4914 = vmatprep.subr.bf16.mxu0 0
        %4915 = vmatpush1.bf16.msra.mxu0 0
        %4916 = vmatprep.subr.bf16.mxu0 0
        %4917 = vmatpush1.bf16.msra.mxu0 0
        %4918 = vmatprep.subr.bf16.mxu0 0
        %4919 = vmatpush1.bf16.msra.mxu0 0
        %4920 = vmatprep.subr.bf16.mxu0 0
        %4921 = vmatpush1.bf16.msra.mxu0 0
        %4922 = vmatprep.subr.bf16.mxu0 0
        %4923 = vmatpush1.bf16.msra.mxu0 0
        %4924 = vmatprep.subr.bf16.mxu0 0
        %4925 = vmatpush1.bf16.msra.mxu0 0
        %4926 = vmatprep.subr.bf16.mxu0 0
        %4927 = vmatpush1.bf16.msra.mxu0 0
        %4928 = vmatprep.subr.bf16.mxu0 0
        %4929 = vmatpush1.bf16.msra.mxu0 0
        %4930 = vmatprep.subr.bf16.mxu0 0
        %4931 = vmatpush1.bf16.msra.mxu0 0
        %4932 = vmatprep.subr.bf16.mxu0 0
        %4933 = vmatpush1.bf16.msra.mxu0 0
        %4934 = vmatprep.subr.bf16.mxu0 0
        %4935 = vmatpush1.bf16.msra.mxu0 0
        %4936 = vmatprep.mubr.bf16.mxu0 0
        %4937 = vmatmul.mubr.bf16.gmra.mrb[0].mxu0 %v4902
        %v4938 = vpop.f32.mrb[0].mxu0
        %v4939 = vadd.f32 0.0, %v4938
        %v4940 = vpop.f32.mrb[0].mxu0
        %v4941 = vadd.f32 0.0, %v4940
        %v4942 = vpop.f32.mrb[0].mxu0
        %v4943 = vadd.f32 0.0, %v4942
        %v4944 = vpop.f32.mrb[0].mxu0
        %v4945 = vadd.f32 0.0, %v4944
        %4946 = vdwg.mxu0
        %v4947 = vpack.c.bf16 %v4943, %v4939
        %v4948 = vpack.c.bf16 %v4945, %v4941
        %s4949 = scalar_lea.vmem [#allocation7], 16
        %v4950 = vld [vmem:[%s4949] sm:$0xf]
        %v4951 = vld [vmem:[%s4949 + $0x4] sm:$0xf]
        %v4954 = vunpack.c.l.b16 %v4950
        %v4955 = vunpack.c.l.b16 %v4951
        %v4956 = vpack.c.b16 %v4955, %v4954
        %v4958 = vsel %vm4844, %v4956, 0
        %4960 = vmatprep.subr.bf16.mxu0 %v4836
        %4961 = vmatpush1.bf16.msra.mxu0 %v4835
        %4962 = vmatprep.subr.bf16.mxu0 0
        %4963 = vmatpush1.bf16.msra.mxu0 0
        %4964 = vmatprep.subr.bf16.mxu0 0
        %4965 = vmatpush1.bf16.msra.mxu0 0
        %4966 = vmatprep.subr.bf16.mxu0 0
        %4967 = vmatpush1.bf16.msra.mxu0 0
        %4968 = vmatprep.subr.bf16.mxu0 0
        %4969 = vmatpush1.bf16.msra.mxu0 0
        %4970 = vmatprep.subr.bf16.mxu0 0
        %4971 = vmatpush1.bf16.msra.mxu0 0
        %4972 = vmatprep.subr.bf16.mxu0 0
        %4973 = vmatpush1.bf16.msra.mxu0 0
        %4974 = vmatprep.subr.bf16.mxu0 0
        %4975 = vmatpush1.bf16.msra.mxu0 0
        %4976 = vmatprep.subr.bf16.mxu0 0
        %4977 = vmatpush1.bf16.msra.mxu0 0
        %4978 = vmatprep.subr.bf16.mxu0 0
        %4979 = vmatpush1.bf16.msra.mxu0 0
        %4980 = vmatprep.subr.bf16.mxu0 0
        %4981 = vmatpush1.bf16.msra.mxu0 0
        %4982 = vmatprep.subr.bf16.mxu0 0
        %4983 = vmatpush1.bf16.msra.mxu0 0
        %4984 = vmatprep.subr.bf16.mxu0 0
        %4985 = vmatpush1.bf16.msra.mxu0 0
        %4986 = vmatprep.subr.bf16.mxu0 0
        %4987 = vmatpush1.bf16.msra.mxu0 0
        %4988 = vmatprep.subr.bf16.mxu0 0
        %4989 = vmatpush1.bf16.msra.mxu0 0
        %4990 = vmatprep.subr.bf16.mxu0 0
        %4991 = vmatpush1.bf16.msra.mxu0 0
        %4992 = vmatprep.mubr.bf16.mxu0 0
        %4993 = vmatmul.mubr.bf16.gmra.mrb[0].mxu0 %v4958
        %v4994 = vpop.f32.mrb[0].mxu0
        %v4995 = vadd.f32 0.0, %v4994
        %v4996 = vpop.f32.mrb[0].mxu0
        %v4997 = vadd.f32 0.0, %v4996
        %v4998 = vpop.f32.mrb[0].mxu0
        %v4999 = vadd.f32 0.0, %v4998
        %v5000 = vpop.f32.mrb[0].mxu0
        %v5001 = vadd.f32 0.0, %v5000
        %5002 = vdwg.mxu0
        %v5003 = vpack.c.bf16 %v4999, %v4995
        %v5004 = vpack.c.bf16 %v5001, %v4997
        %s5005 = scalar_lea.vmem [#allocation7], 24
        %v5006 = vld [vmem:[%s5005] sm:$0xf]
        %v5007 = vld [vmem:[%s5005 + $0x4] sm:$0xf]
        %v5010 = vunpack.c.l.b16 %v5006
        %v5011 = vunpack.c.l.b16 %v5007
        %v5012 = vpack.c.b16 %v5011, %v5010
        %v5014 = vsel %vm4844, %v5012, 0
        %5016 = vmatprep.subr.bf16.mxu0 %v4836
        %5017 = vmatpush1.bf16.msra.mxu0 %v4835
        %5018 = vmatprep.subr.bf16.mxu0 0
        %5019 = vmatpush1.bf16.msra.mxu0 0
        %5020 = vmatprep.subr.bf16.mxu0 0
        %5021 = vmatpush1.bf16.msra.mxu0 0
        %5022 = vmatprep.subr.bf16.mxu0 0
        %5023 = vmatpush1.bf16.msra.mxu0 0
        %5024 = vmatprep.subr.bf16.mxu0 0
        %5025 = vmatpush1.bf16.msra.mxu0 0
        %5026 = vmatprep.subr.bf16.mxu0 0
        %5027 = vmatpush1.bf16.msra.mxu0 0
        %5028 = vmatprep.subr.bf16.mxu0 0
        %5029 = vmatpush1.bf16.msra.mxu0 0
        %5030 = vmatprep.subr.bf16.mxu0 0
        %5031 = vmatpush1.bf16.msra.mxu0 0
        %5032 = vmatprep.subr.bf16.mxu0 0
        %5033 = vmatpush1.bf16.msra.mxu0 0
        %5034 = vmatprep.subr.bf16.mxu0 0
        %5035 = vmatpush1.bf16.msra.mxu0 0
        %5036 = vmatprep.subr.bf16.mxu0 0
        %5037 = vmatpush1.bf16.msra.mxu0 0
        %5038 = vmatprep.subr.bf16.mxu0 0
        %5039 = vmatpush1.bf16.msra.mxu0 0
        %5040 = vmatprep.subr.bf16.mxu0 0
        %5041 = vmatpush1.bf16.msra.mxu0 0
        %5042 = vmatprep.subr.bf16.mxu0 0
        %5043 = vmatpush1.bf16.msra.mxu0 0
        %5044 = vmatprep.subr.bf16.mxu0 0
        %5045 = vmatpush1.bf16.msra.mxu0 0
        %5046 = vmatprep.subr.bf16.mxu0 0
        %5047 = vmatpush1.bf16.msra.mxu0 0
        %5048 = vmatprep.mubr.bf16.mxu0 0
        %5049 = vmatmul.mubr.bf16.gmra.mrb[0].mxu0 %v5014
        %v5050 = vpop.f32.mrb[0].mxu0
        %v5051 = vadd.f32 0.0, %v5050
        %v5052 = vpop.f32.mrb[0].mxu0
        %v5053 = vadd.f32 0.0, %v5052
        %v5054 = vpop.f32.mrb[0].mxu0
        %v5055 = vadd.f32 0.0, %v5054
        %v5056 = vpop.f32.mrb[0].mxu0
        %v5057 = vadd.f32 0.0, %v5056
        %5058 = vdwg.mxu0
        %v5059 = vpack.c.bf16 %v5055, %v5051
        %v5060 = vpack.c.bf16 %v5057, %v5053
        %v5061 = vld [vmem:[%s9] sm:$0xff]
        %v5062 = vld [vmem:[%s9 + $0x8] sm:$0xff]
        %v5063 = vld [vmem:[%s9 + $0x10] sm:$0xff]
        %v5064 = vld [vmem:[%s9 + $0x18] sm:$0xff]
        %v5065 = vld [vmem:[%s9 + $0x20] sm:$0xff]
        %v5066 = vld [vmem:[%s9 + $0x28] sm:$0xff]
        %v5067 = vld [vmem:[%s9 + $0x30] sm:$0xff]
        %v5068 = vld [vmem:[%s9 + $0x38] sm:$0xff]
        %v5069 = vld [vmem:[%s9 + $0x40] sm:$0xff]
        %v5070 = vld [vmem:[%s9 + $0x48] sm:$0xff]
        %v5071 = vld [vmem:[%s9 + $0x50] sm:$0xff]
        %v5072 = vld [vmem:[%s9 + $0x58] sm:$0xff]
        %v5073 = vld [vmem:[%s9 + $0x60] sm:$0xff]
        %v5074 = vld [vmem:[%s9 + $0x68] sm:$0xff]
        %v5075 = vld [vmem:[%s9 + $0x70] sm:$0xff]
        %v5076 = vld [vmem:[%s9 + $0x78] sm:$0xff]
        %v5077 = vld [vmem:[%s9 + $0x80] sm:$0xff]
        %v5078 = vld [vmem:[%s9 + $0x88] sm:$0xff]
        %v5079 = vld [vmem:[%s9 + $0x90] sm:$0xff]
        %v5080 = vld [vmem:[%s9 + $0x98] sm:$0xff]
        %v5081 = vld [vmem:[%s9 + $0xa0] sm:$0xff]
        %v5082 = vld [vmem:[%s9 + $0xa8] sm:$0xff]
        %v5083 = vld [vmem:[%s9 + $0xb0] sm:$0xff]
        %v5084 = vld [vmem:[%s9 + $0xb8] sm:$0xff]
        %v5085 = vld [vmem:[%s9 + $0xc0] sm:$0xff]
        %v5086 = vld [vmem:[%s9 + $0xc8] sm:$0xff]
        %v5087 = vld [vmem:[%s9 + $0xd0] sm:$0xff]
        %v5088 = vld [vmem:[%s9 + $0xd8] sm:$0xff]
        %v5089 = vld [vmem:[%s9 + $0xe0] sm:$0xff]
        %v5090 = vld [vmem:[%s9 + $0xe8] sm:$0xff]
        %v5091 = vld [vmem:[%s9 + $0xf0] sm:$0xff]
        %v5092 = vld [vmem:[%s9 + $0xf8] sm:$0xff]
        %v5093 = vld [vmem:[%s9 + $0x100] sm:$0xff]
        %v5094 = vld [vmem:[%s9 + $0x108] sm:$0xff]
        %v5095 = vld [vmem:[%s9 + $0x110] sm:$0xff]
        %v5096 = vld [vmem:[%s9 + $0x118] sm:$0xff]
        %v5097 = vld [vmem:[%s9 + $0x120] sm:$0xff]
        %v5098 = vld [vmem:[%s9 + $0x128] sm:$0xff]
        %v5099 = vld [vmem:[%s9 + $0x130] sm:$0xff]
        %v5100 = vld [vmem:[%s9 + $0x138] sm:$0xff]
        %v5101 = vld [vmem:[%s9 + $0x140] sm:$0xff]
        %v5102 = vld [vmem:[%s9 + $0x148] sm:$0xff]
        %v5103 = vld [vmem:[%s9 + $0x150] sm:$0xff]
        %v5104 = vld [vmem:[%s9 + $0x158] sm:$0xff]
        %v5105 = vld [vmem:[%s9 + $0x160] sm:$0xff]
        %v5106 = vld [vmem:[%s9 + $0x168] sm:$0xff]
        %v5107 = vld [vmem:[%s9 + $0x170] sm:$0xff]
        %v5108 = vld [vmem:[%s9 + $0x178] sm:$0xff]
        %v5109 = vld [vmem:[%s9 + $0x180] sm:$0xff]
        %v5110 = vld [vmem:[%s9 + $0x188] sm:$0xff]
        %v5111 = vld [vmem:[%s9 + $0x190] sm:$0xff]
        %v5112 = vld [vmem:[%s9 + $0x198] sm:$0xff]
        %v5113 = vld [vmem:[%s9 + $0x1a0] sm:$0xff]
        %v5114 = vld [vmem:[%s9 + $0x1a8] sm:$0xff]
        %v5115 = vld [vmem:[%s9 + $0x1b0] sm:$0xff]
        %v5116 = vld [vmem:[%s9 + $0x1b8] sm:$0xff]
        %v5117 = vld [vmem:[%s9 + $0x1c0] sm:$0xff]
        %v5118 = vld [vmem:[%s9 + $0x1c8] sm:$0xff]
        %v5119 = vld [vmem:[%s9 + $0x1d0] sm:$0xff]
        %v5120 = vld [vmem:[%s9 + $0x1d8] sm:$0xff]
        %v5121 = vld [vmem:[%s9 + $0x1e0] sm:$0xff]
        %v5122 = vld [vmem:[%s9 + $0x1e8] sm:$0xff]
        %v5123 = vld [vmem:[%s9 + $0x1f0] sm:$0xff]
        %v5124 = vld [vmem:[%s9 + $0x1f8] sm:$0xff]
        %v5125 = vld [vmem:[%s9 + $0x200] sm:$0xff]
        %v5126 = vld [vmem:[%s9 + $0x208] sm:$0xff]
        %v5127 = vld [vmem:[%s9 + $0x210] sm:$0xff]
        %v5128 = vld [vmem:[%s9 + $0x218] sm:$0xff]
        %v5129 = vld [vmem:[%s9 + $0x220] sm:$0xff]
        %v5130 = vld [vmem:[%s9 + $0x228] sm:$0xff]
        %v5131 = vld [vmem:[%s9 + $0x230] sm:$0xff]
        %v5132 = vld [vmem:[%s9 + $0x238] sm:$0xff]
        %v5133 = vld [vmem:[%s9 + $0x240] sm:$0xff]
        %v5134 = vld [vmem:[%s9 + $0x248] sm:$0xff]
        %v5135 = vld [vmem:[%s9 + $0x250] sm:$0xff]
        %v5136 = vld [vmem:[%s9 + $0x258] sm:$0xff]
        %v5137 = vld [vmem:[%s9 + $0x260] sm:$0xff]
        %v5138 = vld [vmem:[%s9 + $0x268] sm:$0xff]
        %v5139 = vld [vmem:[%s9 + $0x270] sm:$0xff]
        %v5140 = vld [vmem:[%s9 + $0x278] sm:$0xff]
        %v5141 = vld [vmem:[%s9 + $0x280] sm:$0xff]
        %v5142 = vld [vmem:[%s9 + $0x288] sm:$0xff]
        %v5143 = vld [vmem:[%s9 + $0x290] sm:$0xff]
        %v5144 = vld [vmem:[%s9 + $0x298] sm:$0xff]
        %v5145 = vld [vmem:[%s9 + $0x2a0] sm:$0xff]
        %v5146 = vld [vmem:[%s9 + $0x2a8] sm:$0xff]
        %v5147 = vld [vmem:[%s9 + $0x2b0] sm:$0xff]
        %v5148 = vld [vmem:[%s9 + $0x2b8] sm:$0xff]
        %v5149 = vld [vmem:[%s9 + $0x2c0] sm:$0xff]
        %v5150 = vld [vmem:[%s9 + $0x2c8] sm:$0xff]
        %v5151 = vld [vmem:[%s9 + $0x2d0] sm:$0xff]
        %v5152 = vld [vmem:[%s9 + $0x2d8] sm:$0xff]
        %v5153 = vld [vmem:[%s9 + $0x2e0] sm:$0xff]
        %v5154 = vld [vmem:[%s9 + $0x2e8] sm:$0xff]
        %v5155 = vld [vmem:[%s9 + $0x2f0] sm:$0xff]
        %v5156 = vld [vmem:[%s9 + $0x2f8] sm:$0xff]
        %v5157 = vld [vmem:[%s9 + $0x300] sm:$0xff]
        %v5158 = vld [vmem:[%s9 + $0x308] sm:$0xff]
        %v5159 = vld [vmem:[%s9 + $0x310] sm:$0xff]
        %v5160 = vld [vmem:[%s9 + $0x318] sm:$0xff]
        %v5161 = vld [vmem:[%s9 + $0x320] sm:$0xff]
        %v5162 = vld [vmem:[%s9 + $0x328] sm:$0xff]
        %v5163 = vld [vmem:[%s9 + $0x330] sm:$0xff]
        %v5164 = vld [vmem:[%s9 + $0x338] sm:$0xff]
        %v5165 = vld [vmem:[%s9 + $0x340] sm:$0xff]
        %v5166 = vld [vmem:[%s9 + $0x348] sm:$0xff]
        %v5167 = vld [vmem:[%s9 + $0x350] sm:$0xff]
        %v5168 = vld [vmem:[%s9 + $0x358] sm:$0xff]
        %v5169 = vld [vmem:[%s9 + $0x360] sm:$0xff]
        %v5170 = vld [vmem:[%s9 + $0x368] sm:$0xff]
        %v5171 = vld [vmem:[%s9 + $0x370] sm:$0xff]
        %v5172 = vld [vmem:[%s9 + $0x378] sm:$0xff]
        %v5173 = vld [vmem:[%s9 + $0x380] sm:$0xff]
        %v5174 = vld [vmem:[%s9 + $0x388] sm:$0xff]
        %v5175 = vld [vmem:[%s9 + $0x390] sm:$0xff]
        %v5176 = vld [vmem:[%s9 + $0x398] sm:$0xff]
        %v5177 = vld [vmem:[%s9 + $0x3a0] sm:$0xff]
        %v5178 = vld [vmem:[%s9 + $0x3a8] sm:$0xff]
        %v5179 = vld [vmem:[%s9 + $0x3b0] sm:$0xff]
        %v5180 = vld [vmem:[%s9 + $0x3b8] sm:$0xff]
        %v5181 = vld [vmem:[%s9 + $0x3c0] sm:$0xff]
        %v5182 = vld [vmem:[%s9 + $0x3c8] sm:$0xff]
        %v5183 = vld [vmem:[%s9 + $0x3d0] sm:$0xff]
        %v5184 = vld [vmem:[%s9 + $0x3d8] sm:$0xff]
        %v5185 = vld [vmem:[%s9 + $0x3e0] sm:$0xff]
        %v5186 = vld [vmem:[%s9 + $0x3e8] sm:$0xff]
        %v5187 = vld [vmem:[%s9 + $0x3f0] sm:$0xff]
        %v5188 = vld [vmem:[%s9 + $0x3f8] sm:$0xff]
        %v5189 = vld [vmem:[%s9 + $0x400] sm:$0xff]
        %v5190 = vld [vmem:[%s9 + $0x408] sm:$0xff]
        %v5191 = vld [vmem:[%s9 + $0x410] sm:$0xff]
        %v5192 = vld [vmem:[%s9 + $0x418] sm:$0xff]
        %v5193 = vld [vmem:[%s9 + $0x420] sm:$0xff]
        %v5194 = vld [vmem:[%s9 + $0x428] sm:$0xff]
        %v5195 = vld [vmem:[%s9 + $0x430] sm:$0xff]
        %v5196 = vld [vmem:[%s9 + $0x438] sm:$0xff]
        %v5197 = vld [vmem:[%s9 + $0x440] sm:$0xff]
        %v5198 = vld [vmem:[%s9 + $0x448] sm:$0xff]
        %v5199 = vld [vmem:[%s9 + $0x450] sm:$0xff]
        %v5200 = vld [vmem:[%s9 + $0x458] sm:$0xff]
        %v5201 = vld [vmem:[%s9 + $0x460] sm:$0xff]
        %v5202 = vld [vmem:[%s9 + $0x468] sm:$0xff]
        %v5203 = vld [vmem:[%s9 + $0x470] sm:$0xff]
        %v5204 = vld [vmem:[%s9 + $0x478] sm:$0xff]
        %v5205 = vld [vmem:[%s9 + $0x480] sm:$0xff]
        %v5206 = vld [vmem:[%s9 + $0x488] sm:$0xff]
        %v5207 = vld [vmem:[%s9 + $0x490] sm:$0xff]
        %v5208 = vld [vmem:[%s9 + $0x498] sm:$0xff]
        %v5209 = vld [vmem:[%s9 + $0x4a0] sm:$0xff]
        %v5210 = vld [vmem:[%s9 + $0x4a8] sm:$0xff]
        %v5211 = vld [vmem:[%s9 + $0x4b0] sm:$0xff]
        %v5212 = vld [vmem:[%s9 + $0x4b8] sm:$0xff]
        %v5213 = vld [vmem:[%s9 + $0x4c0] sm:$0xff]
        %v5214 = vld [vmem:[%s9 + $0x4c8] sm:$0xff]
        %v5215 = vld [vmem:[%s9 + $0x4d0] sm:$0xff]
        %v5216 = vld [vmem:[%s9 + $0x4d8] sm:$0xff]
        %v5217 = vld [vmem:[%s9 + $0x4e0] sm:$0xff]
        %v5218 = vld [vmem:[%s9 + $0x4e8] sm:$0xff]
        %v5219 = vld [vmem:[%s9 + $0x4f0] sm:$0xff]
        %v5220 = vld [vmem:[%s9 + $0x4f8] sm:$0xff]
        %v5221 = vld [vmem:[%s9 + $0x500] sm:$0xff]
        %v5222 = vld [vmem:[%s9 + $0x508] sm:$0xff]
        %v5223 = vld [vmem:[%s9 + $0x510] sm:$0xff]
        %v5224 = vld [vmem:[%s9 + $0x518] sm:$0xff]
        %v5225 = vld [vmem:[%s9 + $0x520] sm:$0xff]
        %v5226 = vld [vmem:[%s9 + $0x528] sm:$0xff]
        %v5227 = vld [vmem:[%s9 + $0x530] sm:$0xff]
        %v5228 = vld [vmem:[%s9 + $0x538] sm:$0xff]
        %v5229 = vld [vmem:[%s9 + $0x540] sm:$0xff]
        %v5230 = vld [vmem:[%s9 + $0x548] sm:$0xff]
        %v5231 = vld [vmem:[%s9 + $0x550] sm:$0xff]
        %v5232 = vld [vmem:[%s9 + $0x558] sm:$0xff]
        %v5233 = vld [vmem:[%s9 + $0x560] sm:$0xff]
        %v5234 = vld [vmem:[%s9 + $0x568] sm:$0xff]
        %v5235 = vld [vmem:[%s9 + $0x570] sm:$0xff]
        %v5236 = vld [vmem:[%s9 + $0x578] sm:$0xff]
        %v5237 = vld [vmem:[%s9 + $0x580] sm:$0xff]
        %v5238 = vld [vmem:[%s9 + $0x588] sm:$0xff]
        %v5239 = vld [vmem:[%s9 + $0x590] sm:$0xff]
        %v5240 = vld [vmem:[%s9 + $0x598] sm:$0xff]
        %v5241 = vld [vmem:[%s9 + $0x5a0] sm:$0xff]
        %v5242 = vld [vmem:[%s9 + $0x5a8] sm:$0xff]
        %v5243 = vld [vmem:[%s9 + $0x5b0] sm:$0xff]
        %v5244 = vld [vmem:[%s9 + $0x5b8] sm:$0xff]
        %v5245 = vld [vmem:[%s9 + $0x5c0] sm:$0xff]
        %v5246 = vld [vmem:[%s9 + $0x5c8] sm:$0xff]
        %v5247 = vld [vmem:[%s9 + $0x5d0] sm:$0xff]
        %v5248 = vld [vmem:[%s9 + $0x5d8] sm:$0xff]
        %v5249 = vld [vmem:[%s9 + $0x5e0] sm:$0xff]
        %v5250 = vld [vmem:[%s9 + $0x5e8] sm:$0xff]
        %v5251 = vld [vmem:[%s9 + $0x5f0] sm:$0xff]
        %v5252 = vld [vmem:[%s9 + $0x5f8] sm:$0xff]
        %v5253 = vld [vmem:[%s9 + $0x600] sm:$0xff]
        %v5254 = vld [vmem:[%s9 + $0x608] sm:$0xff]
        %v5255 = vld [vmem:[%s9 + $0x610] sm:$0xff]
        %v5256 = vld [vmem:[%s9 + $0x618] sm:$0xff]
        %v5257 = vld [vmem:[%s9 + $0x620] sm:$0xff]
        %v5258 = vld [vmem:[%s9 + $0x628] sm:$0xff]
        %v5259 = vld [vmem:[%s9 + $0x630] sm:$0xff]
        %v5260 = vld [vmem:[%s9 + $0x638] sm:$0xff]
        %v5261 = vld [vmem:[%s9 + $0x640] sm:$0xff]
        %v5262 = vld [vmem:[%s9 + $0x648] sm:$0xff]
        %v5263 = vld [vmem:[%s9 + $0x650] sm:$0xff]
        %v5264 = vld [vmem:[%s9 + $0x658] sm:$0xff]
        %v5265 = vld [vmem:[%s9 + $0x660] sm:$0xff]
        %v5266 = vld [vmem:[%s9 + $0x668] sm:$0xff]
        %v5267 = vld [vmem:[%s9 + $0x670] sm:$0xff]
        %v5268 = vld [vmem:[%s9 + $0x678] sm:$0xff]
        %v5269 = vld [vmem:[%s9 + $0x680] sm:$0xff]
        %v5270 = vld [vmem:[%s9 + $0x688] sm:$0xff]
        %v5271 = vld [vmem:[%s9 + $0x690] sm:$0xff]
        %v5272 = vld [vmem:[%s9 + $0x698] sm:$0xff]
        %v5273 = vld [vmem:[%s9 + $0x6a0] sm:$0xff]
        %v5274 = vld [vmem:[%s9 + $0x6a8] sm:$0xff]
        %v5275 = vld [vmem:[%s9 + $0x6b0] sm:$0xff]
        %v5276 = vld [vmem:[%s9 + $0x6b8] sm:$0xff]
        %v5277 = vld [vmem:[%s9 + $0x6c0] sm:$0xff]
        %v5278 = vld [vmem:[%s9 + $0x6c8] sm:$0xff]
        %v5279 = vld [vmem:[%s9 + $0x6d0] sm:$0xff]
        %v5280 = vld [vmem:[%s9 + $0x6d8] sm:$0xff]
        %v5281 = vld [vmem:[%s9 + $0x6e0] sm:$0xff]
        %v5282 = vld [vmem:[%s9 + $0x6e8] sm:$0xff]
        %v5283 = vld [vmem:[%s9 + $0x6f0] sm:$0xff]
        %v5284 = vld [vmem:[%s9 + $0x6f8] sm:$0xff]
        %v5285 = vld [vmem:[%s9 + $0x700] sm:$0xff]
        %v5286 = vld [vmem:[%s9 + $0x708] sm:$0xff]
        %v5287 = vld [vmem:[%s9 + $0x710] sm:$0xff]
        %v5288 = vld [vmem:[%s9 + $0x718] sm:$0xff]
        %v5289 = vld [vmem:[%s9 + $0x720] sm:$0xff]
        %v5290 = vld [vmem:[%s9 + $0x728] sm:$0xff]
        %v5291 = vld [vmem:[%s9 + $0x730] sm:$0xff]
        %v5292 = vld [vmem:[%s9 + $0x738] sm:$0xff]
        %v5293 = vld [vmem:[%s9 + $0x740] sm:$0xff]
        %v5294 = vld [vmem:[%s9 + $0x748] sm:$0xff]
        %v5295 = vld [vmem:[%s9 + $0x750] sm:$0xff]
        %v5296 = vld [vmem:[%s9 + $0x758] sm:$0xff]
        %v5297 = vld [vmem:[%s9 + $0x760] sm:$0xff]
        %v5298 = vld [vmem:[%s9 + $0x768] sm:$0xff]
        %v5299 = vld [vmem:[%s9 + $0x770] sm:$0xff]
        %v5300 = vld [vmem:[%s9 + $0x778] sm:$0xff]
        %v5301 = vld [vmem:[%s9 + $0x780] sm:$0xff]
        %v5302 = vld [vmem:[%s9 + $0x788] sm:$0xff]
        %v5303 = vld [vmem:[%s9 + $0x790] sm:$0xff]
        %v5304 = vld [vmem:[%s9 + $0x798] sm:$0xff]
        %v5305 = vld [vmem:[%s9 + $0x7a0] sm:$0xff]
        %v5306 = vld [vmem:[%s9 + $0x7a8] sm:$0xff]
        %v5307 = vld [vmem:[%s9 + $0x7b0] sm:$0xff]
        %v5308 = vld [vmem:[%s9 + $0x7b8] sm:$0xff]
        %v5309 = vld [vmem:[%s9 + $0x7c0] sm:$0xff]
        %v5310 = vld [vmem:[%s9 + $0x7c8] sm:$0xff]
        %v5311 = vld [vmem:[%s9 + $0x7d0] sm:$0xff]
        %v5312 = vld [vmem:[%s9 + $0x7d8] sm:$0xff]
        %v5313 = vld [vmem:[%s9 + $0x7e0] sm:$0xff]
        %v5314 = vld [vmem:[%s9 + $0x7e8] sm:$0xff]
        %v5315 = vld [vmem:[%s9 + $0x7f0] sm:$0xff]
        %v5316 = vld [vmem:[%s9 + $0x7f8] sm:$0xff]
        %v5317 = vld [vmem:[%s14] sm:$0xf]
        %v5319 = vlaneseq
        %v5320 = vshrl.u32 %v5319, 7
        %v5321 = vsub.s32 0, %v5320
        %v5322 = vrot.slane %v5317, %v5321
        %v5323 = vlaneseq
        %v5324 = vshrl.u32 %v5323, 7
        %v5325 = vsub.s32 1, %v5324
        %v5326 = vrot.slane %v5317, %v5325
        %v5327 = vlaneseq
        %v5328 = vshrl.u32 %v5327, 7
        %v5329 = vsub.s32 2, %v5328
        %v5330 = vrot.slane %v5317, %v5329
        %v5331 = vlaneseq
        %v5332 = vshrl.u32 %v5331, 7
        %v5333 = vsub.s32 3, %v5332
        %v5334 = vrot.slane %v5317, %v5333
        %v5595 = vunpack.c.l.b16 %v5061
        %v5596 = vunpack.c.h.b16 %v5061
        %v5597 = vunpack.c.l.b16 %v5062
        %v5598 = vunpack.c.h.b16 %v5062
        %v5599 = vunpack.c.l.b16 %v5063
        %v5600 = vunpack.c.h.b16 %v5063
        %v5601 = vunpack.c.l.b16 %v5064
        %v5602 = vunpack.c.h.b16 %v5064
        %v5603 = vunpack.c.l.b16 %v5065
        %v5604 = vunpack.c.h.b16 %v5065
        %v5605 = vunpack.c.l.b16 %v5066
        %v5606 = vunpack.c.h.b16 %v5066
        %v5607 = vunpack.c.l.b16 %v5067
        %v5608 = vunpack.c.h.b16 %v5067
        %v5609 = vunpack.c.l.b16 %v5068
        %v5610 = vunpack.c.h.b16 %v5068
        %v5611 = vunpack.c.l.b16 %v5069
        %v5612 = vunpack.c.h.b16 %v5069
        %v5613 = vunpack.c.l.b16 %v5070
        %v5614 = vunpack.c.h.b16 %v5070
        %v5615 = vunpack.c.l.b16 %v5071
        %v5616 = vunpack.c.h.b16 %v5071
        %v5617 = vunpack.c.l.b16 %v5072
        %v5618 = vunpack.c.h.b16 %v5072
        %v5619 = vunpack.c.l.b16 %v5073
        %v5620 = vunpack.c.h.b16 %v5073
        %v5621 = vunpack.c.l.b16 %v5074
        %v5622 = vunpack.c.h.b16 %v5074
        %v5623 = vunpack.c.l.b16 %v5075
        %v5624 = vunpack.c.h.b16 %v5075
        %v5625 = vunpack.c.l.b16 %v5076
        %v5626 = vunpack.c.h.b16 %v5076
        %v5627 = vunpack.c.l.b16 %v5077
        %v5628 = vunpack.c.h.b16 %v5077
        %v5629 = vunpack.c.l.b16 %v5078
        %v5630 = vunpack.c.h.b16 %v5078
        %v5631 = vunpack.c.l.b16 %v5079
        %v5632 = vunpack.c.h.b16 %v5079
        %v5633 = vunpack.c.l.b16 %v5080
        %v5634 = vunpack.c.h.b16 %v5080
        %v5635 = vunpack.c.l.b16 %v5081
        %v5636 = vunpack.c.h.b16 %v5081
        %v5637 = vunpack.c.l.b16 %v5082
        %v5638 = vunpack.c.h.b16 %v5082
        %v5639 = vunpack.c.l.b16 %v5083
        %v5640 = vunpack.c.h.b16 %v5083
        %v5641 = vunpack.c.l.b16 %v5084
        %v5642 = vunpack.c.h.b16 %v5084
        %v5643 = vunpack.c.l.b16 %v5085
        %v5644 = vunpack.c.h.b16 %v5085
        %v5645 = vunpack.c.l.b16 %v5086
        %v5646 = vunpack.c.h.b16 %v5086
        %v5647 = vunpack.c.l.b16 %v5087
        %v5648 = vunpack.c.h.b16 %v5087
        %v5649 = vunpack.c.l.b16 %v5088
        %v5650 = vunpack.c.h.b16 %v5088
        %v5651 = vunpack.c.l.b16 %v5089
        %v5652 = vunpack.c.h.b16 %v5089
        %v5653 = vunpack.c.l.b16 %v5090
        %v5654 = vunpack.c.h.b16 %v5090
        %v5655 = vunpack.c.l.b16 %v5091
        %v5656 = vunpack.c.h.b16 %v5091
        %v5657 = vunpack.c.l.b16 %v5092
        %v5658 = vunpack.c.h.b16 %v5092
        %v5659 = vunpack.c.l.b16 %v5093
        %v5660 = vunpack.c.h.b16 %v5093
        %v5661 = vunpack.c.l.b16 %v5094
        %v5662 = vunpack.c.h.b16 %v5094
        %v5663 = vunpack.c.l.b16 %v5095
        %v5664 = vunpack.c.h.b16 %v5095
        %v5665 = vunpack.c.l.b16 %v5096
        %v5666 = vunpack.c.h.b16 %v5096
        %v5667 = vunpack.c.l.b16 %v5097
        %v5668 = vunpack.c.h.b16 %v5097
        %v5669 = vunpack.c.l.b16 %v5098
        %v5670 = vunpack.c.h.b16 %v5098
        %v5671 = vunpack.c.l.b16 %v5099
        %v5672 = vunpack.c.h.b16 %v5099
        %v5673 = vunpack.c.l.b16 %v5100
        %v5674 = vunpack.c.h.b16 %v5100
        %v5675 = vunpack.c.l.b16 %v5101
        %v5676 = vunpack.c.h.b16 %v5101
        %v5677 = vunpack.c.l.b16 %v5102
        %v5678 = vunpack.c.h.b16 %v5102
        %v5679 = vunpack.c.l.b16 %v5103
        %v5680 = vunpack.c.h.b16 %v5103
        %v5681 = vunpack.c.l.b16 %v5104
        %v5682 = vunpack.c.h.b16 %v5104
        %v5683 = vunpack.c.l.b16 %v5105
        %v5684 = vunpack.c.h.b16 %v5105
        %v5685 = vunpack.c.l.b16 %v5106
        %v5686 = vunpack.c.h.b16 %v5106
        %v5687 = vunpack.c.l.b16 %v5107
        %v5688 = vunpack.c.h.b16 %v5107
        %v5689 = vunpack.c.l.b16 %v5108
        %v5690 = vunpack.c.h.b16 %v5108
        %v5691 = vunpack.c.l.b16 %v5109
        %v5692 = vunpack.c.h.b16 %v5109
        %v5693 = vunpack.c.l.b16 %v5110
        %v5694 = vunpack.c.h.b16 %v5110
        %v5695 = vunpack.c.l.b16 %v5111
        %v5696 = vunpack.c.h.b16 %v5111
        %v5697 = vunpack.c.l.b16 %v5112
        %v5698 = vunpack.c.h.b16 %v5112
        %v5699 = vunpack.c.l.b16 %v5113
        %v5700 = vunpack.c.h.b16 %v5113
        %v5701 = vunpack.c.l.b16 %v5114
        %v5702 = vunpack.c.h.b16 %v5114
        %v5703 = vunpack.c.l.b16 %v5115
        %v5704 = vunpack.c.h.b16 %v5115
        %v5705 = vunpack.c.l.b16 %v5116
        %v5706 = vunpack.c.h.b16 %v5116
        %v5707 = vunpack.c.l.b16 %v5117
        %v5708 = vunpack.c.h.b16 %v5117
        %v5709 = vunpack.c.l.b16 %v5118
        %v5710 = vunpack.c.h.b16 %v5118
        %v5711 = vunpack.c.l.b16 %v5119
        %v5712 = vunpack.c.h.b16 %v5119
        %v5713 = vunpack.c.l.b16 %v5120
        %v5714 = vunpack.c.h.b16 %v5120
        %v5715 = vunpack.c.l.b16 %v5121
        %v5716 = vunpack.c.h.b16 %v5121
        %v5717 = vunpack.c.l.b16 %v5122
        %v5718 = vunpack.c.h.b16 %v5122
        %v5719 = vunpack.c.l.b16 %v5123
        %v5720 = vunpack.c.h.b16 %v5123
        %v5721 = vunpack.c.l.b16 %v5124
        %v5722 = vunpack.c.h.b16 %v5124
        %v5723 = vunpack.c.l.b16 %v5125
        %v5724 = vunpack.c.h.b16 %v5125
        %v5725 = vunpack.c.l.b16 %v5126
        %v5726 = vunpack.c.h.b16 %v5126
        %v5727 = vunpack.c.l.b16 %v5127
        %v5728 = vunpack.c.h.b16 %v5127
        %v5729 = vunpack.c.l.b16 %v5128
        %v5730 = vunpack.c.h.b16 %v5128
        %v5731 = vunpack.c.l.b16 %v5129
        %v5732 = vunpack.c.h.b16 %v5129
        %v5733 = vunpack.c.l.b16 %v5130
        %v5734 = vunpack.c.h.b16 %v5130
        %v5735 = vunpack.c.l.b16 %v5131
        %v5736 = vunpack.c.h.b16 %v5131
        %v5737 = vunpack.c.l.b16 %v5132
        %v5738 = vunpack.c.h.b16 %v5132
        %v5739 = vunpack.c.l.b16 %v5133
        %v5740 = vunpack.c.h.b16 %v5133
        %v5741 = vunpack.c.l.b16 %v5134
        %v5742 = vunpack.c.h.b16 %v5134
        %v5743 = vunpack.c.l.b16 %v5135
        %v5744 = vunpack.c.h.b16 %v5135
        %v5745 = vunpack.c.l.b16 %v5136
        %v5746 = vunpack.c.h.b16 %v5136
        %v5747 = vunpack.c.l.b16 %v5137
        %v5748 = vunpack.c.h.b16 %v5137
        %v5749 = vunpack.c.l.b16 %v5138
        %v5750 = vunpack.c.h.b16 %v5138
        %v5751 = vunpack.c.l.b16 %v5139
        %v5752 = vunpack.c.h.b16 %v5139
        %v5753 = vunpack.c.l.b16 %v5140
        %v5754 = vunpack.c.h.b16 %v5140
        %v5755 = vunpack.c.l.b16 %v5141
        %v5756 = vunpack.c.h.b16 %v5141
        %v5757 = vunpack.c.l.b16 %v5142
        %v5758 = vunpack.c.h.b16 %v5142
        %v5759 = vunpack.c.l.b16 %v5143
        %v5760 = vunpack.c.h.b16 %v5143
        %v5761 = vunpack.c.l.b16 %v5144
        %v5762 = vunpack.c.h.b16 %v5144
        %v5763 = vunpack.c.l.b16 %v5145
        %v5764 = vunpack.c.h.b16 %v5145
        %v5765 = vunpack.c.l.b16 %v5146
        %v5766 = vunpack.c.h.b16 %v5146
        %v5767 = vunpack.c.l.b16 %v5147
        %v5768 = vunpack.c.h.b16 %v5147
        %v5769 = vunpack.c.l.b16 %v5148
        %v5770 = vunpack.c.h.b16 %v5148
        %v5771 = vunpack.c.l.b16 %v5149
        %v5772 = vunpack.c.h.b16 %v5149
        %v5773 = vunpack.c.l.b16 %v5150
        %v5774 = vunpack.c.h.b16 %v5150
        %v5775 = vunpack.c.l.b16 %v5151
        %v5776 = vunpack.c.h.b16 %v5151
        %v5777 = vunpack.c.l.b16 %v5152
        %v5778 = vunpack.c.h.b16 %v5152
        %v5779 = vunpack.c.l.b16 %v5153
        %v5780 = vunpack.c.h.b16 %v5153
        %v5781 = vunpack.c.l.b16 %v5154
        %v5782 = vunpack.c.h.b16 %v5154
        %v5783 = vunpack.c.l.b16 %v5155
        %v5784 = vunpack.c.h.b16 %v5155
        %v5785 = vunpack.c.l.b16 %v5156
        %v5786 = vunpack.c.h.b16 %v5156
        %v5787 = vunpack.c.l.b16 %v5157
        %v5788 = vunpack.c.h.b16 %v5157
        %v5789 = vunpack.c.l.b16 %v5158
        %v5790 = vunpack.c.h.b16 %v5158
        %v5791 = vunpack.c.l.b16 %v5159
        %v5792 = vunpack.c.h.b16 %v5159
        %v5793 = vunpack.c.l.b16 %v5160
        %v5794 = vunpack.c.h.b16 %v5160
        %v5795 = vunpack.c.l.b16 %v5161
        %v5796 = vunpack.c.h.b16 %v5161
        %v5797 = vunpack.c.l.b16 %v5162
        %v5798 = vunpack.c.h.b16 %v5162
        %v5799 = vunpack.c.l.b16 %v5163
        %v5800 = vunpack.c.h.b16 %v5163
        %v5801 = vunpack.c.l.b16 %v5164
        %v5802 = vunpack.c.h.b16 %v5164
        %v5803 = vunpack.c.l.b16 %v5165
        %v5804 = vunpack.c.h.b16 %v5165
        %v5805 = vunpack.c.l.b16 %v5166
        %v5806 = vunpack.c.h.b16 %v5166
        %v5807 = vunpack.c.l.b16 %v5167
        %v5808 = vunpack.c.h.b16 %v5167
        %v5809 = vunpack.c.l.b16 %v5168
        %v5810 = vunpack.c.h.b16 %v5168
        %v5811 = vunpack.c.l.b16 %v5169
        %v5812 = vunpack.c.h.b16 %v5169
        %v5813 = vunpack.c.l.b16 %v5170
        %v5814 = vunpack.c.h.b16 %v5170
        %v5815 = vunpack.c.l.b16 %v5171
        %v5816 = vunpack.c.h.b16 %v5171
        %v5817 = vunpack.c.l.b16 %v5172
        %v5818 = vunpack.c.h.b16 %v5172
        %v5819 = vunpack.c.l.b16 %v5173
        %v5820 = vunpack.c.h.b16 %v5173
        %v5821 = vunpack.c.l.b16 %v5174
        %v5822 = vunpack.c.h.b16 %v5174
        %v5823 = vunpack.c.l.b16 %v5175
        %v5824 = vunpack.c.h.b16 %v5175
        %v5825 = vunpack.c.l.b16 %v5176
        %v5826 = vunpack.c.h.b16 %v5176
        %v5827 = vunpack.c.l.b16 %v5177
        %v5828 = vunpack.c.h.b16 %v5177
        %v5829 = vunpack.c.l.b16 %v5178
        %v5830 = vunpack.c.h.b16 %v5178
        %v5831 = vunpack.c.l.b16 %v5179
        %v5832 = vunpack.c.h.b16 %v5179
        %v5833 = vunpack.c.l.b16 %v5180
        %v5834 = vunpack.c.h.b16 %v5180
        %v5835 = vunpack.c.l.b16 %v5181
        %v5836 = vunpack.c.h.b16 %v5181
        %v5837 = vunpack.c.l.b16 %v5182
        %v5838 = vunpack.c.h.b16 %v5182
        %v5839 = vunpack.c.l.b16 %v5183
        %v5840 = vunpack.c.h.b16 %v5183
        %v5841 = vunpack.c.l.b16 %v5184
        %v5842 = vunpack.c.h.b16 %v5184
        %v5843 = vunpack.c.l.b16 %v5185
        %v5844 = vunpack.c.h.b16 %v5185
        %v5845 = vunpack.c.l.b16 %v5186
        %v5846 = vunpack.c.h.b16 %v5186
        %v5847 = vunpack.c.l.b16 %v5187
        %v5848 = vunpack.c.h.b16 %v5187
        %v5849 = vunpack.c.l.b16 %v5188
        %v5850 = vunpack.c.h.b16 %v5188
        %v5851 = vunpack.c.l.b16 %v5189
        %v5852 = vunpack.c.h.b16 %v5189
        %v5853 = vunpack.c.l.b16 %v5190
        %v5854 = vunpack.c.h.b16 %v5190
        %v5855 = vunpack.c.l.b16 %v5191
        %v5856 = vunpack.c.h.b16 %v5191
        %v5857 = vunpack.c.l.b16 %v5192
        %v5858 = vunpack.c.h.b16 %v5192
        %v5859 = vunpack.c.l.b16 %v5193
        %v5860 = vunpack.c.h.b16 %v5193
        %v5861 = vunpack.c.l.b16 %v5194
        %v5862 = vunpack.c.h.b16 %v5194
        %v5863 = vunpack.c.l.b16 %v5195
        %v5864 = vunpack.c.h.b16 %v5195
        %v5865 = vunpack.c.l.b16 %v5196
        %v5866 = vunpack.c.h.b16 %v5196
        %v5867 = vunpack.c.l.b16 %v5197
        %v5868 = vunpack.c.h.b16 %v5197
        %v5869 = vunpack.c.l.b16 %v5198
        %v5870 = vunpack.c.h.b16 %v5198
        %v5871 = vunpack.c.l.b16 %v5199
        %v5872 = vunpack.c.h.b16 %v5199
        %v5873 = vunpack.c.l.b16 %v5200
        %v5874 = vunpack.c.h.b16 %v5200
        %v5875 = vunpack.c.l.b16 %v5201
        %v5876 = vunpack.c.h.b16 %v5201
        %v5877 = vunpack.c.l.b16 %v5202
        %v5878 = vunpack.c.h.b16 %v5202
        %v5879 = vunpack.c.l.b16 %v5203
        %v5880 = vunpack.c.h.b16 %v5203
        %v5881 = vunpack.c.l.b16 %v5204
        %v5882 = vunpack.c.h.b16 %v5204
        %v5883 = vunpack.c.l.b16 %v5205
        %v5884 = vunpack.c.h.b16 %v5205
        %v5885 = vunpack.c.l.b16 %v5206
        %v5886 = vunpack.c.h.b16 %v5206
        %v5887 = vunpack.c.l.b16 %v5207
        %v5888 = vunpack.c.h.b16 %v5207
        %v5889 = vunpack.c.l.b16 %v5208
        %v5890 = vunpack.c.h.b16 %v5208
        %v5891 = vunpack.c.l.b16 %v5209
        %v5892 = vunpack.c.h.b16 %v5209
        %v5893 = vunpack.c.l.b16 %v5210
        %v5894 = vunpack.c.h.b16 %v5210
        %v5895 = vunpack.c.l.b16 %v5211
        %v5896 = vunpack.c.h.b16 %v5211
        %v5897 = vunpack.c.l.b16 %v5212
        %v5898 = vunpack.c.h.b16 %v5212
        %v5899 = vunpack.c.l.b16 %v5213
        %v5900 = vunpack.c.h.b16 %v5213
        %v5901 = vunpack.c.l.b16 %v5214
        %v5902 = vunpack.c.h.b16 %v5214
        %v5903 = vunpack.c.l.b16 %v5215
        %v5904 = vunpack.c.h.b16 %v5215
        %v5905 = vunpack.c.l.b16 %v5216
        %v5906 = vunpack.c.h.b16 %v5216
        %v5907 = vunpack.c.l.b16 %v5217
        %v5908 = vunpack.c.h.b16 %v5217
        %v5909 = vunpack.c.l.b16 %v5218
        %v5910 = vunpack.c.h.b16 %v5218
        %v5911 = vunpack.c.l.b16 %v5219
        %v5912 = vunpack.c.h.b16 %v5219
        %v5913 = vunpack.c.l.b16 %v5220
        %v5914 = vunpack.c.h.b16 %v5220
        %v5915 = vunpack.c.l.b16 %v5221
        %v5916 = vunpack.c.h.b16 %v5221
        %v5917 = vunpack.c.l.b16 %v5222
        %v5918 = vunpack.c.h.b16 %v5222
        %v5919 = vunpack.c.l.b16 %v5223
        %v5920 = vunpack.c.h.b16 %v5223
        %v5921 = vunpack.c.l.b16 %v5224
        %v5922 = vunpack.c.h.b16 %v5224
        %v5923 = vunpack.c.l.b16 %v5225
        %v5924 = vunpack.c.h.b16 %v5225
        %v5925 = vunpack.c.l.b16 %v5226
        %v5926 = vunpack.c.h.b16 %v5226
        %v5927 = vunpack.c.l.b16 %v5227
        %v5928 = vunpack.c.h.b16 %v5227
        %v5929 = vunpack.c.l.b16 %v5228
        %v5930 = vunpack.c.h.b16 %v5228
        %v5931 = vunpack.c.l.b16 %v5229
        %v5932 = vunpack.c.h.b16 %v5229
        %v5933 = vunpack.c.l.b16 %v5230
        %v5934 = vunpack.c.h.b16 %v5230
        %v5935 = vunpack.c.l.b16 %v5231
        %v5936 = vunpack.c.h.b16 %v5231
        %v5937 = vunpack.c.l.b16 %v5232
        %v5938 = vunpack.c.h.b16 %v5232
        %v5939 = vunpack.c.l.b16 %v5233
        %v5940 = vunpack.c.h.b16 %v5233
        %v5941 = vunpack.c.l.b16 %v5234
        %v5942 = vunpack.c.h.b16 %v5234
        %v5943 = vunpack.c.l.b16 %v5235
        %v5944 = vunpack.c.h.b16 %v5235
        %v5945 = vunpack.c.l.b16 %v5236
        %v5946 = vunpack.c.h.b16 %v5236
        %v5947 = vunpack.c.l.b16 %v5237
        %v5948 = vunpack.c.h.b16 %v5237
        %v5949 = vunpack.c.l.b16 %v5238
        %v5950 = vunpack.c.h.b16 %v5238
        %v5951 = vunpack.c.l.b16 %v5239
        %v5952 = vunpack.c.h.b16 %v5239
        %v5953 = vunpack.c.l.b16 %v5240
        %v5954 = vunpack.c.h.b16 %v5240
        %v5955 = vunpack.c.l.b16 %v5241
        %v5956 = vunpack.c.h.b16 %v5241
        %v5957 = vunpack.c.l.b16 %v5242
        %v5958 = vunpack.c.h.b16 %v5242
        %v5959 = vunpack.c.l.b16 %v5243
        %v5960 = vunpack.c.h.b16 %v5243
        %v5961 = vunpack.c.l.b16 %v5244
        %v5962 = vunpack.c.h.b16 %v5244
        %v5963 = vunpack.c.l.b16 %v5245
        %v5964 = vunpack.c.h.b16 %v5245
        %v5965 = vunpack.c.l.b16 %v5246
        %v5966 = vunpack.c.h.b16 %v5246
        %v5967 = vunpack.c.l.b16 %v5247
        %v5968 = vunpack.c.h.b16 %v5247
        %v5969 = vunpack.c.l.b16 %v5248
        %v5970 = vunpack.c.h.b16 %v5248
        %v5971 = vunpack.c.l.b16 %v5249
        %v5972 = vunpack.c.h.b16 %v5249
        %v5973 = vunpack.c.l.b16 %v5250
        %v5974 = vunpack.c.h.b16 %v5250
        %v5975 = vunpack.c.l.b16 %v5251
        %v5976 = vunpack.c.h.b16 %v5251
        %v5977 = vunpack.c.l.b16 %v5252
        %v5978 = vunpack.c.h.b16 %v5252
        %v5979 = vunpack.c.l.b16 %v5253
        %v5980 = vunpack.c.h.b16 %v5253
        %v5981 = vunpack.c.l.b16 %v5254
        %v5982 = vunpack.c.h.b16 %v5254
        %v5983 = vunpack.c.l.b16 %v5255
        %v5984 = vunpack.c.h.b16 %v5255
        %v5985 = vunpack.c.l.b16 %v5256
        %v5986 = vunpack.c.h.b16 %v5256
        %v5987 = vunpack.c.l.b16 %v5257
        %v5988 = vunpack.c.h.b16 %v5257
        %v5989 = vunpack.c.l.b16 %v5258
        %v5990 = vunpack.c.h.b16 %v5258
        %v5991 = vunpack.c.l.b16 %v5259
        %v5992 = vunpack.c.h.b16 %v5259
        %v5993 = vunpack.c.l.b16 %v5260
        %v5994 = vunpack.c.h.b16 %v5260
        %v5995 = vunpack.c.l.b16 %v5261
        %v5996 = vunpack.c.h.b16 %v5261
        %v5997 = vunpack.c.l.b16 %v5262
        %v5998 = vunpack.c.h.b16 %v5262
        %v5999 = vunpack.c.l.b16 %v5263
        %v6000 = vunpack.c.h.b16 %v5263
        %v6001 = vunpack.c.l.b16 %v5264
        %v6002 = vunpack.c.h.b16 %v5264
        %v6003 = vunpack.c.l.b16 %v5265
        %v6004 = vunpack.c.h.b16 %v5265
        %v6005 = vunpack.c.l.b16 %v5266
        %v6006 = vunpack.c.h.b16 %v5266
        %v6007 = vunpack.c.l.b16 %v5267
        %v6008 = vunpack.c.h.b16 %v5267
        %v6009 = vunpack.c.l.b16 %v5268
        %v6010 = vunpack.c.h.b16 %v5268
        %v6011 = vunpack.c.l.b16 %v5269
        %v6012 = vunpack.c.h.b16 %v5269
        %v6013 = vunpack.c.l.b16 %v5270
        %v6014 = vunpack.c.h.b16 %v5270
        %v6015 = vunpack.c.l.b16 %v5271
        %v6016 = vunpack.c.h.b16 %v5271
        %v6017 = vunpack.c.l.b16 %v5272
        %v6018 = vunpack.c.h.b16 %v5272
        %v6019 = vunpack.c.l.b16 %v5273
        %v6020 = vunpack.c.h.b16 %v5273
        %v6021 = vunpack.c.l.b16 %v5274
        %v6022 = vunpack.c.h.b16 %v5274
        %v6023 = vunpack.c.l.b16 %v5275
        %v6024 = vunpack.c.h.b16 %v5275
        %v6025 = vunpack.c.l.b16 %v5276
        %v6026 = vunpack.c.h.b16 %v5276
        %v6027 = vunpack.c.l.b16 %v5277
        %v6028 = vunpack.c.h.b16 %v5277
        %v6029 = vunpack.c.l.b16 %v5278
        %v6030 = vunpack.c.h.b16 %v5278
        %v6031 = vunpack.c.l.b16 %v5279
        %v6032 = vunpack.c.h.b16 %v5279
        %v6033 = vunpack.c.l.b16 %v5280
        %v6034 = vunpack.c.h.b16 %v5280
        %v6035 = vunpack.c.l.b16 %v5281
        %v6036 = vunpack.c.h.b16 %v5281
        %v6037 = vunpack.c.l.b16 %v5282
        %v6038 = vunpack.c.h.b16 %v5282
        %v6039 = vunpack.c.l.b16 %v5283
        %v6040 = vunpack.c.h.b16 %v5283
        %v6041 = vunpack.c.l.b16 %v5284
        %v6042 = vunpack.c.h.b16 %v5284
        %v6043 = vunpack.c.l.b16 %v5285
        %v6044 = vunpack.c.h.b16 %v5285
        %v6045 = vunpack.c.l.b16 %v5286
        %v6046 = vunpack.c.h.b16 %v5286
        %v6047 = vunpack.c.l.b16 %v5287
        %v6048 = vunpack.c.h.b16 %v5287
        %v6049 = vunpack.c.l.b16 %v5288
        %v6050 = vunpack.c.h.b16 %v5288
        %v6051 = vunpack.c.l.b16 %v5289
        %v6052 = vunpack.c.h.b16 %v5289
        %v6053 = vunpack.c.l.b16 %v5290
        %v6054 = vunpack.c.h.b16 %v5290
        %v6055 = vunpack.c.l.b16 %v5291
        %v6056 = vunpack.c.h.b16 %v5291
        %v6057 = vunpack.c.l.b16 %v5292
        %v6058 = vunpack.c.h.b16 %v5292
        %v6059 = vunpack.c.l.b16 %v5293
        %v6060 = vunpack.c.h.b16 %v5293
        %v6061 = vunpack.c.l.b16 %v5294
        %v6062 = vunpack.c.h.b16 %v5294
        %v6063 = vunpack.c.l.b16 %v5295
        %v6064 = vunpack.c.h.b16 %v5295
        %v6065 = vunpack.c.l.b16 %v5296
        %v6066 = vunpack.c.h.b16 %v5296
        %v6067 = vunpack.c.l.b16 %v5297
        %v6068 = vunpack.c.h.b16 %v5297
        %v6069 = vunpack.c.l.b16 %v5298
        %v6070 = vunpack.c.h.b16 %v5298
        %v6071 = vunpack.c.l.b16 %v5299
        %v6072 = vunpack.c.h.b16 %v5299
        %v6073 = vunpack.c.l.b16 %v5300
        %v6074 = vunpack.c.h.b16 %v5300
        %v6075 = vunpack.c.l.b16 %v5301
        %v6076 = vunpack.c.h.b16 %v5301
        %v6077 = vunpack.c.l.b16 %v5302
        %v6078 = vunpack.c.h.b16 %v5302
        %v6079 = vunpack.c.l.b16 %v5303
        %v6080 = vunpack.c.h.b16 %v5303
        %v6081 = vunpack.c.l.b16 %v5304
        %v6082 = vunpack.c.h.b16 %v5304
        %v6083 = vunpack.c.l.b16 %v5305
        %v6084 = vunpack.c.h.b16 %v5305
        %v6085 = vunpack.c.l.b16 %v5306
        %v6086 = vunpack.c.h.b16 %v5306
        %v6087 = vunpack.c.l.b16 %v5307
        %v6088 = vunpack.c.h.b16 %v5307
        %v6089 = vunpack.c.l.b16 %v5308
        %v6090 = vunpack.c.h.b16 %v5308
        %v6091 = vunpack.c.l.b16 %v5309
        %v6092 = vunpack.c.h.b16 %v5309
        %v6093 = vunpack.c.l.b16 %v5310
        %v6094 = vunpack.c.h.b16 %v5310
        %v6095 = vunpack.c.l.b16 %v5311
        %v6096 = vunpack.c.h.b16 %v5311
        %v6097 = vunpack.c.l.b16 %v5312
        %v6098 = vunpack.c.h.b16 %v5312
        %v6099 = vunpack.c.l.b16 %v5313
        %v6100 = vunpack.c.h.b16 %v5313
        %v6101 = vunpack.c.l.b16 %v5314
        %v6102 = vunpack.c.h.b16 %v5314
        %v6103 = vunpack.c.l.b16 %v5315
        %v6104 = vunpack.c.h.b16 %v5315
        %v6105 = vunpack.c.l.b16 %v5316
        %v6106 = vunpack.c.h.b16 %v5316
        %v6107 = vpack.c.b16 %v5599, %v5595
        %v6108 = vpack.c.b16 %v5600, %v5596
        %v6109 = vpack.c.b16 %v5601, %v5597
        %v6110 = vpack.c.b16 %v5602, %v5598
        %v6111 = vpack.c.b16 %v5607, %v5603
        %v6112 = vpack.c.b16 %v5608, %v5604
        %v6113 = vpack.c.b16 %v5609, %v5605
        %v6114 = vpack.c.b16 %v5610, %v5606
        %v6115 = vpack.c.b16 %v5615, %v5611
        %v6116 = vpack.c.b16 %v5616, %v5612
        %v6117 = vpack.c.b16 %v5617, %v5613
        %v6118 = vpack.c.b16 %v5618, %v5614
        %v6119 = vpack.c.b16 %v5623, %v5619
        %v6120 = vpack.c.b16 %v5624, %v5620
        %v6121 = vpack.c.b16 %v5625, %v5621
        %v6122 = vpack.c.b16 %v5626, %v5622
        %v6123 = vpack.c.b16 %v5631, %v5627
        %v6124 = vpack.c.b16 %v5632, %v5628
        %v6125 = vpack.c.b16 %v5633, %v5629
        %v6126 = vpack.c.b16 %v5634, %v5630
        %v6127 = vpack.c.b16 %v5639, %v5635
        %v6128 = vpack.c.b16 %v5640, %v5636
        %v6129 = vpack.c.b16 %v5641, %v5637
        %v6130 = vpack.c.b16 %v5642, %v5638
        %v6131 = vpack.c.b16 %v5647, %v5643
        %v6132 = vpack.c.b16 %v5648, %v5644
        %v6133 = vpack.c.b16 %v5649, %v5645
        %v6134 = vpack.c.b16 %v5650, %v5646
        %v6135 = vpack.c.b16 %v5655, %v5651
        %v6136 = vpack.c.b16 %v5656, %v5652
        %v6137 = vpack.c.b16 %v5657, %v5653
        %v6138 = vpack.c.b16 %v5658, %v5654
        %v6139 = vpack.c.b16 %v5663, %v5659
        %v6140 = vpack.c.b16 %v5664, %v5660
        %v6141 = vpack.c.b16 %v5665, %v5661
        %v6142 = vpack.c.b16 %v5666, %v5662
        %v6143 = vpack.c.b16 %v5671, %v5667
        %v6144 = vpack.c.b16 %v5672, %v5668
        %v6145 = vpack.c.b16 %v5673, %v5669
        %v6146 = vpack.c.b16 %v5674, %v5670
        %v6147 = vpack.c.b16 %v5679, %v5675
        %v6148 = vpack.c.b16 %v5680, %v5676
        %v6149 = vpack.c.b16 %v5681, %v5677
        %v6150 = vpack.c.b16 %v5682, %v5678
        %v6151 = vpack.c.b16 %v5687, %v5683
        %v6152 = vpack.c.b16 %v5688, %v5684
        %v6153 = vpack.c.b16 %v5689, %v5685
        %v6154 = vpack.c.b16 %v5690, %v5686
        %v6155 = vpack.c.b16 %v5695, %v5691
        %v6156 = vpack.c.b16 %v5696, %v5692
        %v6157 = vpack.c.b16 %v5697, %v5693
        %v6158 = vpack.c.b16 %v5698, %v5694
        %v6159 = vpack.c.b16 %v5703, %v5699
        %v6160 = vpack.c.b16 %v5704, %v5700
        %v6161 = vpack.c.b16 %v5705, %v5701
        %v6162 = vpack.c.b16 %v5706, %v5702
        %v6163 = vpack.c.b16 %v5711, %v5707
        %v6164 = vpack.c.b16 %v5712, %v5708
        %v6165 = vpack.c.b16 %v5713, %v5709
        %v6166 = vpack.c.b16 %v5714, %v5710
        %v6167 = vpack.c.b16 %v5719, %v5715
        %v6168 = vpack.c.b16 %v5720, %v5716
        %v6169 = vpack.c.b16 %v5721, %v5717
        %v6170 = vpack.c.b16 %v5722, %v5718
        %v6171 = vpack.c.b16 %v5727, %v5723
        %v6172 = vpack.c.b16 %v5728, %v5724
        %v6173 = vpack.c.b16 %v5729, %v5725
        %v6174 = vpack.c.b16 %v5730, %v5726
        %v6175 = vpack.c.b16 %v5735, %v5731
        %v6176 = vpack.c.b16 %v5736, %v5732
        %v6177 = vpack.c.b16 %v5737, %v5733
        %v6178 = vpack.c.b16 %v5738, %v5734
        %v6179 = vpack.c.b16 %v5743, %v5739
        %v6180 = vpack.c.b16 %v5744, %v5740
        %v6181 = vpack.c.b16 %v5745, %v5741
        %v6182 = vpack.c.b16 %v5746, %v5742
        %v6183 = vpack.c.b16 %v5751, %v5747
        %v6184 = vpack.c.b16 %v5752, %v5748
        %v6185 = vpack.c.b16 %v5753, %v5749
        %v6186 = vpack.c.b16 %v5754, %v5750
        %v6187 = vpack.c.b16 %v5759, %v5755
        %v6188 = vpack.c.b16 %v5760, %v5756
        %v6189 = vpack.c.b16 %v5761, %v5757
        %v6190 = vpack.c.b16 %v5762, %v5758
        %v6191 = vpack.c.b16 %v5767, %v5763
        %v6192 = vpack.c.b16 %v5768, %v5764
        %v6193 = vpack.c.b16 %v5769, %v5765
        %v6194 = vpack.c.b16 %v5770, %v5766
        %v6195 = vpack.c.b16 %v5775, %v5771
        %v6196 = vpack.c.b16 %v5776, %v5772
        %v6197 = vpack.c.b16 %v5777, %v5773
        %v6198 = vpack.c.b16 %v5778, %v5774
        %v6199 = vpack.c.b16 %v5783, %v5779
        %v6200 = vpack.c.b16 %v5784, %v5780
        %v6201 = vpack.c.b16 %v5785, %v5781
        %v6202 = vpack.c.b16 %v5786, %v5782
        %v6203 = vpack.c.b16 %v5791, %v5787
        %v6204 = vpack.c.b16 %v5792, %v5788
        %v6205 = vpack.c.b16 %v5793, %v5789
        %v6206 = vpack.c.b16 %v5794, %v5790
        %v6207 = vpack.c.b16 %v5799, %v5795
        %v6208 = vpack.c.b16 %v5800, %v5796
        %v6209 = vpack.c.b16 %v5801, %v5797
        %v6210 = vpack.c.b16 %v5802, %v5798
        %v6211 = vpack.c.b16 %v5807, %v5803
        %v6212 = vpack.c.b16 %v5808, %v5804
        %v6213 = vpack.c.b16 %v5809, %v5805
        %v6214 = vpack.c.b16 %v5810, %v5806
        %v6215 = vpack.c.b16 %v5815, %v5811
        %v6216 = vpack.c.b16 %v5816, %v5812
        %v6217 = vpack.c.b16 %v5817, %v5813
        %v6218 = vpack.c.b16 %v5818, %v5814
        %v6219 = vpack.c.b16 %v5823, %v5819
        %v6220 = vpack.c.b16 %v5824, %v5820
        %v6221 = vpack.c.b16 %v5825, %v5821
        %v6222 = vpack.c.b16 %v5826, %v5822
        %v6223 = vpack.c.b16 %v5831, %v5827
        %v6224 = vpack.c.b16 %v5832, %v5828
        %v6225 = vpack.c.b16 %v5833, %v5829
        %v6226 = vpack.c.b16 %v5834, %v5830
        %v6227 = vpack.c.b16 %v5839, %v5835
        %v6228 = vpack.c.b16 %v5840, %v5836
        %v6229 = vpack.c.b16 %v5841, %v5837
        %v6230 = vpack.c.b16 %v5842, %v5838
        %v6231 = vpack.c.b16 %v5847, %v5843
        %v6232 = vpack.c.b16 %v5848, %v5844
        %v6233 = vpack.c.b16 %v5849, %v5845
        %v6234 = vpack.c.b16 %v5850, %v5846
        %v6235 = vpack.c.b16 %v5855, %v5851
        %v6236 = vpack.c.b16 %v5856, %v5852
        %v6237 = vpack.c.b16 %v5857, %v5853
        %v6238 = vpack.c.b16 %v5858, %v5854
        %v6239 = vpack.c.b16 %v5863, %v5859
        %v6240 = vpack.c.b16 %v5864, %v5860
        %v6241 = vpack.c.b16 %v5865, %v5861
        %v6242 = vpack.c.b16 %v5866, %v5862
        %v6243 = vpack.c.b16 %v5871, %v5867
        %v6244 = vpack.c.b16 %v5872, %v5868
        %v6245 = vpack.c.b16 %v5873, %v5869
        %v6246 = vpack.c.b16 %v5874, %v5870
        %v6247 = vpack.c.b16 %v5879, %v5875
        %v6248 = vpack.c.b16 %v5880, %v5876
        %v6249 = vpack.c.b16 %v5881, %v5877
        %v6250 = vpack.c.b16 %v5882, %v5878
        %v6251 = vpack.c.b16 %v5887, %v5883
        %v6252 = vpack.c.b16 %v5888, %v5884
        %v6253 = vpack.c.b16 %v5889, %v5885
        %v6254 = vpack.c.b16 %v5890, %v5886
        %v6255 = vpack.c.b16 %v5895, %v5891
        %v6256 = vpack.c.b16 %v5896, %v5892
        %v6257 = vpack.c.b16 %v5897, %v5893
        %v6258 = vpack.c.b16 %v5898, %v5894
        %v6259 = vpack.c.b16 %v5903, %v5899
        %v6260 = vpack.c.b16 %v5904, %v5900
        %v6261 = vpack.c.b16 %v5905, %v5901
        %v6262 = vpack.c.b16 %v5906, %v5902
        %v6263 = vpack.c.b16 %v5911, %v5907
        %v6264 = vpack.c.b16 %v5912, %v5908
        %v6265 = vpack.c.b16 %v5913, %v5909
        %v6266 = vpack.c.b16 %v5914, %v5910
        %v6267 = vpack.c.b16 %v5919, %v5915
        %v6268 = vpack.c.b16 %v5920, %v5916
        %v6269 = vpack.c.b16 %v5921, %v5917
        %v6270 = vpack.c.b16 %v5922, %v5918
        %v6271 = vpack.c.b16 %v5927, %v5923
        %v6272 = vpack.c.b16 %v5928, %v5924
        %v6273 = vpack.c.b16 %v5929, %v5925
        %v6274 = vpack.c.b16 %v5930, %v5926
        %v6275 = vpack.c.b16 %v5935, %v5931
        %v6276 = vpack.c.b16 %v5936, %v5932
        %v6277 = vpack.c.b16 %v5937, %v5933
        %v6278 = vpack.c.b16 %v5938, %v5934
        %v6279 = vpack.c.b16 %v5943, %v5939
        %v6280 = vpack.c.b16 %v5944, %v5940
        %v6281 = vpack.c.b16 %v5945, %v5941
        %v6282 = vpack.c.b16 %v5946, %v5942
        %v6283 = vpack.c.b16 %v5951, %v5947
        %v6284 = vpack.c.b16 %v5952, %v5948
        %v6285 = vpack.c.b16 %v5953, %v5949
        %v6286 = vpack.c.b16 %v5954, %v5950
        %v6287 = vpack.c.b16 %v5959, %v5955
        %v6288 = vpack.c.b16 %v5960, %v5956
        %v6289 = vpack.c.b16 %v5961, %v5957
        %v6290 = vpack.c.b16 %v5962, %v5958
        %v6291 = vpack.c.b16 %v5967, %v5963
        %v6292 = vpack.c.b16 %v5968, %v5964
        %v6293 = vpack.c.b16 %v5969, %v5965
        %v6294 = vpack.c.b16 %v5970, %v5966
        %v6295 = vpack.c.b16 %v5975, %v5971
        %v6296 = vpack.c.b16 %v5976, %v5972
        %v6297 = vpack.c.b16 %v5977, %v5973
        %v6298 = vpack.c.b16 %v5978, %v5974
        %v6299 = vpack.c.b16 %v5983, %v5979
        %v6300 = vpack.c.b16 %v5984, %v5980
        %v6301 = vpack.c.b16 %v5985, %v5981
        %v6302 = vpack.c.b16 %v5986, %v5982
        %v6303 = vpack.c.b16 %v5991, %v5987
        %v6304 = vpack.c.b16 %v5992, %v5988
        %v6305 = vpack.c.b16 %v5993, %v5989
        %v6306 = vpack.c.b16 %v5994, %v5990
        %v6307 = vpack.c.b16 %v5999, %v5995
        %v6308 = vpack.c.b16 %v6000, %v5996
        %v6309 = vpack.c.b16 %v6001, %v5997
        %v6310 = vpack.c.b16 %v6002, %v5998
        %v6311 = vpack.c.b16 %v6007, %v6003
        %v6312 = vpack.c.b16 %v6008, %v6004
        %v6313 = vpack.c.b16 %v6009, %v6005
        %v6314 = vpack.c.b16 %v6010, %v6006
        %v6315 = vpack.c.b16 %v6015, %v6011
        %v6316 = vpack.c.b16 %v6016, %v6012
        %v6317 = vpack.c.b16 %v6017, %v6013
        %v6318 = vpack.c.b16 %v6018, %v6014
        %v6319 = vpack.c.b16 %v6023, %v6019
        %v6320 = vpack.c.b16 %v6024, %v6020
        %v6321 = vpack.c.b16 %v6025, %v6021
        %v6322 = vpack.c.b16 %v6026, %v6022
        %v6323 = vpack.c.b16 %v6031, %v6027
        %v6324 = vpack.c.b16 %v6032, %v6028
        %v6325 = vpack.c.b16 %v6033, %v6029
        %v6326 = vpack.c.b16 %v6034, %v6030
        %v6327 = vpack.c.b16 %v6039, %v6035
        %v6328 = vpack.c.b16 %v6040, %v6036
        %v6329 = vpack.c.b16 %v6041, %v6037
        %v6330 = vpack.c.b16 %v6042, %v6038
        %v6331 = vpack.c.b16 %v6047, %v6043
        %v6332 = vpack.c.b16 %v6048, %v6044
        %v6333 = vpack.c.b16 %v6049, %v6045
        %v6334 = vpack.c.b16 %v6050, %v6046
        %v6335 = vpack.c.b16 %v6055, %v6051
        %v6336 = vpack.c.b16 %v6056, %v6052
        %v6337 = vpack.c.b16 %v6057, %v6053
        %v6338 = vpack.c.b16 %v6058, %v6054
        %v6339 = vpack.c.b16 %v6063, %v6059
        %v6340 = vpack.c.b16 %v6064, %v6060
        %v6341 = vpack.c.b16 %v6065, %v6061
        %v6342 = vpack.c.b16 %v6066, %v6062
        %v6343 = vpack.c.b16 %v6071, %v6067
        %v6344 = vpack.c.b16 %v6072, %v6068
        %v6345 = vpack.c.b16 %v6073, %v6069
        %v6346 = vpack.c.b16 %v6074, %v6070
        %v6347 = vpack.c.b16 %v6079, %v6075
        %v6348 = vpack.c.b16 %v6080, %v6076
        %v6349 = vpack.c.b16 %v6081, %v6077
        %v6350 = vpack.c.b16 %v6082, %v6078
        %v6351 = vpack.c.b16 %v6087, %v6083
        %v6352 = vpack.c.b16 %v6088, %v6084
        %v6353 = vpack.c.b16 %v6089, %v6085
        %v6354 = vpack.c.b16 %v6090, %v6086
        %v6355 = vpack.c.b16 %v6095, %v6091
        %v6356 = vpack.c.b16 %v6096, %v6092
        %v6357 = vpack.c.b16 %v6097, %v6093
        %v6358 = vpack.c.b16 %v6098, %v6094
        %v6359 = vpack.c.b16 %v6103, %v6099
        %v6360 = vpack.c.b16 %v6104, %v6100
        %v6361 = vpack.c.b16 %v6105, %v6101
        %v6362 = vpack.c.b16 %v6106, %v6102
        %6619 = vmatprep.subr.bf16.mxu0 %v6108
        %6620 = vmatpush1.bf16.msra.mxu0 %v6107
        %6621 = vmatprep.subr.bf16.mxu0 %v6112
        %6622 = vmatpush1.bf16.msra.mxu0 %v6111
        %6623 = vmatprep.subr.bf16.mxu0 %v6116
        %6624 = vmatpush1.bf16.msra.mxu0 %v6115
        %6625 = vmatprep.subr.bf16.mxu0 %v6120
        %6626 = vmatpush1.bf16.msra.mxu0 %v6119
        %6627 = vmatprep.subr.bf16.mxu0 %v6124
        %6628 = vmatpush1.bf16.msra.mxu0 %v6123
        %6629 = vmatprep.subr.bf16.mxu0 %v6128
        %6630 = vmatpush1.bf16.msra.mxu0 %v6127
        %6631 = vmatprep.subr.bf16.mxu0 %v6132
        %6632 = vmatpush1.bf16.msra.mxu0 %v6131
        %6633 = vmatprep.subr.bf16.mxu0 %v6136
        %6634 = vmatpush1.bf16.msra.mxu0 %v6135
        %6635 = vmatprep.subr.bf16.mxu0 %v6140
        %6636 = vmatpush1.bf16.msra.mxu0 %v6139
        %6637 = vmatprep.subr.bf16.mxu0 %v6144
        %6638 = vmatpush1.bf16.msra.mxu0 %v6143
        %6639 = vmatprep.subr.bf16.mxu0 %v6148
        %6640 = vmatpush1.bf16.msra.mxu0 %v6147
        %6641 = vmatprep.subr.bf16.mxu0 %v6152
        %6642 = vmatpush1.bf16.msra.mxu0 %v6151
        %6643 = vmatprep.subr.bf16.mxu0 %v6156
        %6644 = vmatpush1.bf16.msra.mxu0 %v6155
        %6645 = vmatprep.subr.bf16.mxu0 %v6160
        %6646 = vmatpush1.bf16.msra.mxu0 %v6159
        %6647 = vmatprep.subr.bf16.mxu0 %v6164
        %6648 = vmatpush1.bf16.msra.mxu0 %v6163
        %6649 = vmatprep.subr.bf16.mxu0 %v6168
        %6650 = vmatpush1.bf16.msra.mxu0 %v6167
        %6651 = vmatprep.mubr.bf16.mxu0 %v4892
        %6652 = vmatmul.mubr.bf16.gmra.mrb[0].mxu0 %v4891
        %v6653 = vpop.f32.mrb[0].mxu0
        %v6654 = vadd.f32 %v5322, %v6653
        %v6655 = vpop.f32.mrb[0].mxu0
        %v6656 = vadd.f32 %v5326, %v6655
        %v6657 = vpop.f32.mrb[0].mxu0
        %v6658 = vadd.f32 %v5322, %v6657
        %v6659 = vpop.f32.mrb[0].mxu0
        %v6660 = vadd.f32 %v5326, %v6659
        %6661 = vdwg.mxu0
        %6662 = vmatprep.subr.bf16.mxu0 %v6172
        %6663 = vmatpush1.bf16.msra.mxu0 %v6171
        %6664 = vmatprep.subr.bf16.mxu0 %v6176
        %6665 = vmatpush1.bf16.msra.mxu0 %v6175
        %6666 = vmatprep.subr.bf16.mxu0 %v6180
        %6667 = vmatpush1.bf16.msra.mxu0 %v6179
        %6668 = vmatprep.subr.bf16.mxu0 %v6184
        %6669 = vmatpush1.bf16.msra.mxu0 %v6183
        %6670 = vmatprep.subr.bf16.mxu0 %v6188
        %6671 = vmatpush1.bf16.msra.mxu0 %v6187
        %6672 = vmatprep.subr.bf16.mxu0 %v6192
        %6673 = vmatpush1.bf16.msra.mxu0 %v6191
        %6674 = vmatprep.subr.bf16.mxu0 %v6196
        %6675 = vmatpush1.bf16.msra.mxu0 %v6195
        %6676 = vmatprep.subr.bf16.mxu0 %v6200
        %6677 = vmatpush1.bf16.msra.mxu0 %v6199
        %6678 = vmatprep.subr.bf16.mxu0 %v6204
        %6679 = vmatpush1.bf16.msra.mxu0 %v6203
        %6680 = vmatprep.subr.bf16.mxu0 %v6208
        %6681 = vmatpush1.bf16.msra.mxu0 %v6207
        %6682 = vmatprep.subr.bf16.mxu0 %v6212
        %6683 = vmatpush1.bf16.msra.mxu0 %v6211
        %6684 = vmatprep.subr.bf16.mxu0 %v6216
        %6685 = vmatpush1.bf16.msra.mxu0 %v6215
        %6686 = vmatprep.subr.bf16.mxu0 %v6220
        %6687 = vmatpush1.bf16.msra.mxu0 %v6219
        %6688 = vmatprep.subr.bf16.mxu0 %v6224
        %6689 = vmatpush1.bf16.msra.mxu0 %v6223
        %6690 = vmatprep.subr.bf16.mxu0 %v6228
        %6691 = vmatpush1.bf16.msra.mxu0 %v6227
        %6692 = vmatprep.subr.bf16.mxu0 %v6232
        %6693 = vmatpush1.bf16.msra.mxu0 %v6231
        %6694 = vmatprep.mubr.bf16.mxu0 %v4948
        %6695 = vmatmul.mubr.bf16.gmra.mrb[0].mxu0 %v4947
        %v6696 = vpop.f32.mrb[0].mxu0
        %v6697 = vadd.f32 %v6654, %v6696
        %v6698 = vpop.f32.mrb[0].mxu0
        %v6699 = vadd.f32 %v6656, %v6698
        %v6700 = vpop.f32.mrb[0].mxu0
        %v6701 = vadd.f32 %v6658, %v6700
        %v6702 = vpop.f32.mrb[0].mxu0
        %v6703 = vadd.f32 %v6660, %v6702
        %6704 = vdwg.mxu0
        %6705 = vmatprep.subr.bf16.mxu0 %v6236
        %6706 = vmatpush1.bf16.msra.mxu0 %v6235
        %6707 = vmatprep.subr.bf16.mxu0 %v6240
        %6708 = vmatpush1.bf16.msra.mxu0 %v6239
        %6709 = vmatprep.subr.bf16.mxu0 %v6244
        %6710 = vmatpush1.bf16.msra.mxu0 %v6243
        %6711 = vmatprep.subr.bf16.mxu0 %v6248
        %6712 = vmatpush1.bf16.msra.mxu0 %v6247
        %6713 = vmatprep.subr.bf16.mxu0 %v6252
        %6714 = vmatpush1.bf16.msra.mxu0 %v6251
        %6715 = vmatprep.subr.bf16.mxu0 %v6256
        %6716 = vmatpush1.bf16.msra.mxu0 %v6255
        %6717 = vmatprep.subr.bf16.mxu0 %v6260
        %6718 = vmatpush1.bf16.msra.mxu0 %v6259
        %6719 = vmatprep.subr.bf16.mxu0 %v6264
        %6720 = vmatpush1.bf16.msra.mxu0 %v6263
        %6721 = vmatprep.subr.bf16.mxu0 %v6268
        %6722 = vmatpush1.bf16.msra.mxu0 %v6267
        %6723 = vmatprep.subr.bf16.mxu0 %v6272
        %6724 = vmatpush1.bf16.msra.mxu0 %v6271
        %6725 = vmatprep.subr.bf16.mxu0 %v6276
        %6726 = vmatpush1.bf16.msra.mxu0 %v6275
        %6727 = vmatprep.subr.bf16.mxu0 %v6280
        %6728 = vmatpush1.bf16.msra.mxu0 %v6279
        %6729 = vmatprep.subr.bf16.mxu0 %v6284
        %6730 = vmatpush1.bf16.msra.mxu0 %v6283
        %6731 = vmatprep.subr.bf16.mxu0 %v6288
        %6732 = vmatpush1.bf16.msra.mxu0 %v6287
        %6733 = vmatprep.subr.bf16.mxu0 %v6292
        %6734 = vmatpush1.bf16.msra.mxu0 %v6291
        %6735 = vmatprep.subr.bf16.mxu0 %v6296
        %6736 = vmatpush1.bf16.msra.mxu0 %v6295
        %6737 = vmatprep.mubr.bf16.mxu0 %v5004
        %6738 = vmatmul.mubr.bf16.gmra.mrb[0].mxu0 %v5003
        %v6739 = vpop.f32.mrb[0].mxu0
        %v6740 = vadd.f32 %v6697, %v6739
        %v6741 = vpop.f32.mrb[0].mxu0
        %v6742 = vadd.f32 %v6699, %v6741
        %v6743 = vpop.f32.mrb[0].mxu0
        %v6744 = vadd.f32 %v6701, %v6743
        %v6745 = vpop.f32.mrb[0].mxu0
        %v6746 = vadd.f32 %v6703, %v6745
        %6747 = vdwg.mxu0
        %6748 = vmatprep.subr.bf16.mxu0 %v6300
        %6749 = vmatpush1.bf16.msra.mxu0 %v6299
        %6750 = vmatprep.subr.bf16.mxu0 %v6304
        %6751 = vmatpush1.bf16.msra.mxu0 %v6303
        %6752 = vmatprep.subr.bf16.mxu0 %v6308
        %6753 = vmatpush1.bf16.msra.mxu0 %v6307
        %6754 = vmatprep.subr.bf16.mxu0 %v6312
        %6755 = vmatpush1.bf16.msra.mxu0 %v6311
        %6756 = vmatprep.subr.bf16.mxu0 %v6316
        %6757 = vmatpush1.bf16.msra.mxu0 %v6315
        %6758 = vmatprep.subr.bf16.mxu0 %v6320
        %6759 = vmatpush1.bf16.msra.mxu0 %v6319
        %6760 = vmatprep.subr.bf16.mxu0 %v6324
        %6761 = vmatpush1.bf16.msra.mxu0 %v6323
        %6762 = vmatprep.subr.bf16.mxu0 %v6328
        %6763 = vmatpush1.bf16.msra.mxu0 %v6327
        %6764 = vmatprep.subr.bf16.mxu0 %v6332
        %6765 = vmatpush1.bf16.msra.mxu0 %v6331
        %6766 = vmatprep.subr.bf16.mxu0 %v6336
        %6767 = vmatpush1.bf16.msra.mxu0 %v6335
        %6768 = vmatprep.subr.bf16.mxu0 %v6340
        %6769 = vmatpush1.bf16.msra.mxu0 %v6339
        %6770 = vmatprep.subr.bf16.mxu0 %v6344
        %6771 = vmatpush1.bf16.msra.mxu0 %v6343
        %6772 = vmatprep.subr.bf16.mxu0 %v6348
        %6773 = vmatpush1.bf16.msra.mxu0 %v6347
        %6774 = vmatprep.subr.bf16.mxu0 %v6352
        %6775 = vmatpush1.bf16.msra.mxu0 %v6351
        %6776 = vmatprep.subr.bf16.mxu0 %v6356
        %6777 = vmatpush1.bf16.msra.mxu0 %v6355
        %6778 = vmatprep.subr.bf16.mxu0 %v6360
        %6779 = vmatpush1.bf16.msra.mxu0 %v6359
        %6780 = vmatprep.mubr.bf16.mxu0 %v5060
        %6781 = vmatmul.mubr.bf16.gmra.mrb[0].mxu0 %v5059
        %v6782 = vpop.f32.mrb[0].mxu0
        %v6783 = vadd.f32 %v6740, %v6782
        %v6784 = vpop.f32.mrb[0].mxu0
        %v6785 = vadd.f32 %v6742, %v6784
        %v6786 = vpop.f32.mrb[0].mxu0
        %v6787 = vadd.f32 %v6744, %v6786
        %v6788 = vpop.f32.mrb[0].mxu0
        %v6789 = vadd.f32 %v6746, %v6788
        %6790 = vdwg.mxu0
        %6791 = vmatprep.subr.bf16.mxu0 %v6110
        %6792 = vmatpush1.bf16.msra.mxu0 %v6109
        %6793 = vmatprep.subr.bf16.mxu0 %v6114
        %6794 = vmatpush1.bf16.msra.mxu0 %v6113
        %6795 = vmatprep.subr.bf16.mxu0 %v6118
        %6796 = vmatpush1.bf16.msra.mxu0 %v6117
        %6797 = vmatprep.subr.bf16.mxu0 %v6122
        %6798 = vmatpush1.bf16.msra.mxu0 %v6121
        %6799 = vmatprep.subr.bf16.mxu0 %v6126
        %6800 = vmatpush1.bf16.msra.mxu0 %v6125
        %6801 = vmatprep.subr.bf16.mxu0 %v6130
        %6802 = vmatpush1.bf16.msra.mxu0 %v6129
        %6803 = vmatprep.subr.bf16.mxu0 %v6134
        %6804 = vmatpush1.bf16.msra.mxu0 %v6133
        %6805 = vmatprep.subr.bf16.mxu0 %v6138
        %6806 = vmatpush1.bf16.msra.mxu0 %v6137
        %6807 = vmatprep.subr.bf16.mxu0 %v6142
        %6808 = vmatpush1.bf16.msra.mxu0 %v6141
        %6809 = vmatprep.subr.bf16.mxu0 %v6146
        %6810 = vmatpush1.bf16.msra.mxu0 %v6145
        %6811 = vmatprep.subr.bf16.mxu0 %v6150
        %6812 = vmatpush1.bf16.msra.mxu0 %v6149
        %6813 = vmatprep.subr.bf16.mxu0 %v6154
        %6814 = vmatpush1.bf16.msra.mxu0 %v6153
        %6815 = vmatprep.subr.bf16.mxu0 %v6158
        %6816 = vmatpush1.bf16.msra.mxu0 %v6157
        %6817 = vmatprep.subr.bf16.mxu0 %v6162
        %6818 = vmatpush1.bf16.msra.mxu0 %v6161
        %6819 = vmatprep.subr.bf16.mxu0 %v6166
        %6820 = vmatpush1.bf16.msra.mxu0 %v6165
        %6821 = vmatprep.subr.bf16.mxu0 %v6170
        %6822 = vmatpush1.bf16.msra.mxu0 %v6169
        %6823 = vmatprep.mubr.bf16.mxu0 %v4892
        %6824 = vmatmul.mubr.bf16.gmra.mrb[0].mxu0 %v4891
        %v6825 = vpop.f32.mrb[0].mxu0
        %v6826 = vadd.f32 %v5330, %v6825
        %v6827 = vpop.f32.mrb[0].mxu0
        %v6828 = vadd.f32 %v5334, %v6827
        %v6829 = vpop.f32.mrb[0].mxu0
        %v6830 = vadd.f32 %v5330, %v6829
        %v6831 = vpop.f32.mrb[0].mxu0
        %v6832 = vadd.f32 %v5334, %v6831
        %6833 = vdwg.mxu0
        %6834 = vmatprep.subr.bf16.mxu0 %v6174
        %6835 = vmatpush1.bf16.msra.mxu0 %v6173
        %6836 = vmatprep.subr.bf16.mxu0 %v6178
        %6837 = vmatpush1.bf16.msra.mxu0 %v6177
        %6838 = vmatprep.subr.bf16.mxu0 %v6182
        %6839 = vmatpush1.bf16.msra.mxu0 %v6181
        %6840 = vmatprep.subr.bf16.mxu0 %v6186
        %6841 = vmatpush1.bf16.msra.mxu0 %v6185
        %6842 = vmatprep.subr.bf16.mxu0 %v6190
        %6843 = vmatpush1.bf16.msra.mxu0 %v6189
        %6844 = vmatprep.subr.bf16.mxu0 %v6194
        %6845 = vmatpush1.bf16.msra.mxu0 %v6193
        %6846 = vmatprep.subr.bf16.mxu0 %v6198
        %6847 = vmatpush1.bf16.msra.mxu0 %v6197
        %6848 = vmatprep.subr.bf16.mxu0 %v6202
        %6849 = vmatpush1.bf16.msra.mxu0 %v6201
        %6850 = vmatprep.subr.bf16.mxu0 %v6206
        %6851 = vmatpush1.bf16.msra.mxu0 %v6205
        %6852 = vmatprep.subr.bf16.mxu0 %v6210
        %6853 = vmatpush1.bf16.msra.mxu0 %v6209
        %6854 = vmatprep.subr.bf16.mxu0 %v6214
        %6855 = vmatpush1.bf16.msra.mxu0 %v6213
        %6856 = vmatprep.subr.bf16.mxu0 %v6218
        %6857 = vmatpush1.bf16.msra.mxu0 %v6217
        %6858 = vmatprep.subr.bf16.mxu0 %v6222
        %6859 = vmatpush1.bf16.msra.mxu0 %v6221
        %6860 = vmatprep.subr.bf16.mxu0 %v6226
        %6861 = vmatpush1.bf16.msra.mxu0 %v6225
        %6862 = vmatprep.subr.bf16.mxu0 %v6230
        %6863 = vmatpush1.bf16.msra.mxu0 %v6229
        %6864 = vmatprep.subr.bf16.mxu0 %v6234
        %6865 = vmatpush1.bf16.msra.mxu0 %v6233
        %6866 = vmatprep.mubr.bf16.mxu0 %v4948
        %6867 = vmatmul.mubr.bf16.gmra.mrb[0].mxu0 %v4947
        %v6868 = vpop.f32.mrb[0].mxu0
        %v6869 = vadd.f32 %v6826, %v6868
        %v6870 = vpop.f32.mrb[0].mxu0
        %v6871 = vadd.f32 %v6828, %v6870
        %v6872 = vpop.f32.mrb[0].mxu0
        %v6873 = vadd.f32 %v6830, %v6872
        %v6874 = vpop.f32.mrb[0].mxu0
        %v6875 = vadd.f32 %v6832, %v6874
        %6876 = vdwg.mxu0
        %6877 = vmatprep.subr.bf16.mxu0 %v6238
        %6878 = vmatpush1.bf16.msra.mxu0 %v6237
        %6879 = vmatprep.subr.bf16.mxu0 %v6242
        %6880 = vmatpush1.bf16.msra.mxu0 %v6241
        %6881 = vmatprep.subr.bf16.mxu0 %v6246
        %6882 = vmatpush1.bf16.msra.mxu0 %v6245
        %6883 = vmatprep.subr.bf16.mxu0 %v6250
        %6884 = vmatpush1.bf16.msra.mxu0 %v6249
        %6885 = vmatprep.subr.bf16.mxu0 %v6254
        %6886 = vmatpush1.bf16.msra.mxu0 %v6253
        %6887 = vmatprep.subr.bf16.mxu0 %v6258
        %6888 = vmatpush1.bf16.msra.mxu0 %v6257
        %6889 = vmatprep.subr.bf16.mxu0 %v6262
        %6890 = vmatpush1.bf16.msra.mxu0 %v6261
        %6891 = vmatprep.subr.bf16.mxu0 %v6266
        %6892 = vmatpush1.bf16.msra.mxu0 %v6265
        %6893 = vmatprep.subr.bf16.mxu0 %v6270
        %6894 = vmatpush1.bf16.msra.mxu0 %v6269
        %6895 = vmatprep.subr.bf16.mxu0 %v6274
        %6896 = vmatpush1.bf16.msra.mxu0 %v6273
        %6897 = vmatprep.subr.bf16.mxu0 %v6278
        %6898 = vmatpush1.bf16.msra.mxu0 %v6277
        %6899 = vmatprep.subr.bf16.mxu0 %v6282
        %6900 = vmatpush1.bf16.msra.mxu0 %v6281
        %6901 = vmatprep.subr.bf16.mxu0 %v6286
        %6902 = vmatpush1.bf16.msra.mxu0 %v6285
        %6903 = vmatprep.subr.bf16.mxu0 %v6290
        %6904 = vmatpush1.bf16.msra.mxu0 %v6289
        %6905 = vmatprep.subr.bf16.mxu0 %v6294
        %6906 = vmatpush1.bf16.msra.mxu0 %v6293
        %6907 = vmatprep.subr.bf16.mxu0 %v6298
        %6908 = vmatpush1.bf16.msra.mxu0 %v6297
        %6909 = vmatprep.mubr.bf16.mxu0 %v5004
        %6910 = vmatmul.mubr.bf16.gmra.mrb[0].mxu0 %v5003
        %v6911 = vpop.f32.mrb[0].mxu0
        %v6912 = vadd.f32 %v6869, %v6911
        %v6913 = vpop.f32.mrb[0].mxu0
        %v6914 = vadd.f32 %v6871, %v6913
        %v6915 = vpop.f32.mrb[0].mxu0
        %v6916 = vadd.f32 %v6873, %v6915
        %v6917 = vpop.f32.mrb[0].mxu0
        %v6918 = vadd.f32 %v6875, %v6917
        %6919 = vdwg.mxu0
        %6920 = vmatprep.subr.bf16.mxu0 %v6302
        %6921 = vmatpush1.bf16.msra.mxu0 %v6301
        %6922 = vmatprep.subr.bf16.mxu0 %v6306
        %6923 = vmatpush1.bf16.msra.mxu0 %v6305
        %6924 = vmatprep.subr.bf16.mxu0 %v6310
        %6925 = vmatpush1.bf16.msra.mxu0 %v6309
        %6926 = vmatprep.subr.bf16.mxu0 %v6314
        %6927 = vmatpush1.bf16.msra.mxu0 %v6313
        %6928 = vmatprep.subr.bf16.mxu0 %v6318
        %6929 = vmatpush1.bf16.msra.mxu0 %v6317
        %6930 = vmatprep.subr.bf16.mxu0 %v6322
        %6931 = vmatpush1.bf16.msra.mxu0 %v6321
        %6932 = vmatprep.subr.bf16.mxu0 %v6326
        %6933 = vmatpush1.bf16.msra.mxu0 %v6325
        %6934 = vmatprep.subr.bf16.mxu0 %v6330
        %6935 = vmatpush1.bf16.msra.mxu0 %v6329
        %6936 = vmatprep.subr.bf16.mxu0 %v6334
        %6937 = vmatpush1.bf16.msra.mxu0 %v6333
        %6938 = vmatprep.subr.bf16.mxu0 %v6338
        %6939 = vmatpush1.bf16.msra.mxu0 %v6337
        %6940 = vmatprep.subr.bf16.mxu0 %v6342
        %6941 = vmatpush1.bf16.msra.mxu0 %v6341
        %6942 = vmatprep.subr.bf16.mxu0 %v6346
        %6943 = vmatpush1.bf16.msra.mxu0 %v6345
        %6944 = vmatprep.subr.bf16.mxu0 %v6350
        %6945 = vmatpush1.bf16.msra.mxu0 %v6349
        %6946 = vmatprep.subr.bf16.mxu0 %v6354
        %6947 = vmatpush1.bf16.msra.mxu0 %v6353
        %6948 = vmatprep.subr.bf16.mxu0 %v6358
        %6949 = vmatpush1.bf16.msra.mxu0 %v6357
        %6950 = vmatprep.subr.bf16.mxu0 %v6362
        %6951 = vmatpush1.bf16.msra.mxu0 %v6361
        %6952 = vmatprep.mubr.bf16.mxu0 %v5060
        %6953 = vmatmul.mubr.bf16.gmra.mrb[0].mxu0 %v5059
        %v6954 = vpop.f32.mrb[0].mxu0
        %v6955 = vadd.f32 %v6912, %v6954
        %v6956 = vpop.f32.mrb[0].mxu0
        %v6957 = vadd.f32 %v6914, %v6956
        %v6958 = vpop.f32.mrb[0].mxu0
        %v6959 = vadd.f32 %v6916, %v6958
        %v6960 = vpop.f32.mrb[0].mxu0
        %v6961 = vadd.f32 %v6918, %v6960
        %6962 = vdwg.mxu0
        %vm6963 = vcmp.gt.f32.partialorder %v6783, 0.0
        %vm6964 = vcmp.gt.f32.partialorder %v6785, 0.0
        %vm6965 = vcmp.gt.f32.partialorder %v6955, 0.0
        %vm6966 = vcmp.gt.f32.partialorder %v6957, 0.0
        %vm6967 = vcmp.gt.f32.partialorder %v6787, 0.0
        %vm6968 = vcmp.gt.f32.partialorder %v6789, 0.0
        %vm6969 = vcmp.gt.f32.partialorder %v6959, 0.0
        %vm6970 = vcmp.gt.f32.partialorder %v6961, 0.0
        %v6971 = vmul.f32 %v6783, 0.2
        %v6972 = vmul.f32 %v6785, 0.2
        %v6973 = vmul.f32 %v6955, 0.2
        %v6974 = vmul.f32 %v6957, 0.2
        %v6975 = vmul.f32 %v6787, 0.2
        %v6976 = vmul.f32 %v6789, 0.2
        %v6977 = vmul.f32 %v6959, 0.2
        %v6978 = vmul.f32 %v6961, 0.2
        %v6979 = vsel %vm6963, %v6783, %v6971
        %v6980 = vsel %vm6964, %v6785, %v6972
        %v6981 = vsel %vm6965, %v6955, %v6973
        %v6982 = vsel %vm6966, %v6957, %v6974
        %v6983 = vsel %vm6967, %v6787, %v6975
        %v6984 = vsel %vm6968, %v6789, %v6976
        %v6985 = vsel %vm6969, %v6959, %v6977
        %v6986 = vsel %vm6970, %v6961, %v6978
        %v6987 = vpack.c.bf16 %v6983, %v6979
        %v6988 = vpack.c.bf16 %v6984, %v6980
        %v6989 = vpack.c.bf16 %v6985, %v6981
        %v6990 = vpack.c.bf16 %v6986, %v6982
        %v6991 = vld [vmem:[#allocation9] sm:$0xf]
        %v6993 = vsel %vm4844, %v6991, 0
        %6995 = vmatprep.subr.bf16.mxu0 %v6988
        %6996 = vmatpush1.bf16.msra.mxu0 %v6987
        %6997 = vmatprep.subr.bf16.mxu0 0
        %6998 = vmatpush1.bf16.msra.mxu0 0
        %6999 = vmatprep.subr.bf16.mxu0 0
        %7000 = vmatpush1.bf16.msra.mxu0 0
        %7001 = vmatprep.subr.bf16.mxu0 0
        %7002 = vmatpush1.bf16.msra.mxu0 0
        %7003 = vmatprep.subr.bf16.mxu0 0
        %7004 = vmatpush1.bf16.msra.mxu0 0
        %7005 = vmatprep.subr.bf16.mxu0 0
        %7006 = vmatpush1.bf16.msra.mxu0 0
        %7007 = vmatprep.subr.bf16.mxu0 0
        %7008 = vmatpush1.bf16.msra.mxu0 0
        %7009 = vmatprep.subr.bf16.mxu0 0
        %7010 = vmatpush1.bf16.msra.mxu0 0
        %7011 = vmatprep.subr.bf16.mxu0 0
        %7012 = vmatpush1.bf16.msra.mxu0 0
        %7013 = vmatprep.subr.bf16.mxu0 0
        %7014 = vmatpush1.bf16.msra.mxu0 0
        %7015 = vmatprep.subr.bf16.mxu0 0
        %7016 = vmatpush1.bf16.msra.mxu0 0
        %7017 = vmatprep.subr.bf16.mxu0 0
        %7018 = vmatpush1.bf16.msra.mxu0 0
        %7019 = vmatprep.subr.bf16.mxu0 0
        %7020 = vmatpush1.bf16.msra.mxu0 0
        %7021 = vmatprep.subr.bf16.mxu0 0
        %7022 = vmatpush1.bf16.msra.mxu0 0
        %7023 = vmatprep.subr.bf16.mxu0 0
        %7024 = vmatpush1.bf16.msra.mxu0 0
        %7025 = vmatprep.subr.bf16.mxu0 0
        %7026 = vmatpush1.bf16.msra.mxu0 0
        %7027 = vmatprep.mubr.bf16.mxu0 0
        %7028 = vmatmul.mubr.bf16.gmra.mrb[0].mxu0 %v6993
        %v7029 = vpop.f32.mrb[0].mxu0
        %v7030 = vadd.f32 0.0, %v7029
        %v7031 = vpop.f32.mrb[0].mxu0
        %v7032 = vadd.f32 0.0, %v7031
        %v7033 = vpop.f32.mrb[0].mxu0
        %v7034 = vpop.f32.mrb[0].mxu0
        %7035 = vdwg.mxu0
        %7036 = vmatprep.subr.bf16.mxu0 %v6990
        %7037 = vmatpush1.bf16.msra.mxu0 %v6989
        %7038 = vmatprep.subr.bf16.mxu0 0
        %7039 = vmatpush1.bf16.msra.mxu0 0
        %7040 = vmatprep.subr.bf16.mxu0 0
        %7041 = vmatpush1.bf16.msra.mxu0 0
        %7042 = vmatprep.subr.bf16.mxu0 0
        %7043 = vmatpush1.bf16.msra.mxu0 0
        %7044 = vmatprep.subr.bf16.mxu0 0
        %7045 = vmatpush1.bf16.msra.mxu0 0
        %7046 = vmatprep.subr.bf16.mxu0 0
        %7047 = vmatpush1.bf16.msra.mxu0 0
        %7048 = vmatprep.subr.bf16.mxu0 0
        %7049 = vmatpush1.bf16.msra.mxu0 0
        %7050 = vmatprep.subr.bf16.mxu0 0
        %7051 = vmatpush1.bf16.msra.mxu0 0
        %7052 = vmatprep.subr.bf16.mxu0 0
        %7053 = vmatpush1.bf16.msra.mxu0 0
        %7054 = vmatprep.subr.bf16.mxu0 0
        %7055 = vmatpush1.bf16.msra.mxu0 0
        %7056 = vmatprep.subr.bf16.mxu0 0
        %7057 = vmatpush1.bf16.msra.mxu0 0
        %7058 = vmatprep.subr.bf16.mxu0 0
        %7059 = vmatpush1.bf16.msra.mxu0 0
        %7060 = vmatprep.subr.bf16.mxu0 0
        %7061 = vmatpush1.bf16.msra.mxu0 0
        %7062 = vmatprep.subr.bf16.mxu0 0
        %7063 = vmatpush1.bf16.msra.mxu0 0
        %7064 = vmatprep.subr.bf16.mxu0 0
        %7065 = vmatpush1.bf16.msra.mxu0 0
        %7066 = vmatprep.subr.bf16.mxu0 0
        %7067 = vmatpush1.bf16.msra.mxu0 0
        %7068 = vmatprep.mubr.bf16.mxu0 0
        %7069 = vmatmul.mubr.bf16.gmra.mrb[0].mxu0 %v6993
        %v7070 = vpop.f32.mrb[0].mxu0
        %v7071 = vadd.f32 0.0, %v7070
        %v7072 = vpop.f32.mrb[0].mxu0
        %v7073 = vadd.f32 0.0, %v7072
        %v7074 = vpop.f32.mrb[0].mxu0
        %v7075 = vpop.f32.mrb[0].mxu0
        %7076 = vdwg.mxu0
        %v7077 = vpack.c.bf16 %v7030, %v7030
        %v7078 = vpack.c.bf16 %v7032, %v7032
        %v7079 = vpack.c.bf16 %v7071, %v7071
        %v7080 = vpack.c.bf16 %v7073, %v7073
        %s7081 = scalar_lea.vmem [#allocation9], 4
        %v7082 = vld [vmem:[%s7081] sm:$0xf]
        %v7084 = vsel %vm4844, %v7082, 0
        %7086 = vmatprep.subr.bf16.mxu0 %v6988
        %7087 = vmatpush1.bf16.msra.mxu0 %v6987
        %7088 = vmatprep.subr.bf16.mxu0 0
        %7089 = vmatpush1.bf16.msra.mxu0 0
        %7090 = vmatprep.subr.bf16.mxu0 0
        %7091 = vmatpush1.bf16.msra.mxu0 0
        %7092 = vmatprep.subr.bf16.mxu0 0
        %7093 = vmatpush1.bf16.msra.mxu0 0
        %7094 = vmatprep.subr.bf16.mxu0 0
        %7095 = vmatpush1.bf16.msra.mxu0 0
        %7096 = vmatprep.subr.bf16.mxu0 0
        %7097 = vmatpush1.bf16.msra.mxu0 0
        %7098 = vmatprep.subr.bf16.mxu0 0
        %7099 = vmatpush1.bf16.msra.mxu0 0
        %7100 = vmatprep.subr.bf16.mxu0 0
        %7101 = vmatpush1.bf16.msra.mxu0 0
        %7102 = vmatprep.subr.bf16.mxu0 0
        %7103 = vmatpush1.bf16.msra.mxu0 0
        %7104 = vmatprep.subr.bf16.mxu0 0
        %7105 = vmatpush1.bf16.msra.mxu0 0
        %7106 = vmatprep.subr.bf16.mxu0 0
        %7107 = vmatpush1.bf16.msra.mxu0 0
        %7108 = vmatprep.subr.bf16.mxu0 0
        %7109 = vmatpush1.bf16.msra.mxu0 0
        %7110 = vmatprep.subr.bf16.mxu0 0
        %7111 = vmatpush1.bf16.msra.mxu0 0
        %7112 = vmatprep.subr.bf16.mxu0 0
        %7113 = vmatpush1.bf16.msra.mxu0 0
        %7114 = vmatprep.subr.bf16.mxu0 0
        %7115 = vmatpush1.bf16.msra.mxu0 0
        %7116 = vmatprep.subr.bf16.mxu0 0
        %7117 = vmatpush1.bf16.msra.mxu0 0
        %7118 = vmatprep.mubr.bf16.mxu0 0
        %7119 = vmatmul.mubr.bf16.gmra.mrb[0].mxu0 %v7084
        %v7120 = vpop.f32.mrb[0].mxu0
        %v7121 = vadd.f32 0.0, %v7120
        %v7122 = vpop.f32.mrb[0].mxu0
        %v7123 = vadd.f32 0.0, %v7122
        %v7124 = vpop.f32.mrb[0].mxu0
        %v7125 = vpop.f32.mrb[0].mxu0
        %7126 = vdwg.mxu0
        %7127 = vmatprep.subr.bf16.mxu0 %v6990
        %7128 = vmatpush1.bf16.msra.mxu0 %v6989
        %7129 = vmatprep.subr.bf16.mxu0 0
        %7130 = vmatpush1.bf16.msra.mxu0 0
        %7131 = vmatprep.subr.bf16.mxu0 0
        %7132 = vmatpush1.bf16.msra.mxu0 0
        %7133 = vmatprep.subr.bf16.mxu0 0
        %7134 = vmatpush1.bf16.msra.mxu0 0
        %7135 = vmatprep.subr.bf16.mxu0 0
        %7136 = vmatpush1.bf16.msra.mxu0 0
        %7137 = vmatprep.subr.bf16.mxu0 0
        %7138 = vmatpush1.bf16.msra.mxu0 0
        %7139 = vmatprep.subr.bf16.mxu0 0
        %7140 = vmatpush1.bf16.msra.mxu0 0
        %7141 = vmatprep.subr.bf16.mxu0 0
        %7142 = vmatpush1.bf16.msra.mxu0 0
        %7143 = vmatprep.subr.bf16.mxu0 0
        %7144 = vmatpush1.bf16.msra.mxu0 0
        %7145 = vmatprep.subr.bf16.mxu0 0
        %7146 = vmatpush1.bf16.msra.mxu0 0
        %7147 = vmatprep.subr.bf16.mxu0 0
        %7148 = vmatpush1.bf16.msra.mxu0 0
        %7149 = vmatprep.subr.bf16.mxu0 0
        %7150 = vmatpush1.bf16.msra.mxu0 0
        %7151 = vmatprep.subr.bf16.mxu0 0
        %7152 = vmatpush1.bf16.msra.mxu0 0
        %7153 = vmatprep.subr.bf16.mxu0 0
        %7154 = vmatpush1.bf16.msra.mxu0 0
        %7155 = vmatprep.subr.bf16.mxu0 0
        %7156 = vmatpush1.bf16.msra.mxu0 0
        %7157 = vmatprep.subr.bf16.mxu0 0
        %7158 = vmatpush1.bf16.msra.mxu0 0
        %7159 = vmatprep.mubr.bf16.mxu0 0
        %7160 = vmatmul.mubr.bf16.gmra.mrb[0].mxu0 %v7084
        %v7161 = vpop.f32.mrb[0].mxu0
        %v7162 = vadd.f32 0.0, %v7161
        %v7163 = vpop.f32.mrb[0].mxu0
        %v7164 = vadd.f32 0.0, %v7163
        %v7165 = vpop.f32.mrb[0].mxu0
        %v7166 = vpop.f32.mrb[0].mxu0
        %7167 = vdwg.mxu0
        %v7168 = vpack.c.bf16 %v7121, %v7121
        %v7169 = vpack.c.bf16 %v7123, %v7123
        %v7170 = vpack.c.bf16 %v7162, %v7162
        %v7171 = vpack.c.bf16 %v7164, %v7164
        %s7172 = scalar_lea.vmem [#allocation9], 8
        %v7173 = vld [vmem:[%s7172] sm:$0xf]
        %v7175 = vsel %vm4844, %v7173, 0
        %7177 = vmatprep.subr.bf16.mxu0 %v6988
        %7178 = vmatpush1.bf16.msra.mxu0 %v6987
        %7179 = vmatprep.subr.bf16.mxu0 0
        %7180 = vmatpush1.bf16.msra.mxu0 0
        %7181 = vmatprep.subr.bf16.mxu0 0
        %7182 = vmatpush1.bf16.msra.mxu0 0
        %7183 = vmatprep.subr.bf16.mxu0 0
        %7184 = vmatpush1.bf16.msra.mxu0 0
        %7185 = vmatprep.subr.bf16.mxu0 0
        %7186 = vmatpush1.bf16.msra.mxu0 0
        %7187 = vmatprep.subr.bf16.mxu0 0
        %7188 = vmatpush1.bf16.msra.mxu0 0
        %7189 = vmatprep.subr.bf16.mxu0 0
        %7190 = vmatpush1.bf16.msra.mxu0 0
        %7191 = vmatprep.subr.bf16.mxu0 0
        %7192 = vmatpush1.bf16.msra.mxu0 0
        %7193 = vmatprep.subr.bf16.mxu0 0
        %7194 = vmatpush1.bf16.msra.mxu0 0
        %7195 = vmatprep.subr.bf16.mxu0 0
        %7196 = vmatpush1.bf16.msra.mxu0 0
        %7197 = vmatprep.subr.bf16.mxu0 0
        %7198 = vmatpush1.bf16.msra.mxu0 0
        %7199 = vmatprep.subr.bf16.mxu0 0
        %7200 = vmatpush1.bf16.msra.mxu0 0
        %7201 = vmatprep.subr.bf16.mxu0 0
        %7202 = vmatpush1.bf16.msra.mxu0 0
        %7203 = vmatprep.subr.bf16.mxu0 0
        %7204 = vmatpush1.bf16.msra.mxu0 0
        %7205 = vmatprep.subr.bf16.mxu0 0
        %7206 = vmatpush1.bf16.msra.mxu0 0
        %7207 = vmatprep.subr.bf16.mxu0 0
        %7208 = vmatpush1.bf16.msra.mxu0 0
        %7209 = vmatprep.mubr.bf16.mxu0 0
        %7210 = vmatmul.mubr.bf16.gmra.mrb[0].mxu0 %v7175
        %v7211 = vpop.f32.mrb[0].mxu0
        %v7212 = vadd.f32 0.0, %v7211
        %v7213 = vpop.f32.mrb[0].mxu0
        %v7214 = vadd.f32 0.0, %v7213
        %v7215 = vpop.f32.mrb[0].mxu0
        %v7216 = vpop.f32.mrb[0].mxu0
        %7217 = vdwg.mxu0
        %7218 = vmatprep.subr.bf16.mxu0 %v6990
        %7219 = vmatpush1.bf16.msra.mxu0 %v6989
        %7220 = vmatprep.subr.bf16.mxu0 0
        %7221 = vmatpush1.bf16.msra.mxu0 0
        %7222 = vmatprep.subr.bf16.mxu0 0
        %7223 = vmatpush1.bf16.msra.mxu0 0
        %7224 = vmatprep.subr.bf16.mxu0 0
        %7225 = vmatpush1.bf16.msra.mxu0 0
        %7226 = vmatprep.subr.bf16.mxu0 0
        %7227 = vmatpush1.bf16.msra.mxu0 0
        %7228 = vmatprep.subr.bf16.mxu0 0
        %7229 = vmatpush1.bf16.msra.mxu0 0
        %7230 = vmatprep.subr.bf16.mxu0 0
        %7231 = vmatpush1.bf16.msra.mxu0 0
        %7232 = vmatprep.subr.bf16.mxu0 0
        %7233 = vmatpush1.bf16.msra.mxu0 0
        %7234 = vmatprep.subr.bf16.mxu0 0
        %7235 = vmatpush1.bf16.msra.mxu0 0
        %7236 = vmatprep.subr.bf16.mxu0 0
        %7237 = vmatpush1.bf16.msra.mxu0 0
        %7238 = vmatprep.subr.bf16.mxu0 0
        %7239 = vmatpush1.bf16.msra.mxu0 0
        %7240 = vmatprep.subr.bf16.mxu0 0
        %7241 = vmatpush1.bf16.msra.mxu0 0
        %7242 = vmatprep.subr.bf16.mxu0 0
        %7243 = vmatpush1.bf16.msra.mxu0 0
        %7244 = vmatprep.subr.bf16.mxu0 0
        %7245 = vmatpush1.bf16.msra.mxu0 0
        %7246 = vmatprep.subr.bf16.mxu0 0
        %7247 = vmatpush1.bf16.msra.mxu0 0
        %7248 = vmatprep.subr.bf16.mxu0 0
        %7249 = vmatpush1.bf16.msra.mxu0 0
        %7250 = vmatprep.mubr.bf16.mxu0 0
        %7251 = vmatmul.mubr.bf16.gmra.mrb[0].mxu0 %v7175
        %v7252 = vpop.f32.mrb[0].mxu0
        %v7253 = vadd.f32 0.0, %v7252
        %v7254 = vpop.f32.mrb[0].mxu0
        %v7255 = vadd.f32 0.0, %v7254
        %v7256 = vpop.f32.mrb[0].mxu0
        %v7257 = vpop.f32.mrb[0].mxu0
        %7258 = vdwg.mxu0
        %v7259 = vpack.c.bf16 %v7212, %v7212
        %v7260 = vpack.c.bf16 %v7214, %v7214
        %v7261 = vpack.c.bf16 %v7253, %v7253
        %v7262 = vpack.c.bf16 %v7255, %v7255
        %s7263 = scalar_lea.vmem [#allocation9], 12
        %v7264 = vld [vmem:[%s7263] sm:$0xf]
        %v7266 = vsel %vm4844, %v7264, 0
        %7268 = vmatprep.subr.bf16.mxu0 %v6988
        %7269 = vmatpush1.bf16.msra.mxu0 %v6987
        %7270 = vmatprep.subr.bf16.mxu0 0
        %7271 = vmatpush1.bf16.msra.mxu0 0
        %7272 = vmatprep.subr.bf16.mxu0 0
        %7273 = vmatpush1.bf16.msra.mxu0 0
        %7274 = vmatprep.subr.bf16.mxu0 0
        %7275 = vmatpush1.bf16.msra.mxu0 0
        %7276 = vmatprep.subr.bf16.mxu0 0
        %7277 = vmatpush1.bf16.msra.mxu0 0
        %7278 = vmatprep.subr.bf16.mxu0 0
        %7279 = vmatpush1.bf16.msra.mxu0 0
        %7280 = vmatprep.subr.bf16.mxu0 0
        %7281 = vmatpush1.bf16.msra.mxu0 0
        %7282 = vmatprep.subr.bf16.mxu0 0
        %7283 = vmatpush1.bf16.msra.mxu0 0
        %7284 = vmatprep.subr.bf16.mxu0 0
        %7285 = vmatpush1.bf16.msra.mxu0 0
        %7286 = vmatprep.subr.bf16.mxu0 0
        %7287 = vmatpush1.bf16.msra.mxu0 0
        %7288 = vmatprep.subr.bf16.mxu0 0
        %7289 = vmatpush1.bf16.msra.mxu0 0
        %7290 = vmatprep.subr.bf16.mxu0 0
        %7291 = vmatpush1.bf16.msra.mxu0 0
        %7292 = vmatprep.subr.bf16.mxu0 0
        %7293 = vmatpush1.bf16.msra.mxu0 0
        %7294 = vmatprep.subr.bf16.mxu0 0
        %7295 = vmatpush1.bf16.msra.mxu0 0
        %7296 = vmatprep.subr.bf16.mxu0 0
        %7297 = vmatpush1.bf16.msra.mxu0 0
        %7298 = vmatprep.subr.bf16.mxu0 0
        %7299 = vmatpush1.bf16.msra.mxu0 0
        %7300 = vmatprep.mubr.bf16.mxu0 0
        %7301 = vmatmul.mubr.bf16.gmra.mrb[0].mxu0 %v7266
        %v7302 = vpop.f32.mrb[0].mxu0
        %v7303 = vadd.f32 0.0, %v7302
        %v7304 = vpop.f32.mrb[0].mxu0
        %v7305 = vadd.f32 0.0, %v7304
        %v7306 = vpop.f32.mrb[0].mxu0
        %v7307 = vpop.f32.mrb[0].mxu0
        %7308 = vdwg.mxu0
        %7309 = vmatprep.subr.bf16.mxu0 %v6990
        %7310 = vmatpush1.bf16.msra.mxu0 %v6989
        %7311 = vmatprep.subr.bf16.mxu0 0
        %7312 = vmatpush1.bf16.msra.mxu0 0
        %7313 = vmatprep.subr.bf16.mxu0 0
        %7314 = vmatpush1.bf16.msra.mxu0 0
        %7315 = vmatprep.subr.bf16.mxu0 0
        %7316 = vmatpush1.bf16.msra.mxu0 0
        %7317 = vmatprep.subr.bf16.mxu0 0
        %7318 = vmatpush1.bf16.msra.mxu0 0
        %7319 = vmatprep.subr.bf16.mxu0 0
        %7320 = vmatpush1.bf16.msra.mxu0 0
        %7321 = vmatprep.subr.bf16.mxu0 0
        %7322 = vmatpush1.bf16.msra.mxu0 0
        %7323 = vmatprep.subr.bf16.mxu0 0
        %7324 = vmatpush1.bf16.msra.mxu0 0
        %7325 = vmatprep.subr.bf16.mxu0 0
        %7326 = vmatpush1.bf16.msra.mxu0 0
        %7327 = vmatprep.subr.bf16.mxu0 0
        %7328 = vmatpush1.bf16.msra.mxu0 0
        %7329 = vmatprep.subr.bf16.mxu0 0
        %7330 = vmatpush1.bf16.msra.mxu0 0
        %7331 = vmatprep.subr.bf16.mxu0 0
        %7332 = vmatpush1.bf16.msra.mxu0 0
        %7333 = vmatprep.subr.bf16.mxu0 0
        %7334 = vmatpush1.bf16.msra.mxu0 0
        %7335 = vmatprep.subr.bf16.mxu0 0
        %7336 = vmatpush1.bf16.msra.mxu0 0
        %7337 = vmatprep.subr.bf16.mxu0 0
        %7338 = vmatpush1.bf16.msra.mxu0 0
        %7339 = vmatprep.subr.bf16.mxu0 0
        %7340 = vmatpush1.bf16.msra.mxu0 0
        %7341 = vmatprep.mubr.bf16.mxu0 0
        %7342 = vmatmul.mubr.bf16.gmra.mrb[0].mxu0 %v7266
        %v7343 = vpop.f32.mrb[0].mxu0
        %v7344 = vadd.f32 0.0, %v7343
        %v7345 = vpop.f32.mrb[0].mxu0
        %v7346 = vadd.f32 0.0, %v7345
        %v7347 = vpop.f32.mrb[0].mxu0
        %v7348 = vpop.f32.mrb[0].mxu0
        %7349 = vdwg.mxu0
        %v7350 = vpack.c.bf16 %v7303, %v7303
        %v7351 = vpack.c.bf16 %v7305, %v7305
        %v7352 = vpack.c.bf16 %v7344, %v7344
        %v7353 = vpack.c.bf16 %v7346, %v7346
        %v7354 = vld [vmem:[#allocation12] sm:$0xf]
        %v7355 = vld [vmem:[#allocation12 + $0x4] sm:$0xf]
        %v7356 = vld [vmem:[#allocation12 + $0x8] sm:$0xf]
        %v7357 = vld [vmem:[#allocation12 + $0xc] sm:$0xf]
        %v7358 = vld [vmem:[#allocation12 + $0x10] sm:$0xf]
        %v7359 = vld [vmem:[#allocation12 + $0x14] sm:$0xf]
        %v7360 = vld [vmem:[#allocation12 + $0x18] sm:$0xf]
        %v7361 = vld [vmem:[#allocation12 + $0x1c] sm:$0xf]
        %v7362 = vld [vmem:[#allocation12 + $0x20] sm:$0xf]
        %v7363 = vld [vmem:[#allocation12 + $0x24] sm:$0xf]
        %v7364 = vld [vmem:[#allocation12 + $0x28] sm:$0xf]
        %v7365 = vld [vmem:[#allocation12 + $0x2c] sm:$0xf]
        %v7366 = vld [vmem:[#allocation12 + $0x30] sm:$0xf]
        %v7367 = vld [vmem:[#allocation12 + $0x34] sm:$0xf]
        %v7368 = vld [vmem:[#allocation12 + $0x38] sm:$0xf]
        %v7369 = vld [vmem:[#allocation12 + $0x3c] sm:$0xf]
        %v7370 = vld [vmem:[#allocation12 + $0x40] sm:$0xf]
        %v7371 = vld [vmem:[#allocation12 + $0x44] sm:$0xf]
        %v7372 = vld [vmem:[#allocation12 + $0x48] sm:$0xf]
        %v7373 = vld [vmem:[#allocation12 + $0x4c] sm:$0xf]
        %v7374 = vld [vmem:[#allocation12 + $0x50] sm:$0xf]
        %v7375 = vld [vmem:[#allocation12 + $0x54] sm:$0xf]
        %v7376 = vld [vmem:[#allocation12 + $0x58] sm:$0xf]
        %v7377 = vld [vmem:[#allocation12 + $0x5c] sm:$0xf]
        %v7378 = vld [vmem:[#allocation12 + $0x60] sm:$0xf]
        %v7379 = vld [vmem:[#allocation12 + $0x64] sm:$0xf]
        %v7380 = vld [vmem:[#allocation12 + $0x68] sm:$0xf]
        %v7381 = vld [vmem:[#allocation12 + $0x6c] sm:$0xf]
        %v7382 = vld [vmem:[#allocation12 + $0x70] sm:$0xf]
        %v7383 = vld [vmem:[#allocation12 + $0x74] sm:$0xf]
        %v7384 = vld [vmem:[#allocation12 + $0x78] sm:$0xf]
        %v7385 = vld [vmem:[#allocation12 + $0x7c] sm:$0xf]
        %v7386 = vld [vmem:[#allocation12 + $0x80] sm:$0xf]
        %v7387 = vld [vmem:[#allocation12 + $0x84] sm:$0xf]
        %v7388 = vld [vmem:[#allocation12 + $0x88] sm:$0xf]
        %v7389 = vld [vmem:[#allocation12 + $0x8c] sm:$0xf]
        %v7390 = vld [vmem:[#allocation12 + $0x90] sm:$0xf]
        %v7391 = vld [vmem:[#allocation12 + $0x94] sm:$0xf]
        %v7392 = vld [vmem:[#allocation12 + $0x98] sm:$0xf]
        %v7393 = vld [vmem:[#allocation12 + $0x9c] sm:$0xf]
        %v7394 = vld [vmem:[#allocation12 + $0xa0] sm:$0xf]
        %v7395 = vld [vmem:[#allocation12 + $0xa4] sm:$0xf]
        %v7396 = vld [vmem:[#allocation12 + $0xa8] sm:$0xf]
        %v7397 = vld [vmem:[#allocation12 + $0xac] sm:$0xf]
        %v7398 = vld [vmem:[#allocation12 + $0xb0] sm:$0xf]
        %v7399 = vld [vmem:[#allocation12 + $0xb4] sm:$0xf]
        %v7400 = vld [vmem:[#allocation12 + $0xb8] sm:$0xf]
        %v7401 = vld [vmem:[#allocation12 + $0xbc] sm:$0xf]
        %v7402 = vld [vmem:[#allocation12 + $0xc0] sm:$0xf]
        %v7403 = vld [vmem:[#allocation12 + $0xc4] sm:$0xf]
        %v7404 = vld [vmem:[#allocation12 + $0xc8] sm:$0xf]
        %v7405 = vld [vmem:[#allocation12 + $0xcc] sm:$0xf]
        %v7406 = vld [vmem:[#allocation12 + $0xd0] sm:$0xf]
        %v7407 = vld [vmem:[#allocation12 + $0xd4] sm:$0xf]
        %v7408 = vld [vmem:[#allocation12 + $0xd8] sm:$0xf]
        %v7409 = vld [vmem:[#allocation12 + $0xdc] sm:$0xf]
        %v7410 = vld [vmem:[#allocation12 + $0xe0] sm:$0xf]
        %v7411 = vld [vmem:[#allocation12 + $0xe4] sm:$0xf]
        %v7412 = vld [vmem:[#allocation12 + $0xe8] sm:$0xf]
        %v7413 = vld [vmem:[#allocation12 + $0xec] sm:$0xf]
        %v7414 = vld [vmem:[#allocation12 + $0xf0] sm:$0xf]
        %v7415 = vld [vmem:[#allocation12 + $0xf4] sm:$0xf]
        %v7416 = vld [vmem:[#allocation12 + $0xf8] sm:$0xf]
        %v7417 = vld [vmem:[#allocation12 + $0xfc] sm:$0xf]
        %v7418 = vld [vmem:[#allocation12 + $0x100] sm:$0xf]
        %v7419 = vld [vmem:[#allocation12 + $0x104] sm:$0xf]
        %v7420 = vld [vmem:[#allocation12 + $0x108] sm:$0xf]
        %v7421 = vld [vmem:[#allocation12 + $0x10c] sm:$0xf]
        %v7422 = vld [vmem:[#allocation12 + $0x110] sm:$0xf]
        %v7423 = vld [vmem:[#allocation12 + $0x114] sm:$0xf]
        %v7424 = vld [vmem:[#allocation12 + $0x118] sm:$0xf]
        %v7425 = vld [vmem:[#allocation12 + $0x11c] sm:$0xf]
        %v7426 = vld [vmem:[#allocation12 + $0x120] sm:$0xf]
        %v7427 = vld [vmem:[#allocation12 + $0x124] sm:$0xf]
        %v7428 = vld [vmem:[#allocation12 + $0x128] sm:$0xf]
        %v7429 = vld [vmem:[#allocation12 + $0x12c] sm:$0xf]
        %v7430 = vld [vmem:[#allocation12 + $0x130] sm:$0xf]
        %v7431 = vld [vmem:[#allocation12 + $0x134] sm:$0xf]
        %v7432 = vld [vmem:[#allocation12 + $0x138] sm:$0xf]
        %v7433 = vld [vmem:[#allocation12 + $0x13c] sm:$0xf]
        %v7434 = vld [vmem:[#allocation12 + $0x140] sm:$0xf]
        %v7435 = vld [vmem:[#allocation12 + $0x144] sm:$0xf]
        %v7436 = vld [vmem:[#allocation12 + $0x148] sm:$0xf]
        %v7437 = vld [vmem:[#allocation12 + $0x14c] sm:$0xf]
        %v7438 = vld [vmem:[#allocation12 + $0x150] sm:$0xf]
        %v7439 = vld [vmem:[#allocation12 + $0x154] sm:$0xf]
        %v7440 = vld [vmem:[#allocation12 + $0x158] sm:$0xf]
        %v7441 = vld [vmem:[#allocation12 + $0x15c] sm:$0xf]
        %v7442 = vld [vmem:[#allocation12 + $0x160] sm:$0xf]
        %v7443 = vld [vmem:[#allocation12 + $0x164] sm:$0xf]
        %v7444 = vld [vmem:[#allocation12 + $0x168] sm:$0xf]
        %v7445 = vld [vmem:[#allocation12 + $0x16c] sm:$0xf]
        %v7446 = vld [vmem:[#allocation12 + $0x170] sm:$0xf]
        %v7447 = vld [vmem:[#allocation12 + $0x174] sm:$0xf]
        %v7448 = vld [vmem:[#allocation12 + $0x178] sm:$0xf]
        %v7449 = vld [vmem:[#allocation12 + $0x17c] sm:$0xf]
        %v7450 = vld [vmem:[#allocation12 + $0x180] sm:$0xf]
        %v7451 = vld [vmem:[#allocation12 + $0x184] sm:$0xf]
        %v7452 = vld [vmem:[#allocation12 + $0x188] sm:$0xf]
        %v7453 = vld [vmem:[#allocation12 + $0x18c] sm:$0xf]
        %v7454 = vld [vmem:[#allocation12 + $0x190] sm:$0xf]
        %v7455 = vld [vmem:[#allocation12 + $0x194] sm:$0xf]
        %v7456 = vld [vmem:[#allocation12 + $0x198] sm:$0xf]
        %v7457 = vld [vmem:[#allocation12 + $0x19c] sm:$0xf]
        %v7458 = vld [vmem:[#allocation12 + $0x1a0] sm:$0xf]
        %v7459 = vld [vmem:[#allocation12 + $0x1a4] sm:$0xf]
        %v7460 = vld [vmem:[#allocation12 + $0x1a8] sm:$0xf]
        %v7461 = vld [vmem:[#allocation12 + $0x1ac] sm:$0xf]
        %v7462 = vld [vmem:[#allocation12 + $0x1b0] sm:$0xf]
        %v7463 = vld [vmem:[#allocation12 + $0x1b4] sm:$0xf]
        %v7464 = vld [vmem:[#allocation12 + $0x1b8] sm:$0xf]
        %v7465 = vld [vmem:[#allocation12 + $0x1bc] sm:$0xf]
        %v7466 = vld [vmem:[#allocation12 + $0x1c0] sm:$0xf]
        %v7467 = vld [vmem:[#allocation12 + $0x1c4] sm:$0xf]
        %v7468 = vld [vmem:[#allocation12 + $0x1c8] sm:$0xf]
        %v7469 = vld [vmem:[#allocation12 + $0x1cc] sm:$0xf]
        %v7470 = vld [vmem:[#allocation12 + $0x1d0] sm:$0xf]
        %v7471 = vld [vmem:[#allocation12 + $0x1d4] sm:$0xf]
        %v7472 = vld [vmem:[#allocation12 + $0x1d8] sm:$0xf]
        %v7473 = vld [vmem:[#allocation12 + $0x1dc] sm:$0xf]
        %v7474 = vld [vmem:[#allocation12 + $0x1e0] sm:$0xf]
        %v7475 = vld [vmem:[#allocation12 + $0x1e4] sm:$0xf]
        %v7476 = vld [vmem:[#allocation12 + $0x1e8] sm:$0xf]
        %v7477 = vld [vmem:[#allocation12 + $0x1ec] sm:$0xf]
        %v7478 = vld [vmem:[#allocation12 + $0x1f0] sm:$0xf]
        %v7479 = vld [vmem:[#allocation12 + $0x1f4] sm:$0xf]
        %v7480 = vld [vmem:[#allocation12 + $0x1f8] sm:$0xf]
        %v7481 = vld [vmem:[#allocation12 + $0x1fc] sm:$0xf]
        %v7482 = vld [vmem:[#allocation12 + $0x200] sm:$0xf]
        %v7483 = vld [vmem:[#allocation12 + $0x204] sm:$0xf]
        %v7484 = vld [vmem:[#allocation12 + $0x208] sm:$0xf]
        %v7485 = vld [vmem:[#allocation12 + $0x20c] sm:$0xf]
        %v7486 = vld [vmem:[#allocation12 + $0x210] sm:$0xf]
        %v7487 = vld [vmem:[#allocation12 + $0x214] sm:$0xf]
        %v7488 = vld [vmem:[#allocation12 + $0x218] sm:$0xf]
        %v7489 = vld [vmem:[#allocation12 + $0x21c] sm:$0xf]
        %v7490 = vld [vmem:[#allocation12 + $0x220] sm:$0xf]
        %v7491 = vld [vmem:[#allocation12 + $0x224] sm:$0xf]
        %v7492 = vld [vmem:[#allocation12 + $0x228] sm:$0xf]
        %v7493 = vld [vmem:[#allocation12 + $0x22c] sm:$0xf]
        %v7494 = vld [vmem:[#allocation12 + $0x230] sm:$0xf]
        %v7495 = vld [vmem:[#allocation12 + $0x234] sm:$0xf]
        %v7496 = vld [vmem:[#allocation12 + $0x238] sm:$0xf]
        %v7497 = vld [vmem:[#allocation12 + $0x23c] sm:$0xf]
        %v7498 = vld [vmem:[#allocation12 + $0x240] sm:$0xf]
        %v7499 = vld [vmem:[#allocation12 + $0x244] sm:$0xf]
        %v7500 = vld [vmem:[#allocation12 + $0x248] sm:$0xf]
        %v7501 = vld [vmem:[#allocation12 + $0x24c] sm:$0xf]
        %v7502 = vld [vmem:[#allocation12 + $0x250] sm:$0xf]
        %v7503 = vld [vmem:[#allocation12 + $0x254] sm:$0xf]
        %v7504 = vld [vmem:[#allocation12 + $0x258] sm:$0xf]
        %v7505 = vld [vmem:[#allocation12 + $0x25c] sm:$0xf]
        %v7506 = vld [vmem:[#allocation12 + $0x260] sm:$0xf]
        %v7507 = vld [vmem:[#allocation12 + $0x264] sm:$0xf]
        %v7508 = vld [vmem:[#allocation12 + $0x268] sm:$0xf]
        %v7509 = vld [vmem:[#allocation12 + $0x26c] sm:$0xf]
        %v7510 = vld [vmem:[#allocation12 + $0x270] sm:$0xf]
        %v7511 = vld [vmem:[#allocation12 + $0x274] sm:$0xf]
        %v7512 = vld [vmem:[#allocation12 + $0x278] sm:$0xf]
        %v7513 = vld [vmem:[#allocation12 + $0x27c] sm:$0xf]
        %v7514 = vld [vmem:[#allocation12 + $0x280] sm:$0xf]
        %v7515 = vld [vmem:[#allocation12 + $0x284] sm:$0xf]
        %v7516 = vld [vmem:[#allocation12 + $0x288] sm:$0xf]
        %v7517 = vld [vmem:[#allocation12 + $0x28c] sm:$0xf]
        %v7518 = vld [vmem:[#allocation12 + $0x290] sm:$0xf]
        %v7519 = vld [vmem:[#allocation12 + $0x294] sm:$0xf]
        %v7520 = vld [vmem:[#allocation12 + $0x298] sm:$0xf]
        %v7521 = vld [vmem:[#allocation12 + $0x29c] sm:$0xf]
        %v7522 = vld [vmem:[#allocation12 + $0x2a0] sm:$0xf]
        %v7523 = vld [vmem:[#allocation12 + $0x2a4] sm:$0xf]
        %v7524 = vld [vmem:[#allocation12 + $0x2a8] sm:$0xf]
        %v7525 = vld [vmem:[#allocation12 + $0x2ac] sm:$0xf]
        %v7526 = vld [vmem:[#allocation12 + $0x2b0] sm:$0xf]
        %v7527 = vld [vmem:[#allocation12 + $0x2b4] sm:$0xf]
        %v7528 = vld [vmem:[#allocation12 + $0x2b8] sm:$0xf]
        %v7529 = vld [vmem:[#allocation12 + $0x2bc] sm:$0xf]
        %v7530 = vld [vmem:[#allocation12 + $0x2c0] sm:$0xf]
        %v7531 = vld [vmem:[#allocation12 + $0x2c4] sm:$0xf]
        %v7532 = vld [vmem:[#allocation12 + $0x2c8] sm:$0xf]
        %v7533 = vld [vmem:[#allocation12 + $0x2cc] sm:$0xf]
        %v7534 = vld [vmem:[#allocation12 + $0x2d0] sm:$0xf]
        %v7535 = vld [vmem:[#allocation12 + $0x2d4] sm:$0xf]
        %v7536 = vld [vmem:[#allocation12 + $0x2d8] sm:$0xf]
        %v7537 = vld [vmem:[#allocation12 + $0x2dc] sm:$0xf]
        %v7538 = vld [vmem:[#allocation12 + $0x2e0] sm:$0xf]
        %v7539 = vld [vmem:[#allocation12 + $0x2e4] sm:$0xf]
        %v7540 = vld [vmem:[#allocation12 + $0x2e8] sm:$0xf]
        %v7541 = vld [vmem:[#allocation12 + $0x2ec] sm:$0xf]
        %v7542 = vld [vmem:[#allocation12 + $0x2f0] sm:$0xf]
        %v7543 = vld [vmem:[#allocation12 + $0x2f4] sm:$0xf]
        %v7544 = vld [vmem:[#allocation12 + $0x2f8] sm:$0xf]
        %v7545 = vld [vmem:[#allocation12 + $0x2fc] sm:$0xf]
        %v7546 = vld [vmem:[#allocation12 + $0x300] sm:$0xf]
        %v7547 = vld [vmem:[#allocation12 + $0x304] sm:$0xf]
        %v7548 = vld [vmem:[#allocation12 + $0x308] sm:$0xf]
        %v7549 = vld [vmem:[#allocation12 + $0x30c] sm:$0xf]
        %v7550 = vld [vmem:[#allocation12 + $0x310] sm:$0xf]
        %v7551 = vld [vmem:[#allocation12 + $0x314] sm:$0xf]
        %v7552 = vld [vmem:[#allocation12 + $0x318] sm:$0xf]
        %v7553 = vld [vmem:[#allocation12 + $0x31c] sm:$0xf]
        %v7554 = vld [vmem:[#allocation12 + $0x320] sm:$0xf]
        %v7555 = vld [vmem:[#allocation12 + $0x324] sm:$0xf]
        %v7556 = vld [vmem:[#allocation12 + $0x328] sm:$0xf]
        %v7557 = vld [vmem:[#allocation12 + $0x32c] sm:$0xf]
        %v7558 = vld [vmem:[#allocation12 + $0x330] sm:$0xf]
        %v7559 = vld [vmem:[#allocation12 + $0x334] sm:$0xf]
        %v7560 = vld [vmem:[#allocation12 + $0x338] sm:$0xf]
        %v7561 = vld [vmem:[#allocation12 + $0x33c] sm:$0xf]
        %v7562 = vld [vmem:[#allocation12 + $0x340] sm:$0xf]
        %v7563 = vld [vmem:[#allocation12 + $0x344] sm:$0xf]
        %v7564 = vld [vmem:[#allocation12 + $0x348] sm:$0xf]
        %v7565 = vld [vmem:[#allocation12 + $0x34c] sm:$0xf]
        %v7566 = vld [vmem:[#allocation12 + $0x350] sm:$0xf]
        %v7567 = vld [vmem:[#allocation12 + $0x354] sm:$0xf]
        %v7568 = vld [vmem:[#allocation12 + $0x358] sm:$0xf]
        %v7569 = vld [vmem:[#allocation12 + $0x35c] sm:$0xf]
        %v7570 = vld [vmem:[#allocation12 + $0x360] sm:$0xf]
        %v7571 = vld [vmem:[#allocation12 + $0x364] sm:$0xf]
        %v7572 = vld [vmem:[#allocation12 + $0x368] sm:$0xf]
        %v7573 = vld [vmem:[#allocation12 + $0x36c] sm:$0xf]
        %v7574 = vld [vmem:[#allocation12 + $0x370] sm:$0xf]
        %v7575 = vld [vmem:[#allocation12 + $0x374] sm:$0xf]
        %v7576 = vld [vmem:[#allocation12 + $0x378] sm:$0xf]
        %v7577 = vld [vmem:[#allocation12 + $0x37c] sm:$0xf]
        %v7578 = vld [vmem:[#allocation12 + $0x380] sm:$0xf]
        %v7579 = vld [vmem:[#allocation12 + $0x384] sm:$0xf]
        %v7580 = vld [vmem:[#allocation12 + $0x388] sm:$0xf]
        %v7581 = vld [vmem:[#allocation12 + $0x38c] sm:$0xf]
        %v7582 = vld [vmem:[#allocation12 + $0x390] sm:$0xf]
        %v7583 = vld [vmem:[#allocation12 + $0x394] sm:$0xf]
        %v7584 = vld [vmem:[#allocation12 + $0x398] sm:$0xf]
        %v7585 = vld [vmem:[#allocation12 + $0x39c] sm:$0xf]
        %v7586 = vld [vmem:[#allocation12 + $0x3a0] sm:$0xf]
        %v7587 = vld [vmem:[#allocation12 + $0x3a4] sm:$0xf]
        %v7588 = vld [vmem:[#allocation12 + $0x3a8] sm:$0xf]
        %v7589 = vld [vmem:[#allocation12 + $0x3ac] sm:$0xf]
        %v7590 = vld [vmem:[#allocation12 + $0x3b0] sm:$0xf]
        %v7591 = vld [vmem:[#allocation12 + $0x3b4] sm:$0xf]
        %v7592 = vld [vmem:[#allocation12 + $0x3b8] sm:$0xf]
        %v7593 = vld [vmem:[#allocation12 + $0x3bc] sm:$0xf]
        %v7594 = vld [vmem:[#allocation12 + $0x3c0] sm:$0xf]
        %v7595 = vld [vmem:[#allocation12 + $0x3c4] sm:$0xf]
        %v7596 = vld [vmem:[#allocation12 + $0x3c8] sm:$0xf]
        %v7597 = vld [vmem:[#allocation12 + $0x3cc] sm:$0xf]
        %v7598 = vld [vmem:[#allocation12 + $0x3d0] sm:$0xf]
        %v7599 = vld [vmem:[#allocation12 + $0x3d4] sm:$0xf]
        %v7600 = vld [vmem:[#allocation12 + $0x3d8] sm:$0xf]
        %v7601 = vld [vmem:[#allocation12 + $0x3dc] sm:$0xf]
        %v7602 = vld [vmem:[#allocation12 + $0x3e0] sm:$0xf]
        %v7603 = vld [vmem:[#allocation12 + $0x3e4] sm:$0xf]
        %v7604 = vld [vmem:[#allocation12 + $0x3e8] sm:$0xf]
        %v7605 = vld [vmem:[#allocation12 + $0x3ec] sm:$0xf]
        %v7606 = vld [vmem:[#allocation12 + $0x3f0] sm:$0xf]
        %v7607 = vld [vmem:[#allocation12 + $0x3f4] sm:$0xf]
        %v7608 = vld [vmem:[#allocation12 + $0x3f8] sm:$0xf]
        %v7609 = vld [vmem:[#allocation12 + $0x3fc] sm:$0xf]
        %v7610 = vld [vmem:[%s15] sm:$0x1]
        %v7612 = vlaneseq
        %v7613 = vshrl.u32 %v7612, 7
        %v7614 = vsub.s32 0, %v7613
        %v7615 = vrot.slane %v7610, %v7614
        %v7873 = vunpack.c.l.b16 %v7354
        %v7874 = vunpack.c.l.b16 %v7355
        %v7875 = vunpack.c.l.b16 %v7356
        %v7876 = vunpack.c.l.b16 %v7357
        %v7877 = vunpack.c.l.b16 %v7358
        %v7878 = vunpack.c.l.b16 %v7359
        %v7879 = vunpack.c.l.b16 %v7360
        %v7880 = vunpack.c.l.b16 %v7361
        %v7881 = vunpack.c.l.b16 %v7362
        %v7882 = vunpack.c.l.b16 %v7363
        %v7883 = vunpack.c.l.b16 %v7364
        %v7884 = vunpack.c.l.b16 %v7365
        %v7885 = vunpack.c.l.b16 %v7366
        %v7886 = vunpack.c.l.b16 %v7367
        %v7887 = vunpack.c.l.b16 %v7368
        %v7888 = vunpack.c.l.b16 %v7369
        %v7889 = vunpack.c.l.b16 %v7370
        %v7890 = vunpack.c.l.b16 %v7371
        %v7891 = vunpack.c.l.b16 %v7372
        %v7892 = vunpack.c.l.b16 %v7373
        %v7893 = vunpack.c.l.b16 %v7374
        %v7894 = vunpack.c.l.b16 %v7375
        %v7895 = vunpack.c.l.b16 %v7376
        %v7896 = vunpack.c.l.b16 %v7377
        %v7897 = vunpack.c.l.b16 %v7378
        %v7898 = vunpack.c.l.b16 %v7379
        %v7899 = vunpack.c.l.b16 %v7380
        %v7900 = vunpack.c.l.b16 %v7381
        %v7901 = vunpack.c.l.b16 %v7382
        %v7902 = vunpack.c.l.b16 %v7383
        %v7903 = vunpack.c.l.b16 %v7384
        %v7904 = vunpack.c.l.b16 %v7385
        %v7905 = vunpack.c.l.b16 %v7386
        %v7906 = vunpack.c.l.b16 %v7387
        %v7907 = vunpack.c.l.b16 %v7388
        %v7908 = vunpack.c.l.b16 %v7389
        %v7909 = vunpack.c.l.b16 %v7390
        %v7910 = vunpack.c.l.b16 %v7391
        %v7911 = vunpack.c.l.b16 %v7392
        %v7912 = vunpack.c.l.b16 %v7393
        %v7913 = vunpack.c.l.b16 %v7394
        %v7914 = vunpack.c.l.b16 %v7395
        %v7915 = vunpack.c.l.b16 %v7396
        %v7916 = vunpack.c.l.b16 %v7397
        %v7917 = vunpack.c.l.b16 %v7398
        %v7918 = vunpack.c.l.b16 %v7399
        %v7919 = vunpack.c.l.b16 %v7400
        %v7920 = vunpack.c.l.b16 %v7401
        %v7921 = vunpack.c.l.b16 %v7402
        %v7922 = vunpack.c.l.b16 %v7403
        %v7923 = vunpack.c.l.b16 %v7404
        %v7924 = vunpack.c.l.b16 %v7405
        %v7925 = vunpack.c.l.b16 %v7406
        %v7926 = vunpack.c.l.b16 %v7407
        %v7927 = vunpack.c.l.b16 %v7408
        %v7928 = vunpack.c.l.b16 %v7409
        %v7929 = vunpack.c.l.b16 %v7410
        %v7930 = vunpack.c.l.b16 %v7411
        %v7931 = vunpack.c.l.b16 %v7412
        %v7932 = vunpack.c.l.b16 %v7413
        %v7933 = vunpack.c.l.b16 %v7414
        %v7934 = vunpack.c.l.b16 %v7415
        %v7935 = vunpack.c.l.b16 %v7416
        %v7936 = vunpack.c.l.b16 %v7417
        %v7937 = vunpack.c.l.b16 %v7418
        %v7938 = vunpack.c.l.b16 %v7419
        %v7939 = vunpack.c.l.b16 %v7420
        %v7940 = vunpack.c.l.b16 %v7421
        %v7941 = vunpack.c.l.b16 %v7422
        %v7942 = vunpack.c.l.b16 %v7423
        %v7943 = vunpack.c.l.b16 %v7424
        %v7944 = vunpack.c.l.b16 %v7425
        %v7945 = vunpack.c.l.b16 %v7426
        %v7946 = vunpack.c.l.b16 %v7427
        %v7947 = vunpack.c.l.b16 %v7428
        %v7948 = vunpack.c.l.b16 %v7429
        %v7949 = vunpack.c.l.b16 %v7430
        %v7950 = vunpack.c.l.b16 %v7431
        %v7951 = vunpack.c.l.b16 %v7432
        %v7952 = vunpack.c.l.b16 %v7433
        %v7953 = vunpack.c.l.b16 %v7434
        %v7954 = vunpack.c.l.b16 %v7435
        %v7955 = vunpack.c.l.b16 %v7436
        %v7956 = vunpack.c.l.b16 %v7437
        %v7957 = vunpack.c.l.b16 %v7438
        %v7958 = vunpack.c.l.b16 %v7439
        %v7959 = vunpack.c.l.b16 %v7440
        %v7960 = vunpack.c.l.b16 %v7441
        %v7961 = vunpack.c.l.b16 %v7442
        %v7962 = vunpack.c.l.b16 %v7443
        %v7963 = vunpack.c.l.b16 %v7444
        %v7964 = vunpack.c.l.b16 %v7445
        %v7965 = vunpack.c.l.b16 %v7446
        %v7966 = vunpack.c.l.b16 %v7447
        %v7967 = vunpack.c.l.b16 %v7448
        %v7968 = vunpack.c.l.b16 %v7449
        %v7969 = vunpack.c.l.b16 %v7450
        %v7970 = vunpack.c.l.b16 %v7451
        %v7971 = vunpack.c.l.b16 %v7452
        %v7972 = vunpack.c.l.b16 %v7453
        %v7973 = vunpack.c.l.b16 %v7454
        %v7974 = vunpack.c.l.b16 %v7455
        %v7975 = vunpack.c.l.b16 %v7456
        %v7976 = vunpack.c.l.b16 %v7457
        %v7977 = vunpack.c.l.b16 %v7458
        %v7978 = vunpack.c.l.b16 %v7459
        %v7979 = vunpack.c.l.b16 %v7460
        %v7980 = vunpack.c.l.b16 %v7461
        %v7981 = vunpack.c.l.b16 %v7462
        %v7982 = vunpack.c.l.b16 %v7463
        %v7983 = vunpack.c.l.b16 %v7464
        %v7984 = vunpack.c.l.b16 %v7465
        %v7985 = vunpack.c.l.b16 %v7466
        %v7986 = vunpack.c.l.b16 %v7467
        %v7987 = vunpack.c.l.b16 %v7468
        %v7988 = vunpack.c.l.b16 %v7469
        %v7989 = vunpack.c.l.b16 %v7470
        %v7990 = vunpack.c.l.b16 %v7471
        %v7991 = vunpack.c.l.b16 %v7472
        %v7992 = vunpack.c.l.b16 %v7473
        %v7993 = vunpack.c.l.b16 %v7474
        %v7994 = vunpack.c.l.b16 %v7475
        %v7995 = vunpack.c.l.b16 %v7476
        %v7996 = vunpack.c.l.b16 %v7477
        %v7997 = vunpack.c.l.b16 %v7478
        %v7998 = vunpack.c.l.b16 %v7479
        %v7999 = vunpack.c.l.b16 %v7480
        %v8000 = vunpack.c.l.b16 %v7481
        %v8001 = vunpack.c.l.b16 %v7482
        %v8002 = vunpack.c.l.b16 %v7483
        %v8003 = vunpack.c.l.b16 %v7484
        %v8004 = vunpack.c.l.b16 %v7485
        %v8005 = vunpack.c.l.b16 %v7486
        %v8006 = vunpack.c.l.b16 %v7487
        %v8007 = vunpack.c.l.b16 %v7488
        %v8008 = vunpack.c.l.b16 %v7489
        %v8009 = vunpack.c.l.b16 %v7490
        %v8010 = vunpack.c.l.b16 %v7491
        %v8011 = vunpack.c.l.b16 %v7492
        %v8012 = vunpack.c.l.b16 %v7493
        %v8013 = vunpack.c.l.b16 %v7494
        %v8014 = vunpack.c.l.b16 %v7495
        %v8015 = vunpack.c.l.b16 %v7496
        %v8016 = vunpack.c.l.b16 %v7497
        %v8017 = vunpack.c.l.b16 %v7498
        %v8018 = vunpack.c.l.b16 %v7499
        %v8019 = vunpack.c.l.b16 %v7500
        %v8020 = vunpack.c.l.b16 %v7501
        %v8021 = vunpack.c.l.b16 %v7502
        %v8022 = vunpack.c.l.b16 %v7503
        %v8023 = vunpack.c.l.b16 %v7504
        %v8024 = vunpack.c.l.b16 %v7505
        %v8025 = vunpack.c.l.b16 %v7506
        %v8026 = vunpack.c.l.b16 %v7507
        %v8027 = vunpack.c.l.b16 %v7508
        %v8028 = vunpack.c.l.b16 %v7509
        %v8029 = vunpack.c.l.b16 %v7510
        %v8030 = vunpack.c.l.b16 %v7511
        %v8031 = vunpack.c.l.b16 %v7512
        %v8032 = vunpack.c.l.b16 %v7513
        %v8033 = vunpack.c.l.b16 %v7514
        %v8034 = vunpack.c.l.b16 %v7515
        %v8035 = vunpack.c.l.b16 %v7516
        %v8036 = vunpack.c.l.b16 %v7517
        %v8037 = vunpack.c.l.b16 %v7518
        %v8038 = vunpack.c.l.b16 %v7519
        %v8039 = vunpack.c.l.b16 %v7520
        %v8040 = vunpack.c.l.b16 %v7521
        %v8041 = vunpack.c.l.b16 %v7522
        %v8042 = vunpack.c.l.b16 %v7523
        %v8043 = vunpack.c.l.b16 %v7524
        %v8044 = vunpack.c.l.b16 %v7525
        %v8045 = vunpack.c.l.b16 %v7526
        %v8046 = vunpack.c.l.b16 %v7527
        %v8047 = vunpack.c.l.b16 %v7528
        %v8048 = vunpack.c.l.b16 %v7529
        %v8049 = vunpack.c.l.b16 %v7530
        %v8050 = vunpack.c.l.b16 %v7531
        %v8051 = vunpack.c.l.b16 %v7532
        %v8052 = vunpack.c.l.b16 %v7533
        %v8053 = vunpack.c.l.b16 %v7534
        %v8054 = vunpack.c.l.b16 %v7535
        %v8055 = vunpack.c.l.b16 %v7536
        %v8056 = vunpack.c.l.b16 %v7537
        %v8057 = vunpack.c.l.b16 %v7538
        %v8058 = vunpack.c.l.b16 %v7539
        %v8059 = vunpack.c.l.b16 %v7540
        %v8060 = vunpack.c.l.b16 %v7541
        %v8061 = vunpack.c.l.b16 %v7542
        %v8062 = vunpack.c.l.b16 %v7543
        %v8063 = vunpack.c.l.b16 %v7544
        %v8064 = vunpack.c.l.b16 %v7545
        %v8065 = vunpack.c.l.b16 %v7546
        %v8066 = vunpack.c.l.b16 %v7547
        %v8067 = vunpack.c.l.b16 %v7548
        %v8068 = vunpack.c.l.b16 %v7549
        %v8069 = vunpack.c.l.b16 %v7550
        %v8070 = vunpack.c.l.b16 %v7551
        %v8071 = vunpack.c.l.b16 %v7552
        %v8072 = vunpack.c.l.b16 %v7553
        %v8073 = vunpack.c.l.b16 %v7554
        %v8074 = vunpack.c.l.b16 %v7555
        %v8075 = vunpack.c.l.b16 %v7556
        %v8076 = vunpack.c.l.b16 %v7557
        %v8077 = vunpack.c.l.b16 %v7558
        %v8078 = vunpack.c.l.b16 %v7559
        %v8079 = vunpack.c.l.b16 %v7560
        %v8080 = vunpack.c.l.b16 %v7561
        %v8081 = vunpack.c.l.b16 %v7562
        %v8082 = vunpack.c.l.b16 %v7563
        %v8083 = vunpack.c.l.b16 %v7564
        %v8084 = vunpack.c.l.b16 %v7565
        %v8085 = vunpack.c.l.b16 %v7566
        %v8086 = vunpack.c.l.b16 %v7567
        %v8087 = vunpack.c.l.b16 %v7568
        %v8088 = vunpack.c.l.b16 %v7569
        %v8089 = vunpack.c.l.b16 %v7570
        %v8090 = vunpack.c.l.b16 %v7571
        %v8091 = vunpack.c.l.b16 %v7572
        %v8092 = vunpack.c.l.b16 %v7573
        %v8093 = vunpack.c.l.b16 %v7574
        %v8094 = vunpack.c.l.b16 %v7575
        %v8095 = vunpack.c.l.b16 %v7576
        %v8096 = vunpack.c.l.b16 %v7577
        %v8097 = vunpack.c.l.b16 %v7578
        %v8098 = vunpack.c.l.b16 %v7579
        %v8099 = vunpack.c.l.b16 %v7580
        %v8100 = vunpack.c.l.b16 %v7581
        %v8101 = vunpack.c.l.b16 %v7582
        %v8102 = vunpack.c.l.b16 %v7583
        %v8103 = vunpack.c.l.b16 %v7584
        %v8104 = vunpack.c.l.b16 %v7585
        %v8105 = vunpack.c.l.b16 %v7586
        %v8106 = vunpack.c.l.b16 %v7587
        %v8107 = vunpack.c.l.b16 %v7588
        %v8108 = vunpack.c.l.b16 %v7589
        %v8109 = vunpack.c.l.b16 %v7590
        %v8110 = vunpack.c.l.b16 %v7591
        %v8111 = vunpack.c.l.b16 %v7592
        %v8112 = vunpack.c.l.b16 %v7593
        %v8113 = vunpack.c.l.b16 %v7594
        %v8114 = vunpack.c.l.b16 %v7595
        %v8115 = vunpack.c.l.b16 %v7596
        %v8116 = vunpack.c.l.b16 %v7597
        %v8117 = vunpack.c.l.b16 %v7598
        %v8118 = vunpack.c.l.b16 %v7599
        %v8119 = vunpack.c.l.b16 %v7600
        %v8120 = vunpack.c.l.b16 %v7601
        %v8121 = vunpack.c.l.b16 %v7602
        %v8122 = vunpack.c.l.b16 %v7603
        %v8123 = vunpack.c.l.b16 %v7604
        %v8124 = vunpack.c.l.b16 %v7605
        %v8125 = vunpack.c.l.b16 %v7606
        %v8126 = vunpack.c.l.b16 %v7607
        %v8127 = vunpack.c.l.b16 %v7608
        %v8128 = vunpack.c.l.b16 %v7609
        %v8129 = vpack.c.b16 %v7874, %v7873
        %v8130 = vpack.c.b16 %v7876, %v7875
        %v8131 = vpack.c.b16 %v7878, %v7877
        %v8132 = vpack.c.b16 %v7880, %v7879
        %v8133 = vpack.c.b16 %v7882, %v7881
        %v8134 = vpack.c.b16 %v7884, %v7883
        %v8135 = vpack.c.b16 %v7886, %v7885
        %v8136 = vpack.c.b16 %v7888, %v7887
        %v8137 = vpack.c.b16 %v7890, %v7889
        %v8138 = vpack.c.b16 %v7892, %v7891
        %v8139 = vpack.c.b16 %v7894, %v7893
        %v8140 = vpack.c.b16 %v7896, %v7895
        %v8141 = vpack.c.b16 %v7898, %v7897
        %v8142 = vpack.c.b16 %v7900, %v7899
        %v8143 = vpack.c.b16 %v7902, %v7901
        %v8144 = vpack.c.b16 %v7904, %v7903
        %v8145 = vpack.c.b16 %v7906, %v7905
        %v8146 = vpack.c.b16 %v7908, %v7907
        %v8147 = vpack.c.b16 %v7910, %v7909
        %v8148 = vpack.c.b16 %v7912, %v7911
        %v8149 = vpack.c.b16 %v7914, %v7913
        %v8150 = vpack.c.b16 %v7916, %v7915
        %v8151 = vpack.c.b16 %v7918, %v7917
        %v8152 = vpack.c.b16 %v7920, %v7919
        %v8153 = vpack.c.b16 %v7922, %v7921
        %v8154 = vpack.c.b16 %v7924, %v7923
        %v8155 = vpack.c.b16 %v7926, %v7925
        %v8156 = vpack.c.b16 %v7928, %v7927
        %v8157 = vpack.c.b16 %v7930, %v7929
        %v8158 = vpack.c.b16 %v7932, %v7931
        %v8159 = vpack.c.b16 %v7934, %v7933
        %v8160 = vpack.c.b16 %v7936, %v7935
        %v8161 = vpack.c.b16 %v7938, %v7937
        %v8162 = vpack.c.b16 %v7940, %v7939
        %v8163 = vpack.c.b16 %v7942, %v7941
        %v8164 = vpack.c.b16 %v7944, %v7943
        %v8165 = vpack.c.b16 %v7946, %v7945
        %v8166 = vpack.c.b16 %v7948, %v7947
        %v8167 = vpack.c.b16 %v7950, %v7949
        %v8168 = vpack.c.b16 %v7952, %v7951
        %v8169 = vpack.c.b16 %v7954, %v7953
        %v8170 = vpack.c.b16 %v7956, %v7955
        %v8171 = vpack.c.b16 %v7958, %v7957
        %v8172 = vpack.c.b16 %v7960, %v7959
        %v8173 = vpack.c.b16 %v7962, %v7961
        %v8174 = vpack.c.b16 %v7964, %v7963
        %v8175 = vpack.c.b16 %v7966, %v7965
        %v8176 = vpack.c.b16 %v7968, %v7967
        %v8177 = vpack.c.b16 %v7970, %v7969
        %v8178 = vpack.c.b16 %v7972, %v7971
        %v8179 = vpack.c.b16 %v7974, %v7973
        %v8180 = vpack.c.b16 %v7976, %v7975
        %v8181 = vpack.c.b16 %v7978, %v7977
        %v8182 = vpack.c.b16 %v7980, %v7979
        %v8183 = vpack.c.b16 %v7982, %v7981
        %v8184 = vpack.c.b16 %v7984, %v7983
        %v8185 = vpack.c.b16 %v7986, %v7985
        %v8186 = vpack.c.b16 %v7988, %v7987
        %v8187 = vpack.c.b16 %v7990, %v7989
        %v8188 = vpack.c.b16 %v7992, %v7991
        %v8189 = vpack.c.b16 %v7994, %v7993
        %v8190 = vpack.c.b16 %v7996, %v7995
        %v8191 = vpack.c.b16 %v7998, %v7997
        %v8192 = vpack.c.b16 %v8000, %v7999
        %v8193 = vpack.c.b16 %v8002, %v8001
        %v8194 = vpack.c.b16 %v8004, %v8003
        %v8195 = vpack.c.b16 %v8006, %v8005
        %v8196 = vpack.c.b16 %v8008, %v8007
        %v8197 = vpack.c.b16 %v8010, %v8009
        %v8198 = vpack.c.b16 %v8012, %v8011
        %v8199 = vpack.c.b16 %v8014, %v8013
        %v8200 = vpack.c.b16 %v8016, %v8015
        %v8201 = vpack.c.b16 %v8018, %v8017
        %v8202 = vpack.c.b16 %v8020, %v8019
        %v8203 = vpack.c.b16 %v8022, %v8021
        %v8204 = vpack.c.b16 %v8024, %v8023
        %v8205 = vpack.c.b16 %v8026, %v8025
        %v8206 = vpack.c.b16 %v8028, %v8027
        %v8207 = vpack.c.b16 %v8030, %v8029
        %v8208 = vpack.c.b16 %v8032, %v8031
        %v8209 = vpack.c.b16 %v8034, %v8033
        %v8210 = vpack.c.b16 %v8036, %v8035
        %v8211 = vpack.c.b16 %v8038, %v8037
        %v8212 = vpack.c.b16 %v8040, %v8039
        %v8213 = vpack.c.b16 %v8042, %v8041
        %v8214 = vpack.c.b16 %v8044, %v8043
        %v8215 = vpack.c.b16 %v8046, %v8045
        %v8216 = vpack.c.b16 %v8048, %v8047
        %v8217 = vpack.c.b16 %v8050, %v8049
        %v8218 = vpack.c.b16 %v8052, %v8051
        %v8219 = vpack.c.b16 %v8054, %v8053
        %v8220 = vpack.c.b16 %v8056, %v8055
        %v8221 = vpack.c.b16 %v8058, %v8057
        %v8222 = vpack.c.b16 %v8060, %v8059
        %v8223 = vpack.c.b16 %v8062, %v8061
        %v8224 = vpack.c.b16 %v8064, %v8063
        %v8225 = vpack.c.b16 %v8066, %v8065
        %v8226 = vpack.c.b16 %v8068, %v8067
        %v8227 = vpack.c.b16 %v8070, %v8069
        %v8228 = vpack.c.b16 %v8072, %v8071
        %v8229 = vpack.c.b16 %v8074, %v8073
        %v8230 = vpack.c.b16 %v8076, %v8075
        %v8231 = vpack.c.b16 %v8078, %v8077
        %v8232 = vpack.c.b16 %v8080, %v8079
        %v8233 = vpack.c.b16 %v8082, %v8081
        %v8234 = vpack.c.b16 %v8084, %v8083
        %v8235 = vpack.c.b16 %v8086, %v8085
        %v8236 = vpack.c.b16 %v8088, %v8087
        %v8237 = vpack.c.b16 %v8090, %v8089
        %v8238 = vpack.c.b16 %v8092, %v8091
        %v8239 = vpack.c.b16 %v8094, %v8093
        %v8240 = vpack.c.b16 %v8096, %v8095
        %v8241 = vpack.c.b16 %v8098, %v8097
        %v8242 = vpack.c.b16 %v8100, %v8099
        %v8243 = vpack.c.b16 %v8102, %v8101
        %v8244 = vpack.c.b16 %v8104, %v8103
        %v8245 = vpack.c.b16 %v8106, %v8105
        %v8246 = vpack.c.b16 %v8108, %v8107
        %v8247 = vpack.c.b16 %v8110, %v8109
        %v8248 = vpack.c.b16 %v8112, %v8111
        %v8249 = vpack.c.b16 %v8114, %v8113
        %v8250 = vpack.c.b16 %v8116, %v8115
        %v8251 = vpack.c.b16 %v8118, %v8117
        %v8252 = vpack.c.b16 %v8120, %v8119
        %v8253 = vpack.c.b16 %v8122, %v8121
        %v8254 = vpack.c.b16 %v8124, %v8123
        %v8255 = vpack.c.b16 %v8126, %v8125
        %v8256 = vpack.c.b16 %v8128, %v8127
        %8385 = vmatprep.subr.bf16.mxu0 0
        %8386 = vmatpush1.bf16.msra.mxu0 %v8129
        %8387 = vmatprep.subr.bf16.mxu0 0
        %8388 = vmatpush1.bf16.msra.mxu0 %v8130
        %8389 = vmatprep.subr.bf16.mxu0 0
        %8390 = vmatpush1.bf16.msra.mxu0 %v8131
        %8391 = vmatprep.subr.bf16.mxu0 0
        %8392 = vmatpush1.bf16.msra.mxu0 %v8132
        %8393 = vmatprep.subr.bf16.mxu0 0
        %8394 = vmatpush1.bf16.msra.mxu0 %v8133
        %8395 = vmatprep.subr.bf16.mxu0 0
        %8396 = vmatpush1.bf16.msra.mxu0 %v8134
        %8397 = vmatprep.subr.bf16.mxu0 0
        %8398 = vmatpush1.bf16.msra.mxu0 %v8135
        %8399 = vmatprep.subr.bf16.mxu0 0
        %8400 = vmatpush1.bf16.msra.mxu0 %v8136
        %8401 = vmatprep.subr.bf16.mxu0 0
        %8402 = vmatpush1.bf16.msra.mxu0 %v8137
        %8403 = vmatprep.subr.bf16.mxu0 0
        %8404 = vmatpush1.bf16.msra.mxu0 %v8138
        %8405 = vmatprep.subr.bf16.mxu0 0
        %8406 = vmatpush1.bf16.msra.mxu0 %v8139
        %8407 = vmatprep.subr.bf16.mxu0 0
        %8408 = vmatpush1.bf16.msra.mxu0 %v8140
        %8409 = vmatprep.subr.bf16.mxu0 0
        %8410 = vmatpush1.bf16.msra.mxu0 %v8141
        %8411 = vmatprep.subr.bf16.mxu0 0
        %8412 = vmatpush1.bf16.msra.mxu0 %v8142
        %8413 = vmatprep.subr.bf16.mxu0 0
        %8414 = vmatpush1.bf16.msra.mxu0 %v8143
        %8415 = vmatprep.subr.bf16.mxu0 0
        %8416 = vmatpush1.bf16.msra.mxu0 %v8144
        %8417 = vmatprep.mubr.bf16.mxu0 %v7078
        %8418 = vmatmul.mubr.bf16.gmra.mrb[0].mxu0 %v7077
        %v8419 = vpop.f32.mrb[0].mxu0
        %v8420 = vadd.f32 %v7615, %v8419
        %v8421 = vpop.f32.mrb[0].mxu0
        %v8422 = vpop.f32.mrb[0].mxu0
        %v8423 = vpop.f32.mrb[0].mxu0
        %8424 = vdwg.mxu0
        %8425 = vmatprep.subr.bf16.mxu0 0
        %8426 = vmatpush1.bf16.msra.mxu0 %v8145
        %8427 = vmatprep.subr.bf16.mxu0 0
        %8428 = vmatpush1.bf16.msra.mxu0 %v8146
        %8429 = vmatprep.subr.bf16.mxu0 0
        %8430 = vmatpush1.bf16.msra.mxu0 %v8147
        %8431 = vmatprep.subr.bf16.mxu0 0
        %8432 = vmatpush1.bf16.msra.mxu0 %v8148
        %8433 = vmatprep.subr.bf16.mxu0 0
        %8434 = vmatpush1.bf16.msra.mxu0 %v8149
        %8435 = vmatprep.subr.bf16.mxu0 0
        %8436 = vmatpush1.bf16.msra.mxu0 %v8150
        %8437 = vmatprep.subr.bf16.mxu0 0
        %8438 = vmatpush1.bf16.msra.mxu0 %v8151
        %8439 = vmatprep.subr.bf16.mxu0 0
        %8440 = vmatpush1.bf16.msra.mxu0 %v8152
        %8441 = vmatprep.subr.bf16.mxu0 0
        %8442 = vmatpush1.bf16.msra.mxu0 %v8153
        %8443 = vmatprep.subr.bf16.mxu0 0
        %8444 = vmatpush1.bf16.msra.mxu0 %v8154
        %8445 = vmatprep.subr.bf16.mxu0 0
        %8446 = vmatpush1.bf16.msra.mxu0 %v8155
        %8447 = vmatprep.subr.bf16.mxu0 0
        %8448 = vmatpush1.bf16.msra.mxu0 %v8156
        %8449 = vmatprep.subr.bf16.mxu0 0
        %8450 = vmatpush1.bf16.msra.mxu0 %v8157
        %8451 = vmatprep.subr.bf16.mxu0 0
        %8452 = vmatpush1.bf16.msra.mxu0 %v8158
        %8453 = vmatprep.subr.bf16.mxu0 0
        %8454 = vmatpush1.bf16.msra.mxu0 %v8159
        %8455 = vmatprep.subr.bf16.mxu0 0
        %8456 = vmatpush1.bf16.msra.mxu0 %v8160
        %8457 = vmatprep.mubr.bf16.mxu0 %v7080
        %8458 = vmatmul.mubr.bf16.gmra.mrb[0].mxu0 %v7079
        %v8459 = vpop.f32.mrb[0].mxu0
        %v8460 = vadd.f32 %v8420, %v8459
        %v8461 = vpop.f32.mrb[0].mxu0
        %v8462 = vpop.f32.mrb[0].mxu0
        %v8463 = vpop.f32.mrb[0].mxu0
        %8464 = vdwg.mxu0
        %8465 = vmatprep.subr.bf16.mxu0 0
        %8466 = vmatpush1.bf16.msra.mxu0 %v8161
        %8467 = vmatprep.subr.bf16.mxu0 0
        %8468 = vmatpush1.bf16.msra.mxu0 %v8162
        %8469 = vmatprep.subr.bf16.mxu0 0
        %8470 = vmatpush1.bf16.msra.mxu0 %v8163
        %8471 = vmatprep.subr.bf16.mxu0 0
        %8472 = vmatpush1.bf16.msra.mxu0 %v8164
        %8473 = vmatprep.subr.bf16.mxu0 0
        %8474 = vmatpush1.bf16.msra.mxu0 %v8165
        %8475 = vmatprep.subr.bf16.mxu0 0
        %8476 = vmatpush1.bf16.msra.mxu0 %v8166
        %8477 = vmatprep.subr.bf16.mxu0 0
        %8478 = vmatpush1.bf16.msra.mxu0 %v8167
        %8479 = vmatprep.subr.bf16.mxu0 0
        %8480 = vmatpush1.bf16.msra.mxu0 %v8168
        %8481 = vmatprep.subr.bf16.mxu0 0
        %8482 = vmatpush1.bf16.msra.mxu0 %v8169
        %8483 = vmatprep.subr.bf16.mxu0 0
        %8484 = vmatpush1.bf16.msra.mxu0 %v8170
        %8485 = vmatprep.subr.bf16.mxu0 0
        %8486 = vmatpush1.bf16.msra.mxu0 %v8171
        %8487 = vmatprep.subr.bf16.mxu0 0
        %8488 = vmatpush1.bf16.msra.mxu0 %v8172
        %8489 = vmatprep.subr.bf16.mxu0 0
        %8490 = vmatpush1.bf16.msra.mxu0 %v8173
        %8491 = vmatprep.subr.bf16.mxu0 0
        %8492 = vmatpush1.bf16.msra.mxu0 %v8174
        %8493 = vmatprep.subr.bf16.mxu0 0
        %8494 = vmatpush1.bf16.msra.mxu0 %v8175
        %8495 = vmatprep.subr.bf16.mxu0 0
        %8496 = vmatpush1.bf16.msra.mxu0 %v8176
        %8497 = vmatprep.mubr.bf16.mxu0 %v7169
        %8498 = vmatmul.mubr.bf16.gmra.mrb[0].mxu0 %v7168
        %v8499 = vpop.f32.mrb[0].mxu0
        %v8500 = vadd.f32 %v8460, %v8499
        %v8501 = vpop.f32.mrb[0].mxu0
        %v8502 = vpop.f32.mrb[0].mxu0
        %v8503 = vpop.f32.mrb[0].mxu0
        %8504 = vdwg.mxu0
        %8505 = vmatprep.subr.bf16.mxu0 0
        %8506 = vmatpush1.bf16.msra.mxu0 %v8177
        %8507 = vmatprep.subr.bf16.mxu0 0
        %8508 = vmatpush1.bf16.msra.mxu0 %v8178
        %8509 = vmatprep.subr.bf16.mxu0 0
        %8510 = vmatpush1.bf16.msra.mxu0 %v8179
        %8511 = vmatprep.subr.bf16.mxu0 0
        %8512 = vmatpush1.bf16.msra.mxu0 %v8180
        %8513 = vmatprep.subr.bf16.mxu0 0
        %8514 = vmatpush1.bf16.msra.mxu0 %v8181
        %8515 = vmatprep.subr.bf16.mxu0 0
        %8516 = vmatpush1.bf16.msra.mxu0 %v8182
        %8517 = vmatprep.subr.bf16.mxu0 0
        %8518 = vmatpush1.bf16.msra.mxu0 %v8183
        %8519 = vmatprep.subr.bf16.mxu0 0
        %8520 = vmatpush1.bf16.msra.mxu0 %v8184
        %8521 = vmatprep.subr.bf16.mxu0 0
        %8522 = vmatpush1.bf16.msra.mxu0 %v8185
        %8523 = vmatprep.subr.bf16.mxu0 0
        %8524 = vmatpush1.bf16.msra.mxu0 %v8186
        %8525 = vmatprep.subr.bf16.mxu0 0
        %8526 = vmatpush1.bf16.msra.mxu0 %v8187
        %8527 = vmatprep.subr.bf16.mxu0 0
        %8528 = vmatpush1.bf16.msra.mxu0 %v8188
        %8529 = vmatprep.subr.bf16.mxu0 0
        %8530 = vmatpush1.bf16.msra.mxu0 %v8189
        %8531 = vmatprep.subr.bf16.mxu0 0
        %8532 = vmatpush1.bf16.msra.mxu0 %v8190
        %8533 = vmatprep.subr.bf16.mxu0 0
        %8534 = vmatpush1.bf16.msra.mxu0 %v8191
        %8535 = vmatprep.subr.bf16.mxu0 0
        %8536 = vmatpush1.bf16.msra.mxu0 %v8192
        %8537 = vmatprep.mubr.bf16.mxu0 %v7171
        %8538 = vmatmul.mubr.bf16.gmra.mrb[0].mxu0 %v7170
        %v8539 = vpop.f32.mrb[0].mxu0
        %v8540 = vadd.f32 %v8500, %v8539
        %v8541 = vpop.f32.mrb[0].mxu0
        %v8542 = vpop.f32.mrb[0].mxu0
        %v8543 = vpop.f32.mrb[0].mxu0
        %8544 = vdwg.mxu0
        %8545 = vmatprep.subr.bf16.mxu0 0
        %8546 = vmatpush1.bf16.msra.mxu0 %v8193
        %8547 = vmatprep.subr.bf16.mxu0 0
        %8548 = vmatpush1.bf16.msra.mxu0 %v8194
        %8549 = vmatprep.subr.bf16.mxu0 0
        %8550 = vmatpush1.bf16.msra.mxu0 %v8195
        %8551 = vmatprep.subr.bf16.mxu0 0
        %8552 = vmatpush1.bf16.msra.mxu0 %v8196
        %8553 = vmatprep.subr.bf16.mxu0 0
        %8554 = vmatpush1.bf16.msra.mxu0 %v8197
        %8555 = vmatprep.subr.bf16.mxu0 0
        %8556 = vmatpush1.bf16.msra.mxu0 %v8198
        %8557 = vmatprep.subr.bf16.mxu0 0
        %8558 = vmatpush1.bf16.msra.mxu0 %v8199
        %8559 = vmatprep.subr.bf16.mxu0 0
        %8560 = vmatpush1.bf16.msra.mxu0 %v8200
        %8561 = vmatprep.subr.bf16.mxu0 0
        %8562 = vmatpush1.bf16.msra.mxu0 %v8201
        %8563 = vmatprep.subr.bf16.mxu0 0
        %8564 = vmatpush1.bf16.msra.mxu0 %v8202
        %8565 = vmatprep.subr.bf16.mxu0 0
        %8566 = vmatpush1.bf16.msra.mxu0 %v8203
        %8567 = vmatprep.subr.bf16.mxu0 0
        %8568 = vmatpush1.bf16.msra.mxu0 %v8204
        %8569 = vmatprep.subr.bf16.mxu0 0
        %8570 = vmatpush1.bf16.msra.mxu0 %v8205
        %8571 = vmatprep.subr.bf16.mxu0 0
        %8572 = vmatpush1.bf16.msra.mxu0 %v8206
        %8573 = vmatprep.subr.bf16.mxu0 0
        %8574 = vmatpush1.bf16.msra.mxu0 %v8207
        %8575 = vmatprep.subr.bf16.mxu0 0
        %8576 = vmatpush1.bf16.msra.mxu0 %v8208
        %8577 = vmatprep.mubr.bf16.mxu0 %v7260
        %8578 = vmatmul.mubr.bf16.gmra.mrb[0].mxu0 %v7259
        %v8579 = vpop.f32.mrb[0].mxu0
        %v8580 = vadd.f32 %v8540, %v8579
        %v8581 = vpop.f32.mrb[0].mxu0
        %v8582 = vpop.f32.mrb[0].mxu0
        %v8583 = vpop.f32.mrb[0].mxu0
        %8584 = vdwg.mxu0
        %8585 = vmatprep.subr.bf16.mxu0 0
        %8586 = vmatpush1.bf16.msra.mxu0 %v8209
        %8587 = vmatprep.subr.bf16.mxu0 0
        %8588 = vmatpush1.bf16.msra.mxu0 %v8210
        %8589 = vmatprep.subr.bf16.mxu0 0
        %8590 = vmatpush1.bf16.msra.mxu0 %v8211
        %8591 = vmatprep.subr.bf16.mxu0 0
        %8592 = vmatpush1.bf16.msra.mxu0 %v8212
        %8593 = vmatprep.subr.bf16.mxu0 0
        %8594 = vmatpush1.bf16.msra.mxu0 %v8213
        %8595 = vmatprep.subr.bf16.mxu0 0
        %8596 = vmatpush1.bf16.msra.mxu0 %v8214
        %8597 = vmatprep.subr.bf16.mxu0 0
        %8598 = vmatpush1.bf16.msra.mxu0 %v8215
        %8599 = vmatprep.subr.bf16.mxu0 0
        %8600 = vmatpush1.bf16.msra.mxu0 %v8216
        %8601 = vmatprep.subr.bf16.mxu0 0
        %8602 = vmatpush1.bf16.msra.mxu0 %v8217
        %8603 = vmatprep.subr.bf16.mxu0 0
        %8604 = vmatpush1.bf16.msra.mxu0 %v8218
        %8605 = vmatprep.subr.bf16.mxu0 0
        %8606 = vmatpush1.bf16.msra.mxu0 %v8219
        %8607 = vmatprep.subr.bf16.mxu0 0
        %8608 = vmatpush1.bf16.msra.mxu0 %v8220
        %8609 = vmatprep.subr.bf16.mxu0 0
        %8610 = vmatpush1.bf16.msra.mxu0 %v8221
        %8611 = vmatprep.subr.bf16.mxu0 0
        %8612 = vmatpush1.bf16.msra.mxu0 %v8222
        %8613 = vmatprep.subr.bf16.mxu0 0
        %8614 = vmatpush1.bf16.msra.mxu0 %v8223
        %8615 = vmatprep.subr.bf16.mxu0 0
        %8616 = vmatpush1.bf16.msra.mxu0 %v8224
        %8617 = vmatprep.mubr.bf16.mxu0 %v7262
        %8618 = vmatmul.mubr.bf16.gmra.mrb[0].mxu0 %v7261
        %v8619 = vpop.f32.mrb[0].mxu0
        %v8620 = vadd.f32 %v8580, %v8619
        %v8621 = vpop.f32.mrb[0].mxu0
        %v8622 = vpop.f32.mrb[0].mxu0
        %v8623 = vpop.f32.mrb[0].mxu0
        %8624 = vdwg.mxu0
        %8625 = vmatprep.subr.bf16.mxu0 0
        %8626 = vmatpush1.bf16.msra.mxu0 %v8225
        %8627 = vmatprep.subr.bf16.mxu0 0
        %8628 = vmatpush1.bf16.msra.mxu0 %v8226
        %8629 = vmatprep.subr.bf16.mxu0 0
        %8630 = vmatpush1.bf16.msra.mxu0 %v8227
        %8631 = vmatprep.subr.bf16.mxu0 0
        %8632 = vmatpush1.bf16.msra.mxu0 %v8228
        %8633 = vmatprep.subr.bf16.mxu0 0
        %8634 = vmatpush1.bf16.msra.mxu0 %v8229
        %8635 = vmatprep.subr.bf16.mxu0 0
        %8636 = vmatpush1.bf16.msra.mxu0 %v8230
        %8637 = vmatprep.subr.bf16.mxu0 0
        %8638 = vmatpush1.bf16.msra.mxu0 %v8231
        %8639 = vmatprep.subr.bf16.mxu0 0
        %8640 = vmatpush1.bf16.msra.mxu0 %v8232
        %8641 = vmatprep.subr.bf16.mxu0 0
        %8642 = vmatpush1.bf16.msra.mxu0 %v8233
        %8643 = vmatprep.subr.bf16.mxu0 0
        %8644 = vmatpush1.bf16.msra.mxu0 %v8234
        %8645 = vmatprep.subr.bf16.mxu0 0
        %8646 = vmatpush1.bf16.msra.mxu0 %v8235
        %8647 = vmatprep.subr.bf16.mxu0 0
        %8648 = vmatpush1.bf16.msra.mxu0 %v8236
        %8649 = vmatprep.subr.bf16.mxu0 0
        %8650 = vmatpush1.bf16.msra.mxu0 %v8237
        %8651 = vmatprep.subr.bf16.mxu0 0
        %8652 = vmatpush1.bf16.msra.mxu0 %v8238
        %8653 = vmatprep.subr.bf16.mxu0 0
        %8654 = vmatpush1.bf16.msra.mxu0 %v8239
        %8655 = vmatprep.subr.bf16.mxu0 0
        %8656 = vmatpush1.bf16.msra.mxu0 %v8240
        %8657 = vmatprep.mubr.bf16.mxu0 %v7351
        %8658 = vmatmul.mubr.bf16.gmra.mrb[0].mxu0 %v7350
        %v8659 = vpop.f32.mrb[0].mxu0
        %v8660 = vadd.f32 %v8620, %v8659
        %v8661 = vpop.f32.mrb[0].mxu0
        %v8662 = vpop.f32.mrb[0].mxu0
        %v8663 = vpop.f32.mrb[0].mxu0
        %8664 = vdwg.mxu0
        %8665 = vmatprep.subr.bf16.mxu0 0
        %8666 = vmatpush1.bf16.msra.mxu0 %v8241
        %8667 = vmatprep.subr.bf16.mxu0 0
        %8668 = vmatpush1.bf16.msra.mxu0 %v8242
        %8669 = vmatprep.subr.bf16.mxu0 0
        %8670 = vmatpush1.bf16.msra.mxu0 %v8243
        %8671 = vmatprep.subr.bf16.mxu0 0
        %8672 = vmatpush1.bf16.msra.mxu0 %v8244
        %8673 = vmatprep.subr.bf16.mxu0 0
        %8674 = vmatpush1.bf16.msra.mxu0 %v8245
        %8675 = vmatprep.subr.bf16.mxu0 0
        %8676 = vmatpush1.bf16.msra.mxu0 %v8246
        %8677 = vmatprep.subr.bf16.mxu0 0
        %8678 = vmatpush1.bf16.msra.mxu0 %v8247
        %8679 = vmatprep.subr.bf16.mxu0 0
        %8680 = vmatpush1.bf16.msra.mxu0 %v8248
        %8681 = vmatprep.subr.bf16.mxu0 0
        %8682 = vmatpush1.bf16.msra.mxu0 %v8249
        %8683 = vmatprep.subr.bf16.mxu0 0
        %8684 = vmatpush1.bf16.msra.mxu0 %v8250
        %8685 = vmatprep.subr.bf16.mxu0 0
        %8686 = vmatpush1.bf16.msra.mxu0 %v8251
        %8687 = vmatprep.subr.bf16.mxu0 0
        %8688 = vmatpush1.bf16.msra.mxu0 %v8252
        %8689 = vmatprep.subr.bf16.mxu0 0
        %8690 = vmatpush1.bf16.msra.mxu0 %v8253
        %8691 = vmatprep.subr.bf16.mxu0 0
        %8692 = vmatpush1.bf16.msra.mxu0 %v8254
        %8693 = vmatprep.subr.bf16.mxu0 0
        %8694 = vmatpush1.bf16.msra.mxu0 %v8255
        %8695 = vmatprep.subr.bf16.mxu0 0
        %8696 = vmatpush1.bf16.msra.mxu0 %v8256
        %8697 = vmatprep.mubr.bf16.mxu0 %v7353
        %8698 = vmatmul.mubr.bf16.gmra.mrb[0].mxu0 %v7352
        %v8699 = vpop.f32.mrb[0].mxu0
        %v8700 = vadd.f32 %v8660, %v8699
        %v8701 = vpop.f32.mrb[0].mxu0
        %v8702 = vpop.f32.mrb[0].mxu0
        %v8703 = vpop.f32.mrb[0].mxu0
        %8704 = vdwg.mxu0
        %8705 = vst [vmem:[%s634] sm:$0xff] %v8700
        %p8706 = scmp.lt.s32.totalorder %s32, 1
        %s8707 = scalar_select %p8706, %s32, 1
        %s8708 = smul.addr %s8707, 8
        %s8709 = scalar_lea.vmem %s16, %s8708
        // Predicated region
        $region117: #{_forward_impl.1} parent=83 // pred_check
          %p8710 = pneg %p391
        $region118: #{_forward_impl.1} parent=83 // pred_check_branch
          %8712 = sbr.rel (%p8710) target = $region120
        $region119: #{_forward_impl.1} parent=83 // pred_region
          _
        $region120: #{_forward_impl.1} parent=83 // pred_fallthru
          _
      $region84: #{_forward_impl.1} parent=5 // pred_fallthru
        _
      %p8713 = scmp.le.s32.totalorder 2, %s27
      // Predicated region
      $region121: #{_forward_impl.1} parent=5 // pred_check
        %p8714 = pneg %p8713
      $region122: #{_forward_impl.1} parent=5 // pred_check_branch
        %8716 = sbr.rel (%p8714) target = $region124
      $region123: #{_forward_impl.1} parent=5 // pred_region
        %s8717 = ssub.s32 %s27, 2
        // Predicated region
        $region125: #{_forward_impl.1} parent=123 // pred_check
          %p8718 = pneg %p397
        $region126: #{_forward_impl.1} parent=123 // pred_check_branch
          %8720 = sbr.rel (%p8718) target = $region128
        $region127: #{_forward_impl.1} parent=123 // pred_region
          %p8721 = scmp.lt.s32.totalorder %s33, 1
          %s8722 = scalar_select %p8721, %s33, 1
          %s8723 = smul.addr %s8722, 8
          %s8724 = scalar_lea.vmem %s16, %s8723
        $region128: #{_forward_impl.1} parent=123 // pred_fallthru
          _
      $region124: #{_forward_impl.1} parent=5 // pred_fallthru
        _
    $region6: #{_forward_impl.1} parent=1 // loop_footer
      %s31 = sadd.s32 1, %s27
    $region7: #{_forward_impl.1} parent=1 // loop_footer_branch
      %26 = sbr.rel target = $region3
    $region8: #{_forward_impl.1} parent=1 // loop_exit
      _
    %8725 = vsyncpa [#allocation3], 1
    %s8726 = scalar_lea.sflag [#allocation3], 1
    %8727 = vsyncpa %s8726, 1
    %8728 = vsyncpa [#allocation5], 1
    %8729 = vsyncpa [#allocation8], 1
    %8730 = vsyncpa [#allocation11], 1
    %8731 = vsyncpa [#allocation14], 1

</llo_original>
